<compile_context>
chip_gen: v6e
topology: v6e:2x2x1
jax: 0.10.0
libtpu: 0.0.40
codegen_flags: <defaults>
</compile_context>

<pallas_src>
import jax
import jax.numpy as jnp
from jax.experimental import pallas as pl
from jax.experimental.pallas import tpu as pltpu

LEAKY_SLOPE = 0.01           # nn.LeakyReLU default negative_slope

# logical (PyTorch) sizes
INPUT_SIZE = 16 * 3          # 48
PSI_SIZE = 15 * 15           # 225
LINEAR_SIZE = 100
HIDDEN2 = 1000

# lane/sublane-aligned padded sizes (HBM/VMEM layout)
IN_PAD = 128
PSI_PAD = 256
LIN_PAD = 128
HID_PAD = 1024
OUT_PAD = 128
BATCH_PAD = 8

WEIGHT_KEYS = ("w11", "s1w1", "s1w2", "w12", "w2", "s2w1", "s2w2",
               "w3a", "w3b", "w4")


def _leaky(v):
    return jnp.where(v >= 0, v, LEAKY_SLOPE * v)


def _linear(h, w_ref, b_ref):
    # bf16 weights are DMA'd from HBM (half the bytes), upcast in-vreg (exact),
    # and accumulated in f32 on the MXU.
    w = w_ref[...].astype(jnp.float32)
    return jnp.dot(h, w, preferred_element_type=jnp.float32) + b_ref[...]


# ----------------------------------------------------------------------------
# Pallas kernel: full Critic MLP, everything resident in VMEM (grid-less).
# ----------------------------------------------------------------------------
def critic_kernel(x_ref, psi_ref,
                  w11_ref, b11_ref,
                  s1w1_ref, s1b1_ref, s1w2_ref, s1b2_ref,
                  w12_ref, b12_ref,
                  w2_ref, b2_ref,
                  s2w1_ref, s2b1_ref, s2w2_ref, s2b2_ref,
                  w3a_ref, w3b_ref, b3_ref,
                  w4_ref, b4_ref,
                  out_ref):
    f32 = jnp.float32
    x = x_ref[...]          # (Bp, IN_PAD)
    psi = psi_ref[...]      # (Bp, PSI_PAD)

    # ----- branch 1: w11 -> leaky -> residual stage1 -> w12 -----
    y1 = _leaky(_linear(x, w11_ref, b11_ref))
    t = _leaky(_linear(y1, s1w1_ref, s1b1_ref))
    t = _linear(t, s1w2_ref, s1b2_ref)
    y1 = _leaky(y1 + t)
    y1 = _linear(y1, w12_ref, b12_ref)

    # ----- branch 2: w2 -> leaky -> residual stage2 (1024x1024 matmuls) -----
    y2 = _leaky(_linear(psi, w2_ref, b2_ref))
    t = _leaky(_linear(y2, s2w1_ref, s2b1_ref))
    t = _linear(t, s2w2_ref, s2b2_ref)
    y2 = _leaky(y2 + t)

    # ----- head: concat([y1, y2]) @ w3  ==  y1 @ w3a + y2 @ w3b -----
    o = (jnp.dot(y1, w3a_ref[...].astype(f32), preferred_element_type=f32)
         + jnp.dot(y2, w3b_ref[...].astype(f32), preferred_element_type=f32)
         + b3_ref[...])
    o = _leaky(o)
    out_ref[...] = _linear(o, w4_ref, b4_ref)   # (Bp, OUT_PAD), lane-dense store


# ----------------------------------------------------------------------------
# kcs: fixed kinematic-chain-space transform.
# TODO(synk): kcs (15x16 @ 16x3 batched matmul + flatten) stays in plain-JAX
# glue (tiny unaligned shapes); it is fused into the same jitted program.
# ----------------------------------------------------------------------------
_CT_ROWS = [
    [1, 0, 0, 0, 0, 0, 0, 0, 0, 0, 0, 0, 0, 1, 1],
    [-1, 1, 0, 0, 0, 0, 0, 0, 0, 0, 0, 0, 0, 0, 0],
    [0, -1, 0, 0, 0, 0, 0, 0, 0, 0, 0, 0, 0, 0, 0],
    [0, 0, 1, 0, 0, 0, 0, 0, 0, 0, 0, 0, 0, 1, 0],
    [0, 0, -1, 1, 0, 0, 0, 0, 0, 0, 0, 0, 0, 0, 0],
    [0, 0, 0, -1, 0, 0, 0, 0, 0, 0, 0, 0, 0, 0, 0],
    [0, 0, 0, 0, 1, 0, 0, 0, 0, 0, 0, 0, 0, 0, -1],
    [0, 0, 0, 0, -1, 1, 0, 1, 0, 0, 1, 0, 0, 0, 0],
    [0, 0, 0, 0, 0, -1, 1, 0, 0, 0, 0, 0, 0, 0, 0],
    [0, 0, 0, 0, 0, 0, -1, 0, 0, 0, 0, 0, 0, 0, 0],
    [0, 0, 0, 0, 0, 0, 0, -1, 1, 0, 0, 0, 0, 0, 0],
    [0, 0, 0, 0, 0, 0, 0, 0, -1, 1, 0, 0, 0, 0, 0],
    [0, 0, 0, 0, 0, 0, 0, 0, 0, -1, 0, 0, 0, 0, 0],
    [0, 0, 0, 0, 0, 0, 0, 0, 0, 0, -1, 1, 0, 0, 0],
    [0, 0, 0, 0, 0, 0, 0, 0, 0, 0, 0, -1, 1, 0, 0],
    [0, 0, 0, 0, 0, 0, 0, 0, 0, 0, 0, 0, -1, 0, 0],
]
C_MAT = jnp.array(_CT_ROWS, dtype=jnp.float32).T  # (15, 16) == Ct.transpose(0,1)


def kcs_flat(x):
    b = x.shape[0]
    x3 = x.reshape(b, 16, 3)                                  # x.view(-1, 16, 3)
    bm = jnp.einsum("ij,bjk->bik", C_MAT, x3)                 # (B, 15, 3)
    psi = jnp.einsum("bik,bjk->bij", bm, bm)                  # (B, 15, 15)
    return psi.reshape(b, PSI_SIZE)                           # flatten(start_dim=1)


# ----------------------------------------------------------------------------
# Parameters (deterministic synthetic init) + packing (pad + bf16 cast).
# ----------------------------------------------------------------------------
def init_params(key):
    def lin(k, fan_in, fan_out, scale=0.05):
        kw, kb = jax.random.split(k)
        w = scale * jax.random.normal(kw, (fan_in, fan_out), jnp.float32)
        b = scale * jax.random.normal(kb, (1, fan_out), jnp.float32)
        return w, b

    ks = jax.random.split(key, 9)
    p = {}
    p["w11"], p["b11"] = lin(ks[0], INPUT_SIZE, LINEAR_SIZE)
    p["s1w1"], p["s1b1"] = lin(ks[1], LINEAR_SIZE, LINEAR_SIZE)
    p["s1w2"], p["s1b2"] = lin(ks[2], LINEAR_SIZE, LINEAR_SIZE)
    p["w12"], p["b12"] = lin(ks[3], LINEAR_SIZE, LINEAR_SIZE)
    p["w2"], p["b2"] = lin(ks[4], PSI_SIZE, HIDDEN2)
    p["s2w1"], p["s2b1"] = lin(ks[5], HIDDEN2, HIDDEN2)
    p["s2w2"], p["s2b2"] = lin(ks[6], HIDDEN2, HIDDEN2)
    w3, p["b3"] = lin(ks[7], LINEAR_SIZE + HIDDEN2, LINEAR_SIZE)
    p["w4"], p["b4"] = lin(ks[8], LINEAR_SIZE, 1)
    p["w3a"], p["w3b"] = w3[:LINEAR_SIZE], w3[LINEAR_SIZE:]
    return p


def _pad2(a, rows, cols):
    return jnp.pad(a, ((0, rows - a.shape[0]), (0, cols - a.shape[1])))


def pack_params(p):
    """Zero-pad to aligned shapes; weights -> bf16, biases stay f32."""
    bf16 = jnp.bfloat16

    def wpad(w, r, c):
        return _pad2(w.astype(bf16), r, c)

    def bpad(b, c):
        return _pad2(b, 1, c).astype(jnp.float32)

    return (
        wpad(p["w11"], IN_PAD, LIN_PAD), bpad(p["b11"], LIN_PAD),
        wpad(p["s1w1"], LIN_PAD, LIN_PAD), bpad(p["s1b1"], LIN_PAD),
        wpad(p["s1w2"], LIN_PAD, LIN_PAD), bpad(p["s1b2"], LIN_PAD),
        wpad(p["w12"], LIN_PAD, LIN_PAD), bpad(p["b12"], LIN_PAD),
        wpad(p["w2"], PSI_PAD, HID_PAD), bpad(p["b2"], HID_PAD),
        wpad(p["s2w1"], HID_PAD, HID_PAD), bpad(p["s2b1"], HID_PAD),
        wpad(p["s2w2"], HID_PAD, HID_PAD), bpad(p["s2b2"], HID_PAD),
        wpad(p["w3a"], LIN_PAD, LIN_PAD), wpad(p["w3b"], HID_PAD, LIN_PAD),
        bpad(p["b3"], LIN_PAD),
        wpad(p["w4"], LIN_PAD, OUT_PAD), bpad(p["b4"], OUT_PAD),
    )


def dequant_params(p):
    """Logical-shape params as the kernel actually sees them (bf16-rounded)."""
    q = {}
    for k, v in p.items():
        if k in WEIGHT_KEYS:
            q[k] = v.astype(jnp.bfloat16).astype(jnp.float32)
        else:
            q[k] = v
    return q


# ----------------------------------------------------------------------------
# Wrapper: kcs + padding + single pallas_call, all under one jit.
# ----------------------------------------------------------------------------
@jax.jit
def critic_forward(x, packed):
    batch = x.shape[0]
    bp = max(BATCH_PAD, ((batch + BATCH_PAD - 1) // BATCH_PAD) * BATCH_PAD)

    psi = kcs_flat(x)                                            # (B, 225)
    x_pad = jnp.pad(x, ((0, bp - batch), (0, IN_PAD - INPUT_SIZE)))
    psi_pad = jnp.pad(psi, ((0, bp - batch), (0, PSI_PAD - PSI_SIZE)))

    inputs = (x_pad, psi_pad) + tuple(packed)
    n_in = len(inputs)

    out = pl.pallas_call(
        critic_kernel,
        out_shape=jax.ShapeDtypeStruct((bp, OUT_PAD), jnp.float32),
        in_specs=[pl.BlockSpec(memory_space=pltpu.MemorySpace.VMEM)] * n_in,
        out_specs=pl.BlockSpec(memory_space=pltpu.MemorySpace.VMEM),
        compiler_params=pltpu.CompilerParams(
            vmem_limit_bytes=32 * 1024 * 1024),
    )(*inputs)
    return out[:batch, :1]


# Pure-JAX reference (mirrors the PyTorch forward exactly) for validation.
def critic_ref(x, p):
    y1 = _leaky(x @ p["w11"] + p["b11"])
    t = _leaky(y1 @ p["s1w1"] + p["s1b1"])
    t = t @ p["s1w2"] + p["s1b2"]
    y1 = _leaky(y1 + t)
    y1 = y1 @ p["w12"] + p["b12"]
    psi = kcs_flat(x)
    y2 = _leaky(psi @ p["w2"] + p["b2"])
    t = _leaky(y2 @ p["s2w1"] + p["s2b1"])
    t = t @ p["s2w2"] + p["s2b2"]
    y2 = _leaky(y2 + t)
    cat = jnp.concatenate([y1, y2], axis=1)
    w3 = jnp.concatenate([p["w3a"], p["w3b"]], axis=0)
    o = _leaky(cat @ w3 + p["b3"])
    return o @ p["w4"] + p["b4"]


if __name__ == "__main__":
    key = jax.random.PRNGKey(0)
    kx, kp = jax.random.split(key)

    batch = 2
    x = jax.random.normal(kx, (batch, INPUT_SIZE), jnp.float32)   # (2, 48)
    params = init_params(kp)
    packed = pack_params(params)

    out = jax.block_until_ready(critic_forward(x, packed))
    ref = jax.block_until_ready(critic_ref(x, dequant_params(params)))

    assert out.shape == (batch, 1), out.shape
    if not bool(jnp.allclose(out, ref, rtol=1e-2, atol=1e-2)):
        raise AssertionError(f"mismatch: pallas={out} ref={ref}")

    print("KERNEL_OK")
</pallas_src>

<mosaic_0001>
module attributes {stable_mosaic.version = 11 : i64} {
  func.func @critic_kernel(%arg0: memref<8x128xf32, #tpu.memory_space<vmem>>, %arg1: memref<8x256xf32, #tpu.memory_space<vmem>>, %arg2: memref<128x128xbf16, #tpu.memory_space<vmem>>, %arg3: memref<1x128xf32, #tpu.memory_space<vmem>>, %arg4: memref<128x128xbf16, #tpu.memory_space<vmem>>, %arg5: memref<1x128xf32, #tpu.memory_space<vmem>>, %arg6: memref<128x128xbf16, #tpu.memory_space<vmem>>, %arg7: memref<1x128xf32, #tpu.memory_space<vmem>>, %arg8: memref<128x128xbf16, #tpu.memory_space<vmem>>, %arg9: memref<1x128xf32, #tpu.memory_space<vmem>>, %arg10: memref<256x1024xbf16, #tpu.memory_space<vmem>>, %arg11: memref<1x1024xf32, #tpu.memory_space<vmem>>, %arg12: memref<1024x1024xbf16, #tpu.memory_space<vmem>>, %arg13: memref<1x1024xf32, #tpu.memory_space<vmem>>, %arg14: memref<1024x1024xbf16, #tpu.memory_space<vmem>>, %arg15: memref<1x1024xf32, #tpu.memory_space<vmem>>, %arg16: memref<128x128xbf16, #tpu.memory_space<vmem>>, %arg17: memref<1024x128xbf16, #tpu.memory_space<vmem>>, %arg18: memref<1x128xf32, #tpu.memory_space<vmem>>, %arg19: memref<128x128xbf16, #tpu.memory_space<vmem>>, %arg20: memref<1x128xf32, #tpu.memory_space<vmem>>, %arg21: memref<8x128xf32, #tpu.memory_space<vmem>>) attributes {dimension_semantics = [], scalar_prefetch = 0 : i64, scratch_operands = 0 : i64, tpu.core_type = #tpu.core_type<tc>} {
    %c0 = arith.constant 0 : index
    %c0_0 = arith.constant 0 : index
    %0 = vector.load %arg0[%c0, %c0_0] : memref<8x128xf32, #tpu.memory_space<vmem>>, vector<8x128xf32>
    %c0_1 = arith.constant 0 : index
    %c0_2 = arith.constant 0 : index
    %1 = vector.load %arg1[%c0_1, %c0_2] : memref<8x256xf32, #tpu.memory_space<vmem>>, vector<8x256xf32>
    %c0_3 = arith.constant 0 : index
    %c0_4 = arith.constant 0 : index
    %2 = vector.load %arg2[%c0_3, %c0_4] : memref<128x128xbf16, #tpu.memory_space<vmem>>, vector<128x128xbf16>
    %3 = arith.extf %2 : vector<128x128xbf16> to vector<128x128xf32>
    %cst = arith.constant dense<0.000000e+00> : vector<8x128xf32>
    %4 = tpu.matmul %0, %3, %cst {dimension_numbers = #tpu.dot_dimension_numbers<[1], [0], [0], [1], [0, 0, 1, 1], [], []>} : vector<8x128xf32>, vector<128x128xf32>, vector<8x128xf32> -> vector<8x128xf32>
    %c0_5 = arith.constant 0 : index
    %c0_6 = arith.constant 0 : index
    %5 = vector.load %arg3[%c0_5, %c0_6] : memref<1x128xf32, #tpu.memory_space<vmem>>, vector<1x128xf32>
    %6 = vector.broadcast %5 : vector<1x128xf32> to vector<8x128xf32>
    %7 = arith.addf %4, %6 : vector<8x128xf32>
    %cst_7 = arith.constant 0.000000e+00 : f32
    %8 = vector.broadcast %cst_7 : f32 to vector<8x128xf32>
    %9 = arith.cmpf oge, %7, %8 : vector<8x128xf32>
    %cst_8 = arith.constant 0.00999999977 : f32
    %10 = vector.broadcast %cst_8 : f32 to vector<8x128xf32>
    %11 = arith.mulf %10, %7 : vector<8x128xf32>
    %12 = arith.select %9, %7, %11 : vector<8x128xi1>, vector<8x128xf32>
    %c0_9 = arith.constant 0 : index
    %c0_10 = arith.constant 0 : index
    %13 = vector.load %arg4[%c0_9, %c0_10] : memref<128x128xbf16, #tpu.memory_space<vmem>>, vector<128x128xbf16>
    %14 = arith.extf %13 : vector<128x128xbf16> to vector<128x128xf32>
    %cst_11 = arith.constant dense<0.000000e+00> : vector<8x128xf32>
    %15 = tpu.matmul %12, %14, %cst_11 {dimension_numbers = #tpu.dot_dimension_numbers<[1], [0], [0], [1], [0, 0, 1, 1], [], []>} : vector<8x128xf32>, vector<128x128xf32>, vector<8x128xf32> -> vector<8x128xf32>
    %c0_12 = arith.constant 0 : index
    %c0_13 = arith.constant 0 : index
    %16 = vector.load %arg5[%c0_12, %c0_13] : memref<1x128xf32, #tpu.memory_space<vmem>>, vector<1x128xf32>
    %17 = vector.broadcast %16 : vector<1x128xf32> to vector<8x128xf32>
    %18 = arith.addf %15, %17 : vector<8x128xf32>
    %cst_14 = arith.constant 0.000000e+00 : f32
    %19 = vector.broadcast %cst_14 : f32 to vector<8x128xf32>
    %20 = arith.cmpf oge, %18, %19 : vector<8x128xf32>
    %cst_15 = arith.constant 0.00999999977 : f32
    %21 = vector.broadcast %cst_15 : f32 to vector<8x128xf32>
    %22 = arith.mulf %21, %18 : vector<8x128xf32>
    %23 = arith.select %20, %18, %22 : vector<8x128xi1>, vector<8x128xf32>
    %c0_16 = arith.constant 0 : index
    %c0_17 = arith.constant 0 : index
    %24 = vector.load %arg6[%c0_16, %c0_17] : memref<128x128xbf16, #tpu.memory_space<vmem>>, vector<128x128xbf16>
    %25 = arith.extf %24 : vector<128x128xbf16> to vector<128x128xf32>
    %cst_18 = arith.constant dense<0.000000e+00> : vector<8x128xf32>
    %26 = tpu.matmul %23, %25, %cst_18 {dimension_numbers = #tpu.dot_dimension_numbers<[1], [0], [0], [1], [0, 0, 1, 1], [], []>} : vector<8x128xf32>, vector<128x128xf32>, vector<8x128xf32> -> vector<8x128xf32>
    %c0_19 = arith.constant 0 : index
    %c0_20 = arith.constant 0 : index
    %27 = vector.load %arg7[%c0_19, %c0_20] : memref<1x128xf32, #tpu.memory_space<vmem>>, vector<1x128xf32>
    %28 = vector.broadcast %27 : vector<1x128xf32> to vector<8x128xf32>
    %29 = arith.addf %26, %28 : vector<8x128xf32>
    %30 = arith.addf %12, %29 : vector<8x128xf32>
    %cst_21 = arith.constant 0.000000e+00 : f32
    %31 = vector.broadcast %cst_21 : f32 to vector<8x128xf32>
    %32 = arith.cmpf oge, %30, %31 : vector<8x128xf32>
    %cst_22 = arith.constant 0.00999999977 : f32
    %33 = vector.broadcast %cst_22 : f32 to vector<8x128xf32>
    %34 = arith.mulf %33, %30 : vector<8x128xf32>
    %35 = arith.select %32, %30, %34 : vector<8x128xi1>, vector<8x128xf32>
    %c0_23 = arith.constant 0 : index
    %c0_24 = arith.constant 0 : index
    %36 = vector.load %arg8[%c0_23, %c0_24] : memref<128x128xbf16, #tpu.memory_space<vmem>>, vector<128x128xbf16>
    %37 = arith.extf %36 : vector<128x128xbf16> to vector<128x128xf32>
    %cst_25 = arith.constant dense<0.000000e+00> : vector<8x128xf32>
    %38 = tpu.matmul %35, %37, %cst_25 {dimension_numbers = #tpu.dot_dimension_numbers<[1], [0], [0], [1], [0, 0, 1, 1], [], []>} : vector<8x128xf32>, vector<128x128xf32>, vector<8x128xf32> -> vector<8x128xf32>
    %c0_26 = arith.constant 0 : index
    %c0_27 = arith.constant 0 : index
    %39 = vector.load %arg9[%c0_26, %c0_27] : memref<1x128xf32, #tpu.memory_space<vmem>>, vector<1x128xf32>
    %40 = vector.broadcast %39 : vector<1x128xf32> to vector<8x128xf32>
    %41 = arith.addf %38, %40 : vector<8x128xf32>
    %c0_28 = arith.constant 0 : index
    %c0_29 = arith.constant 0 : index
    %42 = vector.load %arg10[%c0_28, %c0_29] : memref<256x1024xbf16, #tpu.memory_space<vmem>>, vector<256x1024xbf16>
    %43 = arith.extf %42 : vector<256x1024xbf16> to vector<256x1024xf32>
    %cst_30 = arith.constant dense<0.000000e+00> : vector<8x1024xf32>
    %44 = tpu.matmul %1, %43, %cst_30 {dimension_numbers = #tpu.dot_dimension_numbers<[1], [0], [0], [1], [0, 0, 1, 1], [], []>} : vector<8x256xf32>, vector<256x1024xf32>, vector<8x1024xf32> -> vector<8x1024xf32>
    %c0_31 = arith.constant 0 : index
    %c0_32 = arith.constant 0 : index
    %45 = vector.load %arg11[%c0_31, %c0_32] : memref<1x1024xf32, #tpu.memory_space<vmem>>, vector<1x1024xf32>
    %46 = vector.broadcast %45 : vector<1x1024xf32> to vector<8x1024xf32>
    %47 = arith.addf %44, %46 : vector<8x1024xf32>
    %cst_33 = arith.constant 0.000000e+00 : f32
    %48 = vector.broadcast %cst_33 : f32 to vector<8x1024xf32>
    %49 = arith.cmpf oge, %47, %48 : vector<8x1024xf32>
    %cst_34 = arith.constant 0.00999999977 : f32
    %50 = vector.broadcast %cst_34 : f32 to vector<8x1024xf32>
    %51 = arith.mulf %50, %47 : vector<8x1024xf32>
    %52 = arith.select %49, %47, %51 : vector<8x1024xi1>, vector<8x1024xf32>
    %c0_35 = arith.constant 0 : index
    %c0_36 = arith.constant 0 : index
    %53 = vector.load %arg12[%c0_35, %c0_36] : memref<1024x1024xbf16, #tpu.memory_space<vmem>>, vector<1024x1024xbf16>
    %54 = arith.extf %53 : vector<1024x1024xbf16> to vector<1024x1024xf32>
    %cst_37 = arith.constant dense<0.000000e+00> : vector<8x1024xf32>
    %55 = tpu.matmul %52, %54, %cst_37 {dimension_numbers = #tpu.dot_dimension_numbers<[1], [0], [0], [1], [0, 0, 1, 1], [], []>} : vector<8x1024xf32>, vector<1024x1024xf32>, vector<8x1024xf32> -> vector<8x1024xf32>
    %c0_38 = arith.constant 0 : index
    %c0_39 = arith.constant 0 : index
    %56 = vector.load %arg13[%c0_38, %c0_39] : memref<1x1024xf32, #tpu.memory_space<vmem>>, vector<1x1024xf32>
    %57 = vector.broadcast %56 : vector<1x1024xf32> to vector<8x1024xf32>
    %58 = arith.addf %55, %57 : vector<8x1024xf32>
    %cst_40 = arith.constant 0.000000e+00 : f32
    %59 = vector.broadcast %cst_40 : f32 to vector<8x1024xf32>
    %60 = arith.cmpf oge, %58, %59 : vector<8x1024xf32>
    %cst_41 = arith.constant 0.00999999977 : f32
    %61 = vector.broadcast %cst_41 : f32 to vector<8x1024xf32>
    %62 = arith.mulf %61, %58 : vector<8x1024xf32>
    %63 = arith.select %60, %58, %62 : vector<8x1024xi1>, vector<8x1024xf32>
    %c0_42 = arith.constant 0 : index
    %c0_43 = arith.constant 0 : index
    %64 = vector.load %arg14[%c0_42, %c0_43] : memref<1024x1024xbf16, #tpu.memory_space<vmem>>, vector<1024x1024xbf16>
    %65 = arith.extf %64 : vector<1024x1024xbf16> to vector<1024x1024xf32>
    %cst_44 = arith.constant dense<0.000000e+00> : vector<8x1024xf32>
    %66 = tpu.matmul %63, %65, %cst_44 {dimension_numbers = #tpu.dot_dimension_numbers<[1], [0], [0], [1], [0, 0, 1, 1], [], []>} : vector<8x1024xf32>, vector<1024x1024xf32>, vector<8x1024xf32> -> vector<8x1024xf32>
    %c0_45 = arith.constant 0 : index
    %c0_46 = arith.constant 0 : index
    %67 = vector.load %arg15[%c0_45, %c0_46] : memref<1x1024xf32, #tpu.memory_space<vmem>>, vector<1x1024xf32>
    %68 = vector.broadcast %67 : vector<1x1024xf32> to vector<8x1024xf32>
    %69 = arith.addf %66, %68 : vector<8x1024xf32>
    %70 = arith.addf %52, %69 : vector<8x1024xf32>
    %cst_47 = arith.constant 0.000000e+00 : f32
    %71 = vector.broadcast %cst_47 : f32 to vector<8x1024xf32>
    %72 = arith.cmpf oge, %70, %71 : vector<8x1024xf32>
    %cst_48 = arith.constant 0.00999999977 : f32
    %73 = vector.broadcast %cst_48 : f32 to vector<8x1024xf32>
    %74 = arith.mulf %73, %70 : vector<8x1024xf32>
    %75 = arith.select %72, %70, %74 : vector<8x1024xi1>, vector<8x1024xf32>
    %c0_49 = arith.constant 0 : index
    %c0_50 = arith.constant 0 : index
    %76 = vector.load %arg16[%c0_49, %c0_50] : memref<128x128xbf16, #tpu.memory_space<vmem>>, vector<128x128xbf16>
    %77 = arith.extf %76 : vector<128x128xbf16> to vector<128x128xf32>
    %cst_51 = arith.constant dense<0.000000e+00> : vector<8x128xf32>
    %78 = tpu.matmul %41, %77, %cst_51 {dimension_numbers = #tpu.dot_dimension_numbers<[1], [0], [0], [1], [0, 0, 1, 1], [], []>} : vector<8x128xf32>, vector<128x128xf32>, vector<8x128xf32> -> vector<8x128xf32>
    %c0_52 = arith.constant 0 : index
    %c0_53 = arith.constant 0 : index
    %79 = vector.load %arg17[%c0_52, %c0_53] : memref<1024x128xbf16, #tpu.memory_space<vmem>>, vector<1024x128xbf16>
    %80 = arith.extf %79 : vector<1024x128xbf16> to vector<1024x128xf32>
    %cst_54 = arith.constant dense<0.000000e+00> : vector<8x128xf32>
    %81 = tpu.matmul %75, %80, %cst_54 {dimension_numbers = #tpu.dot_dimension_numbers<[1], [0], [0], [1], [0, 0, 1, 1], [], []>} : vector<8x1024xf32>, vector<1024x128xf32>, vector<8x128xf32> -> vector<8x128xf32>
    %82 = arith.addf %78, %81 : vector<8x128xf32>
    %c0_55 = arith.constant 0 : index
    %c0_56 = arith.constant 0 : index
    %83 = vector.load %arg18[%c0_55, %c0_56] : memref<1x128xf32, #tpu.memory_space<vmem>>, vector<1x128xf32>
    %84 = vector.broadcast %83 : vector<1x128xf32> to vector<8x128xf32>
    %85 = arith.addf %82, %84 : vector<8x128xf32>
    %cst_57 = arith.constant 0.000000e+00 : f32
    %86 = vector.broadcast %cst_57 : f32 to vector<8x128xf32>
    %87 = arith.cmpf oge, %85, %86 : vector<8x128xf32>
    %cst_58 = arith.constant 0.00999999977 : f32
    %88 = vector.broadcast %cst_58 : f32 to vector<8x128xf32>
    %89 = arith.mulf %88, %85 : vector<8x128xf32>
    %90 = arith.select %87, %85, %89 : vector<8x128xi1>, vector<8x128xf32>
    %c0_59 = arith.constant 0 : index
    %c0_60 = arith.constant 0 : index
    %91 = vector.load %arg19[%c0_59, %c0_60] : memref<128x128xbf16, #tpu.memory_space<vmem>>, vector<128x128xbf16>
    %92 = arith.extf %91 : vector<128x128xbf16> to vector<128x128xf32>
    %cst_61 = arith.constant dense<0.000000e+00> : vector<8x128xf32>
    %93 = tpu.matmul %90, %92, %cst_61 {dimension_numbers = #tpu.dot_dimension_numbers<[1], [0], [0], [1], [0, 0, 1, 1], [], []>} : vector<8x128xf32>, vector<128x128xf32>, vector<8x128xf32> -> vector<8x128xf32>
    %c0_62 = arith.constant 0 : index
    %c0_63 = arith.constant 0 : index
    %94 = vector.load %arg20[%c0_62, %c0_63] : memref<1x128xf32, #tpu.memory_space<vmem>>, vector<1x128xf32>
    %95 = vector.broadcast %94 : vector<1x128xf32> to vector<8x128xf32>
    %96 = arith.addf %93, %95 : vector<8x128xf32>
    %c0_64 = arith.constant 0 : index
    %c0_65 = arith.constant 0 : index
    %97 = vector.load %arg21[%c0_64, %c0_65] : memref<8x128xf32, #tpu.memory_space<vmem>>, vector<8x128xf32>
    tpu.vector_store %arg21[%c0_64, %c0_65], %96 {strides = array<i32>} : memref<8x128xf32, #tpu.memory_space<vmem>>, vector<8x128xf32>,
    return
  }
}

</mosaic_0001>

<llo_original>
// kernel: critic_forward.1
$region0: #{critic_forward.1}
  #allocation0 [shape = 'u32[]', space=smem, size = 0x4, offset = 0x4, fixed_abs, tag = 'smem constant byte address 0x4 - core index']
  #allocation1 [shape = 'u32[144,128]{1,0:T(1,128)}', space=vmem, size = 0x12000, scoped, tag = 'internal scratch']
  %s0 = inlined_call_operand.vmem [shape: f32[8,128], index: 0, kind: input, shape index: {}]
  %s1 = inlined_call_operand.vmem [shape: f32[8,256], index: 1, kind: input, shape index: {}]
  %s2 = inlined_call_operand.hbm [shape: bf16[128,128], index: 2, kind: input, shape index: {}]
  %s3 = inlined_call_operand.hbm [shape: f32[1,128], index: 3, kind: input, shape index: {}]
  %s4 = inlined_call_operand.hbm [shape: bf16[128,128], index: 4, kind: input, shape index: {}]
  %s5 = inlined_call_operand.hbm [shape: f32[1,128], index: 5, kind: input, shape index: {}]
  %s6 = inlined_call_operand.hbm [shape: bf16[128,128], index: 6, kind: input, shape index: {}]
  %s7 = inlined_call_operand.hbm [shape: f32[1,128], index: 7, kind: input, shape index: {}]
  %s8 = inlined_call_operand.hbm [shape: bf16[128,128], index: 8, kind: input, shape index: {}]
  %s9 = inlined_call_operand.hbm [shape: f32[1,128], index: 9, kind: input, shape index: {}]
  %s10 = inlined_call_operand.hbm [shape: bf16[256,1024], index: 10, kind: input, shape index: {}]
  %s11 = inlined_call_operand.hbm [shape: f32[1,1024], index: 11, kind: input, shape index: {}]
  %s12 = inlined_call_operand.hbm [shape: bf16[1024,1024], index: 12, kind: input, shape index: {}]
  %s13 = inlined_call_operand.hbm [shape: f32[1,1024], index: 13, kind: input, shape index: {}]
  %s14 = inlined_call_operand.hbm [shape: bf16[1024,1024], index: 14, kind: input, shape index: {}]
  %s15 = inlined_call_operand.hbm [shape: f32[1,1024], index: 15, kind: input, shape index: {}]
  %s16 = inlined_call_operand.hbm [shape: bf16[128,128], index: 16, kind: input, shape index: {}]
  %s17 = inlined_call_operand.hbm [shape: bf16[1024,128], index: 17, kind: input, shape index: {}]
  %s18 = inlined_call_operand.hbm [shape: f32[1,128], index: 18, kind: input, shape index: {}]
  %s19 = inlined_call_operand.hbm [shape: bf16[128,128], index: 19, kind: input, shape index: {}]
  %s20 = inlined_call_operand.hbm [shape: f32[1,128], index: 20, kind: input, shape index: {}]
  %s21 = inlined_call_operand.vmem [shape: f32[8,128], index: 21, kind: output, shape index: {}]
  %s22 = sld [smem:[#allocation0]]
  $region170: #{critic_forward.1} parent=0
    _
  %s24 = ssub.s32 1, %s22
  %s25 = scalar_select 0, %s24, %s22
  $region1: #{critic_forward.1} parent=0
    #allocation2 [shape = 'u8[32768]{0}', space=vmem, size = 0x8000, scoped, tag = 'input window, operand 2, single buffered']
    #allocation3 [shape = 's32[1]{0}', space=sflag, size = 0x4, scoped, tag = 'scoped memory for critic_forward.1']
    #allocation4 [shape = 'u8[512]{0}', space=vmem, size = 0x400, scoped, tag = 'input window, operand 3, single buffered']
    #allocation5 [shape = 's32[1]{0}', space=sflag, size = 0x4, scoped, tag = 'scoped memory for critic_forward.1']
    #allocation6 [shape = 'u8[32768]{0}', space=vmem, size = 0x8000, scoped, tag = 'input window, operand 4, single buffered']
    #allocation7 [shape = 'u8[512]{0}', space=vmem, size = 0x400, scoped, tag = 'input window, operand 5, single buffered']
    #allocation8 [shape = 's32[1]{0}', space=sflag, size = 0x4, scoped, tag = 'scoped memory for critic_forward.1']
    #allocation9 [shape = 'u8[32768]{0}', space=vmem, size = 0x8000, scoped, tag = 'input window, operand 6, single buffered']
    #allocation10 [shape = 'u8[512]{0}', space=vmem, size = 0x400, scoped, tag = 'input window, operand 7, single buffered']
    #allocation11 [shape = 's32[1]{0}', space=sflag, size = 0x4, scoped, tag = 'scoped memory for critic_forward.1']
    #allocation12 [shape = 'u8[32768]{0}', space=vmem, size = 0x8000, scoped, tag = 'input window, operand 8, single buffered']
    #allocation13 [shape = 'u8[512]{0}', space=vmem, size = 0x400, scoped, tag = 'input window, operand 9, single buffered']
    #allocation14 [shape = 's32[1]{0}', space=sflag, size = 0x4, scoped, tag = 'scoped memory for critic_forward.1']
    #allocation15 [shape = 'u8[524288]{0}', space=vmem, size = 0x80000, scoped, tag = 'input window, operand 10, single buffered']
    #allocation16 [shape = 'u8[4096]{0}', space=vmem, size = 0x1000, scoped, tag = 'input window, operand 11, single buffered']
    #allocation17 [shape = 's32[1]{0}', space=sflag, size = 0x4, scoped, tag = 'scoped memory for critic_forward.1']
    #allocation18 [shape = 'u8[2097152]{0}', space=vmem, size = 0x200000, scoped, tag = 'input window, operand 12, single buffered']
    #allocation19 [shape = 'u8[4096]{0}', space=vmem, size = 0x1000, scoped, tag = 'input window, operand 13, single buffered']
    #allocation20 [shape = 's32[1]{0}', space=sflag, size = 0x4, scoped, tag = 'scoped memory for critic_forward.1']
    #allocation21 [shape = 'u8[2097152]{0}', space=vmem, size = 0x200000, scoped, tag = 'input window, operand 14, single buffered']
    #allocation22 [shape = 'u8[4096]{0}', space=vmem, size = 0x1000, scoped, tag = 'input window, operand 15, single buffered']
    #allocation23 [shape = 's32[1]{0}', space=sflag, size = 0x4, scoped, tag = 'scoped memory for critic_forward.1']
    #allocation24 [shape = 'u8[32768]{0}', space=vmem, size = 0x8000, scoped, tag = 'input window, operand 16, single buffered']
    #allocation25 [shape = 'u8[262144]{0}', space=vmem, size = 0x40000, scoped, tag = 'input window, operand 17, single buffered']
    #allocation26 [shape = 's32[1]{0}', space=sflag, size = 0x4, scoped, tag = 'scoped memory for critic_forward.1']
    #allocation27 [shape = 'u8[512]{0}', space=vmem, size = 0x400, scoped, tag = 'input window, operand 18, single buffered']
    #allocation28 [shape = 'u8[32768]{0}', space=vmem, size = 0x8000, scoped, tag = 'input window, operand 19, single buffered']
    #allocation29 [shape = 's32[1]{0}', space=sflag, size = 0x4, scoped, tag = 'scoped memory for critic_forward.1']
    #allocation30 [shape = 'u8[512]{0}', space=vmem, size = 0x400, scoped, tag = 'input window, operand 20, single buffered']
    %26 = vsyncpa [#allocation3], 0
    %27 = vsyncpa [#allocation5], 0
    %28 = vsyncpa [#allocation8], 0
    %29 = vsyncpa [#allocation11], 0
    %30 = vsyncpa [#allocation14], 0
    %31 = vsyncpa [#allocation17], 0
    %32 = vsyncpa [#allocation20], 0
    %33 = vsyncpa [#allocation23], 0
    %34 = vsyncpa [#allocation26], 0
    %35 = vsyncpa [#allocation29], 0
    // Predicated region
    $region2: #{critic_forward.1} parent=1 // pred_check
      _
    $region3: #{critic_forward.1} parent=1 // pred_check_branch
      %37 = sbr.rel (0) target = $region5
    $region4: #{critic_forward.1} parent=1 // pred_region
      _
    $region5: #{critic_forward.1} parent=1 // pred_fallthru
      _
    // Predicated region
    $region6: #{critic_forward.1} parent=1 // pred_check
      _
    $region7: #{critic_forward.1} parent=1 // pred_check_branch
      %39 = sbr.rel (0) target = $region9
    $region8: #{critic_forward.1} parent=1 // pred_region
      _
    $region9: #{critic_forward.1} parent=1 // pred_fallthru
      _
    // Predicated region
    $region10: #{critic_forward.1} parent=1 // pred_check
      _
    $region11: #{critic_forward.1} parent=1 // pred_check_branch
      %41 = sbr.rel (0) target = $region13
    $region12: #{critic_forward.1} parent=1 // pred_region
      %s43 = ssub.s32 1024, 1024
      %44 = vsyncadd [#allocation3], %s43
      %s45 = sshll.u32 [#allocation2], 4
      %s46 = int_to_ptr.vmem [resolvable:$true] %s45
      %51 = dma.hbm_to_vmem [thread:$0]  %s2, 1024, %s46, [#allocation3], 64, 64, 4
    $region13: #{critic_forward.1} parent=1 // pred_fallthru
      _
    // Predicated region
    $region14: #{critic_forward.1} parent=1 // pred_check
      _
    $region15: #{critic_forward.1} parent=1 // pred_check_branch
      %53 = sbr.rel (0) target = $region17
    $region16: #{critic_forward.1} parent=1 // pred_region
      %s55 = ssub.s32 16, 16
      %56 = vsyncadd [#allocation5], %s55
      %s58 = sshll.u32 [#allocation4], 4
      %s59 = int_to_ptr.vmem [resolvable:$true] %s58
      %61 = dma.hbm_to_vmem [thread:$0]  %s3, 16, %s59, [#allocation5]
    $region17: #{critic_forward.1} parent=1 // pred_fallthru
      _
    // Predicated region
    $region18: #{critic_forward.1} parent=1 // pred_check
      _
    $region19: #{critic_forward.1} parent=1 // pred_check_branch
      %63 = sbr.rel (0) target = $region21
    $region20: #{critic_forward.1} parent=1 // pred_region
      %s65 = ssub.s32 1024, 1024
      %66 = vsyncadd [#allocation5], %s65
      %s67 = sshll.u32 [#allocation6], 4
      %s68 = int_to_ptr.vmem [resolvable:$true] %s67
      %73 = dma.hbm_to_vmem [thread:$0]  %s4, 1024, %s68, [#allocation5], 64, 64, 4
    $region21: #{critic_forward.1} parent=1 // pred_fallthru
      _
    // Predicated region
    $region22: #{critic_forward.1} parent=1 // pred_check
      _
    $region23: #{critic_forward.1} parent=1 // pred_check_branch
      %75 = sbr.rel (0) target = $region25
    $region24: #{critic_forward.1} parent=1 // pred_region
      %s77 = ssub.s32 16, 16
      %78 = vsyncadd [#allocation8], %s77
      %s80 = sshll.u32 [#allocation7], 4
      %s81 = int_to_ptr.vmem [resolvable:$true] %s80
      %83 = dma.hbm_to_vmem [thread:$0]  %s5, 16, %s81, [#allocation8]
    $region25: #{critic_forward.1} parent=1 // pred_fallthru
      _
    // Predicated region
    $region26: #{critic_forward.1} parent=1 // pred_check
      _
    $region27: #{critic_forward.1} parent=1 // pred_check_branch
      %85 = sbr.rel (0) target = $region29
    $region28: #{critic_forward.1} parent=1 // pred_region
      %s87 = ssub.s32 1024, 1024
      %88 = vsyncadd [#allocation8], %s87
      %s89 = sshll.u32 [#allocation9], 4
      %s90 = int_to_ptr.vmem [resolvable:$true] %s89
      %95 = dma.hbm_to_vmem [thread:$0]  %s6, 1024, %s90, [#allocation8], 64, 64, 4
    $region29: #{critic_forward.1} parent=1 // pred_fallthru
      _
    // Predicated region
    $region30: #{critic_forward.1} parent=1 // pred_check
      _
    $region31: #{critic_forward.1} parent=1 // pred_check_branch
      %97 = sbr.rel (0) target = $region33
    $region32: #{critic_forward.1} parent=1 // pred_region
      %s99 = ssub.s32 16, 16
      %100 = vsyncadd [#allocation11], %s99
      %s102 = sshll.u32 [#allocation10], 4
      %s103 = int_to_ptr.vmem [resolvable:$true] %s102
      %105 = dma.hbm_to_vmem [thread:$0]  %s7, 16, %s103, [#allocation11]
    $region33: #{critic_forward.1} parent=1 // pred_fallthru
      _
    // Predicated region
    $region34: #{critic_forward.1} parent=1 // pred_check
      _
    $region35: #{critic_forward.1} parent=1 // pred_check_branch
      %107 = sbr.rel (0) target = $region37
    $region36: #{critic_forward.1} parent=1 // pred_region
      %s109 = ssub.s32 1024, 1024
      %110 = vsyncadd [#allocation11], %s109
      %s111 = sshll.u32 [#allocation12], 4
      %s112 = int_to_ptr.vmem [resolvable:$true] %s111
      %117 = dma.hbm_to_vmem [thread:$0]  %s8, 1024, %s112, [#allocation11], 64, 64, 4
    $region37: #{critic_forward.1} parent=1 // pred_fallthru
      _
    // Predicated region
    $region38: #{critic_forward.1} parent=1 // pred_check
      _
    $region39: #{critic_forward.1} parent=1 // pred_check_branch
      %119 = sbr.rel (0) target = $region41
    $region40: #{critic_forward.1} parent=1 // pred_region
      %s121 = ssub.s32 16, 16
      %122 = vsyncadd [#allocation14], %s121
      %s124 = sshll.u32 [#allocation13], 4
      %s125 = int_to_ptr.vmem [resolvable:$true] %s124
      %127 = dma.hbm_to_vmem [thread:$0]  %s9, 16, %s125, [#allocation14]
    $region41: #{critic_forward.1} parent=1 // pred_fallthru
      _
    // Predicated region
    $region42: #{critic_forward.1} parent=1 // pred_check
      _
    $region43: #{critic_forward.1} parent=1 // pred_check_branch
      %129 = sbr.rel (0) target = $region45
    $region44: #{critic_forward.1} parent=1 // pred_region
      %s131 = ssub.s32 16384, 16384
      %132 = vsyncadd [#allocation14], %s131
      %s133 = sshll.u32 [#allocation15], 4
      %s134 = int_to_ptr.vmem [resolvable:$true] %s133
      %139 = dma.hbm_to_vmem [thread:$0]  %s10, 16384, %s134, [#allocation14], 512, 512, 32
    $region45: #{critic_forward.1} parent=1 // pred_fallthru
      _
    // Predicated region
    $region46: #{critic_forward.1} parent=1 // pred_check
      _
    $region47: #{critic_forward.1} parent=1 // pred_check_branch
      %141 = sbr.rel (0) target = $region49
    $region48: #{critic_forward.1} parent=1 // pred_region
      %s143 = ssub.s32 128, 128
      %144 = vsyncadd [#allocation17], %s143
      %s146 = sshll.u32 [#allocation16], 4
      %s147 = int_to_ptr.vmem [resolvable:$true] %s146
      %149 = dma.hbm_to_vmem [thread:$0]  %s11, 128, %s147, [#allocation17]
    $region49: #{critic_forward.1} parent=1 // pred_fallthru
      _
    // Predicated region
    $region50: #{critic_forward.1} parent=1 // pred_check
      _
    $region51: #{critic_forward.1} parent=1 // pred_check_branch
      %151 = sbr.rel (0) target = $region53
    $region52: #{critic_forward.1} parent=1 // pred_region
      %s153 = ssub.s32 65536, 65536
      %154 = vsyncadd [#allocation17], %s153
      %s155 = sshll.u32 [#allocation18], 4
      %s156 = int_to_ptr.vmem [resolvable:$true] %s155
      %161 = dma.hbm_to_vmem [thread:$0]  %s12, 65536, %s156, [#allocation17], 512, 512, 32
    $region53: #{critic_forward.1} parent=1 // pred_fallthru
      _
    // Predicated region
    $region54: #{critic_forward.1} parent=1 // pred_check
      _
    $region55: #{critic_forward.1} parent=1 // pred_check_branch
      %163 = sbr.rel (0) target = $region57
    $region56: #{critic_forward.1} parent=1 // pred_region
      %s165 = ssub.s32 128, 128
      %166 = vsyncadd [#allocation20], %s165
      %s168 = sshll.u32 [#allocation19], 4
      %s169 = int_to_ptr.vmem [resolvable:$true] %s168
      %171 = dma.hbm_to_vmem [thread:$0]  %s13, 128, %s169, [#allocation20]
    $region57: #{critic_forward.1} parent=1 // pred_fallthru
      _
    // Predicated region
    $region58: #{critic_forward.1} parent=1 // pred_check
      _
    $region59: #{critic_forward.1} parent=1 // pred_check_branch
      %173 = sbr.rel (0) target = $region61
    $region60: #{critic_forward.1} parent=1 // pred_region
      %s175 = ssub.s32 65536, 65536
      %176 = vsyncadd [#allocation20], %s175
      %s177 = sshll.u32 [#allocation21], 4
      %s178 = int_to_ptr.vmem [resolvable:$true] %s177
      %183 = dma.hbm_to_vmem [thread:$0]  %s14, 65536, %s178, [#allocation20], 512, 512, 32
    $region61: #{critic_forward.1} parent=1 // pred_fallthru
      _
    // Predicated region
    $region62: #{critic_forward.1} parent=1 // pred_check
      _
    $region63: #{critic_forward.1} parent=1 // pred_check_branch
      %185 = sbr.rel (0) target = $region65
    $region64: #{critic_forward.1} parent=1 // pred_region
      %s187 = ssub.s32 128, 128
      %188 = vsyncadd [#allocation23], %s187
      %s190 = sshll.u32 [#allocation22], 4
      %s191 = int_to_ptr.vmem [resolvable:$true] %s190
      %193 = dma.hbm_to_vmem [thread:$0]  %s15, 128, %s191, [#allocation23]
    $region65: #{critic_forward.1} parent=1 // pred_fallthru
      _
    // Predicated region
    $region66: #{critic_forward.1} parent=1 // pred_check
      _
    $region67: #{critic_forward.1} parent=1 // pred_check_branch
      %195 = sbr.rel (0) target = $region69
    $region68: #{critic_forward.1} parent=1 // pred_region
      %s197 = ssub.s32 1024, 1024
      %198 = vsyncadd [#allocation23], %s197
      %s199 = sshll.u32 [#allocation24], 4
      %s200 = int_to_ptr.vmem [resolvable:$true] %s199
      %205 = dma.hbm_to_vmem [thread:$0]  %s16, 1024, %s200, [#allocation23], 64, 64, 4
    $region69: #{critic_forward.1} parent=1 // pred_fallthru
      _
    // Predicated region
    $region70: #{critic_forward.1} parent=1 // pred_check
      _
    $region71: #{critic_forward.1} parent=1 // pred_check_branch
      %207 = sbr.rel (0) target = $region73
    $region72: #{critic_forward.1} parent=1 // pred_region
      %s209 = ssub.s32 8192, 8192
      %210 = vsyncadd [#allocation26], %s209
      %s211 = sshll.u32 [#allocation25], 4
      %s212 = int_to_ptr.vmem [resolvable:$true] %s211
      %217 = dma.hbm_to_vmem [thread:$0]  %s17, 8192, %s212, [#allocation26], 64, 64, 4
    $region73: #{critic_forward.1} parent=1 // pred_fallthru
      _
    // Predicated region
    $region74: #{critic_forward.1} parent=1 // pred_check
      _
    $region75: #{critic_forward.1} parent=1 // pred_check_branch
      %219 = sbr.rel (0) target = $region77
    $region76: #{critic_forward.1} parent=1 // pred_region
      %s221 = ssub.s32 16, 16
      %222 = vsyncadd [#allocation26], %s221
      %s224 = sshll.u32 [#allocation27], 4
      %s225 = int_to_ptr.vmem [resolvable:$true] %s224
      %227 = dma.hbm_to_vmem [thread:$0]  %s18, 16, %s225, [#allocation26]
    $region77: #{critic_forward.1} parent=1 // pred_fallthru
      _
    // Predicated region
    $region78: #{critic_forward.1} parent=1 // pred_check
      _
    $region79: #{critic_forward.1} parent=1 // pred_check_branch
      %229 = sbr.rel (0) target = $region81
    $region80: #{critic_forward.1} parent=1 // pred_region
      %s231 = ssub.s32 1024, 1024
      %232 = vsyncadd [#allocation29], %s231
      %s233 = sshll.u32 [#allocation28], 4
      %s234 = int_to_ptr.vmem [resolvable:$true] %s233
      %239 = dma.hbm_to_vmem [thread:$0]  %s19, 1024, %s234, [#allocation29], 64, 64, 4
    $region81: #{critic_forward.1} parent=1 // pred_fallthru
      _
    // Predicated region
    $region82: #{critic_forward.1} parent=1 // pred_check
      _
    $region83: #{critic_forward.1} parent=1 // pred_check_branch
      %241 = sbr.rel (0) target = $region85
    $region84: #{critic_forward.1} parent=1 // pred_region
      %s243 = ssub.s32 16, 16
      %244 = vsyncadd [#allocation29], %s243
      %s246 = sshll.u32 [#allocation30], 4
      %s247 = int_to_ptr.vmem [resolvable:$true] %s246
      %249 = dma.hbm_to_vmem [thread:$0]  %s20, 16, %s247, [#allocation29]
    $region85: #{critic_forward.1} parent=1 // pred_fallthru
      _
    // Predicated region
    $region86: #{critic_forward.1} parent=1 // pred_check
      _
    $region87: #{critic_forward.1} parent=1 // pred_check_branch
      %251 = sbr.rel (0) target = $region89
    $region88: #{critic_forward.1} parent=1 // pred_region
      %252 = dma.done [#allocation3], 1024
    $region89: #{critic_forward.1} parent=1 // pred_fallthru
      _
    // Predicated region
    $region90: #{critic_forward.1} parent=1 // pred_check
      _
    $region91: #{critic_forward.1} parent=1 // pred_check_branch
      %254 = sbr.rel (0) target = $region93
    $region92: #{critic_forward.1} parent=1 // pred_region
      %255 = dma.done [#allocation5], 16
    $region93: #{critic_forward.1} parent=1 // pred_fallthru
      _
    // Predicated region
    $region94: #{critic_forward.1} parent=1 // pred_check
      _
    $region95: #{critic_forward.1} parent=1 // pred_check_branch
      %257 = sbr.rel (0) target = $region97
    $region96: #{critic_forward.1} parent=1 // pred_region
      %258 = dma.done [#allocation5], 1024
    $region97: #{critic_forward.1} parent=1 // pred_fallthru
      _
    // Predicated region
    $region98: #{critic_forward.1} parent=1 // pred_check
      _
    $region99: #{critic_forward.1} parent=1 // pred_check_branch
      %260 = sbr.rel (0) target = $region101
    $region100: #{critic_forward.1} parent=1 // pred_region
      %261 = dma.done [#allocation8], 16
    $region101: #{critic_forward.1} parent=1 // pred_fallthru
      _
    // Predicated region
    $region102: #{critic_forward.1} parent=1 // pred_check
      _
    $region103: #{critic_forward.1} parent=1 // pred_check_branch
      %263 = sbr.rel (0) target = $region105
    $region104: #{critic_forward.1} parent=1 // pred_region
      %264 = dma.done [#allocation8], 1024
    $region105: #{critic_forward.1} parent=1 // pred_fallthru
      _
    // Predicated region
    $region106: #{critic_forward.1} parent=1 // pred_check
      _
    $region107: #{critic_forward.1} parent=1 // pred_check_branch
      %266 = sbr.rel (0) target = $region109
    $region108: #{critic_forward.1} parent=1 // pred_region
      %267 = dma.done [#allocation11], 16
    $region109: #{critic_forward.1} parent=1 // pred_fallthru
      _
    // Predicated region
    $region110: #{critic_forward.1} parent=1 // pred_check
      _
    $region111: #{critic_forward.1} parent=1 // pred_check_branch
      %269 = sbr.rel (0) target = $region113
    $region112: #{critic_forward.1} parent=1 // pred_region
      %270 = dma.done [#allocation11], 1024
    $region113: #{critic_forward.1} parent=1 // pred_fallthru
      _
    // Predicated region
    $region114: #{critic_forward.1} parent=1 // pred_check
      _
    $region115: #{critic_forward.1} parent=1 // pred_check_branch
      %272 = sbr.rel (0) target = $region117
    $region116: #{critic_forward.1} parent=1 // pred_region
      %273 = dma.done [#allocation14], 16
    $region117: #{critic_forward.1} parent=1 // pred_fallthru
      _
    // Predicated region
    $region118: #{critic_forward.1} parent=1 // pred_check
      _
    $region119: #{critic_forward.1} parent=1 // pred_check_branch
      %275 = sbr.rel (0) target = $region121
    $region120: #{critic_forward.1} parent=1 // pred_region
      %276 = dma.done [#allocation14], 16384
    $region121: #{critic_forward.1} parent=1 // pred_fallthru
      _
    // Predicated region
    $region122: #{critic_forward.1} parent=1 // pred_check
      _
    $region123: #{critic_forward.1} parent=1 // pred_check_branch
      %278 = sbr.rel (0) target = $region125
    $region124: #{critic_forward.1} parent=1 // pred_region
      %279 = dma.done [#allocation17], 128
    $region125: #{critic_forward.1} parent=1 // pred_fallthru
      _
    // Predicated region
    $region126: #{critic_forward.1} parent=1 // pred_check
      _
    $region127: #{critic_forward.1} parent=1 // pred_check_branch
      %281 = sbr.rel (0) target = $region129
    $region128: #{critic_forward.1} parent=1 // pred_region
      %282 = dma.done [#allocation17], 65536
    $region129: #{critic_forward.1} parent=1 // pred_fallthru
      _
    // Predicated region
    $region130: #{critic_forward.1} parent=1 // pred_check
      _
    $region131: #{critic_forward.1} parent=1 // pred_check_branch
      %284 = sbr.rel (0) target = $region133
    $region132: #{critic_forward.1} parent=1 // pred_region
      %285 = dma.done [#allocation20], 128
    $region133: #{critic_forward.1} parent=1 // pred_fallthru
      _
    // Predicated region
    $region134: #{critic_forward.1} parent=1 // pred_check
      _
    $region135: #{critic_forward.1} parent=1 // pred_check_branch
      %287 = sbr.rel (0) target = $region137
    $region136: #{critic_forward.1} parent=1 // pred_region
      %288 = dma.done [#allocation20], 65536
    $region137: #{critic_forward.1} parent=1 // pred_fallthru
      _
    // Predicated region
    $region138: #{critic_forward.1} parent=1 // pred_check
      _
    $region139: #{critic_forward.1} parent=1 // pred_check_branch
      %290 = sbr.rel (0) target = $region141
    $region140: #{critic_forward.1} parent=1 // pred_region
      %291 = dma.done [#allocation23], 128
    $region141: #{critic_forward.1} parent=1 // pred_fallthru
      _
    // Predicated region
    $region142: #{critic_forward.1} parent=1 // pred_check
      _
    $region143: #{critic_forward.1} parent=1 // pred_check_branch
      %293 = sbr.rel (0) target = $region145
    $region144: #{critic_forward.1} parent=1 // pred_region
      %294 = dma.done [#allocation23], 1024
    $region145: #{critic_forward.1} parent=1 // pred_fallthru
      _
    // Predicated region
    $region146: #{critic_forward.1} parent=1 // pred_check
      _
    $region147: #{critic_forward.1} parent=1 // pred_check_branch
      %296 = sbr.rel (0) target = $region149
    $region148: #{critic_forward.1} parent=1 // pred_region
      %297 = dma.done [#allocation26], 8192
    $region149: #{critic_forward.1} parent=1 // pred_fallthru
      _
    // Predicated region
    $region150: #{critic_forward.1} parent=1 // pred_check
      _
    $region151: #{critic_forward.1} parent=1 // pred_check_branch
      %299 = sbr.rel (0) target = $region153
    $region152: #{critic_forward.1} parent=1 // pred_region
      %300 = dma.done [#allocation26], 16
    $region153: #{critic_forward.1} parent=1 // pred_fallthru
      _
    // Predicated region
    $region154: #{critic_forward.1} parent=1 // pred_check
      _
    $region155: #{critic_forward.1} parent=1 // pred_check_branch
      %302 = sbr.rel (0) target = $region157
    $region156: #{critic_forward.1} parent=1 // pred_region
      %303 = dma.done [#allocation29], 1024
    $region157: #{critic_forward.1} parent=1 // pred_fallthru
      _
    // Predicated region
    $region158: #{critic_forward.1} parent=1 // pred_check
      _
    $region159: #{critic_forward.1} parent=1 // pred_check_branch
      %305 = sbr.rel (0) target = $region161
    $region160: #{critic_forward.1} parent=1 // pred_region
      %306 = dma.done [#allocation29], 16
    $region161: #{critic_forward.1} parent=1 // pred_fallthru
      _
    %v307 = vld [vmem:[%s0] sm:$0xff]
    %v308 = vld [vmem:[%s1] sm:$0xff]
    %v309 = vld [vmem:[%s1 + $0x8] sm:$0xff]
    %v310 = vld [vmem:[#allocation2] sm:$0xf]
    %v311 = vld [vmem:[#allocation2 + $0x4] sm:$0xf]
    %v312 = vld [vmem:[#allocation2 + $0x8] sm:$0xf]
    %v313 = vld [vmem:[#allocation2 + $0xc] sm:$0xf]
    %v314 = vld [vmem:[#allocation2 + $0x10] sm:$0xf]
    %v315 = vld [vmem:[#allocation2 + $0x14] sm:$0xf]
    %v316 = vld [vmem:[#allocation2 + $0x18] sm:$0xf]
    %v317 = vld [vmem:[#allocation2 + $0x1c] sm:$0xf]
    %v318 = vld [vmem:[#allocation2 + $0x20] sm:$0xf]
    %v319 = vld [vmem:[#allocation2 + $0x24] sm:$0xf]
    %v320 = vld [vmem:[#allocation2 + $0x28] sm:$0xf]
    %v321 = vld [vmem:[#allocation2 + $0x2c] sm:$0xf]
    %v322 = vld [vmem:[#allocation2 + $0x30] sm:$0xf]
    %v323 = vld [vmem:[#allocation2 + $0x34] sm:$0xf]
    %v324 = vld [vmem:[#allocation2 + $0x38] sm:$0xf]
    %v325 = vld [vmem:[#allocation2 + $0x3c] sm:$0xf]
    %v326 = vunpack.c.l.bf16 %v310
    %v327 = vunpack.c.l.bf16 %v311
    %v328 = vunpack.c.l.bf16 %v312
    %v329 = vunpack.c.l.bf16 %v313
    %v330 = vunpack.c.l.bf16 %v314
    %v331 = vunpack.c.l.bf16 %v315
    %v332 = vunpack.c.l.bf16 %v316
    %v333 = vunpack.c.l.bf16 %v317
    %v334 = vunpack.c.l.bf16 %v318
    %v335 = vunpack.c.l.bf16 %v319
    %v336 = vunpack.c.l.bf16 %v320
    %v337 = vunpack.c.l.bf16 %v321
    %v338 = vunpack.c.l.bf16 %v322
    %v339 = vunpack.c.l.bf16 %v323
    %v340 = vunpack.c.l.bf16 %v324
    %v341 = vunpack.c.l.bf16 %v325
    %v342 = vld [vmem:[#allocation4] sm:$0x1]
    %v344 = vlaneseq
    %v345 = vshrl.u32 %v344, 7
    %v346 = vsub.s32 0, %v345
    %v347 = vrot.slane %v342, %v346
    %349 = vmatprep.subr.mxu0 0.0
    %350 = vmatpush1.msra.mxu0 %v341
    %351 = vmatprep.subr.mxu0 0.0
    %352 = vmatpush1.msra.mxu0 %v340
    %353 = vmatprep.subr.mxu0 0.0
    %354 = vmatpush1.msra.mxu0 %v339
    %355 = vmatprep.subr.mxu0 0.0
    %356 = vmatpush1.msra.mxu0 %v338
    %357 = vmatprep.subr.mxu0 0.0
    %358 = vmatpush1.msra.mxu0 %v337
    %359 = vmatprep.subr.mxu0 0.0
    %360 = vmatpush1.msra.mxu0 %v336
    %361 = vmatprep.subr.mxu0 0.0
    %362 = vmatpush1.msra.mxu0 %v335
    %363 = vmatprep.subr.mxu0 0.0
    %364 = vmatpush1.msra.mxu0 %v334
    %365 = vmatprep.subr.mxu0 0.0
    %366 = vmatpush1.msra.mxu0 %v333
    %367 = vmatprep.subr.mxu0 0.0
    %368 = vmatpush1.msra.mxu0 %v332
    %369 = vmatprep.subr.mxu0 0.0
    %370 = vmatpush1.msra.mxu0 %v331
    %371 = vmatprep.subr.mxu0 0.0
    %372 = vmatpush1.msra.mxu0 %v330
    %373 = vmatprep.subr.mxu0 0.0
    %374 = vmatpush1.msra.mxu0 %v329
    %375 = vmatprep.subr.mxu0 0.0
    %376 = vmatpush1.msra.mxu0 %v328
    %377 = vmatprep.subr.mxu0 0.0
    %378 = vmatpush1.msra.mxu0 %v327
    %379 = vmatprep.subr.mxu0 0.0
    %380 = vmatpush1.msra.mxu0 %v326
    %381 = vmatprep.subr.mxu0 0.0
    %382 = vmatpush2.msra.mxu0 0.0
    %383 = vmatprep.subr.mxu0 0.0
    %384 = vmatpush2.msra.mxu0 0.0
    %385 = vmatprep.subr.mxu0 0.0
    %386 = vmatpush2.msra.mxu0 0.0
    %387 = vmatprep.subr.mxu0 0.0
    %388 = vmatpush2.msra.mxu0 0.0
    %389 = vmatprep.subr.mxu0 0.0
    %390 = vmatpush2.msra.mxu0 0.0
    %391 = vmatprep.subr.mxu0 0.0
    %392 = vmatpush2.msra.mxu0 0.0
    %393 = vmatprep.subr.mxu0 0.0
    %394 = vmatpush2.msra.mxu0 0.0
    %395 = vmatprep.subr.mxu0 0.0
    %396 = vmatpush2.msra.mxu0 0.0
    %397 = vmatprep.subr.mxu0 0.0
    %398 = vmatpush2.msra.mxu0 0.0
    %399 = vmatprep.subr.mxu0 0.0
    %400 = vmatpush2.msra.mxu0 0.0
    %401 = vmatprep.subr.mxu0 0.0
    %402 = vmatpush2.msra.mxu0 0.0
    %403 = vmatprep.subr.mxu0 0.0
    %404 = vmatpush2.msra.mxu0 0.0
    %405 = vmatprep.subr.mxu0 0.0
    %406 = vmatpush2.msra.mxu0 0.0
    %407 = vmatprep.subr.mxu0 0.0
    %408 = vmatpush2.msra.mxu0 0.0
    %409 = vmatprep.subr.mxu0 0.0
    %410 = vmatpush2.msra.mxu0 0.0
    %411 = vmatprep.subr.mxu0 0.0
    %412 = vmatpush2.msra.mxu0 0.0
    %413 = vmatprep.mubr.f32.mxu0 0.0
    %414 = vmatmul.mubr.f32.gmra.mxu0 %v307
    %v415 = vpop.f32.mrf.mxu0
    %v416 = vadd.f32 %v347, %v415
    %v417 = vpop.f32.mrf.mxu0
    %418 = vdwg.mxu0
    %vm419 = vcmp.ge.f32.partialorder %v416, 0.0
    %v420 = vmul.f32 %v416, 0.01
    %v421 = vsel %vm419, %v416, %v420
    %v422 = vld [vmem:[#allocation6] sm:$0xf]
    %v423 = vld [vmem:[#allocation6 + $0x4] sm:$0xf]
    %v424 = vld [vmem:[#allocation6 + $0x8] sm:$0xf]
    %v425 = vld [vmem:[#allocation6 + $0xc] sm:$0xf]
    %v426 = vld [vmem:[#allocation6 + $0x10] sm:$0xf]
    %v427 = vld [vmem:[#allocation6 + $0x14] sm:$0xf]
    %v428 = vld [vmem:[#allocation6 + $0x18] sm:$0xf]
    %v429 = vld [vmem:[#allocation6 + $0x1c] sm:$0xf]
    %v430 = vld [vmem:[#allocation6 + $0x20] sm:$0xf]
    %v431 = vld [vmem:[#allocation6 + $0x24] sm:$0xf]
    %v432 = vld [vmem:[#allocation6 + $0x28] sm:$0xf]
    %v433 = vld [vmem:[#allocation6 + $0x2c] sm:$0xf]
    %v434 = vld [vmem:[#allocation6 + $0x30] sm:$0xf]
    %v435 = vld [vmem:[#allocation6 + $0x34] sm:$0xf]
    %v436 = vld [vmem:[#allocation6 + $0x38] sm:$0xf]
    %v437 = vld [vmem:[#allocation6 + $0x3c] sm:$0xf]
    %v438 = vunpack.c.l.bf16 %v422
    %v439 = vunpack.c.l.bf16 %v423
    %v440 = vunpack.c.l.bf16 %v424
    %v441 = vunpack.c.l.bf16 %v425
    %v442 = vunpack.c.l.bf16 %v426
    %v443 = vunpack.c.l.bf16 %v427
    %v444 = vunpack.c.l.bf16 %v428
    %v445 = vunpack.c.l.bf16 %v429
    %v446 = vunpack.c.l.bf16 %v430
    %v447 = vunpack.c.l.bf16 %v431
    %v448 = vunpack.c.l.bf16 %v432
    %v449 = vunpack.c.l.bf16 %v433
    %v450 = vunpack.c.l.bf16 %v434
    %v451 = vunpack.c.l.bf16 %v435
    %v452 = vunpack.c.l.bf16 %v436
    %v453 = vunpack.c.l.bf16 %v437
    %v454 = vld [vmem:[#allocation7] sm:$0x1]
    %v456 = vlaneseq
    %v457 = vshrl.u32 %v456, 7
    %v458 = vsub.s32 0, %v457
    %v459 = vrot.slane %v454, %v458
    %461 = vmatprep.subr.mxu0 0.0
    %462 = vmatpush1.msra.mxu0 %v453
    %463 = vmatprep.subr.mxu0 0.0
    %464 = vmatpush1.msra.mxu0 %v452
    %465 = vmatprep.subr.mxu0 0.0
    %466 = vmatpush1.msra.mxu0 %v451
    %467 = vmatprep.subr.mxu0 0.0
    %468 = vmatpush1.msra.mxu0 %v450
    %469 = vmatprep.subr.mxu0 0.0
    %470 = vmatpush1.msra.mxu0 %v449
    %471 = vmatprep.subr.mxu0 0.0
    %472 = vmatpush1.msra.mxu0 %v448
    %473 = vmatprep.subr.mxu0 0.0
    %474 = vmatpush1.msra.mxu0 %v447
    %475 = vmatprep.subr.mxu0 0.0
    %476 = vmatpush1.msra.mxu0 %v446
    %477 = vmatprep.subr.mxu0 0.0
    %478 = vmatpush1.msra.mxu0 %v445
    %479 = vmatprep.subr.mxu0 0.0
    %480 = vmatpush1.msra.mxu0 %v444
    %481 = vmatprep.subr.mxu0 0.0
    %482 = vmatpush1.msra.mxu0 %v443
    %483 = vmatprep.subr.mxu0 0.0
    %484 = vmatpush1.msra.mxu0 %v442
    %485 = vmatprep.subr.mxu0 0.0
    %486 = vmatpush1.msra.mxu0 %v441
    %487 = vmatprep.subr.mxu0 0.0
    %488 = vmatpush1.msra.mxu0 %v440
    %489 = vmatprep.subr.mxu0 0.0
    %490 = vmatpush1.msra.mxu0 %v439
    %491 = vmatprep.subr.mxu0 0.0
    %492 = vmatpush1.msra.mxu0 %v438
    %493 = vmatprep.subr.mxu0 0.0
    %494 = vmatpush2.msra.mxu0 0.0
    %495 = vmatprep.subr.mxu0 0.0
    %496 = vmatpush2.msra.mxu0 0.0
    %497 = vmatprep.subr.mxu0 0.0
    %498 = vmatpush2.msra.mxu0 0.0
    %499 = vmatprep.subr.mxu0 0.0
    %500 = vmatpush2.msra.mxu0 0.0
    %501 = vmatprep.subr.mxu0 0.0
    %502 = vmatpush2.msra.mxu0 0.0
    %503 = vmatprep.subr.mxu0 0.0
    %504 = vmatpush2.msra.mxu0 0.0
    %505 = vmatprep.subr.mxu0 0.0
    %506 = vmatpush2.msra.mxu0 0.0
    %507 = vmatprep.subr.mxu0 0.0
    %508 = vmatpush2.msra.mxu0 0.0
    %509 = vmatprep.subr.mxu0 0.0
    %510 = vmatpush2.msra.mxu0 0.0
    %511 = vmatprep.subr.mxu0 0.0
    %512 = vmatpush2.msra.mxu0 0.0
    %513 = vmatprep.subr.mxu0 0.0
    %514 = vmatpush2.msra.mxu0 0.0
    %515 = vmatprep.subr.mxu0 0.0
    %516 = vmatpush2.msra.mxu0 0.0
    %517 = vmatprep.subr.mxu0 0.0
    %518 = vmatpush2.msra.mxu0 0.0
    %519 = vmatprep.subr.mxu0 0.0
    %520 = vmatpush2.msra.mxu0 0.0
    %521 = vmatprep.subr.mxu0 0.0
    %522 = vmatpush2.msra.mxu0 0.0
    %523 = vmatprep.subr.mxu0 0.0
    %524 = vmatpush2.msra.mxu0 0.0
    %525 = vmatprep.mubr.f32.mxu0 0.0
    %526 = vmatmul.mubr.f32.gmra.mxu0 %v421
    %v527 = vpop.f32.mrf.mxu0
    %v528 = vadd.f32 %v459, %v527
    %v529 = vpop.f32.mrf.mxu0
    %530 = vdwg.mxu0
    %vm531 = vcmp.ge.f32.partialorder %v528, 0.0
    %v532 = vmul.f32 %v528, 0.01
    %v533 = vsel %vm531, %v528, %v532
    %v534 = vld [vmem:[#allocation9] sm:$0xf]
    %v535 = vld [vmem:[#allocation9 + $0x4] sm:$0xf]
    %v536 = vld [vmem:[#allocation9 + $0x8] sm:$0xf]
    %v537 = vld [vmem:[#allocation9 + $0xc] sm:$0xf]
    %v538 = vld [vmem:[#allocation9 + $0x10] sm:$0xf]
    %v539 = vld [vmem:[#allocation9 + $0x14] sm:$0xf]
    %v540 = vld [vmem:[#allocation9 + $0x18] sm:$0xf]
    %v541 = vld [vmem:[#allocation9 + $0x1c] sm:$0xf]
    %v542 = vld [vmem:[#allocation9 + $0x20] sm:$0xf]
    %v543 = vld [vmem:[#allocation9 + $0x24] sm:$0xf]
    %v544 = vld [vmem:[#allocation9 + $0x28] sm:$0xf]
    %v545 = vld [vmem:[#allocation9 + $0x2c] sm:$0xf]
    %v546 = vld [vmem:[#allocation9 + $0x30] sm:$0xf]
    %v547 = vld [vmem:[#allocation9 + $0x34] sm:$0xf]
    %v548 = vld [vmem:[#allocation9 + $0x38] sm:$0xf]
    %v549 = vld [vmem:[#allocation9 + $0x3c] sm:$0xf]
    %v550 = vunpack.c.l.bf16 %v534
    %v551 = vunpack.c.l.bf16 %v535
    %v552 = vunpack.c.l.bf16 %v536
    %v553 = vunpack.c.l.bf16 %v537
    %v554 = vunpack.c.l.bf16 %v538
    %v555 = vunpack.c.l.bf16 %v539
    %v556 = vunpack.c.l.bf16 %v540
    %v557 = vunpack.c.l.bf16 %v541
    %v558 = vunpack.c.l.bf16 %v542
    %v559 = vunpack.c.l.bf16 %v543
    %v560 = vunpack.c.l.bf16 %v544
    %v561 = vunpack.c.l.bf16 %v545
    %v562 = vunpack.c.l.bf16 %v546
    %v563 = vunpack.c.l.bf16 %v547
    %v564 = vunpack.c.l.bf16 %v548
    %v565 = vunpack.c.l.bf16 %v549
    %v566 = vld [vmem:[#allocation10] sm:$0x1]
    %v568 = vlaneseq
    %v569 = vshrl.u32 %v568, 7
    %v570 = vsub.s32 0, %v569
    %v571 = vrot.slane %v566, %v570
    %573 = vmatprep.subr.mxu0 0.0
    %574 = vmatpush1.msra.mxu0 %v565
    %575 = vmatprep.subr.mxu0 0.0
    %576 = vmatpush1.msra.mxu0 %v564
    %577 = vmatprep.subr.mxu0 0.0
    %578 = vmatpush1.msra.mxu0 %v563
    %579 = vmatprep.subr.mxu0 0.0
    %580 = vmatpush1.msra.mxu0 %v562
    %581 = vmatprep.subr.mxu0 0.0
    %582 = vmatpush1.msra.mxu0 %v561
    %583 = vmatprep.subr.mxu0 0.0
    %584 = vmatpush1.msra.mxu0 %v560
    %585 = vmatprep.subr.mxu0 0.0
    %586 = vmatpush1.msra.mxu0 %v559
    %587 = vmatprep.subr.mxu0 0.0
    %588 = vmatpush1.msra.mxu0 %v558
    %589 = vmatprep.subr.mxu0 0.0
    %590 = vmatpush1.msra.mxu0 %v557
    %591 = vmatprep.subr.mxu0 0.0
    %592 = vmatpush1.msra.mxu0 %v556
    %593 = vmatprep.subr.mxu0 0.0
    %594 = vmatpush1.msra.mxu0 %v555
    %595 = vmatprep.subr.mxu0 0.0
    %596 = vmatpush1.msra.mxu0 %v554
    %597 = vmatprep.subr.mxu0 0.0
    %598 = vmatpush1.msra.mxu0 %v553
    %599 = vmatprep.subr.mxu0 0.0
    %600 = vmatpush1.msra.mxu0 %v552
    %601 = vmatprep.subr.mxu0 0.0
    %602 = vmatpush1.msra.mxu0 %v551
    %603 = vmatprep.subr.mxu0 0.0
    %604 = vmatpush1.msra.mxu0 %v550
    %605 = vmatprep.subr.mxu0 0.0
    %606 = vmatpush2.msra.mxu0 0.0
    %607 = vmatprep.subr.mxu0 0.0
    %608 = vmatpush2.msra.mxu0 0.0
    %609 = vmatprep.subr.mxu0 0.0
    %610 = vmatpush2.msra.mxu0 0.0
    %611 = vmatprep.subr.mxu0 0.0
    %612 = vmatpush2.msra.mxu0 0.0
    %613 = vmatprep.subr.mxu0 0.0
    %614 = vmatpush2.msra.mxu0 0.0
    %615 = vmatprep.subr.mxu0 0.0
    %616 = vmatpush2.msra.mxu0 0.0
    %617 = vmatprep.subr.mxu0 0.0
    %618 = vmatpush2.msra.mxu0 0.0
    %619 = vmatprep.subr.mxu0 0.0
    %620 = vmatpush2.msra.mxu0 0.0
    %621 = vmatprep.subr.mxu0 0.0
    %622 = vmatpush2.msra.mxu0 0.0
    %623 = vmatprep.subr.mxu0 0.0
    %624 = vmatpush2.msra.mxu0 0.0
    %625 = vmatprep.subr.mxu0 0.0
    %626 = vmatpush2.msra.mxu0 0.0
    %627 = vmatprep.subr.mxu0 0.0
    %628 = vmatpush2.msra.mxu0 0.0
    %629 = vmatprep.subr.mxu0 0.0
    %630 = vmatpush2.msra.mxu0 0.0
    %631 = vmatprep.subr.mxu0 0.0
    %632 = vmatpush2.msra.mxu0 0.0
    %633 = vmatprep.subr.mxu0 0.0
    %634 = vmatpush2.msra.mxu0 0.0
    %635 = vmatprep.subr.mxu0 0.0
    %636 = vmatpush2.msra.mxu0 0.0
    %637 = vmatprep.mubr.f32.mxu0 0.0
    %638 = vmatmul.mubr.f32.gmra.mxu0 %v533
    %v639 = vpop.f32.mrf.mxu0
    %v640 = vadd.f32 %v571, %v639
    %v641 = vpop.f32.mrf.mxu0
    %642 = vdwg.mxu0
    %v643 = vadd.f32 %v421, %v640
    %vm644 = vcmp.ge.f32.partialorder %v643, 0.0
    %v645 = vmul.f32 %v643, 0.01
    %v646 = vsel %vm644, %v643, %v645
    %v647 = vld [vmem:[#allocation12] sm:$0xf]
    %v648 = vld [vmem:[#allocation12 + $0x4] sm:$0xf]
    %v649 = vld [vmem:[#allocation12 + $0x8] sm:$0xf]
    %v650 = vld [vmem:[#allocation12 + $0xc] sm:$0xf]
    %v651 = vld [vmem:[#allocation12 + $0x10] sm:$0xf]
    %v652 = vld [vmem:[#allocation12 + $0x14] sm:$0xf]
    %v653 = vld [vmem:[#allocation12 + $0x18] sm:$0xf]
    %v654 = vld [vmem:[#allocation12 + $0x1c] sm:$0xf]
    %v655 = vld [vmem:[#allocation12 + $0x20] sm:$0xf]
    %v656 = vld [vmem:[#allocation12 + $0x24] sm:$0xf]
    %v657 = vld [vmem:[#allocation12 + $0x28] sm:$0xf]
    %v658 = vld [vmem:[#allocation12 + $0x2c] sm:$0xf]
    %v659 = vld [vmem:[#allocation12 + $0x30] sm:$0xf]
    %v660 = vld [vmem:[#allocation12 + $0x34] sm:$0xf]
    %v661 = vld [vmem:[#allocation12 + $0x38] sm:$0xf]
    %v662 = vld [vmem:[#allocation12 + $0x3c] sm:$0xf]
    %v663 = vunpack.c.l.bf16 %v647
    %v664 = vunpack.c.l.bf16 %v648
    %v665 = vunpack.c.l.bf16 %v649
    %v666 = vunpack.c.l.bf16 %v650
    %v667 = vunpack.c.l.bf16 %v651
    %v668 = vunpack.c.l.bf16 %v652
    %v669 = vunpack.c.l.bf16 %v653
    %v670 = vunpack.c.l.bf16 %v654
    %v671 = vunpack.c.l.bf16 %v655
    %v672 = vunpack.c.l.bf16 %v656
    %v673 = vunpack.c.l.bf16 %v657
    %v674 = vunpack.c.l.bf16 %v658
    %v675 = vunpack.c.l.bf16 %v659
    %v676 = vunpack.c.l.bf16 %v660
    %v677 = vunpack.c.l.bf16 %v661
    %v678 = vunpack.c.l.bf16 %v662
    %v679 = vld [vmem:[#allocation13] sm:$0x1]
    %v681 = vlaneseq
    %v682 = vshrl.u32 %v681, 7
    %v683 = vsub.s32 0, %v682
    %v684 = vrot.slane %v679, %v683
    %686 = vmatprep.subr.mxu0 0.0
    %687 = vmatpush1.msra.mxu0 %v678
    %688 = vmatprep.subr.mxu0 0.0
    %689 = vmatpush1.msra.mxu0 %v677
    %690 = vmatprep.subr.mxu0 0.0
    %691 = vmatpush1.msra.mxu0 %v676
    %692 = vmatprep.subr.mxu0 0.0
    %693 = vmatpush1.msra.mxu0 %v675
    %694 = vmatprep.subr.mxu0 0.0
    %695 = vmatpush1.msra.mxu0 %v674
    %696 = vmatprep.subr.mxu0 0.0
    %697 = vmatpush1.msra.mxu0 %v673
    %698 = vmatprep.subr.mxu0 0.0
    %699 = vmatpush1.msra.mxu0 %v672
    %700 = vmatprep.subr.mxu0 0.0
    %701 = vmatpush1.msra.mxu0 %v671
    %702 = vmatprep.subr.mxu0 0.0
    %703 = vmatpush1.msra.mxu0 %v670
    %704 = vmatprep.subr.mxu0 0.0
    %705 = vmatpush1.msra.mxu0 %v669
    %706 = vmatprep.subr.mxu0 0.0
    %707 = vmatpush1.msra.mxu0 %v668
    %708 = vmatprep.subr.mxu0 0.0
    %709 = vmatpush1.msra.mxu0 %v667
    %710 = vmatprep.subr.mxu0 0.0
    %711 = vmatpush1.msra.mxu0 %v666
    %712 = vmatprep.subr.mxu0 0.0
    %713 = vmatpush1.msra.mxu0 %v665
    %714 = vmatprep.subr.mxu0 0.0
    %715 = vmatpush1.msra.mxu0 %v664
    %716 = vmatprep.subr.mxu0 0.0
    %717 = vmatpush1.msra.mxu0 %v663
    %718 = vmatprep.subr.mxu0 0.0
    %719 = vmatpush2.msra.mxu0 0.0
    %720 = vmatprep.subr.mxu0 0.0
    %721 = vmatpush2.msra.mxu0 0.0
    %722 = vmatprep.subr.mxu0 0.0
    %723 = vmatpush2.msra.mxu0 0.0
    %724 = vmatprep.subr.mxu0 0.0
    %725 = vmatpush2.msra.mxu0 0.0
    %726 = vmatprep.subr.mxu0 0.0
    %727 = vmatpush2.msra.mxu0 0.0
    %728 = vmatprep.subr.mxu0 0.0
    %729 = vmatpush2.msra.mxu0 0.0
    %730 = vmatprep.subr.mxu0 0.0
    %731 = vmatpush2.msra.mxu0 0.0
    %732 = vmatprep.subr.mxu0 0.0
    %733 = vmatpush2.msra.mxu0 0.0
    %734 = vmatprep.subr.mxu0 0.0
    %735 = vmatpush2.msra.mxu0 0.0
    %736 = vmatprep.subr.mxu0 0.0
    %737 = vmatpush2.msra.mxu0 0.0
    %738 = vmatprep.subr.mxu0 0.0
    %739 = vmatpush2.msra.mxu0 0.0
    %740 = vmatprep.subr.mxu0 0.0
    %741 = vmatpush2.msra.mxu0 0.0
    %742 = vmatprep.subr.mxu0 0.0
    %743 = vmatpush2.msra.mxu0 0.0
    %744 = vmatprep.subr.mxu0 0.0
    %745 = vmatpush2.msra.mxu0 0.0
    %746 = vmatprep.subr.mxu0 0.0
    %747 = vmatpush2.msra.mxu0 0.0
    %748 = vmatprep.subr.mxu0 0.0
    %749 = vmatpush2.msra.mxu0 0.0
    %750 = vmatprep.mubr.f32.mxu0 0.0
    %751 = vmatmul.mubr.f32.gmra.mxu0 %v646
    %v752 = vpop.f32.mrf.mxu0
    %v753 = vadd.f32 %v684, %v752
    %v754 = vpop.f32.mrf.mxu0
    %755 = vdwg.mxu0
    %v756 = vld [vmem:[#allocation15] sm:$0xff]
    %v757 = vld [vmem:[#allocation15 + $0x8] sm:$0xff]
    %v758 = vld [vmem:[#allocation15 + $0x10] sm:$0xff]
    %v759 = vld [vmem:[#allocation15 + $0x18] sm:$0xff]
    %v760 = vld [vmem:[#allocation15 + $0x20] sm:$0xff]
    %v761 = vld [vmem:[#allocation15 + $0x28] sm:$0xff]
    %v762 = vld [vmem:[#allocation15 + $0x30] sm:$0xff]
    %v763 = vld [vmem:[#allocation15 + $0x38] sm:$0xff]
    %v764 = vld [vmem:[#allocation15 + $0x40] sm:$0xff]
    %v765 = vld [vmem:[#allocation15 + $0x48] sm:$0xff]
    %v766 = vld [vmem:[#allocation15 + $0x50] sm:$0xff]
    %v767 = vld [vmem:[#allocation15 + $0x58] sm:$0xff]
    %v768 = vld [vmem:[#allocation15 + $0x60] sm:$0xff]
    %v769 = vld [vmem:[#allocation15 + $0x68] sm:$0xff]
    %v770 = vld [vmem:[#allocation15 + $0x70] sm:$0xff]
    %v771 = vld [vmem:[#allocation15 + $0x78] sm:$0xff]
    %v772 = vld [vmem:[#allocation15 + $0x80] sm:$0xff]
    %v773 = vld [vmem:[#allocation15 + $0x88] sm:$0xff]
    %v774 = vld [vmem:[#allocation15 + $0x90] sm:$0xff]
    %v775 = vld [vmem:[#allocation15 + $0x98] sm:$0xff]
    %v776 = vld [vmem:[#allocation15 + $0xa0] sm:$0xff]
    %v777 = vld [vmem:[#allocation15 + $0xa8] sm:$0xff]
    %v778 = vld [vmem:[#allocation15 + $0xb0] sm:$0xff]
    %v779 = vld [vmem:[#allocation15 + $0xb8] sm:$0xff]
    %v780 = vld [vmem:[#allocation15 + $0xc0] sm:$0xff]
    %v781 = vld [vmem:[#allocation15 + $0xc8] sm:$0xff]
    %v782 = vld [vmem:[#allocation15 + $0xd0] sm:$0xff]
    %v783 = vld [vmem:[#allocation15 + $0xd8] sm:$0xff]
    %v784 = vld [vmem:[#allocation15 + $0xe0] sm:$0xff]
    %v785 = vld [vmem:[#allocation15 + $0xe8] sm:$0xff]
    %v786 = vld [vmem:[#allocation15 + $0xf0] sm:$0xff]
    %v787 = vld [vmem:[#allocation15 + $0xf8] sm:$0xff]
    %v788 = vld [vmem:[#allocation15 + $0x100] sm:$0xff]
    %v789 = vld [vmem:[#allocation15 + $0x108] sm:$0xff]
    %v790 = vld [vmem:[#allocation15 + $0x110] sm:$0xff]
    %v791 = vld [vmem:[#allocation15 + $0x118] sm:$0xff]
    %v792 = vld [vmem:[#allocation15 + $0x120] sm:$0xff]
    %v793 = vld [vmem:[#allocation15 + $0x128] sm:$0xff]
    %v794 = vld [vmem:[#allocation15 + $0x130] sm:$0xff]
    %v795 = vld [vmem:[#allocation15 + $0x138] sm:$0xff]
    %v796 = vld [vmem:[#allocation15 + $0x140] sm:$0xff]
    %v797 = vld [vmem:[#allocation15 + $0x148] sm:$0xff]
    %v798 = vld [vmem:[#allocation15 + $0x150] sm:$0xff]
    %v799 = vld [vmem:[#allocation15 + $0x158] sm:$0xff]
    %v800 = vld [vmem:[#allocation15 + $0x160] sm:$0xff]
    %v801 = vld [vmem:[#allocation15 + $0x168] sm:$0xff]
    %v802 = vld [vmem:[#allocation15 + $0x170] sm:$0xff]
    %v803 = vld [vmem:[#allocation15 + $0x178] sm:$0xff]
    %v804 = vld [vmem:[#allocation15 + $0x180] sm:$0xff]
    %v805 = vld [vmem:[#allocation15 + $0x188] sm:$0xff]
    %v806 = vld [vmem:[#allocation15 + $0x190] sm:$0xff]
    %v807 = vld [vmem:[#allocation15 + $0x198] sm:$0xff]
    %v808 = vld [vmem:[#allocation15 + $0x1a0] sm:$0xff]
    %v809 = vld [vmem:[#allocation15 + $0x1a8] sm:$0xff]
    %v810 = vld [vmem:[#allocation15 + $0x1b0] sm:$0xff]
    %v811 = vld [vmem:[#allocation15 + $0x1b8] sm:$0xff]
    %v812 = vld [vmem:[#allocation15 + $0x1c0] sm:$0xff]
    %v813 = vld [vmem:[#allocation15 + $0x1c8] sm:$0xff]
    %v814 = vld [vmem:[#allocation15 + $0x1d0] sm:$0xff]
    %v815 = vld [vmem:[#allocation15 + $0x1d8] sm:$0xff]
    %v816 = vld [vmem:[#allocation15 + $0x1e0] sm:$0xff]
    %v817 = vld [vmem:[#allocation15 + $0x1e8] sm:$0xff]
    %v818 = vld [vmem:[#allocation15 + $0x1f0] sm:$0xff]
    %v819 = vld [vmem:[#allocation15 + $0x1f8] sm:$0xff]
    %v820 = vld [vmem:[#allocation15 + $0x200] sm:$0xff]
    %v821 = vld [vmem:[#allocation15 + $0x208] sm:$0xff]
    %v822 = vld [vmem:[#allocation15 + $0x210] sm:$0xff]
    %v823 = vld [vmem:[#allocation15 + $0x218] sm:$0xff]
    %v824 = vld [vmem:[#allocation15 + $0x220] sm:$0xff]
    %v825 = vld [vmem:[#allocation15 + $0x228] sm:$0xff]
    %v826 = vld [vmem:[#allocation15 + $0x230] sm:$0xff]
    %v827 = vld [vmem:[#allocation15 + $0x238] sm:$0xff]
    %v828 = vld [vmem:[#allocation15 + $0x240] sm:$0xff]
    %v829 = vld [vmem:[#allocation15 + $0x248] sm:$0xff]
    %v830 = vld [vmem:[#allocation15 + $0x250] sm:$0xff]
    %v831 = vld [vmem:[#allocation15 + $0x258] sm:$0xff]
    %v832 = vld [vmem:[#allocation15 + $0x260] sm:$0xff]
    %v833 = vld [vmem:[#allocation15 + $0x268] sm:$0xff]
    %v834 = vld [vmem:[#allocation15 + $0x270] sm:$0xff]
    %v835 = vld [vmem:[#allocation15 + $0x278] sm:$0xff]
    %v836 = vld [vmem:[#allocation15 + $0x280] sm:$0xff]
    %v837 = vld [vmem:[#allocation15 + $0x288] sm:$0xff]
    %v838 = vld [vmem:[#allocation15 + $0x290] sm:$0xff]
    %v839 = vld [vmem:[#allocation15 + $0x298] sm:$0xff]
    %v840 = vld [vmem:[#allocation15 + $0x2a0] sm:$0xff]
    %v841 = vld [vmem:[#allocation15 + $0x2a8] sm:$0xff]
    %v842 = vld [vmem:[#allocation15 + $0x2b0] sm:$0xff]
    %v843 = vld [vmem:[#allocation15 + $0x2b8] sm:$0xff]
    %v844 = vld [vmem:[#allocation15 + $0x2c0] sm:$0xff]
    %v845 = vld [vmem:[#allocation15 + $0x2c8] sm:$0xff]
    %v846 = vld [vmem:[#allocation15 + $0x2d0] sm:$0xff]
    %v847 = vld [vmem:[#allocation15 + $0x2d8] sm:$0xff]
    %v848 = vld [vmem:[#allocation15 + $0x2e0] sm:$0xff]
    %v849 = vld [vmem:[#allocation15 + $0x2e8] sm:$0xff]
    %v850 = vld [vmem:[#allocation15 + $0x2f0] sm:$0xff]
    %v851 = vld [vmem:[#allocation15 + $0x2f8] sm:$0xff]
    %v852 = vld [vmem:[#allocation15 + $0x300] sm:$0xff]
    %v853 = vld [vmem:[#allocation15 + $0x308] sm:$0xff]
    %v854 = vld [vmem:[#allocation15 + $0x310] sm:$0xff]
    %v855 = vld [vmem:[#allocation15 + $0x318] sm:$0xff]
    %v856 = vld [vmem:[#allocation15 + $0x320] sm:$0xff]
    %v857 = vld [vmem:[#allocation15 + $0x328] sm:$0xff]
    %v858 = vld [vmem:[#allocation15 + $0x330] sm:$0xff]
    %v859 = vld [vmem:[#allocation15 + $0x338] sm:$0xff]
    %v860 = vld [vmem:[#allocation15 + $0x340] sm:$0xff]
    %v861 = vld [vmem:[#allocation15 + $0x348] sm:$0xff]
    %v862 = vld [vmem:[#allocation15 + $0x350] sm:$0xff]
    %v863 = vld [vmem:[#allocation15 + $0x358] sm:$0xff]
    %v864 = vld [vmem:[#allocation15 + $0x360] sm:$0xff]
    %v865 = vld [vmem:[#allocation15 + $0x368] sm:$0xff]
    %v866 = vld [vmem:[#allocation15 + $0x370] sm:$0xff]
    %v867 = vld [vmem:[#allocation15 + $0x378] sm:$0xff]
    %v868 = vld [vmem:[#allocation15 + $0x380] sm:$0xff]
    %v869 = vld [vmem:[#allocation15 + $0x388] sm:$0xff]
    %v870 = vld [vmem:[#allocation15 + $0x390] sm:$0xff]
    %v871 = vld [vmem:[#allocation15 + $0x398] sm:$0xff]
    %v872 = vld [vmem:[#allocation15 + $0x3a0] sm:$0xff]
    %v873 = vld [vmem:[#allocation15 + $0x3a8] sm:$0xff]
    %v874 = vld [vmem:[#allocation15 + $0x3b0] sm:$0xff]
    %v875 = vld [vmem:[#allocation15 + $0x3b8] sm:$0xff]
    %v876 = vld [vmem:[#allocation15 + $0x3c0] sm:$0xff]
    %v877 = vld [vmem:[#allocation15 + $0x3c8] sm:$0xff]
    %v878 = vld [vmem:[#allocation15 + $0x3d0] sm:$0xff]
    %v879 = vld [vmem:[#allocation15 + $0x3d8] sm:$0xff]
    %v880 = vld [vmem:[#allocation15 + $0x3e0] sm:$0xff]
    %v881 = vld [vmem:[#allocation15 + $0x3e8] sm:$0xff]
    %v882 = vld [vmem:[#allocation15 + $0x3f0] sm:$0xff]
    %v883 = vld [vmem:[#allocation15 + $0x3f8] sm:$0xff]
    %v884 = vunpack.c.l.bf16 %v756
    %v885 = vunpack.c.h.bf16 %v756
    %v886 = vunpack.c.l.bf16 %v757
    %v887 = vunpack.c.h.bf16 %v757
    %v888 = vunpack.c.l.bf16 %v758
    %v889 = vunpack.c.h.bf16 %v758
    %v890 = vunpack.c.l.bf16 %v759
    %v891 = vunpack.c.h.bf16 %v759
    %v892 = vunpack.c.l.bf16 %v760
    %v893 = vunpack.c.h.bf16 %v760
    %v894 = vunpack.c.l.bf16 %v761
    %v895 = vunpack.c.h.bf16 %v761
    %v896 = vunpack.c.l.bf16 %v762
    %v897 = vunpack.c.h.bf16 %v762
    %v898 = vunpack.c.l.bf16 %v763
    %v899 = vunpack.c.h.bf16 %v763
    %v900 = vunpack.c.l.bf16 %v764
    %v901 = vunpack.c.h.bf16 %v764
    %v902 = vunpack.c.l.bf16 %v765
    %v903 = vunpack.c.h.bf16 %v765
    %v904 = vunpack.c.l.bf16 %v766
    %v905 = vunpack.c.h.bf16 %v766
    %v906 = vunpack.c.l.bf16 %v767
    %v907 = vunpack.c.h.bf16 %v767
    %v908 = vunpack.c.l.bf16 %v768
    %v909 = vunpack.c.h.bf16 %v768
    %v910 = vunpack.c.l.bf16 %v769
    %v911 = vunpack.c.h.bf16 %v769
    %v912 = vunpack.c.l.bf16 %v770
    %v913 = vunpack.c.h.bf16 %v770
    %v914 = vunpack.c.l.bf16 %v771
    %v915 = vunpack.c.h.bf16 %v771
    %v916 = vunpack.c.l.bf16 %v772
    %v917 = vunpack.c.h.bf16 %v772
    %v918 = vunpack.c.l.bf16 %v773
    %v919 = vunpack.c.h.bf16 %v773
    %v920 = vunpack.c.l.bf16 %v774
    %v921 = vunpack.c.h.bf16 %v774
    %v922 = vunpack.c.l.bf16 %v775
    %v923 = vunpack.c.h.bf16 %v775
    %v924 = vunpack.c.l.bf16 %v776
    %v925 = vunpack.c.h.bf16 %v776
    %v926 = vunpack.c.l.bf16 %v777
    %v927 = vunpack.c.h.bf16 %v777
    %v928 = vunpack.c.l.bf16 %v778
    %v929 = vunpack.c.h.bf16 %v778
    %v930 = vunpack.c.l.bf16 %v779
    %v931 = vunpack.c.h.bf16 %v779
    %v932 = vunpack.c.l.bf16 %v780
    %v933 = vunpack.c.h.bf16 %v780
    %v934 = vunpack.c.l.bf16 %v781
    %v935 = vunpack.c.h.bf16 %v781
    %v936 = vunpack.c.l.bf16 %v782
    %v937 = vunpack.c.h.bf16 %v782
    %v938 = vunpack.c.l.bf16 %v783
    %v939 = vunpack.c.h.bf16 %v783
    %v940 = vunpack.c.l.bf16 %v784
    %v941 = vunpack.c.h.bf16 %v784
    %v942 = vunpack.c.l.bf16 %v785
    %v943 = vunpack.c.h.bf16 %v785
    %v944 = vunpack.c.l.bf16 %v786
    %v945 = vunpack.c.h.bf16 %v786
    %v946 = vunpack.c.l.bf16 %v787
    %v947 = vunpack.c.h.bf16 %v787
    %v948 = vunpack.c.l.bf16 %v788
    %v949 = vunpack.c.h.bf16 %v788
    %v950 = vunpack.c.l.bf16 %v789
    %v951 = vunpack.c.h.bf16 %v789
    %v952 = vunpack.c.l.bf16 %v790
    %v953 = vunpack.c.h.bf16 %v790
    %v954 = vunpack.c.l.bf16 %v791
    %v955 = vunpack.c.h.bf16 %v791
    %v956 = vunpack.c.l.bf16 %v792
    %v957 = vunpack.c.h.bf16 %v792
    %v958 = vunpack.c.l.bf16 %v793
    %v959 = vunpack.c.h.bf16 %v793
    %v960 = vunpack.c.l.bf16 %v794
    %v961 = vunpack.c.h.bf16 %v794
    %v962 = vunpack.c.l.bf16 %v795
    %v963 = vunpack.c.h.bf16 %v795
    %v964 = vunpack.c.l.bf16 %v796
    %v965 = vunpack.c.h.bf16 %v796
    %v966 = vunpack.c.l.bf16 %v797
    %v967 = vunpack.c.h.bf16 %v797
    %v968 = vunpack.c.l.bf16 %v798
    %v969 = vunpack.c.h.bf16 %v798
    %v970 = vunpack.c.l.bf16 %v799
    %v971 = vunpack.c.h.bf16 %v799
    %v972 = vunpack.c.l.bf16 %v800
    %v973 = vunpack.c.h.bf16 %v800
    %v974 = vunpack.c.l.bf16 %v801
    %v975 = vunpack.c.h.bf16 %v801
    %v976 = vunpack.c.l.bf16 %v802
    %v977 = vunpack.c.h.bf16 %v802
    %v978 = vunpack.c.l.bf16 %v803
    %v979 = vunpack.c.h.bf16 %v803
    %v980 = vunpack.c.l.bf16 %v804
    %v981 = vunpack.c.h.bf16 %v804
    %v982 = vunpack.c.l.bf16 %v805
    %v983 = vunpack.c.h.bf16 %v805
    %v984 = vunpack.c.l.bf16 %v806
    %v985 = vunpack.c.h.bf16 %v806
    %v986 = vunpack.c.l.bf16 %v807
    %v987 = vunpack.c.h.bf16 %v807
    %v988 = vunpack.c.l.bf16 %v808
    %v989 = vunpack.c.h.bf16 %v808
    %v990 = vunpack.c.l.bf16 %v809
    %v991 = vunpack.c.h.bf16 %v809
    %v992 = vunpack.c.l.bf16 %v810
    %v993 = vunpack.c.h.bf16 %v810
    %v994 = vunpack.c.l.bf16 %v811
    %v995 = vunpack.c.h.bf16 %v811
    %v996 = vunpack.c.l.bf16 %v812
    %v997 = vunpack.c.h.bf16 %v812
    %v998 = vunpack.c.l.bf16 %v813
    %v999 = vunpack.c.h.bf16 %v813
    %v1000 = vunpack.c.l.bf16 %v814
    %v1001 = vunpack.c.h.bf16 %v814
    %v1002 = vunpack.c.l.bf16 %v815
    %v1003 = vunpack.c.h.bf16 %v815
    %v1004 = vunpack.c.l.bf16 %v816
    %v1005 = vunpack.c.h.bf16 %v816
    %v1006 = vunpack.c.l.bf16 %v817
    %v1007 = vunpack.c.h.bf16 %v817
    %v1008 = vunpack.c.l.bf16 %v818
    %v1009 = vunpack.c.h.bf16 %v818
    %v1010 = vunpack.c.l.bf16 %v819
    %v1011 = vunpack.c.h.bf16 %v819
    %v1012 = vunpack.c.l.bf16 %v820
    %v1013 = vunpack.c.h.bf16 %v820
    %v1014 = vunpack.c.l.bf16 %v821
    %v1015 = vunpack.c.h.bf16 %v821
    %v1016 = vunpack.c.l.bf16 %v822
    %v1017 = vunpack.c.h.bf16 %v822
    %v1018 = vunpack.c.l.bf16 %v823
    %v1019 = vunpack.c.h.bf16 %v823
    %v1020 = vunpack.c.l.bf16 %v824
    %v1021 = vunpack.c.h.bf16 %v824
    %v1022 = vunpack.c.l.bf16 %v825
    %v1023 = vunpack.c.h.bf16 %v825
    %v1024 = vunpack.c.l.bf16 %v826
    %v1025 = vunpack.c.h.bf16 %v826
    %v1026 = vunpack.c.l.bf16 %v827
    %v1027 = vunpack.c.h.bf16 %v827
    %v1028 = vunpack.c.l.bf16 %v828
    %v1029 = vunpack.c.h.bf16 %v828
    %v1030 = vunpack.c.l.bf16 %v829
    %v1031 = vunpack.c.h.bf16 %v829
    %v1032 = vunpack.c.l.bf16 %v830
    %v1033 = vunpack.c.h.bf16 %v830
    %v1034 = vunpack.c.l.bf16 %v831
    %v1035 = vunpack.c.h.bf16 %v831
    %v1036 = vunpack.c.l.bf16 %v832
    %v1037 = vunpack.c.h.bf16 %v832
    %v1038 = vunpack.c.l.bf16 %v833
    %v1039 = vunpack.c.h.bf16 %v833
    %v1040 = vunpack.c.l.bf16 %v834
    %v1041 = vunpack.c.h.bf16 %v834
    %v1042 = vunpack.c.l.bf16 %v835
    %v1043 = vunpack.c.h.bf16 %v835
    %v1044 = vunpack.c.l.bf16 %v836
    %v1045 = vunpack.c.h.bf16 %v836
    %v1046 = vunpack.c.l.bf16 %v837
    %v1047 = vunpack.c.h.bf16 %v837
    %v1048 = vunpack.c.l.bf16 %v838
    %v1049 = vunpack.c.h.bf16 %v838
    %v1050 = vunpack.c.l.bf16 %v839
    %v1051 = vunpack.c.h.bf16 %v839
    %v1052 = vunpack.c.l.bf16 %v840
    %v1053 = vunpack.c.h.bf16 %v840
    %v1054 = vunpack.c.l.bf16 %v841
    %v1055 = vunpack.c.h.bf16 %v841
    %v1056 = vunpack.c.l.bf16 %v842
    %v1057 = vunpack.c.h.bf16 %v842
    %v1058 = vunpack.c.l.bf16 %v843
    %v1059 = vunpack.c.h.bf16 %v843
    %v1060 = vunpack.c.l.bf16 %v844
    %v1061 = vunpack.c.h.bf16 %v844
    %v1062 = vunpack.c.l.bf16 %v845
    %v1063 = vunpack.c.h.bf16 %v845
    %v1064 = vunpack.c.l.bf16 %v846
    %v1065 = vunpack.c.h.bf16 %v846
    %v1066 = vunpack.c.l.bf16 %v847
    %v1067 = vunpack.c.h.bf16 %v847
    %v1068 = vunpack.c.l.bf16 %v848
    %v1069 = vunpack.c.h.bf16 %v848
    %v1070 = vunpack.c.l.bf16 %v849
    %v1071 = vunpack.c.h.bf16 %v849
    %v1072 = vunpack.c.l.bf16 %v850
    %v1073 = vunpack.c.h.bf16 %v850
    %v1074 = vunpack.c.l.bf16 %v851
    %v1075 = vunpack.c.h.bf16 %v851
    %v1076 = vunpack.c.l.bf16 %v852
    %v1077 = vunpack.c.h.bf16 %v852
    %v1078 = vunpack.c.l.bf16 %v853
    %v1079 = vunpack.c.h.bf16 %v853
    %v1080 = vunpack.c.l.bf16 %v854
    %v1081 = vunpack.c.h.bf16 %v854
    %v1082 = vunpack.c.l.bf16 %v855
    %v1083 = vunpack.c.h.bf16 %v855
    %v1084 = vunpack.c.l.bf16 %v856
    %v1085 = vunpack.c.h.bf16 %v856
    %v1086 = vunpack.c.l.bf16 %v857
    %v1087 = vunpack.c.h.bf16 %v857
    %v1088 = vunpack.c.l.bf16 %v858
    %v1089 = vunpack.c.h.bf16 %v858
    %v1090 = vunpack.c.l.bf16 %v859
    %v1091 = vunpack.c.h.bf16 %v859
    %v1092 = vunpack.c.l.bf16 %v860
    %v1093 = vunpack.c.h.bf16 %v860
    %v1094 = vunpack.c.l.bf16 %v861
    %v1095 = vunpack.c.h.bf16 %v861
    %v1096 = vunpack.c.l.bf16 %v862
    %v1097 = vunpack.c.h.bf16 %v862
    %v1098 = vunpack.c.l.bf16 %v863
    %v1099 = vunpack.c.h.bf16 %v863
    %v1100 = vunpack.c.l.bf16 %v864
    %v1101 = vunpack.c.h.bf16 %v864
    %v1102 = vunpack.c.l.bf16 %v865
    %v1103 = vunpack.c.h.bf16 %v865
    %v1104 = vunpack.c.l.bf16 %v866
    %v1105 = vunpack.c.h.bf16 %v866
    %v1106 = vunpack.c.l.bf16 %v867
    %v1107 = vunpack.c.h.bf16 %v867
    %v1108 = vunpack.c.l.bf16 %v868
    %v1109 = vunpack.c.h.bf16 %v868
    %v1110 = vunpack.c.l.bf16 %v869
    %v1111 = vunpack.c.h.bf16 %v869
    %v1112 = vunpack.c.l.bf16 %v870
    %v1113 = vunpack.c.h.bf16 %v870
    %v1114 = vunpack.c.l.bf16 %v871
    %v1115 = vunpack.c.h.bf16 %v871
    %v1116 = vunpack.c.l.bf16 %v872
    %v1117 = vunpack.c.h.bf16 %v872
    %v1118 = vunpack.c.l.bf16 %v873
    %v1119 = vunpack.c.h.bf16 %v873
    %v1120 = vunpack.c.l.bf16 %v874
    %v1121 = vunpack.c.h.bf16 %v874
    %v1122 = vunpack.c.l.bf16 %v875
    %v1123 = vunpack.c.h.bf16 %v875
    %v1124 = vunpack.c.l.bf16 %v876
    %v1125 = vunpack.c.h.bf16 %v876
    %v1126 = vunpack.c.l.bf16 %v877
    %v1127 = vunpack.c.h.bf16 %v877
    %v1128 = vunpack.c.l.bf16 %v878
    %v1129 = vunpack.c.h.bf16 %v878
    %v1130 = vunpack.c.l.bf16 %v879
    %v1131 = vunpack.c.h.bf16 %v879
    %v1132 = vunpack.c.l.bf16 %v880
    %v1133 = vunpack.c.h.bf16 %v880
    %v1134 = vunpack.c.l.bf16 %v881
    %v1135 = vunpack.c.h.bf16 %v881
    %v1136 = vunpack.c.l.bf16 %v882
    %v1137 = vunpack.c.h.bf16 %v882
    %v1138 = vunpack.c.l.bf16 %v883
    %v1139 = vunpack.c.h.bf16 %v883
    %v1140 = vld [vmem:[#allocation16] sm:$0xff]
    %v1142 = vlaneseq
    %v1143 = vshrl.u32 %v1142, 7
    %v1144 = vsub.s32 0, %v1143
    %v1145 = vrot.slane %v1140, %v1144
    %v1146 = vlaneseq
    %v1147 = vshrl.u32 %v1146, 7
    %v1148 = vsub.s32 1, %v1147
    %v1149 = vrot.slane %v1140, %v1148
    %v1150 = vlaneseq
    %v1151 = vshrl.u32 %v1150, 7
    %v1152 = vsub.s32 2, %v1151
    %v1153 = vrot.slane %v1140, %v1152
    %v1154 = vlaneseq
    %v1155 = vshrl.u32 %v1154, 7
    %v1156 = vsub.s32 3, %v1155
    %v1157 = vrot.slane %v1140, %v1156
    %v1158 = vlaneseq
    %v1159 = vshrl.u32 %v1158, 7
    %v1160 = vsub.s32 4, %v1159
    %v1161 = vrot.slane %v1140, %v1160
    %v1162 = vlaneseq
    %v1163 = vshrl.u32 %v1162, 7
    %v1164 = vsub.s32 5, %v1163
    %v1165 = vrot.slane %v1140, %v1164
    %v1166 = vlaneseq
    %v1167 = vshrl.u32 %v1166, 7
    %v1168 = vsub.s32 6, %v1167
    %v1169 = vrot.slane %v1140, %v1168
    %v1170 = vlaneseq
    %v1171 = vshrl.u32 %v1170, 7
    %v1172 = vsub.s32 7, %v1171
    %v1173 = vrot.slane %v1140, %v1172
    %1182 = vmatprep.subr.mxu0 %v1005
    %1183 = vmatpush1.msra.mxu0 %v1004
    %1184 = vmatprep.subr.mxu0 %v997
    %1185 = vmatpush1.msra.mxu0 %v996
    %1186 = vmatprep.subr.mxu0 %v989
    %1187 = vmatpush1.msra.mxu0 %v988
    %1188 = vmatprep.subr.mxu0 %v981
    %1189 = vmatpush1.msra.mxu0 %v980
    %1190 = vmatprep.subr.mxu0 %v973
    %1191 = vmatpush1.msra.mxu0 %v972
    %1192 = vmatprep.subr.mxu0 %v965
    %1193 = vmatpush1.msra.mxu0 %v964
    %1194 = vmatprep.subr.mxu0 %v957
    %1195 = vmatpush1.msra.mxu0 %v956
    %1196 = vmatprep.subr.mxu0 %v949
    %1197 = vmatpush1.msra.mxu0 %v948
    %1198 = vmatprep.subr.mxu0 %v941
    %1199 = vmatpush1.msra.mxu0 %v940
    %1200 = vmatprep.subr.mxu0 %v933
    %1201 = vmatpush1.msra.mxu0 %v932
    %1202 = vmatprep.subr.mxu0 %v925
    %1203 = vmatpush1.msra.mxu0 %v924
    %1204 = vmatprep.subr.mxu0 %v917
    %1205 = vmatpush1.msra.mxu0 %v916
    %1206 = vmatprep.subr.mxu0 %v909
    %1207 = vmatpush1.msra.mxu0 %v908
    %1208 = vmatprep.subr.mxu0 %v901
    %1209 = vmatpush1.msra.mxu0 %v900
    %1210 = vmatprep.subr.mxu0 %v893
    %1211 = vmatpush1.msra.mxu0 %v892
    %1212 = vmatprep.subr.mxu0 %v885
    %1213 = vmatpush1.msra.mxu0 %v884
    %1214 = vmatprep.subr.mxu0 %v1133
    %1215 = vmatpush2.msra.mxu0 %v1132
    %1216 = vmatprep.subr.mxu0 %v1125
    %1217 = vmatpush2.msra.mxu0 %v1124
    %1218 = vmatprep.subr.mxu0 %v1117
    %1219 = vmatpush2.msra.mxu0 %v1116
    %1220 = vmatprep.subr.mxu0 %v1109
    %1221 = vmatpush2.msra.mxu0 %v1108
    %1222 = vmatprep.subr.mxu0 %v1101
    %1223 = vmatpush2.msra.mxu0 %v1100
    %1224 = vmatprep.subr.mxu0 %v1093
    %1225 = vmatpush2.msra.mxu0 %v1092
    %1226 = vmatprep.subr.mxu0 %v1085
    %1227 = vmatpush2.msra.mxu0 %v1084
    %1228 = vmatprep.subr.mxu0 %v1077
    %1229 = vmatpush2.msra.mxu0 %v1076
    %1230 = vmatprep.subr.mxu0 %v1069
    %1231 = vmatpush2.msra.mxu0 %v1068
    %1232 = vmatprep.subr.mxu0 %v1061
    %1233 = vmatpush2.msra.mxu0 %v1060
    %1234 = vmatprep.subr.mxu0 %v1053
    %1235 = vmatpush2.msra.mxu0 %v1052
    %1236 = vmatprep.subr.mxu0 %v1045
    %1237 = vmatpush2.msra.mxu0 %v1044
    %1238 = vmatprep.subr.mxu0 %v1037
    %1239 = vmatpush2.msra.mxu0 %v1036
    %1240 = vmatprep.subr.mxu0 %v1029
    %1241 = vmatpush2.msra.mxu0 %v1028
    %1242 = vmatprep.subr.mxu0 %v1021
    %1243 = vmatpush2.msra.mxu0 %v1020
    %1244 = vmatprep.subr.mxu0 %v1013
    %1245 = vmatpush2.msra.mxu0 %v1012
    %1246 = vmatprep.mubr.f32.mxu0 %v309
    %1247 = vmatmul.mubr.f32.gmra.mxu0 %v308
    %v1248 = vpop.f32.mrf.mxu0
    %v1249 = vadd.f32 %v1145, %v1248
    %v1250 = vpop.f32.mrf.mxu0
    %v1251 = vadd.f32 %v1149, %v1250
    %1252 = vdwg.mxu0
    %1253 = vmatprep.subr.mxu0 %v1007
    %1254 = vmatpush1.msra.mxu0 %v1006
    %1255 = vmatprep.subr.mxu0 %v999
    %1256 = vmatpush1.msra.mxu0 %v998
    %1257 = vmatprep.subr.mxu0 %v991
    %1258 = vmatpush1.msra.mxu0 %v990
    %1259 = vmatprep.subr.mxu0 %v983
    %1260 = vmatpush1.msra.mxu0 %v982
    %1261 = vmatprep.subr.mxu0 %v975
    %1262 = vmatpush1.msra.mxu0 %v974
    %1263 = vmatprep.subr.mxu0 %v967
    %1264 = vmatpush1.msra.mxu0 %v966
    %1265 = vmatprep.subr.mxu0 %v959
    %1266 = vmatpush1.msra.mxu0 %v958
    %1267 = vmatprep.subr.mxu0 %v951
    %1268 = vmatpush1.msra.mxu0 %v950
    %1269 = vmatprep.subr.mxu0 %v943
    %1270 = vmatpush1.msra.mxu0 %v942
    %1271 = vmatprep.subr.mxu0 %v935
    %1272 = vmatpush1.msra.mxu0 %v934
    %1273 = vmatprep.subr.mxu0 %v927
    %1274 = vmatpush1.msra.mxu0 %v926
    %1275 = vmatprep.subr.mxu0 %v919
    %1276 = vmatpush1.msra.mxu0 %v918
    %1277 = vmatprep.subr.mxu0 %v911
    %1278 = vmatpush1.msra.mxu0 %v910
    %1279 = vmatprep.subr.mxu0 %v903
    %1280 = vmatpush1.msra.mxu0 %v902
    %1281 = vmatprep.subr.mxu0 %v895
    %1282 = vmatpush1.msra.mxu0 %v894
    %1283 = vmatprep.subr.mxu0 %v887
    %1284 = vmatpush1.msra.mxu0 %v886
    %1285 = vmatprep.subr.mxu0 %v1135
    %1286 = vmatpush2.msra.mxu0 %v1134
    %1287 = vmatprep.subr.mxu0 %v1127
    %1288 = vmatpush2.msra.mxu0 %v1126
    %1289 = vmatprep.subr.mxu0 %v1119
    %1290 = vmatpush2.msra.mxu0 %v1118
    %1291 = vmatprep.subr.mxu0 %v1111
    %1292 = vmatpush2.msra.mxu0 %v1110
    %1293 = vmatprep.subr.mxu0 %v1103
    %1294 = vmatpush2.msra.mxu0 %v1102
    %1295 = vmatprep.subr.mxu0 %v1095
    %1296 = vmatpush2.msra.mxu0 %v1094
    %1297 = vmatprep.subr.mxu0 %v1087
    %1298 = vmatpush2.msra.mxu0 %v1086
    %1299 = vmatprep.subr.mxu0 %v1079
    %1300 = vmatpush2.msra.mxu0 %v1078
    %1301 = vmatprep.subr.mxu0 %v1071
    %1302 = vmatpush2.msra.mxu0 %v1070
    %1303 = vmatprep.subr.mxu0 %v1063
    %1304 = vmatpush2.msra.mxu0 %v1062
    %1305 = vmatprep.subr.mxu0 %v1055
    %1306 = vmatpush2.msra.mxu0 %v1054
    %1307 = vmatprep.subr.mxu0 %v1047
    %1308 = vmatpush2.msra.mxu0 %v1046
    %1309 = vmatprep.subr.mxu0 %v1039
    %1310 = vmatpush2.msra.mxu0 %v1038
    %1311 = vmatprep.subr.mxu0 %v1031
    %1312 = vmatpush2.msra.mxu0 %v1030
    %1313 = vmatprep.subr.mxu0 %v1023
    %1314 = vmatpush2.msra.mxu0 %v1022
    %1315 = vmatprep.subr.mxu0 %v1015
    %1316 = vmatpush2.msra.mxu0 %v1014
    %1317 = vmatprep.mubr.f32.mxu0 %v309
    %1318 = vmatmul.mubr.f32.gmra.mxu0 %v308
    %v1319 = vpop.f32.mrf.mxu0
    %v1320 = vadd.f32 %v1153, %v1319
    %v1321 = vpop.f32.mrf.mxu0
    %v1322 = vadd.f32 %v1157, %v1321
    %1323 = vdwg.mxu0
    %1324 = vmatprep.subr.mxu0 %v1009
    %1325 = vmatpush1.msra.mxu0 %v1008
    %1326 = vmatprep.subr.mxu0 %v1001
    %1327 = vmatpush1.msra.mxu0 %v1000
    %1328 = vmatprep.subr.mxu0 %v993
    %1329 = vmatpush1.msra.mxu0 %v992
    %1330 = vmatprep.subr.mxu0 %v985
    %1331 = vmatpush1.msra.mxu0 %v984
    %1332 = vmatprep.subr.mxu0 %v977
    %1333 = vmatpush1.msra.mxu0 %v976
    %1334 = vmatprep.subr.mxu0 %v969
    %1335 = vmatpush1.msra.mxu0 %v968
    %1336 = vmatprep.subr.mxu0 %v961
    %1337 = vmatpush1.msra.mxu0 %v960
    %1338 = vmatprep.subr.mxu0 %v953
    %1339 = vmatpush1.msra.mxu0 %v952
    %1340 = vmatprep.subr.mxu0 %v945
    %1341 = vmatpush1.msra.mxu0 %v944
    %1342 = vmatprep.subr.mxu0 %v937
    %1343 = vmatpush1.msra.mxu0 %v936
    %1344 = vmatprep.subr.mxu0 %v929
    %1345 = vmatpush1.msra.mxu0 %v928
    %1346 = vmatprep.subr.mxu0 %v921
    %1347 = vmatpush1.msra.mxu0 %v920
    %1348 = vmatprep.subr.mxu0 %v913
    %1349 = vmatpush1.msra.mxu0 %v912
    %1350 = vmatprep.subr.mxu0 %v905
    %1351 = vmatpush1.msra.mxu0 %v904
    %1352 = vmatprep.subr.mxu0 %v897
    %1353 = vmatpush1.msra.mxu0 %v896
    %1354 = vmatprep.subr.mxu0 %v889
    %1355 = vmatpush1.msra.mxu0 %v888
    %1356 = vmatprep.subr.mxu0 %v1137
    %1357 = vmatpush2.msra.mxu0 %v1136
    %1358 = vmatprep.subr.mxu0 %v1129
    %1359 = vmatpush2.msra.mxu0 %v1128
    %1360 = vmatprep.subr.mxu0 %v1121
    %1361 = vmatpush2.msra.mxu0 %v1120
    %1362 = vmatprep.subr.mxu0 %v1113
    %1363 = vmatpush2.msra.mxu0 %v1112
    %1364 = vmatprep.subr.mxu0 %v1105
    %1365 = vmatpush2.msra.mxu0 %v1104
    %1366 = vmatprep.subr.mxu0 %v1097
    %1367 = vmatpush2.msra.mxu0 %v1096
    %1368 = vmatprep.subr.mxu0 %v1089
    %1369 = vmatpush2.msra.mxu0 %v1088
    %1370 = vmatprep.subr.mxu0 %v1081
    %1371 = vmatpush2.msra.mxu0 %v1080
    %1372 = vmatprep.subr.mxu0 %v1073
    %1373 = vmatpush2.msra.mxu0 %v1072
    %1374 = vmatprep.subr.mxu0 %v1065
    %1375 = vmatpush2.msra.mxu0 %v1064
    %1376 = vmatprep.subr.mxu0 %v1057
    %1377 = vmatpush2.msra.mxu0 %v1056
    %1378 = vmatprep.subr.mxu0 %v1049
    %1379 = vmatpush2.msra.mxu0 %v1048
    %1380 = vmatprep.subr.mxu0 %v1041
    %1381 = vmatpush2.msra.mxu0 %v1040
    %1382 = vmatprep.subr.mxu0 %v1033
    %1383 = vmatpush2.msra.mxu0 %v1032
    %1384 = vmatprep.subr.mxu0 %v1025
    %1385 = vmatpush2.msra.mxu0 %v1024
    %1386 = vmatprep.subr.mxu0 %v1017
    %1387 = vmatpush2.msra.mxu0 %v1016
    %1388 = vmatprep.mubr.f32.mxu0 %v309
    %1389 = vmatmul.mubr.f32.gmra.mxu0 %v308
    %v1390 = vpop.f32.mrf.mxu0
    %v1391 = vadd.f32 %v1161, %v1390
    %v1392 = vpop.f32.mrf.mxu0
    %v1393 = vadd.f32 %v1165, %v1392
    %1394 = vdwg.mxu0
    %1395 = vmatprep.subr.mxu0 %v1011
    %1396 = vmatpush1.msra.mxu0 %v1010
    %1397 = vmatprep.subr.mxu0 %v1003
    %1398 = vmatpush1.msra.mxu0 %v1002
    %1399 = vmatprep.subr.mxu0 %v995
    %1400 = vmatpush1.msra.mxu0 %v994
    %1401 = vmatprep.subr.mxu0 %v987
    %1402 = vmatpush1.msra.mxu0 %v986
    %1403 = vmatprep.subr.mxu0 %v979
    %1404 = vmatpush1.msra.mxu0 %v978
    %1405 = vmatprep.subr.mxu0 %v971
    %1406 = vmatpush1.msra.mxu0 %v970
    %1407 = vmatprep.subr.mxu0 %v963
    %1408 = vmatpush1.msra.mxu0 %v962
    %1409 = vmatprep.subr.mxu0 %v955
    %1410 = vmatpush1.msra.mxu0 %v954
    %1411 = vmatprep.subr.mxu0 %v947
    %1412 = vmatpush1.msra.mxu0 %v946
    %1413 = vmatprep.subr.mxu0 %v939
    %1414 = vmatpush1.msra.mxu0 %v938
    %1415 = vmatprep.subr.mxu0 %v931
    %1416 = vmatpush1.msra.mxu0 %v930
    %1417 = vmatprep.subr.mxu0 %v923
    %1418 = vmatpush1.msra.mxu0 %v922
    %1419 = vmatprep.subr.mxu0 %v915
    %1420 = vmatpush1.msra.mxu0 %v914
    %1421 = vmatprep.subr.mxu0 %v907
    %1422 = vmatpush1.msra.mxu0 %v906
    %1423 = vmatprep.subr.mxu0 %v899
    %1424 = vmatpush1.msra.mxu0 %v898
    %1425 = vmatprep.subr.mxu0 %v891
    %1426 = vmatpush1.msra.mxu0 %v890
    %1427 = vmatprep.subr.mxu0 %v1139
    %1428 = vmatpush2.msra.mxu0 %v1138
    %1429 = vmatprep.subr.mxu0 %v1131
    %1430 = vmatpush2.msra.mxu0 %v1130
    %1431 = vmatprep.subr.mxu0 %v1123
    %1432 = vmatpush2.msra.mxu0 %v1122
    %1433 = vmatprep.subr.mxu0 %v1115
    %1434 = vmatpush2.msra.mxu0 %v1114
    %1435 = vmatprep.subr.mxu0 %v1107
    %1436 = vmatpush2.msra.mxu0 %v1106
    %1437 = vmatprep.subr.mxu0 %v1099
    %1438 = vmatpush2.msra.mxu0 %v1098
    %1439 = vmatprep.subr.mxu0 %v1091
    %1440 = vmatpush2.msra.mxu0 %v1090
    %1441 = vmatprep.subr.mxu0 %v1083
    %1442 = vmatpush2.msra.mxu0 %v1082
    %1443 = vmatprep.subr.mxu0 %v1075
    %1444 = vmatpush2.msra.mxu0 %v1074
    %1445 = vmatprep.subr.mxu0 %v1067
    %1446 = vmatpush2.msra.mxu0 %v1066
    %1447 = vmatprep.subr.mxu0 %v1059
    %1448 = vmatpush2.msra.mxu0 %v1058
    %1449 = vmatprep.subr.mxu0 %v1051
    %1450 = vmatpush2.msra.mxu0 %v1050
    %1451 = vmatprep.subr.mxu0 %v1043
    %1452 = vmatpush2.msra.mxu0 %v1042
    %1453 = vmatprep.subr.mxu0 %v1035
    %1454 = vmatpush2.msra.mxu0 %v1034
    %1455 = vmatprep.subr.mxu0 %v1027
    %1456 = vmatpush2.msra.mxu0 %v1026
    %1457 = vmatprep.subr.mxu0 %v1019
    %1458 = vmatpush2.msra.mxu0 %v1018
    %1459 = vmatprep.mubr.f32.mxu0 %v309
    %1460 = vmatmul.mubr.f32.gmra.mxu0 %v308
    %v1461 = vpop.f32.mrf.mxu0
    %v1462 = vadd.f32 %v1169, %v1461
    %v1463 = vpop.f32.mrf.mxu0
    %v1464 = vadd.f32 %v1173, %v1463
    %1465 = vdwg.mxu0
    %vm1466 = vcmp.ge.f32.partialorder %v1249, 0.0
    %vm1467 = vcmp.ge.f32.partialorder %v1251, 0.0
    %vm1468 = vcmp.ge.f32.partialorder %v1320, 0.0
    %vm1469 = vcmp.ge.f32.partialorder %v1322, 0.0
    %vm1470 = vcmp.ge.f32.partialorder %v1391, 0.0
    %vm1471 = vcmp.ge.f32.partialorder %v1393, 0.0
    %vm1472 = vcmp.ge.f32.partialorder %v1462, 0.0
    %vm1473 = vcmp.ge.f32.partialorder %v1464, 0.0
    %v1474 = vmul.f32 %v1249, 0.01
    %v1475 = vmul.f32 %v1251, 0.01
    %v1476 = vmul.f32 %v1320, 0.01
    %v1477 = vmul.f32 %v1322, 0.01
    %v1478 = vmul.f32 %v1391, 0.01
    %v1479 = vmul.f32 %v1393, 0.01
    %v1480 = vmul.f32 %v1462, 0.01
    %v1481 = vmul.f32 %v1464, 0.01
    %v1482 = vsel %vm1466, %v1249, %v1474
    %v1483 = vsel %vm1467, %v1251, %v1475
    %v1484 = vsel %vm1468, %v1320, %v1476
    %v1485 = vsel %vm1469, %v1322, %v1477
    %v1486 = vsel %vm1470, %v1391, %v1478
    %v1487 = vsel %vm1471, %v1393, %v1479
    %v1488 = vsel %vm1472, %v1462, %v1480
    %v1489 = vsel %vm1473, %v1464, %v1481
    %v1490 = vld [vmem:[#allocation18] sm:$0xff]
    %v1491 = vld [vmem:[#allocation18 + $0x8] sm:$0xff]
    %v1492 = vld [vmem:[#allocation18 + $0x10] sm:$0xff]
    %v1493 = vld [vmem:[#allocation18 + $0x18] sm:$0xff]
    %v1494 = vld [vmem:[#allocation18 + $0x20] sm:$0xff]
    %v1495 = vld [vmem:[#allocation18 + $0x28] sm:$0xff]
    %v1496 = vld [vmem:[#allocation18 + $0x30] sm:$0xff]
    %v1497 = vld [vmem:[#allocation18 + $0x38] sm:$0xff]
    %v1498 = vld [vmem:[#allocation18 + $0x40] sm:$0xff]
    %v1499 = vld [vmem:[#allocation18 + $0x48] sm:$0xff]
    %v1500 = vld [vmem:[#allocation18 + $0x50] sm:$0xff]
    %v1501 = vld [vmem:[#allocation18 + $0x58] sm:$0xff]
    %v1502 = vld [vmem:[#allocation18 + $0x60] sm:$0xff]
    %v1503 = vld [vmem:[#allocation18 + $0x68] sm:$0xff]
    %v1504 = vld [vmem:[#allocation18 + $0x70] sm:$0xff]
    %v1505 = vld [vmem:[#allocation18 + $0x78] sm:$0xff]
    %v1506 = vld [vmem:[#allocation18 + $0x80] sm:$0xff]
    %v1507 = vld [vmem:[#allocation18 + $0x88] sm:$0xff]
    %v1508 = vld [vmem:[#allocation18 + $0x90] sm:$0xff]
    %v1509 = vld [vmem:[#allocation18 + $0x98] sm:$0xff]
    %v1510 = vld [vmem:[#allocation18 + $0xa0] sm:$0xff]
    %v1511 = vld [vmem:[#allocation18 + $0xa8] sm:$0xff]
    %v1512 = vld [vmem:[#allocation18 + $0xb0] sm:$0xff]
    %v1513 = vld [vmem:[#allocation18 + $0xb8] sm:$0xff]
    %v1514 = vld [vmem:[#allocation18 + $0xc0] sm:$0xff]
    %v1515 = vld [vmem:[#allocation18 + $0xc8] sm:$0xff]
    %v1516 = vld [vmem:[#allocation18 + $0xd0] sm:$0xff]
    %v1517 = vld [vmem:[#allocation18 + $0xd8] sm:$0xff]
    %v1518 = vld [vmem:[#allocation18 + $0xe0] sm:$0xff]
    %v1519 = vld [vmem:[#allocation18 + $0xe8] sm:$0xff]
    %v1520 = vld [vmem:[#allocation18 + $0xf0] sm:$0xff]
    %v1521 = vld [vmem:[#allocation18 + $0xf8] sm:$0xff]
    %v1522 = vld [vmem:[#allocation18 + $0x100] sm:$0xff]
    %v1523 = vld [vmem:[#allocation18 + $0x108] sm:$0xff]
    %v1524 = vld [vmem:[#allocation18 + $0x110] sm:$0xff]
    %v1525 = vld [vmem:[#allocation18 + $0x118] sm:$0xff]
    %v1526 = vld [vmem:[#allocation18 + $0x120] sm:$0xff]
    %v1527 = vld [vmem:[#allocation18 + $0x128] sm:$0xff]
    %v1528 = vld [vmem:[#allocation18 + $0x130] sm:$0xff]
    %v1529 = vld [vmem:[#allocation18 + $0x138] sm:$0xff]
    %v1530 = vld [vmem:[#allocation18 + $0x140] sm:$0xff]
    %v1531 = vld [vmem:[#allocation18 + $0x148] sm:$0xff]
    %v1532 = vld [vmem:[#allocation18 + $0x150] sm:$0xff]
    %v1533 = vld [vmem:[#allocation18 + $0x158] sm:$0xff]
    %v1534 = vld [vmem:[#allocation18 + $0x160] sm:$0xff]
    %v1535 = vld [vmem:[#allocation18 + $0x168] sm:$0xff]
    %v1536 = vld [vmem:[#allocation18 + $0x170] sm:$0xff]
    %v1537 = vld [vmem:[#allocation18 + $0x178] sm:$0xff]
    %v1538 = vld [vmem:[#allocation18 + $0x180] sm:$0xff]
    %v1539 = vld [vmem:[#allocation18 + $0x188] sm:$0xff]
    %v1540 = vld [vmem:[#allocation18 + $0x190] sm:$0xff]
    %v1541 = vld [vmem:[#allocation18 + $0x198] sm:$0xff]
    %v1542 = vld [vmem:[#allocation18 + $0x1a0] sm:$0xff]
    %v1543 = vld [vmem:[#allocation18 + $0x1a8] sm:$0xff]
    %v1544 = vld [vmem:[#allocation18 + $0x1b0] sm:$0xff]
    %v1545 = vld [vmem:[#allocation18 + $0x1b8] sm:$0xff]
    %v1546 = vld [vmem:[#allocation18 + $0x1c0] sm:$0xff]
    %v1547 = vld [vmem:[#allocation18 + $0x1c8] sm:$0xff]
    %v1548 = vld [vmem:[#allocation18 + $0x1d0] sm:$0xff]
    %v1549 = vld [vmem:[#allocation18 + $0x1d8] sm:$0xff]
    %v1550 = vld [vmem:[#allocation18 + $0x1e0] sm:$0xff]
    %v1551 = vld [vmem:[#allocation18 + $0x1e8] sm:$0xff]
    %v1552 = vld [vmem:[#allocation18 + $0x1f0] sm:$0xff]
    %v1553 = vld [vmem:[#allocation18 + $0x1f8] sm:$0xff]
    %v1554 = vld [vmem:[#allocation18 + $0x200] sm:$0xff]
    %v1555 = vld [vmem:[#allocation18 + $0x208] sm:$0xff]
    %v1556 = vld [vmem:[#allocation18 + $0x210] sm:$0xff]
    %v1557 = vld [vmem:[#allocation18 + $0x218] sm:$0xff]
    %v1558 = vld [vmem:[#allocation18 + $0x220] sm:$0xff]
    %v1559 = vld [vmem:[#allocation18 + $0x228] sm:$0xff]
    %v1560 = vld [vmem:[#allocation18 + $0x230] sm:$0xff]
    %v1561 = vld [vmem:[#allocation18 + $0x238] sm:$0xff]
    %v1562 = vld [vmem:[#allocation18 + $0x240] sm:$0xff]
    %v1563 = vld [vmem:[#allocation18 + $0x248] sm:$0xff]
    %v1564 = vld [vmem:[#allocation18 + $0x250] sm:$0xff]
    %v1565 = vld [vmem:[#allocation18 + $0x258] sm:$0xff]
    %v1566 = vld [vmem:[#allocation18 + $0x260] sm:$0xff]
    %v1567 = vld [vmem:[#allocation18 + $0x268] sm:$0xff]
    %v1568 = vld [vmem:[#allocation18 + $0x270] sm:$0xff]
    %v1569 = vld [vmem:[#allocation18 + $0x278] sm:$0xff]
    %v1570 = vld [vmem:[#allocation18 + $0x280] sm:$0xff]
    %v1571 = vld [vmem:[#allocation18 + $0x288] sm:$0xff]
    %v1572 = vld [vmem:[#allocation18 + $0x290] sm:$0xff]
    %v1573 = vld [vmem:[#allocation18 + $0x298] sm:$0xff]
    %v1574 = vld [vmem:[#allocation18 + $0x2a0] sm:$0xff]
    %v1575 = vld [vmem:[#allocation18 + $0x2a8] sm:$0xff]
    %v1576 = vld [vmem:[#allocation18 + $0x2b0] sm:$0xff]
    %v1577 = vld [vmem:[#allocation18 + $0x2b8] sm:$0xff]
    %v1578 = vld [vmem:[#allocation18 + $0x2c0] sm:$0xff]
    %v1579 = vld [vmem:[#allocation18 + $0x2c8] sm:$0xff]
    %v1580 = vld [vmem:[#allocation18 + $0x2d0] sm:$0xff]
    %v1581 = vld [vmem:[#allocation18 + $0x2d8] sm:$0xff]
    %v1582 = vld [vmem:[#allocation18 + $0x2e0] sm:$0xff]
    %v1583 = vld [vmem:[#allocation18 + $0x2e8] sm:$0xff]
    %v1584 = vld [vmem:[#allocation18 + $0x2f0] sm:$0xff]
    %v1585 = vld [vmem:[#allocation18 + $0x2f8] sm:$0xff]
    %v1586 = vld [vmem:[#allocation18 + $0x300] sm:$0xff]
    %v1587 = vld [vmem:[#allocation18 + $0x308] sm:$0xff]
    %v1588 = vld [vmem:[#allocation18 + $0x310] sm:$0xff]
    %v1589 = vld [vmem:[#allocation18 + $0x318] sm:$0xff]
    %v1590 = vld [vmem:[#allocation18 + $0x320] sm:$0xff]
    %v1591 = vld [vmem:[#allocation18 + $0x328] sm:$0xff]
    %v1592 = vld [vmem:[#allocation18 + $0x330] sm:$0xff]
    %v1593 = vld [vmem:[#allocation18 + $0x338] sm:$0xff]
    %v1594 = vld [vmem:[#allocation18 + $0x340] sm:$0xff]
    %v1595 = vld [vmem:[#allocation18 + $0x348] sm:$0xff]
    %v1596 = vld [vmem:[#allocation18 + $0x350] sm:$0xff]
    %v1597 = vld [vmem:[#allocation18 + $0x358] sm:$0xff]
    %v1598 = vld [vmem:[#allocation18 + $0x360] sm:$0xff]
    %v1599 = vld [vmem:[#allocation18 + $0x368] sm:$0xff]
    %v1600 = vld [vmem:[#allocation18 + $0x370] sm:$0xff]
    %v1601 = vld [vmem:[#allocation18 + $0x378] sm:$0xff]
    %v1602 = vld [vmem:[#allocation18 + $0x380] sm:$0xff]
    %v1603 = vld [vmem:[#allocation18 + $0x388] sm:$0xff]
    %v1604 = vld [vmem:[#allocation18 + $0x390] sm:$0xff]
    %v1605 = vld [vmem:[#allocation18 + $0x398] sm:$0xff]
    %v1606 = vld [vmem:[#allocation18 + $0x3a0] sm:$0xff]
    %v1607 = vld [vmem:[#allocation18 + $0x3a8] sm:$0xff]
    %v1608 = vld [vmem:[#allocation18 + $0x3b0] sm:$0xff]
    %v1609 = vld [vmem:[#allocation18 + $0x3b8] sm:$0xff]
    %v1610 = vld [vmem:[#allocation18 + $0x3c0] sm:$0xff]
    %v1611 = vld [vmem:[#allocation18 + $0x3c8] sm:$0xff]
    %v1612 = vld [vmem:[#allocation18 + $0x3d0] sm:$0xff]
    %v1613 = vld [vmem:[#allocation18 + $0x3d8] sm:$0xff]
    %v1614 = vld [vmem:[#allocation18 + $0x3e0] sm:$0xff]
    %v1615 = vld [vmem:[#allocation18 + $0x3e8] sm:$0xff]
    %v1616 = vld [vmem:[#allocation18 + $0x3f0] sm:$0xff]
    %v1617 = vld [vmem:[#allocation18 + $0x3f8] sm:$0xff]
    %v1618 = vld [vmem:[#allocation18 + $0x400] sm:$0xff]
    %v1619 = vld [vmem:[#allocation18 + $0x408] sm:$0xff]
    %v1620 = vld [vmem:[#allocation18 + $0x410] sm:$0xff]
    %v1621 = vld [vmem:[#allocation18 + $0x418] sm:$0xff]
    %v1622 = vld [vmem:[#allocation18 + $0x420] sm:$0xff]
    %v1623 = vld [vmem:[#allocation18 + $0x428] sm:$0xff]
    %v1624 = vld [vmem:[#allocation18 + $0x430] sm:$0xff]
    %v1625 = vld [vmem:[#allocation18 + $0x438] sm:$0xff]
    %v1626 = vld [vmem:[#allocation18 + $0x440] sm:$0xff]
    %v1627 = vld [vmem:[#allocation18 + $0x448] sm:$0xff]
    %v1628 = vld [vmem:[#allocation18 + $0x450] sm:$0xff]
    %v1629 = vld [vmem:[#allocation18 + $0x458] sm:$0xff]
    %v1630 = vld [vmem:[#allocation18 + $0x460] sm:$0xff]
    %v1631 = vld [vmem:[#allocation18 + $0x468] sm:$0xff]
    %v1632 = vld [vmem:[#allocation18 + $0x470] sm:$0xff]
    %v1633 = vld [vmem:[#allocation18 + $0x478] sm:$0xff]
    %v1634 = vld [vmem:[#allocation18 + $0x480] sm:$0xff]
    %v1635 = vld [vmem:[#allocation18 + $0x488] sm:$0xff]
    %v1636 = vld [vmem:[#allocation18 + $0x490] sm:$0xff]
    %v1637 = vld [vmem:[#allocation18 + $0x498] sm:$0xff]
    %v1638 = vld [vmem:[#allocation18 + $0x4a0] sm:$0xff]
    %v1639 = vld [vmem:[#allocation18 + $0x4a8] sm:$0xff]
    %v1640 = vld [vmem:[#allocation18 + $0x4b0] sm:$0xff]
    %v1641 = vld [vmem:[#allocation18 + $0x4b8] sm:$0xff]
    %v1642 = vld [vmem:[#allocation18 + $0x4c0] sm:$0xff]
    %v1643 = vld [vmem:[#allocation18 + $0x4c8] sm:$0xff]
    %v1644 = vld [vmem:[#allocation18 + $0x4d0] sm:$0xff]
    %v1645 = vld [vmem:[#allocation18 + $0x4d8] sm:$0xff]
    %v1646 = vld [vmem:[#allocation18 + $0x4e0] sm:$0xff]
    %v1647 = vld [vmem:[#allocation18 + $0x4e8] sm:$0xff]
    %v1648 = vld [vmem:[#allocation18 + $0x4f0] sm:$0xff]
    %v1649 = vld [vmem:[#allocation18 + $0x4f8] sm:$0xff]
    %v1650 = vld [vmem:[#allocation18 + $0x500] sm:$0xff]
    %v1651 = vld [vmem:[#allocation18 + $0x508] sm:$0xff]
    %v1652 = vld [vmem:[#allocation18 + $0x510] sm:$0xff]
    %v1653 = vld [vmem:[#allocation18 + $0x518] sm:$0xff]
    %v1654 = vld [vmem:[#allocation18 + $0x520] sm:$0xff]
    %v1655 = vld [vmem:[#allocation18 + $0x528] sm:$0xff]
    %v1656 = vld [vmem:[#allocation18 + $0x530] sm:$0xff]
    %v1657 = vld [vmem:[#allocation18 + $0x538] sm:$0xff]
    %v1658 = vld [vmem:[#allocation18 + $0x540] sm:$0xff]
    %v1659 = vld [vmem:[#allocation18 + $0x548] sm:$0xff]
    %v1660 = vld [vmem:[#allocation18 + $0x550] sm:$0xff]
    %v1661 = vld [vmem:[#allocation18 + $0x558] sm:$0xff]
    %v1662 = vld [vmem:[#allocation18 + $0x560] sm:$0xff]
    %v1663 = vld [vmem:[#allocation18 + $0x568] sm:$0xff]
    %v1664 = vld [vmem:[#allocation18 + $0x570] sm:$0xff]
    %v1665 = vld [vmem:[#allocation18 + $0x578] sm:$0xff]
    %v1666 = vld [vmem:[#allocation18 + $0x580] sm:$0xff]
    %v1667 = vld [vmem:[#allocation18 + $0x588] sm:$0xff]
    %v1668 = vld [vmem:[#allocation18 + $0x590] sm:$0xff]
    %v1669 = vld [vmem:[#allocation18 + $0x598] sm:$0xff]
    %v1670 = vld [vmem:[#allocation18 + $0x5a0] sm:$0xff]
    %v1671 = vld [vmem:[#allocation18 + $0x5a8] sm:$0xff]
    %v1672 = vld [vmem:[#allocation18 + $0x5b0] sm:$0xff]
    %v1673 = vld [vmem:[#allocation18 + $0x5b8] sm:$0xff]
    %v1674 = vld [vmem:[#allocation18 + $0x5c0] sm:$0xff]
    %v1675 = vld [vmem:[#allocation18 + $0x5c8] sm:$0xff]
    %v1676 = vld [vmem:[#allocation18 + $0x5d0] sm:$0xff]
    %v1677 = vld [vmem:[#allocation18 + $0x5d8] sm:$0xff]
    %v1678 = vld [vmem:[#allocation18 + $0x5e0] sm:$0xff]
    %v1679 = vld [vmem:[#allocation18 + $0x5e8] sm:$0xff]
    %v1680 = vld [vmem:[#allocation18 + $0x5f0] sm:$0xff]
    %v1681 = vld [vmem:[#allocation18 + $0x5f8] sm:$0xff]
    %v1682 = vld [vmem:[#allocation18 + $0x600] sm:$0xff]
    %v1683 = vld [vmem:[#allocation18 + $0x608] sm:$0xff]
    %v1684 = vld [vmem:[#allocation18 + $0x610] sm:$0xff]
    %v1685 = vld [vmem:[#allocation18 + $0x618] sm:$0xff]
    %v1686 = vld [vmem:[#allocation18 + $0x620] sm:$0xff]
    %v1687 = vld [vmem:[#allocation18 + $0x628] sm:$0xff]
    %v1688 = vld [vmem:[#allocation18 + $0x630] sm:$0xff]
    %v1689 = vld [vmem:[#allocation18 + $0x638] sm:$0xff]
    %v1690 = vld [vmem:[#allocation18 + $0x640] sm:$0xff]
    %v1691 = vld [vmem:[#allocation18 + $0x648] sm:$0xff]
    %v1692 = vld [vmem:[#allocation18 + $0x650] sm:$0xff]
    %v1693 = vld [vmem:[#allocation18 + $0x658] sm:$0xff]
    %v1694 = vld [vmem:[#allocation18 + $0x660] sm:$0xff]
    %v1695 = vld [vmem:[#allocation18 + $0x668] sm:$0xff]
    %v1696 = vld [vmem:[#allocation18 + $0x670] sm:$0xff]
    %v1697 = vld [vmem:[#allocation18 + $0x678] sm:$0xff]
    %v1698 = vld [vmem:[#allocation18 + $0x680] sm:$0xff]
    %v1699 = vld [vmem:[#allocation18 + $0x688] sm:$0xff]
    %v1700 = vld [vmem:[#allocation18 + $0x690] sm:$0xff]
    %v1701 = vld [vmem:[#allocation18 + $0x698] sm:$0xff]
    %v1702 = vld [vmem:[#allocation18 + $0x6a0] sm:$0xff]
    %v1703 = vld [vmem:[#allocation18 + $0x6a8] sm:$0xff]
    %v1704 = vld [vmem:[#allocation18 + $0x6b0] sm:$0xff]
    %v1705 = vld [vmem:[#allocation18 + $0x6b8] sm:$0xff]
    %v1706 = vld [vmem:[#allocation18 + $0x6c0] sm:$0xff]
    %v1707 = vld [vmem:[#allocation18 + $0x6c8] sm:$0xff]
    %v1708 = vld [vmem:[#allocation18 + $0x6d0] sm:$0xff]
    %v1709 = vld [vmem:[#allocation18 + $0x6d8] sm:$0xff]
    %v1710 = vld [vmem:[#allocation18 + $0x6e0] sm:$0xff]
    %v1711 = vld [vmem:[#allocation18 + $0x6e8] sm:$0xff]
    %v1712 = vld [vmem:[#allocation18 + $0x6f0] sm:$0xff]
    %v1713 = vld [vmem:[#allocation18 + $0x6f8] sm:$0xff]
    %v1714 = vld [vmem:[#allocation18 + $0x700] sm:$0xff]
    %v1715 = vld [vmem:[#allocation18 + $0x708] sm:$0xff]
    %v1716 = vld [vmem:[#allocation18 + $0x710] sm:$0xff]
    %v1717 = vld [vmem:[#allocation18 + $0x718] sm:$0xff]
    %v1718 = vld [vmem:[#allocation18 + $0x720] sm:$0xff]
    %v1719 = vld [vmem:[#allocation18 + $0x728] sm:$0xff]
    %v1720 = vld [vmem:[#allocation18 + $0x730] sm:$0xff]
    %v1721 = vld [vmem:[#allocation18 + $0x738] sm:$0xff]
    %v1722 = vld [vmem:[#allocation18 + $0x740] sm:$0xff]
    %v1723 = vld [vmem:[#allocation18 + $0x748] sm:$0xff]
    %v1724 = vld [vmem:[#allocation18 + $0x750] sm:$0xff]
    %v1725 = vld [vmem:[#allocation18 + $0x758] sm:$0xff]
    %v1726 = vld [vmem:[#allocation18 + $0x760] sm:$0xff]
    %v1727 = vld [vmem:[#allocation18 + $0x768] sm:$0xff]
    %v1728 = vld [vmem:[#allocation18 + $0x770] sm:$0xff]
    %v1729 = vld [vmem:[#allocation18 + $0x778] sm:$0xff]
    %v1730 = vld [vmem:[#allocation18 + $0x780] sm:$0xff]
    %v1731 = vld [vmem:[#allocation18 + $0x788] sm:$0xff]
    %v1732 = vld [vmem:[#allocation18 + $0x790] sm:$0xff]
    %v1733 = vld [vmem:[#allocation18 + $0x798] sm:$0xff]
    %v1734 = vld [vmem:[#allocation18 + $0x7a0] sm:$0xff]
    %v1735 = vld [vmem:[#allocation18 + $0x7a8] sm:$0xff]
    %v1736 = vld [vmem:[#allocation18 + $0x7b0] sm:$0xff]
    %v1737 = vld [vmem:[#allocation18 + $0x7b8] sm:$0xff]
    %v1738 = vld [vmem:[#allocation18 + $0x7c0] sm:$0xff]
    %v1739 = vld [vmem:[#allocation18 + $0x7c8] sm:$0xff]
    %v1740 = vld [vmem:[#allocation18 + $0x7d0] sm:$0xff]
    %v1741 = vld [vmem:[#allocation18 + $0x7d8] sm:$0xff]
    %v1742 = vld [vmem:[#allocation18 + $0x7e0] sm:$0xff]
    %v1743 = vld [vmem:[#allocation18 + $0x7e8] sm:$0xff]
    %v1744 = vld [vmem:[#allocation18 + $0x7f0] sm:$0xff]
    %v1745 = vld [vmem:[#allocation18 + $0x7f8] sm:$0xff]
    %v1746 = vld [vmem:[#allocation18 + $0x800] sm:$0xff]
    %v1747 = vld [vmem:[#allocation18 + $0x808] sm:$0xff]
    %v1748 = vld [vmem:[#allocation18 + $0x810] sm:$0xff]
    %v1749 = vld [vmem:[#allocation18 + $0x818] sm:$0xff]
    %v1750 = vld [vmem:[#allocation18 + $0x820] sm:$0xff]
    %v1751 = vld [vmem:[#allocation18 + $0x828] sm:$0xff]
    %v1752 = vld [vmem:[#allocation18 + $0x830] sm:$0xff]
    %v1753 = vld [vmem:[#allocation18 + $0x838] sm:$0xff]
    %v1754 = vld [vmem:[#allocation18 + $0x840] sm:$0xff]
    %v1755 = vld [vmem:[#allocation18 + $0x848] sm:$0xff]
    %v1756 = vld [vmem:[#allocation18 + $0x850] sm:$0xff]
    %v1757 = vld [vmem:[#allocation18 + $0x858] sm:$0xff]
    %v1758 = vld [vmem:[#allocation18 + $0x860] sm:$0xff]
    %v1759 = vld [vmem:[#allocation18 + $0x868] sm:$0xff]
    %v1760 = vld [vmem:[#allocation18 + $0x870] sm:$0xff]
    %v1761 = vld [vmem:[#allocation18 + $0x878] sm:$0xff]
    %v1762 = vld [vmem:[#allocation18 + $0x880] sm:$0xff]
    %v1763 = vld [vmem:[#allocation18 + $0x888] sm:$0xff]
    %v1764 = vld [vmem:[#allocation18 + $0x890] sm:$0xff]
    %v1765 = vld [vmem:[#allocation18 + $0x898] sm:$0xff]
    %v1766 = vld [vmem:[#allocation18 + $0x8a0] sm:$0xff]
    %v1767 = vld [vmem:[#allocation18 + $0x8a8] sm:$0xff]
    %v1768 = vld [vmem:[#allocation18 + $0x8b0] sm:$0xff]
    %v1769 = vld [vmem:[#allocation18 + $0x8b8] sm:$0xff]
    %v1770 = vld [vmem:[#allocation18 + $0x8c0] sm:$0xff]
    %v1771 = vld [vmem:[#allocation18 + $0x8c8] sm:$0xff]
    %v1772 = vld [vmem:[#allocation18 + $0x8d0] sm:$0xff]
    %v1773 = vld [vmem:[#allocation18 + $0x8d8] sm:$0xff]
    %v1774 = vld [vmem:[#allocation18 + $0x8e0] sm:$0xff]
    %v1775 = vld [vmem:[#allocation18 + $0x8e8] sm:$0xff]
    %v1776 = vld [vmem:[#allocation18 + $0x8f0] sm:$0xff]
    %v1777 = vld [vmem:[#allocation18 + $0x8f8] sm:$0xff]
    %v1778 = vld [vmem:[#allocation18 + $0x900] sm:$0xff]
    %v1779 = vld [vmem:[#allocation18 + $0x908] sm:$0xff]
    %v1780 = vld [vmem:[#allocation18 + $0x910] sm:$0xff]
    %v1781 = vld [vmem:[#allocation18 + $0x918] sm:$0xff]
    %v1782 = vld [vmem:[#allocation18 + $0x920] sm:$0xff]
    %v1783 = vld [vmem:[#allocation18 + $0x928] sm:$0xff]
    %v1784 = vld [vmem:[#allocation18 + $0x930] sm:$0xff]
    %v1785 = vld [vmem:[#allocation18 + $0x938] sm:$0xff]
    %v1786 = vld [vmem:[#allocation18 + $0x940] sm:$0xff]
    %v1787 = vld [vmem:[#allocation18 + $0x948] sm:$0xff]
    %v1788 = vld [vmem:[#allocation18 + $0x950] sm:$0xff]
    %v1789 = vld [vmem:[#allocation18 + $0x958] sm:$0xff]
    %v1790 = vld [vmem:[#allocation18 + $0x960] sm:$0xff]
    %v1791 = vld [vmem:[#allocation18 + $0x968] sm:$0xff]
    %v1792 = vld [vmem:[#allocation18 + $0x970] sm:$0xff]
    %v1793 = vld [vmem:[#allocation18 + $0x978] sm:$0xff]
    %v1794 = vld [vmem:[#allocation18 + $0x980] sm:$0xff]
    %v1795 = vld [vmem:[#allocation18 + $0x988] sm:$0xff]
    %v1796 = vld [vmem:[#allocation18 + $0x990] sm:$0xff]
    %v1797 = vld [vmem:[#allocation18 + $0x998] sm:$0xff]
    %v1798 = vld [vmem:[#allocation18 + $0x9a0] sm:$0xff]
    %v1799 = vld [vmem:[#allocation18 + $0x9a8] sm:$0xff]
    %v1800 = vld [vmem:[#allocation18 + $0x9b0] sm:$0xff]
    %v1801 = vld [vmem:[#allocation18 + $0x9b8] sm:$0xff]
    %v1802 = vld [vmem:[#allocation18 + $0x9c0] sm:$0xff]
    %v1803 = vld [vmem:[#allocation18 + $0x9c8] sm:$0xff]
    %v1804 = vld [vmem:[#allocation18 + $0x9d0] sm:$0xff]
    %v1805 = vld [vmem:[#allocation18 + $0x9d8] sm:$0xff]
    %v1806 = vld [vmem:[#allocation18 + $0x9e0] sm:$0xff]
    %v1807 = vld [vmem:[#allocation18 + $0x9e8] sm:$0xff]
    %v1808 = vld [vmem:[#allocation18 + $0x9f0] sm:$0xff]
    %v1809 = vld [vmem:[#allocation18 + $0x9f8] sm:$0xff]
    %v1810 = vld [vmem:[#allocation18 + $0xa00] sm:$0xff]
    %v1811 = vld [vmem:[#allocation18 + $0xa08] sm:$0xff]
    %v1812 = vld [vmem:[#allocation18 + $0xa10] sm:$0xff]
    %v1813 = vld [vmem:[#allocation18 + $0xa18] sm:$0xff]
    %v1814 = vld [vmem:[#allocation18 + $0xa20] sm:$0xff]
    %v1815 = vld [vmem:[#allocation18 + $0xa28] sm:$0xff]
    %v1816 = vld [vmem:[#allocation18 + $0xa30] sm:$0xff]
    %v1817 = vld [vmem:[#allocation18 + $0xa38] sm:$0xff]
    %v1818 = vld [vmem:[#allocation18 + $0xa40] sm:$0xff]
    %v1819 = vld [vmem:[#allocation18 + $0xa48] sm:$0xff]
    %v1820 = vld [vmem:[#allocation18 + $0xa50] sm:$0xff]
    %v1821 = vld [vmem:[#allocation18 + $0xa58] sm:$0xff]
    %v1822 = vld [vmem:[#allocation18 + $0xa60] sm:$0xff]
    %v1823 = vld [vmem:[#allocation18 + $0xa68] sm:$0xff]
    %v1824 = vld [vmem:[#allocation18 + $0xa70] sm:$0xff]
    %v1825 = vld [vmem:[#allocation18 + $0xa78] sm:$0xff]
    %v1826 = vld [vmem:[#allocation18 + $0xa80] sm:$0xff]
    %v1827 = vld [vmem:[#allocation18 + $0xa88] sm:$0xff]
    %v1828 = vld [vmem:[#allocation18 + $0xa90] sm:$0xff]
    %v1829 = vld [vmem:[#allocation18 + $0xa98] sm:$0xff]
    %v1830 = vld [vmem:[#allocation18 + $0xaa0] sm:$0xff]
    %v1831 = vld [vmem:[#allocation18 + $0xaa8] sm:$0xff]
    %v1832 = vld [vmem:[#allocation18 + $0xab0] sm:$0xff]
    %v1833 = vld [vmem:[#allocation18 + $0xab8] sm:$0xff]
    %v1834 = vld [vmem:[#allocation18 + $0xac0] sm:$0xff]
    %v1835 = vld [vmem:[#allocation18 + $0xac8] sm:$0xff]
    %v1836 = vld [vmem:[#allocation18 + $0xad0] sm:$0xff]
    %v1837 = vld [vmem:[#allocation18 + $0xad8] sm:$0xff]
    %v1838 = vld [vmem:[#allocation18 + $0xae0] sm:$0xff]
    %v1839 = vld [vmem:[#allocation18 + $0xae8] sm:$0xff]
    %v1840 = vld [vmem:[#allocation18 + $0xaf0] sm:$0xff]
    %v1841 = vld [vmem:[#allocation18 + $0xaf8] sm:$0xff]
    %v1842 = vld [vmem:[#allocation18 + $0xb00] sm:$0xff]
    %v1843 = vld [vmem:[#allocation18 + $0xb08] sm:$0xff]
    %v1844 = vld [vmem:[#allocation18 + $0xb10] sm:$0xff]
    %v1845 = vld [vmem:[#allocation18 + $0xb18] sm:$0xff]
    %v1846 = vld [vmem:[#allocation18 + $0xb20] sm:$0xff]
    %v1847 = vld [vmem:[#allocation18 + $0xb28] sm:$0xff]
    %v1848 = vld [vmem:[#allocation18 + $0xb30] sm:$0xff]
    %v1849 = vld [vmem:[#allocation18 + $0xb38] sm:$0xff]
    %v1850 = vld [vmem:[#allocation18 + $0xb40] sm:$0xff]
    %v1851 = vld [vmem:[#allocation18 + $0xb48] sm:$0xff]
    %v1852 = vld [vmem:[#allocation18 + $0xb50] sm:$0xff]
    %v1853 = vld [vmem:[#allocation18 + $0xb58] sm:$0xff]
    %v1854 = vld [vmem:[#allocation18 + $0xb60] sm:$0xff]
    %v1855 = vld [vmem:[#allocation18 + $0xb68] sm:$0xff]
    %v1856 = vld [vmem:[#allocation18 + $0xb70] sm:$0xff]
    %v1857 = vld [vmem:[#allocation18 + $0xb78] sm:$0xff]
    %v1858 = vld [vmem:[#allocation18 + $0xb80] sm:$0xff]
    %v1859 = vld [vmem:[#allocation18 + $0xb88] sm:$0xff]
    %v1860 = vld [vmem:[#allocation18 + $0xb90] sm:$0xff]
    %v1861 = vld [vmem:[#allocation18 + $0xb98] sm:$0xff]
    %v1862 = vld [vmem:[#allocation18 + $0xba0] sm:$0xff]
    %v1863 = vld [vmem:[#allocation18 + $0xba8] sm:$0xff]
    %v1864 = vld [vmem:[#allocation18 + $0xbb0] sm:$0xff]
    %v1865 = vld [vmem:[#allocation18 + $0xbb8] sm:$0xff]
    %v1866 = vld [vmem:[#allocation18 + $0xbc0] sm:$0xff]
    %v1867 = vld [vmem:[#allocation18 + $0xbc8] sm:$0xff]
    %v1868 = vld [vmem:[#allocation18 + $0xbd0] sm:$0xff]
    %v1869 = vld [vmem:[#allocation18 + $0xbd8] sm:$0xff]
    %v1870 = vld [vmem:[#allocation18 + $0xbe0] sm:$0xff]
    %v1871 = vld [vmem:[#allocation18 + $0xbe8] sm:$0xff]
    %v1872 = vld [vmem:[#allocation18 + $0xbf0] sm:$0xff]
    %v1873 = vld [vmem:[#allocation18 + $0xbf8] sm:$0xff]
    %v1874 = vld [vmem:[#allocation18 + $0xc00] sm:$0xff]
    %v1875 = vld [vmem:[#allocation18 + $0xc08] sm:$0xff]
    %v1876 = vld [vmem:[#allocation18 + $0xc10] sm:$0xff]
    %v1877 = vld [vmem:[#allocation18 + $0xc18] sm:$0xff]
    %v1878 = vld [vmem:[#allocation18 + $0xc20] sm:$0xff]
    %v1879 = vld [vmem:[#allocation18 + $0xc28] sm:$0xff]
    %v1880 = vld [vmem:[#allocation18 + $0xc30] sm:$0xff]
    %v1881 = vld [vmem:[#allocation18 + $0xc38] sm:$0xff]
    %v1882 = vld [vmem:[#allocation18 + $0xc40] sm:$0xff]
    %v1883 = vld [vmem:[#allocation18 + $0xc48] sm:$0xff]
    %v1884 = vld [vmem:[#allocation18 + $0xc50] sm:$0xff]
    %v1885 = vld [vmem:[#allocation18 + $0xc58] sm:$0xff]
    %v1886 = vld [vmem:[#allocation18 + $0xc60] sm:$0xff]
    %v1887 = vld [vmem:[#allocation18 + $0xc68] sm:$0xff]
    %v1888 = vld [vmem:[#allocation18 + $0xc70] sm:$0xff]
    %v1889 = vld [vmem:[#allocation18 + $0xc78] sm:$0xff]
    %v1890 = vld [vmem:[#allocation18 + $0xc80] sm:$0xff]
    %v1891 = vld [vmem:[#allocation18 + $0xc88] sm:$0xff]
    %v1892 = vld [vmem:[#allocation18 + $0xc90] sm:$0xff]
    %v1893 = vld [vmem:[#allocation18 + $0xc98] sm:$0xff]
    %v1894 = vld [vmem:[#allocation18 + $0xca0] sm:$0xff]
    %v1895 = vld [vmem:[#allocation18 + $0xca8] sm:$0xff]
    %v1896 = vld [vmem:[#allocation18 + $0xcb0] sm:$0xff]
    %v1897 = vld [vmem:[#allocation18 + $0xcb8] sm:$0xff]
    %v1898 = vld [vmem:[#allocation18 + $0xcc0] sm:$0xff]
    %v1899 = vld [vmem:[#allocation18 + $0xcc8] sm:$0xff]
    %v1900 = vld [vmem:[#allocation18 + $0xcd0] sm:$0xff]
    %v1901 = vld [vmem:[#allocation18 + $0xcd8] sm:$0xff]
    %v1902 = vld [vmem:[#allocation18 + $0xce0] sm:$0xff]
    %v1903 = vld [vmem:[#allocation18 + $0xce8] sm:$0xff]
    %v1904 = vld [vmem:[#allocation18 + $0xcf0] sm:$0xff]
    %v1905 = vld [vmem:[#allocation18 + $0xcf8] sm:$0xff]
    %v1906 = vld [vmem:[#allocation18 + $0xd00] sm:$0xff]
    %v1907 = vld [vmem:[#allocation18 + $0xd08] sm:$0xff]
    %v1908 = vld [vmem:[#allocation18 + $0xd10] sm:$0xff]
    %v1909 = vld [vmem:[#allocation18 + $0xd18] sm:$0xff]
    %v1910 = vld [vmem:[#allocation18 + $0xd20] sm:$0xff]
    %v1911 = vld [vmem:[#allocation18 + $0xd28] sm:$0xff]
    %v1912 = vld [vmem:[#allocation18 + $0xd30] sm:$0xff]
    %v1913 = vld [vmem:[#allocation18 + $0xd38] sm:$0xff]
    %v1914 = vld [vmem:[#allocation18 + $0xd40] sm:$0xff]
    %v1915 = vld [vmem:[#allocation18 + $0xd48] sm:$0xff]
    %v1916 = vld [vmem:[#allocation18 + $0xd50] sm:$0xff]
    %v1917 = vld [vmem:[#allocation18 + $0xd58] sm:$0xff]
    %v1918 = vld [vmem:[#allocation18 + $0xd60] sm:$0xff]
    %v1919 = vld [vmem:[#allocation18 + $0xd68] sm:$0xff]
    %v1920 = vld [vmem:[#allocation18 + $0xd70] sm:$0xff]
    %v1921 = vld [vmem:[#allocation18 + $0xd78] sm:$0xff]
    %v1922 = vld [vmem:[#allocation18 + $0xd80] sm:$0xff]
    %v1923 = vld [vmem:[#allocation18 + $0xd88] sm:$0xff]
    %v1924 = vld [vmem:[#allocation18 + $0xd90] sm:$0xff]
    %v1925 = vld [vmem:[#allocation18 + $0xd98] sm:$0xff]
    %v1926 = vld [vmem:[#allocation18 + $0xda0] sm:$0xff]
    %v1927 = vld [vmem:[#allocation18 + $0xda8] sm:$0xff]
    %v1928 = vld [vmem:[#allocation18 + $0xdb0] sm:$0xff]
    %v1929 = vld [vmem:[#allocation18 + $0xdb8] sm:$0xff]
    %v1930 = vld [vmem:[#allocation18 + $0xdc0] sm:$0xff]
    %v1931 = vld [vmem:[#allocation18 + $0xdc8] sm:$0xff]
    %v1932 = vld [vmem:[#allocation18 + $0xdd0] sm:$0xff]
    %v1933 = vld [vmem:[#allocation18 + $0xdd8] sm:$0xff]
    %v1934 = vld [vmem:[#allocation18 + $0xde0] sm:$0xff]
    %v1935 = vld [vmem:[#allocation18 + $0xde8] sm:$0xff]
    %v1936 = vld [vmem:[#allocation18 + $0xdf0] sm:$0xff]
    %v1937 = vld [vmem:[#allocation18 + $0xdf8] sm:$0xff]
    %v1938 = vld [vmem:[#allocation18 + $0xe00] sm:$0xff]
    %v1939 = vld [vmem:[#allocation18 + $0xe08] sm:$0xff]
    %v1940 = vld [vmem:[#allocation18 + $0xe10] sm:$0xff]
    %v1941 = vld [vmem:[#allocation18 + $0xe18] sm:$0xff]
    %v1942 = vld [vmem:[#allocation18 + $0xe20] sm:$0xff]
    %v1943 = vld [vmem:[#allocation18 + $0xe28] sm:$0xff]
    %v1944 = vld [vmem:[#allocation18 + $0xe30] sm:$0xff]
    %v1945 = vld [vmem:[#allocation18 + $0xe38] sm:$0xff]
    %v1946 = vld [vmem:[#allocation18 + $0xe40] sm:$0xff]
    %v1947 = vld [vmem:[#allocation18 + $0xe48] sm:$0xff]
    %v1948 = vld [vmem:[#allocation18 + $0xe50] sm:$0xff]
    %v1949 = vld [vmem:[#allocation18 + $0xe58] sm:$0xff]
    %v1950 = vld [vmem:[#allocation18 + $0xe60] sm:$0xff]
    %v1951 = vld [vmem:[#allocation18 + $0xe68] sm:$0xff]
    %v1952 = vld [vmem:[#allocation18 + $0xe70] sm:$0xff]
    %v1953 = vld [vmem:[#allocation18 + $0xe78] sm:$0xff]
    %v1954 = vld [vmem:[#allocation18 + $0xe80] sm:$0xff]
    %v1955 = vld [vmem:[#allocation18 + $0xe88] sm:$0xff]
    %v1956 = vld [vmem:[#allocation18 + $0xe90] sm:$0xff]
    %v1957 = vld [vmem:[#allocation18 + $0xe98] sm:$0xff]
    %v1958 = vld [vmem:[#allocation18 + $0xea0] sm:$0xff]
    %v1959 = vld [vmem:[#allocation18 + $0xea8] sm:$0xff]
    %v1960 = vld [vmem:[#allocation18 + $0xeb0] sm:$0xff]
    %v1961 = vld [vmem:[#allocation18 + $0xeb8] sm:$0xff]
    %v1962 = vld [vmem:[#allocation18 + $0xec0] sm:$0xff]
    %v1963 = vld [vmem:[#allocation18 + $0xec8] sm:$0xff]
    %v1964 = vld [vmem:[#allocation18 + $0xed0] sm:$0xff]
    %v1965 = vld [vmem:[#allocation18 + $0xed8] sm:$0xff]
    %v1966 = vld [vmem:[#allocation18 + $0xee0] sm:$0xff]
    %v1967 = vld [vmem:[#allocation18 + $0xee8] sm:$0xff]
    %v1968 = vld [vmem:[#allocation18 + $0xef0] sm:$0xff]
    %v1969 = vld [vmem:[#allocation18 + $0xef8] sm:$0xff]
    %v1970 = vld [vmem:[#allocation18 + $0xf00] sm:$0xff]
    %v1971 = vld [vmem:[#allocation18 + $0xf08] sm:$0xff]
    %v1972 = vld [vmem:[#allocation18 + $0xf10] sm:$0xff]
    %v1973 = vld [vmem:[#allocation18 + $0xf18] sm:$0xff]
    %v1974 = vld [vmem:[#allocation18 + $0xf20] sm:$0xff]
    %v1975 = vld [vmem:[#allocation18 + $0xf28] sm:$0xff]
    %v1976 = vld [vmem:[#allocation18 + $0xf30] sm:$0xff]
    %v1977 = vld [vmem:[#allocation18 + $0xf38] sm:$0xff]
    %v1978 = vld [vmem:[#allocation18 + $0xf40] sm:$0xff]
    %v1979 = vld [vmem:[#allocation18 + $0xf48] sm:$0xff]
    %v1980 = vld [vmem:[#allocation18 + $0xf50] sm:$0xff]
    %v1981 = vld [vmem:[#allocation18 + $0xf58] sm:$0xff]
    %v1982 = vld [vmem:[#allocation18 + $0xf60] sm:$0xff]
    %v1983 = vld [vmem:[#allocation18 + $0xf68] sm:$0xff]
    %v1984 = vld [vmem:[#allocation18 + $0xf70] sm:$0xff]
    %v1985 = vld [vmem:[#allocation18 + $0xf78] sm:$0xff]
    %v1986 = vld [vmem:[#allocation18 + $0xf80] sm:$0xff]
    %v1987 = vld [vmem:[#allocation18 + $0xf88] sm:$0xff]
    %v1988 = vld [vmem:[#allocation18 + $0xf90] sm:$0xff]
    %v1989 = vld [vmem:[#allocation18 + $0xf98] sm:$0xff]
    %v1990 = vld [vmem:[#allocation18 + $0xfa0] sm:$0xff]
    %v1991 = vld [vmem:[#allocation18 + $0xfa8] sm:$0xff]
    %v1992 = vld [vmem:[#allocation18 + $0xfb0] sm:$0xff]
    %v1993 = vld [vmem:[#allocation18 + $0xfb8] sm:$0xff]
    %v1994 = vld [vmem:[#allocation18 + $0xfc0] sm:$0xff]
    %v1995 = vld [vmem:[#allocation18 + $0xfc8] sm:$0xff]
    %v1996 = vld [vmem:[#allocation18 + $0xfd0] sm:$0xff]
    %v1997 = vld [vmem:[#allocation18 + $0xfd8] sm:$0xff]
    %v1998 = vld [vmem:[#allocation18 + $0xfe0] sm:$0xff]
    %v1999 = vld [vmem:[#allocation18 + $0xfe8] sm:$0xff]
    %v2000 = vld [vmem:[#allocation18 + $0xff0] sm:$0xff]
    %v2001 = vld [vmem:[#allocation18 + $0xff8] sm:$0xff]
    %v2002 = vunpack.c.l.bf16 %v1490
    %v2003 = vunpack.c.h.bf16 %v1490
    %v2004 = vunpack.c.l.bf16 %v1491
    %v2005 = vunpack.c.h.bf16 %v1491
    %v2006 = vunpack.c.l.bf16 %v1492
    %v2007 = vunpack.c.h.bf16 %v1492
    %v2008 = vunpack.c.l.bf16 %v1493
    %v2009 = vunpack.c.h.bf16 %v1493
    %v2010 = vunpack.c.l.bf16 %v1494
    %v2011 = vunpack.c.h.bf16 %v1494
    %v2012 = vunpack.c.l.bf16 %v1495
    %v2013 = vunpack.c.h.bf16 %v1495
    %v2014 = vunpack.c.l.bf16 %v1496
    %v2015 = vunpack.c.h.bf16 %v1496
    %v2016 = vunpack.c.l.bf16 %v1497
    %v2017 = vunpack.c.h.bf16 %v1497
    %v2018 = vunpack.c.l.bf16 %v1498
    %v2019 = vunpack.c.h.bf16 %v1498
    %v2020 = vunpack.c.l.bf16 %v1499
    %v2021 = vunpack.c.h.bf16 %v1499
    %v2022 = vunpack.c.l.bf16 %v1500
    %v2023 = vunpack.c.h.bf16 %v1500
    %v2024 = vunpack.c.l.bf16 %v1501
    %v2025 = vunpack.c.h.bf16 %v1501
    %v2026 = vunpack.c.l.bf16 %v1502
    %v2027 = vunpack.c.h.bf16 %v1502
    %v2028 = vunpack.c.l.bf16 %v1503
    %v2029 = vunpack.c.h.bf16 %v1503
    %v2030 = vunpack.c.l.bf16 %v1504
    %v2031 = vunpack.c.h.bf16 %v1504
    %v2032 = vunpack.c.l.bf16 %v1505
    %v2033 = vunpack.c.h.bf16 %v1505
    %v2034 = vunpack.c.l.bf16 %v1506
    %v2035 = vunpack.c.h.bf16 %v1506
    %v2036 = vunpack.c.l.bf16 %v1507
    %v2037 = vunpack.c.h.bf16 %v1507
    %v2038 = vunpack.c.l.bf16 %v1508
    %v2039 = vunpack.c.h.bf16 %v1508
    %v2040 = vunpack.c.l.bf16 %v1509
    %v2041 = vunpack.c.h.bf16 %v1509
    %v2042 = vunpack.c.l.bf16 %v1510
    %v2043 = vunpack.c.h.bf16 %v1510
    %v2044 = vunpack.c.l.bf16 %v1511
    %v2045 = vunpack.c.h.bf16 %v1511
    %v2046 = vunpack.c.l.bf16 %v1512
    %v2047 = vunpack.c.h.bf16 %v1512
    %v2048 = vunpack.c.l.bf16 %v1513
    %v2049 = vunpack.c.h.bf16 %v1513
    %v2050 = vunpack.c.l.bf16 %v1514
    %v2051 = vunpack.c.h.bf16 %v1514
    %v2052 = vunpack.c.l.bf16 %v1515
    %v2053 = vunpack.c.h.bf16 %v1515
    %v2054 = vunpack.c.l.bf16 %v1516
    %v2055 = vunpack.c.h.bf16 %v1516
    %v2056 = vunpack.c.l.bf16 %v1517
    %v2057 = vunpack.c.h.bf16 %v1517
    %v2058 = vunpack.c.l.bf16 %v1518
    %v2059 = vunpack.c.h.bf16 %v1518
    %v2060 = vunpack.c.l.bf16 %v1519
    %v2061 = vunpack.c.h.bf16 %v1519
    %v2062 = vunpack.c.l.bf16 %v1520
    %v2063 = vunpack.c.h.bf16 %v1520
    %v2064 = vunpack.c.l.bf16 %v1521
    %v2065 = vunpack.c.h.bf16 %v1521
    %v2066 = vunpack.c.l.bf16 %v1522
    %v2067 = vunpack.c.h.bf16 %v1522
    %v2068 = vunpack.c.l.bf16 %v1523
    %v2069 = vunpack.c.h.bf16 %v1523
    %v2070 = vunpack.c.l.bf16 %v1524
    %v2071 = vunpack.c.h.bf16 %v1524
    %v2072 = vunpack.c.l.bf16 %v1525
    %v2073 = vunpack.c.h.bf16 %v1525
    %v2074 = vunpack.c.l.bf16 %v1526
    %v2075 = vunpack.c.h.bf16 %v1526
    %v2076 = vunpack.c.l.bf16 %v1527
    %v2077 = vunpack.c.h.bf16 %v1527
    %v2078 = vunpack.c.l.bf16 %v1528
    %v2079 = vunpack.c.h.bf16 %v1528
    %v2080 = vunpack.c.l.bf16 %v1529
    %v2081 = vunpack.c.h.bf16 %v1529
    %v2082 = vunpack.c.l.bf16 %v1530
    %v2083 = vunpack.c.h.bf16 %v1530
    %v2084 = vunpack.c.l.bf16 %v1531
    %v2085 = vunpack.c.h.bf16 %v1531
    %v2086 = vunpack.c.l.bf16 %v1532
    %v2087 = vunpack.c.h.bf16 %v1532
    %v2088 = vunpack.c.l.bf16 %v1533
    %v2089 = vunpack.c.h.bf16 %v1533
    %v2090 = vunpack.c.l.bf16 %v1534
    %v2091 = vunpack.c.h.bf16 %v1534
    %v2092 = vunpack.c.l.bf16 %v1535
    %v2093 = vunpack.c.h.bf16 %v1535
    %v2094 = vunpack.c.l.bf16 %v1536
    %v2095 = vunpack.c.h.bf16 %v1536
    %v2096 = vunpack.c.l.bf16 %v1537
    %v2097 = vunpack.c.h.bf16 %v1537
    %v2098 = vunpack.c.l.bf16 %v1538
    %v2099 = vunpack.c.h.bf16 %v1538
    %v2100 = vunpack.c.l.bf16 %v1539
    %v2101 = vunpack.c.h.bf16 %v1539
    %v2102 = vunpack.c.l.bf16 %v1540
    %v2103 = vunpack.c.h.bf16 %v1540
    %v2104 = vunpack.c.l.bf16 %v1541
    %v2105 = vunpack.c.h.bf16 %v1541
    %v2106 = vunpack.c.l.bf16 %v1542
    %v2107 = vunpack.c.h.bf16 %v1542
    %v2108 = vunpack.c.l.bf16 %v1543
    %v2109 = vunpack.c.h.bf16 %v1543
    %v2110 = vunpack.c.l.bf16 %v1544
    %v2111 = vunpack.c.h.bf16 %v1544
    %v2112 = vunpack.c.l.bf16 %v1545
    %v2113 = vunpack.c.h.bf16 %v1545
    %v2114 = vunpack.c.l.bf16 %v1546
    %v2115 = vunpack.c.h.bf16 %v1546
    %v2116 = vunpack.c.l.bf16 %v1547
    %v2117 = vunpack.c.h.bf16 %v1547
    %v2118 = vunpack.c.l.bf16 %v1548
    %v2119 = vunpack.c.h.bf16 %v1548
    %v2120 = vunpack.c.l.bf16 %v1549
    %v2121 = vunpack.c.h.bf16 %v1549
    %v2122 = vunpack.c.l.bf16 %v1550
    %v2123 = vunpack.c.h.bf16 %v1550
    %v2124 = vunpack.c.l.bf16 %v1551
    %v2125 = vunpack.c.h.bf16 %v1551
    %v2126 = vunpack.c.l.bf16 %v1552
    %v2127 = vunpack.c.h.bf16 %v1552
    %v2128 = vunpack.c.l.bf16 %v1553
    %v2129 = vunpack.c.h.bf16 %v1553
    %v2130 = vunpack.c.l.bf16 %v1554
    %v2131 = vunpack.c.h.bf16 %v1554
    %v2132 = vunpack.c.l.bf16 %v1555
    %v2133 = vunpack.c.h.bf16 %v1555
    %v2134 = vunpack.c.l.bf16 %v1556
    %v2135 = vunpack.c.h.bf16 %v1556
    %v2136 = vunpack.c.l.bf16 %v1557
    %v2137 = vunpack.c.h.bf16 %v1557
    %v2138 = vunpack.c.l.bf16 %v1558
    %v2139 = vunpack.c.h.bf16 %v1558
    %v2140 = vunpack.c.l.bf16 %v1559
    %v2141 = vunpack.c.h.bf16 %v1559
    %v2142 = vunpack.c.l.bf16 %v1560
    %v2143 = vunpack.c.h.bf16 %v1560
    %v2144 = vunpack.c.l.bf16 %v1561
    %v2145 = vunpack.c.h.bf16 %v1561
    %v2146 = vunpack.c.l.bf16 %v1562
    %v2147 = vunpack.c.h.bf16 %v1562
    %v2148 = vunpack.c.l.bf16 %v1563
    %v2149 = vunpack.c.h.bf16 %v1563
    %v2150 = vunpack.c.l.bf16 %v1564
    %v2151 = vunpack.c.h.bf16 %v1564
    %v2152 = vunpack.c.l.bf16 %v1565
    %v2153 = vunpack.c.h.bf16 %v1565
    %v2154 = vunpack.c.l.bf16 %v1566
    %v2155 = vunpack.c.h.bf16 %v1566
    %v2156 = vunpack.c.l.bf16 %v1567
    %v2157 = vunpack.c.h.bf16 %v1567
    %v2158 = vunpack.c.l.bf16 %v1568
    %v2159 = vunpack.c.h.bf16 %v1568
    %v2160 = vunpack.c.l.bf16 %v1569
    %v2161 = vunpack.c.h.bf16 %v1569
    %v2162 = vunpack.c.l.bf16 %v1570
    %v2163 = vunpack.c.h.bf16 %v1570
    %v2164 = vunpack.c.l.bf16 %v1571
    %v2165 = vunpack.c.h.bf16 %v1571
    %v2166 = vunpack.c.l.bf16 %v1572
    %v2167 = vunpack.c.h.bf16 %v1572
    %v2168 = vunpack.c.l.bf16 %v1573
    %v2169 = vunpack.c.h.bf16 %v1573
    %v2170 = vunpack.c.l.bf16 %v1574
    %v2171 = vunpack.c.h.bf16 %v1574
    %v2172 = vunpack.c.l.bf16 %v1575
    %v2173 = vunpack.c.h.bf16 %v1575
    %v2174 = vunpack.c.l.bf16 %v1576
    %v2175 = vunpack.c.h.bf16 %v1576
    %v2176 = vunpack.c.l.bf16 %v1577
    %v2177 = vunpack.c.h.bf16 %v1577
    %v2178 = vunpack.c.l.bf16 %v1578
    %v2179 = vunpack.c.h.bf16 %v1578
    %v2180 = vunpack.c.l.bf16 %v1579
    %v2181 = vunpack.c.h.bf16 %v1579
    %v2182 = vunpack.c.l.bf16 %v1580
    %v2183 = vunpack.c.h.bf16 %v1580
    %v2184 = vunpack.c.l.bf16 %v1581
    %v2185 = vunpack.c.h.bf16 %v1581
    %v2186 = vunpack.c.l.bf16 %v1582
    %v2187 = vunpack.c.h.bf16 %v1582
    %v2188 = vunpack.c.l.bf16 %v1583
    %v2189 = vunpack.c.h.bf16 %v1583
    %v2190 = vunpack.c.l.bf16 %v1584
    %v2191 = vunpack.c.h.bf16 %v1584
    %v2192 = vunpack.c.l.bf16 %v1585
    %v2193 = vunpack.c.h.bf16 %v1585
    %v2194 = vunpack.c.l.bf16 %v1586
    %v2195 = vunpack.c.h.bf16 %v1586
    %v2196 = vunpack.c.l.bf16 %v1587
    %v2197 = vunpack.c.h.bf16 %v1587
    %v2198 = vunpack.c.l.bf16 %v1588
    %v2199 = vunpack.c.h.bf16 %v1588
    %v2200 = vunpack.c.l.bf16 %v1589
    %v2201 = vunpack.c.h.bf16 %v1589
    %v2202 = vunpack.c.l.bf16 %v1590
    %v2203 = vunpack.c.h.bf16 %v1590
    %v2204 = vunpack.c.l.bf16 %v1591
    %v2205 = vunpack.c.h.bf16 %v1591
    %v2206 = vunpack.c.l.bf16 %v1592
    %v2207 = vunpack.c.h.bf16 %v1592
    %v2208 = vunpack.c.l.bf16 %v1593
    %v2209 = vunpack.c.h.bf16 %v1593
    %v2210 = vunpack.c.l.bf16 %v1594
    %v2211 = vunpack.c.h.bf16 %v1594
    %v2212 = vunpack.c.l.bf16 %v1595
    %v2213 = vunpack.c.h.bf16 %v1595
    %v2214 = vunpack.c.l.bf16 %v1596
    %v2215 = vunpack.c.h.bf16 %v1596
    %v2216 = vunpack.c.l.bf16 %v1597
    %v2217 = vunpack.c.h.bf16 %v1597
    %v2218 = vunpack.c.l.bf16 %v1598
    %v2219 = vunpack.c.h.bf16 %v1598
    %v2220 = vunpack.c.l.bf16 %v1599
    %v2221 = vunpack.c.h.bf16 %v1599
    %v2222 = vunpack.c.l.bf16 %v1600
    %v2223 = vunpack.c.h.bf16 %v1600
    %v2224 = vunpack.c.l.bf16 %v1601
    %v2225 = vunpack.c.h.bf16 %v1601
    %v2226 = vunpack.c.l.bf16 %v1602
    %v2227 = vunpack.c.h.bf16 %v1602
    %v2228 = vunpack.c.l.bf16 %v1603
    %v2229 = vunpack.c.h.bf16 %v1603
    %v2230 = vunpack.c.l.bf16 %v1604
    %v2231 = vunpack.c.h.bf16 %v1604
    %v2232 = vunpack.c.l.bf16 %v1605
    %v2233 = vunpack.c.h.bf16 %v1605
    %v2234 = vunpack.c.l.bf16 %v1606
    %v2235 = vunpack.c.h.bf16 %v1606
    %v2236 = vunpack.c.l.bf16 %v1607
    %v2237 = vunpack.c.h.bf16 %v1607
    %v2238 = vunpack.c.l.bf16 %v1608
    %v2239 = vunpack.c.h.bf16 %v1608
    %v2240 = vunpack.c.l.bf16 %v1609
    %v2241 = vunpack.c.h.bf16 %v1609
    %v2242 = vunpack.c.l.bf16 %v1610
    %v2243 = vunpack.c.h.bf16 %v1610
    %v2244 = vunpack.c.l.bf16 %v1611
    %v2245 = vunpack.c.h.bf16 %v1611
    %v2246 = vunpack.c.l.bf16 %v1612
    %v2247 = vunpack.c.h.bf16 %v1612
    %v2248 = vunpack.c.l.bf16 %v1613
    %v2249 = vunpack.c.h.bf16 %v1613
    %v2250 = vunpack.c.l.bf16 %v1614
    %v2251 = vunpack.c.h.bf16 %v1614
    %v2252 = vunpack.c.l.bf16 %v1615
    %v2253 = vunpack.c.h.bf16 %v1615
    %v2254 = vunpack.c.l.bf16 %v1616
    %v2255 = vunpack.c.h.bf16 %v1616
    %v2256 = vunpack.c.l.bf16 %v1617
    %v2257 = vunpack.c.h.bf16 %v1617
    %v2258 = vunpack.c.l.bf16 %v1618
    %v2259 = vunpack.c.h.bf16 %v1618
    %v2260 = vunpack.c.l.bf16 %v1619
    %v2261 = vunpack.c.h.bf16 %v1619
    %v2262 = vunpack.c.l.bf16 %v1620
    %v2263 = vunpack.c.h.bf16 %v1620
    %v2264 = vunpack.c.l.bf16 %v1621
    %v2265 = vunpack.c.h.bf16 %v1621
    %v2266 = vunpack.c.l.bf16 %v1622
    %v2267 = vunpack.c.h.bf16 %v1622
    %v2268 = vunpack.c.l.bf16 %v1623
    %v2269 = vunpack.c.h.bf16 %v1623
    %v2270 = vunpack.c.l.bf16 %v1624
    %v2271 = vunpack.c.h.bf16 %v1624
    %v2272 = vunpack.c.l.bf16 %v1625
    %v2273 = vunpack.c.h.bf16 %v1625
    %v2274 = vunpack.c.l.bf16 %v1626
    %v2275 = vunpack.c.h.bf16 %v1626
    %v2276 = vunpack.c.l.bf16 %v1627
    %v2277 = vunpack.c.h.bf16 %v1627
    %v2278 = vunpack.c.l.bf16 %v1628
    %v2279 = vunpack.c.h.bf16 %v1628
    %v2280 = vunpack.c.l.bf16 %v1629
    %v2281 = vunpack.c.h.bf16 %v1629
    %v2282 = vunpack.c.l.bf16 %v1630
    %v2283 = vunpack.c.h.bf16 %v1630
    %v2284 = vunpack.c.l.bf16 %v1631
    %v2285 = vunpack.c.h.bf16 %v1631
    %v2286 = vunpack.c.l.bf16 %v1632
    %v2287 = vunpack.c.h.bf16 %v1632
    %v2288 = vunpack.c.l.bf16 %v1633
    %v2289 = vunpack.c.h.bf16 %v1633
    %v2290 = vunpack.c.l.bf16 %v1634
    %v2291 = vunpack.c.h.bf16 %v1634
    %v2292 = vunpack.c.l.bf16 %v1635
    %v2293 = vunpack.c.h.bf16 %v1635
    %v2294 = vunpack.c.l.bf16 %v1636
    %v2295 = vunpack.c.h.bf16 %v1636
    %v2296 = vunpack.c.l.bf16 %v1637
    %v2297 = vunpack.c.h.bf16 %v1637
    %v2298 = vunpack.c.l.bf16 %v1638
    %v2299 = vunpack.c.h.bf16 %v1638
    %v2300 = vunpack.c.l.bf16 %v1639
    %v2301 = vunpack.c.h.bf16 %v1639
    %v2302 = vunpack.c.l.bf16 %v1640
    %v2303 = vunpack.c.h.bf16 %v1640
    %v2304 = vunpack.c.l.bf16 %v1641
    %v2305 = vunpack.c.h.bf16 %v1641
    %v2306 = vunpack.c.l.bf16 %v1642
    %v2307 = vunpack.c.h.bf16 %v1642
    %v2308 = vunpack.c.l.bf16 %v1643
    %v2309 = vunpack.c.h.bf16 %v1643
    %v2310 = vunpack.c.l.bf16 %v1644
    %v2311 = vunpack.c.h.bf16 %v1644
    %v2312 = vunpack.c.l.bf16 %v1645
    %v2313 = vunpack.c.h.bf16 %v1645
    %v2314 = vunpack.c.l.bf16 %v1646
    %v2315 = vunpack.c.h.bf16 %v1646
    %v2316 = vunpack.c.l.bf16 %v1647
    %v2317 = vunpack.c.h.bf16 %v1647
    %v2318 = vunpack.c.l.bf16 %v1648
    %v2319 = vunpack.c.h.bf16 %v1648
    %v2320 = vunpack.c.l.bf16 %v1649
    %v2321 = vunpack.c.h.bf16 %v1649
    %v2322 = vunpack.c.l.bf16 %v1650
    %v2323 = vunpack.c.h.bf16 %v1650
    %v2324 = vunpack.c.l.bf16 %v1651
    %v2325 = vunpack.c.h.bf16 %v1651
    %v2326 = vunpack.c.l.bf16 %v1652
    %v2327 = vunpack.c.h.bf16 %v1652
    %v2328 = vunpack.c.l.bf16 %v1653
    %v2329 = vunpack.c.h.bf16 %v1653
    %v2330 = vunpack.c.l.bf16 %v1654
    %v2331 = vunpack.c.h.bf16 %v1654
    %v2332 = vunpack.c.l.bf16 %v1655
    %v2333 = vunpack.c.h.bf16 %v1655
    %v2334 = vunpack.c.l.bf16 %v1656
    %v2335 = vunpack.c.h.bf16 %v1656
    %v2336 = vunpack.c.l.bf16 %v1657
    %v2337 = vunpack.c.h.bf16 %v1657
    %v2338 = vunpack.c.l.bf16 %v1658
    %v2339 = vunpack.c.h.bf16 %v1658
    %v2340 = vunpack.c.l.bf16 %v1659
    %v2341 = vunpack.c.h.bf16 %v1659
    %v2342 = vunpack.c.l.bf16 %v1660
    %v2343 = vunpack.c.h.bf16 %v1660
    %v2344 = vunpack.c.l.bf16 %v1661
    %v2345 = vunpack.c.h.bf16 %v1661
    %v2346 = vunpack.c.l.bf16 %v1662
    %v2347 = vunpack.c.h.bf16 %v1662
    %v2348 = vunpack.c.l.bf16 %v1663
    %v2349 = vunpack.c.h.bf16 %v1663
    %v2350 = vunpack.c.l.bf16 %v1664
    %v2351 = vunpack.c.h.bf16 %v1664
    %v2352 = vunpack.c.l.bf16 %v1665
    %v2353 = vunpack.c.h.bf16 %v1665
    %v2354 = vunpack.c.l.bf16 %v1666
    %v2355 = vunpack.c.h.bf16 %v1666
    %v2356 = vunpack.c.l.bf16 %v1667
    %v2357 = vunpack.c.h.bf16 %v1667
    %v2358 = vunpack.c.l.bf16 %v1668
    %v2359 = vunpack.c.h.bf16 %v1668
    %v2360 = vunpack.c.l.bf16 %v1669
    %v2361 = vunpack.c.h.bf16 %v1669
    %v2362 = vunpack.c.l.bf16 %v1670
    %v2363 = vunpack.c.h.bf16 %v1670
    %v2364 = vunpack.c.l.bf16 %v1671
    %v2365 = vunpack.c.h.bf16 %v1671
    %v2366 = vunpack.c.l.bf16 %v1672
    %v2367 = vunpack.c.h.bf16 %v1672
    %v2368 = vunpack.c.l.bf16 %v1673
    %v2369 = vunpack.c.h.bf16 %v1673
    %v2370 = vunpack.c.l.bf16 %v1674
    %v2371 = vunpack.c.h.bf16 %v1674
    %v2372 = vunpack.c.l.bf16 %v1675
    %v2373 = vunpack.c.h.bf16 %v1675
    %v2374 = vunpack.c.l.bf16 %v1676
    %v2375 = vunpack.c.h.bf16 %v1676
    %v2376 = vunpack.c.l.bf16 %v1677
    %v2377 = vunpack.c.h.bf16 %v1677
    %v2378 = vunpack.c.l.bf16 %v1678
    %v2379 = vunpack.c.h.bf16 %v1678
    %v2380 = vunpack.c.l.bf16 %v1679
    %v2381 = vunpack.c.h.bf16 %v1679
    %v2382 = vunpack.c.l.bf16 %v1680
    %v2383 = vunpack.c.h.bf16 %v1680
    %v2384 = vunpack.c.l.bf16 %v1681
    %v2385 = vunpack.c.h.bf16 %v1681
    %v2386 = vunpack.c.l.bf16 %v1682
    %v2387 = vunpack.c.h.bf16 %v1682
    %v2388 = vunpack.c.l.bf16 %v1683
    %v2389 = vunpack.c.h.bf16 %v1683
    %v2390 = vunpack.c.l.bf16 %v1684
    %v2391 = vunpack.c.h.bf16 %v1684
    %v2392 = vunpack.c.l.bf16 %v1685
    %v2393 = vunpack.c.h.bf16 %v1685
    %v2394 = vunpack.c.l.bf16 %v1686
    %v2395 = vunpack.c.h.bf16 %v1686
    %v2396 = vunpack.c.l.bf16 %v1687
    %v2397 = vunpack.c.h.bf16 %v1687
    %v2398 = vunpack.c.l.bf16 %v1688
    %v2399 = vunpack.c.h.bf16 %v1688
    %v2400 = vunpack.c.l.bf16 %v1689
    %v2401 = vunpack.c.h.bf16 %v1689
    %v2402 = vunpack.c.l.bf16 %v1690
    %v2403 = vunpack.c.h.bf16 %v1690
    %v2404 = vunpack.c.l.bf16 %v1691
    %v2405 = vunpack.c.h.bf16 %v1691
    %v2406 = vunpack.c.l.bf16 %v1692
    %v2407 = vunpack.c.h.bf16 %v1692
    %v2408 = vunpack.c.l.bf16 %v1693
    %v2409 = vunpack.c.h.bf16 %v1693
    %v2410 = vunpack.c.l.bf16 %v1694
    %v2411 = vunpack.c.h.bf16 %v1694
    %v2412 = vunpack.c.l.bf16 %v1695
    %v2413 = vunpack.c.h.bf16 %v1695
    %v2414 = vunpack.c.l.bf16 %v1696
    %v2415 = vunpack.c.h.bf16 %v1696
    %v2416 = vunpack.c.l.bf16 %v1697
    %v2417 = vunpack.c.h.bf16 %v1697
    %v2418 = vunpack.c.l.bf16 %v1698
    %v2419 = vunpack.c.h.bf16 %v1698
    %v2420 = vunpack.c.l.bf16 %v1699
    %v2421 = vunpack.c.h.bf16 %v1699
    %v2422 = vunpack.c.l.bf16 %v1700
    %v2423 = vunpack.c.h.bf16 %v1700
    %v2424 = vunpack.c.l.bf16 %v1701
    %v2425 = vunpack.c.h.bf16 %v1701
    %v2426 = vunpack.c.l.bf16 %v1702
    %v2427 = vunpack.c.h.bf16 %v1702
    %v2428 = vunpack.c.l.bf16 %v1703
    %v2429 = vunpack.c.h.bf16 %v1703
    %v2430 = vunpack.c.l.bf16 %v1704
    %v2431 = vunpack.c.h.bf16 %v1704
    %v2432 = vunpack.c.l.bf16 %v1705
    %v2433 = vunpack.c.h.bf16 %v1705
    %v2434 = vunpack.c.l.bf16 %v1706
    %v2435 = vunpack.c.h.bf16 %v1706
    %v2436 = vunpack.c.l.bf16 %v1707
    %v2437 = vunpack.c.h.bf16 %v1707
    %v2438 = vunpack.c.l.bf16 %v1708
    %v2439 = vunpack.c.h.bf16 %v1708
    %v2440 = vunpack.c.l.bf16 %v1709
    %v2441 = vunpack.c.h.bf16 %v1709
    %v2442 = vunpack.c.l.bf16 %v1710
    %v2443 = vunpack.c.h.bf16 %v1710
    %v2444 = vunpack.c.l.bf16 %v1711
    %v2445 = vunpack.c.h.bf16 %v1711
    %v2446 = vunpack.c.l.bf16 %v1712
    %v2447 = vunpack.c.h.bf16 %v1712
    %v2448 = vunpack.c.l.bf16 %v1713
    %v2449 = vunpack.c.h.bf16 %v1713
    %v2450 = vunpack.c.l.bf16 %v1714
    %v2451 = vunpack.c.h.bf16 %v1714
    %v2452 = vunpack.c.l.bf16 %v1715
    %v2453 = vunpack.c.h.bf16 %v1715
    %v2454 = vunpack.c.l.bf16 %v1716
    %v2455 = vunpack.c.h.bf16 %v1716
    %v2456 = vunpack.c.l.bf16 %v1717
    %v2457 = vunpack.c.h.bf16 %v1717
    %v2458 = vunpack.c.l.bf16 %v1718
    %v2459 = vunpack.c.h.bf16 %v1718
    %v2460 = vunpack.c.l.bf16 %v1719
    %v2461 = vunpack.c.h.bf16 %v1719
    %v2462 = vunpack.c.l.bf16 %v1720
    %v2463 = vunpack.c.h.bf16 %v1720
    %v2464 = vunpack.c.l.bf16 %v1721
    %v2465 = vunpack.c.h.bf16 %v1721
    %v2466 = vunpack.c.l.bf16 %v1722
    %v2467 = vunpack.c.h.bf16 %v1722
    %v2468 = vunpack.c.l.bf16 %v1723
    %v2469 = vunpack.c.h.bf16 %v1723
    %v2470 = vunpack.c.l.bf16 %v1724
    %v2471 = vunpack.c.h.bf16 %v1724
    %v2472 = vunpack.c.l.bf16 %v1725
    %v2473 = vunpack.c.h.bf16 %v1725
    %v2474 = vunpack.c.l.bf16 %v1726
    %v2475 = vunpack.c.h.bf16 %v1726
    %v2476 = vunpack.c.l.bf16 %v1727
    %v2477 = vunpack.c.h.bf16 %v1727
    %v2478 = vunpack.c.l.bf16 %v1728
    %v2479 = vunpack.c.h.bf16 %v1728
    %v2480 = vunpack.c.l.bf16 %v1729
    %v2481 = vunpack.c.h.bf16 %v1729
    %v2482 = vunpack.c.l.bf16 %v1730
    %v2483 = vunpack.c.h.bf16 %v1730
    %v2484 = vunpack.c.l.bf16 %v1731
    %v2485 = vunpack.c.h.bf16 %v1731
    %v2486 = vunpack.c.l.bf16 %v1732
    %v2487 = vunpack.c.h.bf16 %v1732
    %v2488 = vunpack.c.l.bf16 %v1733
    %v2489 = vunpack.c.h.bf16 %v1733
    %v2490 = vunpack.c.l.bf16 %v1734
    %v2491 = vunpack.c.h.bf16 %v1734
    %v2492 = vunpack.c.l.bf16 %v1735
    %v2493 = vunpack.c.h.bf16 %v1735
    %v2494 = vunpack.c.l.bf16 %v1736
    %v2495 = vunpack.c.h.bf16 %v1736
    %v2496 = vunpack.c.l.bf16 %v1737
    %v2497 = vunpack.c.h.bf16 %v1737
    %v2498 = vunpack.c.l.bf16 %v1738
    %v2499 = vunpack.c.h.bf16 %v1738
    %v2500 = vunpack.c.l.bf16 %v1739
    %v2501 = vunpack.c.h.bf16 %v1739
    %v2502 = vunpack.c.l.bf16 %v1740
    %v2503 = vunpack.c.h.bf16 %v1740
    %v2504 = vunpack.c.l.bf16 %v1741
    %v2505 = vunpack.c.h.bf16 %v1741
    %v2506 = vunpack.c.l.bf16 %v1742
    %v2507 = vunpack.c.h.bf16 %v1742
    %v2508 = vunpack.c.l.bf16 %v1743
    %v2509 = vunpack.c.h.bf16 %v1743
    %v2510 = vunpack.c.l.bf16 %v1744
    %v2511 = vunpack.c.h.bf16 %v1744
    %v2512 = vunpack.c.l.bf16 %v1745
    %v2513 = vunpack.c.h.bf16 %v1745
    %v2514 = vunpack.c.l.bf16 %v1746
    %v2515 = vunpack.c.h.bf16 %v1746
    %v2516 = vunpack.c.l.bf16 %v1747
    %v2517 = vunpack.c.h.bf16 %v1747
    %v2518 = vunpack.c.l.bf16 %v1748
    %v2519 = vunpack.c.h.bf16 %v1748
    %v2520 = vunpack.c.l.bf16 %v1749
    %v2521 = vunpack.c.h.bf16 %v1749
    %v2522 = vunpack.c.l.bf16 %v1750
    %v2523 = vunpack.c.h.bf16 %v1750
    %v2524 = vunpack.c.l.bf16 %v1751
    %v2525 = vunpack.c.h.bf16 %v1751
    %v2526 = vunpack.c.l.bf16 %v1752
    %v2527 = vunpack.c.h.bf16 %v1752
    %v2528 = vunpack.c.l.bf16 %v1753
    %v2529 = vunpack.c.h.bf16 %v1753
    %v2530 = vunpack.c.l.bf16 %v1754
    %v2531 = vunpack.c.h.bf16 %v1754
    %v2532 = vunpack.c.l.bf16 %v1755
    %v2533 = vunpack.c.h.bf16 %v1755
    %v2534 = vunpack.c.l.bf16 %v1756
    %v2535 = vunpack.c.h.bf16 %v1756
    %v2536 = vunpack.c.l.bf16 %v1757
    %v2537 = vunpack.c.h.bf16 %v1757
    %v2538 = vunpack.c.l.bf16 %v1758
    %v2539 = vunpack.c.h.bf16 %v1758
    %v2540 = vunpack.c.l.bf16 %v1759
    %v2541 = vunpack.c.h.bf16 %v1759
    %v2542 = vunpack.c.l.bf16 %v1760
    %v2543 = vunpack.c.h.bf16 %v1760
    %v2544 = vunpack.c.l.bf16 %v1761
    %v2545 = vunpack.c.h.bf16 %v1761
    %v2546 = vunpack.c.l.bf16 %v1762
    %v2547 = vunpack.c.h.bf16 %v1762
    %v2548 = vunpack.c.l.bf16 %v1763
    %v2549 = vunpack.c.h.bf16 %v1763
    %v2550 = vunpack.c.l.bf16 %v1764
    %v2551 = vunpack.c.h.bf16 %v1764
    %v2552 = vunpack.c.l.bf16 %v1765
    %v2553 = vunpack.c.h.bf16 %v1765
    %v2554 = vunpack.c.l.bf16 %v1766
    %v2555 = vunpack.c.h.bf16 %v1766
    %v2556 = vunpack.c.l.bf16 %v1767
    %v2557 = vunpack.c.h.bf16 %v1767
    %v2558 = vunpack.c.l.bf16 %v1768
    %v2559 = vunpack.c.h.bf16 %v1768
    %v2560 = vunpack.c.l.bf16 %v1769
    %v2561 = vunpack.c.h.bf16 %v1769
    %v2562 = vunpack.c.l.bf16 %v1770
    %v2563 = vunpack.c.h.bf16 %v1770
    %v2564 = vunpack.c.l.bf16 %v1771
    %v2565 = vunpack.c.h.bf16 %v1771
    %v2566 = vunpack.c.l.bf16 %v1772
    %v2567 = vunpack.c.h.bf16 %v1772
    %v2568 = vunpack.c.l.bf16 %v1773
    %v2569 = vunpack.c.h.bf16 %v1773
    %v2570 = vunpack.c.l.bf16 %v1774
    %v2571 = vunpack.c.h.bf16 %v1774
    %v2572 = vunpack.c.l.bf16 %v1775
    %v2573 = vunpack.c.h.bf16 %v1775
    %v2574 = vunpack.c.l.bf16 %v1776
    %v2575 = vunpack.c.h.bf16 %v1776
    %v2576 = vunpack.c.l.bf16 %v1777
    %v2577 = vunpack.c.h.bf16 %v1777
    %v2578 = vunpack.c.l.bf16 %v1778
    %v2579 = vunpack.c.h.bf16 %v1778
    %v2580 = vunpack.c.l.bf16 %v1779
    %v2581 = vunpack.c.h.bf16 %v1779
    %v2582 = vunpack.c.l.bf16 %v1780
    %v2583 = vunpack.c.h.bf16 %v1780
    %v2584 = vunpack.c.l.bf16 %v1781
    %v2585 = vunpack.c.h.bf16 %v1781
    %v2586 = vunpack.c.l.bf16 %v1782
    %v2587 = vunpack.c.h.bf16 %v1782
    %v2588 = vunpack.c.l.bf16 %v1783
    %v2589 = vunpack.c.h.bf16 %v1783
    %v2590 = vunpack.c.l.bf16 %v1784
    %v2591 = vunpack.c.h.bf16 %v1784
    %v2592 = vunpack.c.l.bf16 %v1785
    %v2593 = vunpack.c.h.bf16 %v1785
    %v2594 = vunpack.c.l.bf16 %v1786
    %v2595 = vunpack.c.h.bf16 %v1786
    %v2596 = vunpack.c.l.bf16 %v1787
    %v2597 = vunpack.c.h.bf16 %v1787
    %v2598 = vunpack.c.l.bf16 %v1788
    %v2599 = vunpack.c.h.bf16 %v1788
    %v2600 = vunpack.c.l.bf16 %v1789
    %v2601 = vunpack.c.h.bf16 %v1789
    %v2602 = vunpack.c.l.bf16 %v1790
    %v2603 = vunpack.c.h.bf16 %v1790
    %v2604 = vunpack.c.l.bf16 %v1791
    %v2605 = vunpack.c.h.bf16 %v1791
    %v2606 = vunpack.c.l.bf16 %v1792
    %v2607 = vunpack.c.h.bf16 %v1792
    %v2608 = vunpack.c.l.bf16 %v1793
    %v2609 = vunpack.c.h.bf16 %v1793
    %v2610 = vunpack.c.l.bf16 %v1794
    %v2611 = vunpack.c.h.bf16 %v1794
    %v2612 = vunpack.c.l.bf16 %v1795
    %v2613 = vunpack.c.h.bf16 %v1795
    %v2614 = vunpack.c.l.bf16 %v1796
    %v2615 = vunpack.c.h.bf16 %v1796
    %v2616 = vunpack.c.l.bf16 %v1797
    %v2617 = vunpack.c.h.bf16 %v1797
    %v2618 = vunpack.c.l.bf16 %v1798
    %v2619 = vunpack.c.h.bf16 %v1798
    %v2620 = vunpack.c.l.bf16 %v1799
    %v2621 = vunpack.c.h.bf16 %v1799
    %v2622 = vunpack.c.l.bf16 %v1800
    %v2623 = vunpack.c.h.bf16 %v1800
    %v2624 = vunpack.c.l.bf16 %v1801
    %v2625 = vunpack.c.h.bf16 %v1801
    %v2626 = vunpack.c.l.bf16 %v1802
    %v2627 = vunpack.c.h.bf16 %v1802
    %v2628 = vunpack.c.l.bf16 %v1803
    %v2629 = vunpack.c.h.bf16 %v1803
    %v2630 = vunpack.c.l.bf16 %v1804
    %v2631 = vunpack.c.h.bf16 %v1804
    %v2632 = vunpack.c.l.bf16 %v1805
    %v2633 = vunpack.c.h.bf16 %v1805
    %v2634 = vunpack.c.l.bf16 %v1806
    %v2635 = vunpack.c.h.bf16 %v1806
    %v2636 = vunpack.c.l.bf16 %v1807
    %v2637 = vunpack.c.h.bf16 %v1807
    %v2638 = vunpack.c.l.bf16 %v1808
    %v2639 = vunpack.c.h.bf16 %v1808
    %v2640 = vunpack.c.l.bf16 %v1809
    %v2641 = vunpack.c.h.bf16 %v1809
    %v2642 = vunpack.c.l.bf16 %v1810
    %v2643 = vunpack.c.h.bf16 %v1810
    %v2644 = vunpack.c.l.bf16 %v1811
    %v2645 = vunpack.c.h.bf16 %v1811
    %v2646 = vunpack.c.l.bf16 %v1812
    %v2647 = vunpack.c.h.bf16 %v1812
    %v2648 = vunpack.c.l.bf16 %v1813
    %v2649 = vunpack.c.h.bf16 %v1813
    %v2650 = vunpack.c.l.bf16 %v1814
    %v2651 = vunpack.c.h.bf16 %v1814
    %v2652 = vunpack.c.l.bf16 %v1815
    %v2653 = vunpack.c.h.bf16 %v1815
    %v2654 = vunpack.c.l.bf16 %v1816
    %v2655 = vunpack.c.h.bf16 %v1816
    %v2656 = vunpack.c.l.bf16 %v1817
    %v2657 = vunpack.c.h.bf16 %v1817
    %v2658 = vunpack.c.l.bf16 %v1818
    %v2659 = vunpack.c.h.bf16 %v1818
    %v2660 = vunpack.c.l.bf16 %v1819
    %v2661 = vunpack.c.h.bf16 %v1819
    %v2662 = vunpack.c.l.bf16 %v1820
    %v2663 = vunpack.c.h.bf16 %v1820
    %v2664 = vunpack.c.l.bf16 %v1821
    %v2665 = vunpack.c.h.bf16 %v1821
    %v2666 = vunpack.c.l.bf16 %v1822
    %v2667 = vunpack.c.h.bf16 %v1822
    %v2668 = vunpack.c.l.bf16 %v1823
    %v2669 = vunpack.c.h.bf16 %v1823
    %v2670 = vunpack.c.l.bf16 %v1824
    %v2671 = vunpack.c.h.bf16 %v1824
    %v2672 = vunpack.c.l.bf16 %v1825
    %v2673 = vunpack.c.h.bf16 %v1825
    %v2674 = vunpack.c.l.bf16 %v1826
    %v2675 = vunpack.c.h.bf16 %v1826
    %v2676 = vunpack.c.l.bf16 %v1827
    %v2677 = vunpack.c.h.bf16 %v1827
    %v2678 = vunpack.c.l.bf16 %v1828
    %v2679 = vunpack.c.h.bf16 %v1828
    %v2680 = vunpack.c.l.bf16 %v1829
    %v2681 = vunpack.c.h.bf16 %v1829
    %v2682 = vunpack.c.l.bf16 %v1830
    %v2683 = vunpack.c.h.bf16 %v1830
    %v2684 = vunpack.c.l.bf16 %v1831
    %v2685 = vunpack.c.h.bf16 %v1831
    %v2686 = vunpack.c.l.bf16 %v1832
    %v2687 = vunpack.c.h.bf16 %v1832
    %v2688 = vunpack.c.l.bf16 %v1833
    %v2689 = vunpack.c.h.bf16 %v1833
    %v2690 = vunpack.c.l.bf16 %v1834
    %v2691 = vunpack.c.h.bf16 %v1834
    %v2692 = vunpack.c.l.bf16 %v1835
    %v2693 = vunpack.c.h.bf16 %v1835
    %v2694 = vunpack.c.l.bf16 %v1836
    %v2695 = vunpack.c.h.bf16 %v1836
    %v2696 = vunpack.c.l.bf16 %v1837
    %v2697 = vunpack.c.h.bf16 %v1837
    %v2698 = vunpack.c.l.bf16 %v1838
    %v2699 = vunpack.c.h.bf16 %v1838
    %v2700 = vunpack.c.l.bf16 %v1839
    %v2701 = vunpack.c.h.bf16 %v1839
    %v2702 = vunpack.c.l.bf16 %v1840
    %v2703 = vunpack.c.h.bf16 %v1840
    %v2704 = vunpack.c.l.bf16 %v1841
    %v2705 = vunpack.c.h.bf16 %v1841
    %v2706 = vunpack.c.l.bf16 %v1842
    %v2707 = vunpack.c.h.bf16 %v1842
    %v2708 = vunpack.c.l.bf16 %v1843
    %v2709 = vunpack.c.h.bf16 %v1843
    %v2710 = vunpack.c.l.bf16 %v1844
    %v2711 = vunpack.c.h.bf16 %v1844
    %v2712 = vunpack.c.l.bf16 %v1845
    %v2713 = vunpack.c.h.bf16 %v1845
    %v2714 = vunpack.c.l.bf16 %v1846
    %v2715 = vunpack.c.h.bf16 %v1846
    %v2716 = vunpack.c.l.bf16 %v1847
    %v2717 = vunpack.c.h.bf16 %v1847
    %v2718 = vunpack.c.l.bf16 %v1848
    %v2719 = vunpack.c.h.bf16 %v1848
    %v2720 = vunpack.c.l.bf16 %v1849
    %v2721 = vunpack.c.h.bf16 %v1849
    %v2722 = vunpack.c.l.bf16 %v1850
    %v2723 = vunpack.c.h.bf16 %v1850
    %v2724 = vunpack.c.l.bf16 %v1851
    %v2725 = vunpack.c.h.bf16 %v1851
    %v2726 = vunpack.c.l.bf16 %v1852
    %v2727 = vunpack.c.h.bf16 %v1852
    %v2728 = vunpack.c.l.bf16 %v1853
    %v2729 = vunpack.c.h.bf16 %v1853
    %v2730 = vunpack.c.l.bf16 %v1854
    %v2731 = vunpack.c.h.bf16 %v1854
    %v2732 = vunpack.c.l.bf16 %v1855
    %v2733 = vunpack.c.h.bf16 %v1855
    %v2734 = vunpack.c.l.bf16 %v1856
    %v2735 = vunpack.c.h.bf16 %v1856
    %v2736 = vunpack.c.l.bf16 %v1857
    %v2737 = vunpack.c.h.bf16 %v1857
    %v2738 = vunpack.c.l.bf16 %v1858
    %v2739 = vunpack.c.h.bf16 %v1858
    %v2740 = vunpack.c.l.bf16 %v1859
    %v2741 = vunpack.c.h.bf16 %v1859
    %v2742 = vunpack.c.l.bf16 %v1860
    %v2743 = vunpack.c.h.bf16 %v1860
    %v2744 = vunpack.c.l.bf16 %v1861
    %v2745 = vunpack.c.h.bf16 %v1861
    %v2746 = vunpack.c.l.bf16 %v1862
    %v2747 = vunpack.c.h.bf16 %v1862
    %v2748 = vunpack.c.l.bf16 %v1863
    %v2749 = vunpack.c.h.bf16 %v1863
    %v2750 = vunpack.c.l.bf16 %v1864
    %v2751 = vunpack.c.h.bf16 %v1864
    %v2752 = vunpack.c.l.bf16 %v1865
    %v2753 = vunpack.c.h.bf16 %v1865
    %v2754 = vunpack.c.l.bf16 %v1866
    %v2755 = vunpack.c.h.bf16 %v1866
    %v2756 = vunpack.c.l.bf16 %v1867
    %v2757 = vunpack.c.h.bf16 %v1867
    %v2758 = vunpack.c.l.bf16 %v1868
    %v2759 = vunpack.c.h.bf16 %v1868
    %v2760 = vunpack.c.l.bf16 %v1869
    %v2761 = vunpack.c.h.bf16 %v1869
    %v2762 = vunpack.c.l.bf16 %v1870
    %v2763 = vunpack.c.h.bf16 %v1870
    %v2764 = vunpack.c.l.bf16 %v1871
    %v2765 = vunpack.c.h.bf16 %v1871
    %v2766 = vunpack.c.l.bf16 %v1872
    %v2767 = vunpack.c.h.bf16 %v1872
    %v2768 = vunpack.c.l.bf16 %v1873
    %v2769 = vunpack.c.h.bf16 %v1873
    %v2770 = vunpack.c.l.bf16 %v1874
    %v2771 = vunpack.c.h.bf16 %v1874
    %v2772 = vunpack.c.l.bf16 %v1875
    %v2773 = vunpack.c.h.bf16 %v1875
    %v2774 = vunpack.c.l.bf16 %v1876
    %v2775 = vunpack.c.h.bf16 %v1876
    %v2776 = vunpack.c.l.bf16 %v1877
    %v2777 = vunpack.c.h.bf16 %v1877
    %v2778 = vunpack.c.l.bf16 %v1878
    %v2779 = vunpack.c.h.bf16 %v1878
    %v2780 = vunpack.c.l.bf16 %v1879
    %v2781 = vunpack.c.h.bf16 %v1879
    %v2782 = vunpack.c.l.bf16 %v1880
    %v2783 = vunpack.c.h.bf16 %v1880
    %v2784 = vunpack.c.l.bf16 %v1881
    %v2785 = vunpack.c.h.bf16 %v1881
    %v2786 = vunpack.c.l.bf16 %v1882
    %v2787 = vunpack.c.h.bf16 %v1882
    %v2788 = vunpack.c.l.bf16 %v1883
    %v2789 = vunpack.c.h.bf16 %v1883
    %v2790 = vunpack.c.l.bf16 %v1884
    %v2791 = vunpack.c.h.bf16 %v1884
    %v2792 = vunpack.c.l.bf16 %v1885
    %v2793 = vunpack.c.h.bf16 %v1885
    %v2794 = vunpack.c.l.bf16 %v1886
    %v2795 = vunpack.c.h.bf16 %v1886
    %v2796 = vunpack.c.l.bf16 %v1887
    %v2797 = vunpack.c.h.bf16 %v1887
    %v2798 = vunpack.c.l.bf16 %v1888
    %v2799 = vunpack.c.h.bf16 %v1888
    %v2800 = vunpack.c.l.bf16 %v1889
    %v2801 = vunpack.c.h.bf16 %v1889
    %v2802 = vunpack.c.l.bf16 %v1890
    %v2803 = vunpack.c.h.bf16 %v1890
    %v2804 = vunpack.c.l.bf16 %v1891
    %v2805 = vunpack.c.h.bf16 %v1891
    %v2806 = vunpack.c.l.bf16 %v1892
    %v2807 = vunpack.c.h.bf16 %v1892
    %v2808 = vunpack.c.l.bf16 %v1893
    %v2809 = vunpack.c.h.bf16 %v1893
    %v2810 = vunpack.c.l.bf16 %v1894
    %v2811 = vunpack.c.h.bf16 %v1894
    %v2812 = vunpack.c.l.bf16 %v1895
    %v2813 = vunpack.c.h.bf16 %v1895
    %v2814 = vunpack.c.l.bf16 %v1896
    %v2815 = vunpack.c.h.bf16 %v1896
    %v2816 = vunpack.c.l.bf16 %v1897
    %v2817 = vunpack.c.h.bf16 %v1897
    %v2818 = vunpack.c.l.bf16 %v1898
    %v2819 = vunpack.c.h.bf16 %v1898
    %v2820 = vunpack.c.l.bf16 %v1899
    %v2821 = vunpack.c.h.bf16 %v1899
    %v2822 = vunpack.c.l.bf16 %v1900
    %v2823 = vunpack.c.h.bf16 %v1900
    %v2824 = vunpack.c.l.bf16 %v1901
    %v2825 = vunpack.c.h.bf16 %v1901
    %v2826 = vunpack.c.l.bf16 %v1902
    %v2827 = vunpack.c.h.bf16 %v1902
    %v2828 = vunpack.c.l.bf16 %v1903
    %v2829 = vunpack.c.h.bf16 %v1903
    %v2830 = vunpack.c.l.bf16 %v1904
    %v2831 = vunpack.c.h.bf16 %v1904
    %v2832 = vunpack.c.l.bf16 %v1905
    %v2833 = vunpack.c.h.bf16 %v1905
    %v2834 = vunpack.c.l.bf16 %v1906
    %v2835 = vunpack.c.h.bf16 %v1906
    %v2836 = vunpack.c.l.bf16 %v1907
    %v2837 = vunpack.c.h.bf16 %v1907
    %v2838 = vunpack.c.l.bf16 %v1908
    %v2839 = vunpack.c.h.bf16 %v1908
    %v2840 = vunpack.c.l.bf16 %v1909
    %v2841 = vunpack.c.h.bf16 %v1909
    %v2842 = vunpack.c.l.bf16 %v1910
    %v2843 = vunpack.c.h.bf16 %v1910
    %v2844 = vunpack.c.l.bf16 %v1911
    %v2845 = vunpack.c.h.bf16 %v1911
    %v2846 = vunpack.c.l.bf16 %v1912
    %v2847 = vunpack.c.h.bf16 %v1912
    %v2848 = vunpack.c.l.bf16 %v1913
    %v2849 = vunpack.c.h.bf16 %v1913
    %v2850 = vunpack.c.l.bf16 %v1914
    %v2851 = vunpack.c.h.bf16 %v1914
    %v2852 = vunpack.c.l.bf16 %v1915
    %v2853 = vunpack.c.h.bf16 %v1915
    %v2854 = vunpack.c.l.bf16 %v1916
    %v2855 = vunpack.c.h.bf16 %v1916
    %v2856 = vunpack.c.l.bf16 %v1917
    %v2857 = vunpack.c.h.bf16 %v1917
    %v2858 = vunpack.c.l.bf16 %v1918
    %v2859 = vunpack.c.h.bf16 %v1918
    %v2860 = vunpack.c.l.bf16 %v1919
    %v2861 = vunpack.c.h.bf16 %v1919
    %v2862 = vunpack.c.l.bf16 %v1920
    %v2863 = vunpack.c.h.bf16 %v1920
    %v2864 = vunpack.c.l.bf16 %v1921
    %v2865 = vunpack.c.h.bf16 %v1921
    %v2866 = vunpack.c.l.bf16 %v1922
    %v2867 = vunpack.c.h.bf16 %v1922
    %v2868 = vunpack.c.l.bf16 %v1923
    %v2869 = vunpack.c.h.bf16 %v1923
    %v2870 = vunpack.c.l.bf16 %v1924
    %v2871 = vunpack.c.h.bf16 %v1924
    %v2872 = vunpack.c.l.bf16 %v1925
    %v2873 = vunpack.c.h.bf16 %v1925
    %v2874 = vunpack.c.l.bf16 %v1926
    %v2875 = vunpack.c.h.bf16 %v1926
    %v2876 = vunpack.c.l.bf16 %v1927
    %v2877 = vunpack.c.h.bf16 %v1927
    %v2878 = vunpack.c.l.bf16 %v1928
    %v2879 = vunpack.c.h.bf16 %v1928
    %v2880 = vunpack.c.l.bf16 %v1929
    %v2881 = vunpack.c.h.bf16 %v1929
    %v2882 = vunpack.c.l.bf16 %v1930
    %v2883 = vunpack.c.h.bf16 %v1930
    %v2884 = vunpack.c.l.bf16 %v1931
    %v2885 = vunpack.c.h.bf16 %v1931
    %v2886 = vunpack.c.l.bf16 %v1932
    %v2887 = vunpack.c.h.bf16 %v1932
    %v2888 = vunpack.c.l.bf16 %v1933
    %v2889 = vunpack.c.h.bf16 %v1933
    %v2890 = vunpack.c.l.bf16 %v1934
    %v2891 = vunpack.c.h.bf16 %v1934
    %v2892 = vunpack.c.l.bf16 %v1935
    %v2893 = vunpack.c.h.bf16 %v1935
    %v2894 = vunpack.c.l.bf16 %v1936
    %v2895 = vunpack.c.h.bf16 %v1936
    %v2896 = vunpack.c.l.bf16 %v1937
    %v2897 = vunpack.c.h.bf16 %v1937
    %v2898 = vunpack.c.l.bf16 %v1938
    %v2899 = vunpack.c.h.bf16 %v1938
    %v2900 = vunpack.c.l.bf16 %v1939
    %v2901 = vunpack.c.h.bf16 %v1939
    %v2902 = vunpack.c.l.bf16 %v1940
    %v2903 = vunpack.c.h.bf16 %v1940
    %v2904 = vunpack.c.l.bf16 %v1941
    %v2905 = vunpack.c.h.bf16 %v1941
    %v2906 = vunpack.c.l.bf16 %v1942
    %v2907 = vunpack.c.h.bf16 %v1942
    %v2908 = vunpack.c.l.bf16 %v1943
    %v2909 = vunpack.c.h.bf16 %v1943
    %v2910 = vunpack.c.l.bf16 %v1944
    %v2911 = vunpack.c.h.bf16 %v1944
    %v2912 = vunpack.c.l.bf16 %v1945
    %v2913 = vunpack.c.h.bf16 %v1945
    %v2914 = vunpack.c.l.bf16 %v1946
    %v2915 = vunpack.c.h.bf16 %v1946
    %v2916 = vunpack.c.l.bf16 %v1947
    %v2917 = vunpack.c.h.bf16 %v1947
    %v2918 = vunpack.c.l.bf16 %v1948
    %v2919 = vunpack.c.h.bf16 %v1948
    %v2920 = vunpack.c.l.bf16 %v1949
    %v2921 = vunpack.c.h.bf16 %v1949
    %v2922 = vunpack.c.l.bf16 %v1950
    %v2923 = vunpack.c.h.bf16 %v1950
    %v2924 = vunpack.c.l.bf16 %v1951
    %v2925 = vunpack.c.h.bf16 %v1951
    %v2926 = vunpack.c.l.bf16 %v1952
    %v2927 = vunpack.c.h.bf16 %v1952
    %v2928 = vunpack.c.l.bf16 %v1953
    %v2929 = vunpack.c.h.bf16 %v1953
    %v2930 = vunpack.c.l.bf16 %v1954
    %v2931 = vunpack.c.h.bf16 %v1954
    %v2932 = vunpack.c.l.bf16 %v1955
    %v2933 = vunpack.c.h.bf16 %v1955
    %v2934 = vunpack.c.l.bf16 %v1956
    %v2935 = vunpack.c.h.bf16 %v1956
    %v2936 = vunpack.c.l.bf16 %v1957
    %v2937 = vunpack.c.h.bf16 %v1957
    %v2938 = vunpack.c.l.bf16 %v1958
    %v2939 = vunpack.c.h.bf16 %v1958
    %v2940 = vunpack.c.l.bf16 %v1959
    %v2941 = vunpack.c.h.bf16 %v1959
    %v2942 = vunpack.c.l.bf16 %v1960
    %v2943 = vunpack.c.h.bf16 %v1960
    %v2944 = vunpack.c.l.bf16 %v1961
    %v2945 = vunpack.c.h.bf16 %v1961
    %v2946 = vunpack.c.l.bf16 %v1962
    %v2947 = vunpack.c.h.bf16 %v1962
    %v2948 = vunpack.c.l.bf16 %v1963
    %v2949 = vunpack.c.h.bf16 %v1963
    %v2950 = vunpack.c.l.bf16 %v1964
    %v2951 = vunpack.c.h.bf16 %v1964
    %v2952 = vunpack.c.l.bf16 %v1965
    %v2953 = vunpack.c.h.bf16 %v1965
    %v2954 = vunpack.c.l.bf16 %v1966
    %v2955 = vunpack.c.h.bf16 %v1966
    %v2956 = vunpack.c.l.bf16 %v1967
    %v2957 = vunpack.c.h.bf16 %v1967
    %v2958 = vunpack.c.l.bf16 %v1968
    %v2959 = vunpack.c.h.bf16 %v1968
    %v2960 = vunpack.c.l.bf16 %v1969
    %v2961 = vunpack.c.h.bf16 %v1969
    %v2962 = vunpack.c.l.bf16 %v1970
    %v2963 = vunpack.c.h.bf16 %v1970
    %v2964 = vunpack.c.l.bf16 %v1971
    %v2965 = vunpack.c.h.bf16 %v1971
    %v2966 = vunpack.c.l.bf16 %v1972
    %v2967 = vunpack.c.h.bf16 %v1972
    %v2968 = vunpack.c.l.bf16 %v1973
    %v2969 = vunpack.c.h.bf16 %v1973
    %v2970 = vunpack.c.l.bf16 %v1974
    %v2971 = vunpack.c.h.bf16 %v1974
    %v2972 = vunpack.c.l.bf16 %v1975
    %v2973 = vunpack.c.h.bf16 %v1975
    %v2974 = vunpack.c.l.bf16 %v1976
    %v2975 = vunpack.c.h.bf16 %v1976
    %v2976 = vunpack.c.l.bf16 %v1977
    %v2977 = vunpack.c.h.bf16 %v1977
    %v2978 = vunpack.c.l.bf16 %v1978
    %v2979 = vunpack.c.h.bf16 %v1978
    %v2980 = vunpack.c.l.bf16 %v1979
    %v2981 = vunpack.c.h.bf16 %v1979
    %v2982 = vunpack.c.l.bf16 %v1980
    %v2983 = vunpack.c.h.bf16 %v1980
    %v2984 = vunpack.c.l.bf16 %v1981
    %v2985 = vunpack.c.h.bf16 %v1981
    %v2986 = vunpack.c.l.bf16 %v1982
    %v2987 = vunpack.c.h.bf16 %v1982
    %v2988 = vunpack.c.l.bf16 %v1983
    %v2989 = vunpack.c.h.bf16 %v1983
    %v2990 = vunpack.c.l.bf16 %v1984
    %v2991 = vunpack.c.h.bf16 %v1984
    %v2992 = vunpack.c.l.bf16 %v1985
    %v2993 = vunpack.c.h.bf16 %v1985
    %v2994 = vunpack.c.l.bf16 %v1986
    %v2995 = vunpack.c.h.bf16 %v1986
    %v2996 = vunpack.c.l.bf16 %v1987
    %v2997 = vunpack.c.h.bf16 %v1987
    %v2998 = vunpack.c.l.bf16 %v1988
    %v2999 = vunpack.c.h.bf16 %v1988
    %v3000 = vunpack.c.l.bf16 %v1989
    %v3001 = vunpack.c.h.bf16 %v1989
    %v3002 = vunpack.c.l.bf16 %v1990
    %v3003 = vunpack.c.h.bf16 %v1990
    %v3004 = vunpack.c.l.bf16 %v1991
    %v3005 = vunpack.c.h.bf16 %v1991
    %v3006 = vunpack.c.l.bf16 %v1992
    %v3007 = vunpack.c.h.bf16 %v1992
    %v3008 = vunpack.c.l.bf16 %v1993
    %v3009 = vunpack.c.h.bf16 %v1993
    %v3010 = vunpack.c.l.bf16 %v1994
    %v3011 = vunpack.c.h.bf16 %v1994
    %v3012 = vunpack.c.l.bf16 %v1995
    %v3013 = vunpack.c.h.bf16 %v1995
    %v3014 = vunpack.c.l.bf16 %v1996
    %v3015 = vunpack.c.h.bf16 %v1996
    %v3016 = vunpack.c.l.bf16 %v1997
    %v3017 = vunpack.c.h.bf16 %v1997
    %v3018 = vunpack.c.l.bf16 %v1998
    %v3019 = vunpack.c.h.bf16 %v1998
    %v3020 = vunpack.c.l.bf16 %v1999
    %v3021 = vunpack.c.h.bf16 %v1999
    %v3022 = vunpack.c.l.bf16 %v2000
    %v3023 = vunpack.c.h.bf16 %v2000
    %v3024 = vunpack.c.l.bf16 %v2001
    %v3025 = vunpack.c.h.bf16 %v2001
    %v3026 = vld [vmem:[#allocation19] sm:$0xff]
    %v3028 = vlaneseq
    %v3029 = vshrl.u32 %v3028, 7
    %v3030 = vsub.s32 0, %v3029
    %v3031 = vrot.slane %v3026, %v3030
    %v3032 = vlaneseq
    %v3033 = vshrl.u32 %v3032, 7
    %v3034 = vsub.s32 1, %v3033
    %v3035 = vrot.slane %v3026, %v3034
    %v3036 = vlaneseq
    %v3037 = vshrl.u32 %v3036, 7
    %v3038 = vsub.s32 2, %v3037
    %v3039 = vrot.slane %v3026, %v3038
    %v3040 = vlaneseq
    %v3041 = vshrl.u32 %v3040, 7
    %v3042 = vsub.s32 3, %v3041
    %v3043 = vrot.slane %v3026, %v3042
    %v3044 = vlaneseq
    %v3045 = vshrl.u32 %v3044, 7
    %v3046 = vsub.s32 4, %v3045
    %v3047 = vrot.slane %v3026, %v3046
    %v3048 = vlaneseq
    %v3049 = vshrl.u32 %v3048, 7
    %v3050 = vsub.s32 5, %v3049
    %v3051 = vrot.slane %v3026, %v3050
    %v3052 = vlaneseq
    %v3053 = vshrl.u32 %v3052, 7
    %v3054 = vsub.s32 6, %v3053
    %v3055 = vrot.slane %v3026, %v3054
    %v3056 = vlaneseq
    %v3057 = vshrl.u32 %v3056, 7
    %v3058 = vsub.s32 7, %v3057
    %v3059 = vrot.slane %v3026, %v3058
    %3068 = vmatprep.subr.mxu0 %v2123
    %3069 = vmatpush1.msra.mxu0 %v2122
    %3070 = vmatprep.subr.mxu0 %v2115
    %3071 = vmatpush1.msra.mxu0 %v2114
    %3072 = vmatprep.subr.mxu0 %v2107
    %3073 = vmatpush1.msra.mxu0 %v2106
    %3074 = vmatprep.subr.mxu0 %v2099
    %3075 = vmatpush1.msra.mxu0 %v2098
    %3076 = vmatprep.subr.mxu0 %v2091
    %3077 = vmatpush1.msra.mxu0 %v2090
    %3078 = vmatprep.subr.mxu0 %v2083
    %3079 = vmatpush1.msra.mxu0 %v2082
    %3080 = vmatprep.subr.mxu0 %v2075
    %3081 = vmatpush1.msra.mxu0 %v2074
    %3082 = vmatprep.subr.mxu0 %v2067
    %3083 = vmatpush1.msra.mxu0 %v2066
    %3084 = vmatprep.subr.mxu0 %v2059
    %3085 = vmatpush1.msra.mxu0 %v2058
    %3086 = vmatprep.subr.mxu0 %v2051
    %3087 = vmatpush1.msra.mxu0 %v2050
    %3088 = vmatprep.subr.mxu0 %v2043
    %3089 = vmatpush1.msra.mxu0 %v2042
    %3090 = vmatprep.subr.mxu0 %v2035
    %3091 = vmatpush1.msra.mxu0 %v2034
    %3092 = vmatprep.subr.mxu0 %v2027
    %3093 = vmatpush1.msra.mxu0 %v2026
    %3094 = vmatprep.subr.mxu0 %v2019
    %3095 = vmatpush1.msra.mxu0 %v2018
    %3096 = vmatprep.subr.mxu0 %v2011
    %3097 = vmatpush1.msra.mxu0 %v2010
    %3098 = vmatprep.subr.mxu0 %v2003
    %3099 = vmatpush1.msra.mxu0 %v2002
    %3100 = vmatprep.subr.mxu0 %v2251
    %3101 = vmatpush2.msra.mxu0 %v2250
    %3102 = vmatprep.subr.mxu0 %v2243
    %3103 = vmatpush2.msra.mxu0 %v2242
    %3104 = vmatprep.subr.mxu0 %v2235
    %3105 = vmatpush2.msra.mxu0 %v2234
    %3106 = vmatprep.subr.mxu0 %v2227
    %3107 = vmatpush2.msra.mxu0 %v2226
    %3108 = vmatprep.subr.mxu0 %v2219
    %3109 = vmatpush2.msra.mxu0 %v2218
    %3110 = vmatprep.subr.mxu0 %v2211
    %3111 = vmatpush2.msra.mxu0 %v2210
    %3112 = vmatprep.subr.mxu0 %v2203
    %3113 = vmatpush2.msra.mxu0 %v2202
    %3114 = vmatprep.subr.mxu0 %v2195
    %3115 = vmatpush2.msra.mxu0 %v2194
    %3116 = vmatprep.subr.mxu0 %v2187
    %3117 = vmatpush2.msra.mxu0 %v2186
    %3118 = vmatprep.subr.mxu0 %v2179
    %3119 = vmatpush2.msra.mxu0 %v2178
    %3120 = vmatprep.subr.mxu0 %v2171
    %3121 = vmatpush2.msra.mxu0 %v2170
    %3122 = vmatprep.subr.mxu0 %v2163
    %3123 = vmatpush2.msra.mxu0 %v2162
    %3124 = vmatprep.subr.mxu0 %v2155
    %3125 = vmatpush2.msra.mxu0 %v2154
    %3126 = vmatprep.subr.mxu0 %v2147
    %3127 = vmatpush2.msra.mxu0 %v2146
    %3128 = vmatprep.subr.mxu0 %v2139
    %3129 = vmatpush2.msra.mxu0 %v2138
    %3130 = vmatprep.subr.mxu0 %v2131
    %3131 = vmatpush2.msra.mxu0 %v2130
    %3132 = vmatprep.mubr.f32.mxu0 %v1483
    %3133 = vmatmul.mubr.f32.gmra.mxu0 %v1482
    %v3134 = vpop.f32.mrf.mxu0
    %v3135 = vadd.f32 %v3031, %v3134
    %v3136 = vpop.f32.mrf.mxu0
    %v3137 = vadd.f32 %v3035, %v3136
    %3138 = vdwg.mxu0
    %3139 = vmatprep.subr.mxu0 %v2379
    %3140 = vmatpush1.msra.mxu0 %v2378
    %3141 = vmatprep.subr.mxu0 %v2371
    %3142 = vmatpush1.msra.mxu0 %v2370
    %3143 = vmatprep.subr.mxu0 %v2363
    %3144 = vmatpush1.msra.mxu0 %v2362
    %3145 = vmatprep.subr.mxu0 %v2355
    %3146 = vmatpush1.msra.mxu0 %v2354
    %3147 = vmatprep.subr.mxu0 %v2347
    %3148 = vmatpush1.msra.mxu0 %v2346
    %3149 = vmatprep.subr.mxu0 %v2339
    %3150 = vmatpush1.msra.mxu0 %v2338
    %3151 = vmatprep.subr.mxu0 %v2331
    %3152 = vmatpush1.msra.mxu0 %v2330
    %3153 = vmatprep.subr.mxu0 %v2323
    %3154 = vmatpush1.msra.mxu0 %v2322
    %3155 = vmatprep.subr.mxu0 %v2315
    %3156 = vmatpush1.msra.mxu0 %v2314
    %3157 = vmatprep.subr.mxu0 %v2307
    %3158 = vmatpush1.msra.mxu0 %v2306
    %3159 = vmatprep.subr.mxu0 %v2299
    %3160 = vmatpush1.msra.mxu0 %v2298
    %3161 = vmatprep.subr.mxu0 %v2291
    %3162 = vmatpush1.msra.mxu0 %v2290
    %3163 = vmatprep.subr.mxu0 %v2283
    %3164 = vmatpush1.msra.mxu0 %v2282
    %3165 = vmatprep.subr.mxu0 %v2275
    %3166 = vmatpush1.msra.mxu0 %v2274
    %3167 = vmatprep.subr.mxu0 %v2267
    %3168 = vmatpush1.msra.mxu0 %v2266
    %3169 = vmatprep.subr.mxu0 %v2259
    %3170 = vmatpush1.msra.mxu0 %v2258
    %3171 = vmatprep.subr.mxu0 %v2507
    %3172 = vmatpush2.msra.mxu0 %v2506
    %3173 = vmatprep.subr.mxu0 %v2499
    %3174 = vmatpush2.msra.mxu0 %v2498
    %3175 = vmatprep.subr.mxu0 %v2491
    %3176 = vmatpush2.msra.mxu0 %v2490
    %3177 = vmatprep.subr.mxu0 %v2483
    %3178 = vmatpush2.msra.mxu0 %v2482
    %3179 = vmatprep.subr.mxu0 %v2475
    %3180 = vmatpush2.msra.mxu0 %v2474
    %3181 = vmatprep.subr.mxu0 %v2467
    %3182 = vmatpush2.msra.mxu0 %v2466
    %3183 = vmatprep.subr.mxu0 %v2459
    %3184 = vmatpush2.msra.mxu0 %v2458
    %3185 = vmatprep.subr.mxu0 %v2451
    %3186 = vmatpush2.msra.mxu0 %v2450
    %3187 = vmatprep.subr.mxu0 %v2443
    %3188 = vmatpush2.msra.mxu0 %v2442
    %3189 = vmatprep.subr.mxu0 %v2435
    %3190 = vmatpush2.msra.mxu0 %v2434
    %3191 = vmatprep.subr.mxu0 %v2427
    %3192 = vmatpush2.msra.mxu0 %v2426
    %3193 = vmatprep.subr.mxu0 %v2419
    %3194 = vmatpush2.msra.mxu0 %v2418
    %3195 = vmatprep.subr.mxu0 %v2411
    %3196 = vmatpush2.msra.mxu0 %v2410
    %3197 = vmatprep.subr.mxu0 %v2403
    %3198 = vmatpush2.msra.mxu0 %v2402
    %3199 = vmatprep.subr.mxu0 %v2395
    %3200 = vmatpush2.msra.mxu0 %v2394
    %3201 = vmatprep.subr.mxu0 %v2387
    %3202 = vmatpush2.msra.mxu0 %v2386
    %3203 = vmatprep.mubr.f32.mxu0 %v1485
    %3204 = vmatmul.mubr.f32.gmra.mxu0 %v1484
    %v3205 = vpop.f32.mrf.mxu0
    %v3206 = vadd.f32 %v3135, %v3205
    %v3207 = vpop.f32.mrf.mxu0
    %v3208 = vadd.f32 %v3137, %v3207
    %3209 = vdwg.mxu0
    %3210 = vmatprep.subr.mxu0 %v2635
    %3211 = vmatpush1.msra.mxu0 %v2634
    %3212 = vmatprep.subr.mxu0 %v2627
    %3213 = vmatpush1.msra.mxu0 %v2626
    %3214 = vmatprep.subr.mxu0 %v2619
    %3215 = vmatpush1.msra.mxu0 %v2618
    %3216 = vmatprep.subr.mxu0 %v2611
    %3217 = vmatpush1.msra.mxu0 %v2610
    %3218 = vmatprep.subr.mxu0 %v2603
    %3219 = vmatpush1.msra.mxu0 %v2602
    %3220 = vmatprep.subr.mxu0 %v2595
    %3221 = vmatpush1.msra.mxu0 %v2594
    %3222 = vmatprep.subr.mxu0 %v2587
    %3223 = vmatpush1.msra.mxu0 %v2586
    %3224 = vmatprep.subr.mxu0 %v2579
    %3225 = vmatpush1.msra.mxu0 %v2578
    %3226 = vmatprep.subr.mxu0 %v2571
    %3227 = vmatpush1.msra.mxu0 %v2570
    %3228 = vmatprep.subr.mxu0 %v2563
    %3229 = vmatpush1.msra.mxu0 %v2562
    %3230 = vmatprep.subr.mxu0 %v2555
    %3231 = vmatpush1.msra.mxu0 %v2554
    %3232 = vmatprep.subr.mxu0 %v2547
    %3233 = vmatpush1.msra.mxu0 %v2546
    %3234 = vmatprep.subr.mxu0 %v2539
    %3235 = vmatpush1.msra.mxu0 %v2538
    %3236 = vmatprep.subr.mxu0 %v2531
    %3237 = vmatpush1.msra.mxu0 %v2530
    %3238 = vmatprep.subr.mxu0 %v2523
    %3239 = vmatpush1.msra.mxu0 %v2522
    %3240 = vmatprep.subr.mxu0 %v2515
    %3241 = vmatpush1.msra.mxu0 %v2514
    %3242 = vmatprep.subr.mxu0 %v2763
    %3243 = vmatpush2.msra.mxu0 %v2762
    %3244 = vmatprep.subr.mxu0 %v2755
    %3245 = vmatpush2.msra.mxu0 %v2754
    %3246 = vmatprep.subr.mxu0 %v2747
    %3247 = vmatpush2.msra.mxu0 %v2746
    %3248 = vmatprep.subr.mxu0 %v2739
    %3249 = vmatpush2.msra.mxu0 %v2738
    %3250 = vmatprep.subr.mxu0 %v2731
    %3251 = vmatpush2.msra.mxu0 %v2730
    %3252 = vmatprep.subr.mxu0 %v2723
    %3253 = vmatpush2.msra.mxu0 %v2722
    %3254 = vmatprep.subr.mxu0 %v2715
    %3255 = vmatpush2.msra.mxu0 %v2714
    %3256 = vmatprep.subr.mxu0 %v2707
    %3257 = vmatpush2.msra.mxu0 %v2706
    %3258 = vmatprep.subr.mxu0 %v2699
    %3259 = vmatpush2.msra.mxu0 %v2698
    %3260 = vmatprep.subr.mxu0 %v2691
    %3261 = vmatpush2.msra.mxu0 %v2690
    %3262 = vmatprep.subr.mxu0 %v2683
    %3263 = vmatpush2.msra.mxu0 %v2682
    %3264 = vmatprep.subr.mxu0 %v2675
    %3265 = vmatpush2.msra.mxu0 %v2674
    %3266 = vmatprep.subr.mxu0 %v2667
    %3267 = vmatpush2.msra.mxu0 %v2666
    %3268 = vmatprep.subr.mxu0 %v2659
    %3269 = vmatpush2.msra.mxu0 %v2658
    %3270 = vmatprep.subr.mxu0 %v2651
    %3271 = vmatpush2.msra.mxu0 %v2650
    %3272 = vmatprep.subr.mxu0 %v2643
    %3273 = vmatpush2.msra.mxu0 %v2642
    %3274 = vmatprep.mubr.f32.mxu0 %v1487
    %3275 = vmatmul.mubr.f32.gmra.mxu0 %v1486
    %v3276 = vpop.f32.mrf.mxu0
    %v3277 = vadd.f32 %v3206, %v3276
    %v3278 = vpop.f32.mrf.mxu0
    %v3279 = vadd.f32 %v3208, %v3278
    %3280 = vdwg.mxu0
    %3281 = vmatprep.subr.mxu0 %v2891
    %3282 = vmatpush1.msra.mxu0 %v2890
    %3283 = vmatprep.subr.mxu0 %v2883
    %3284 = vmatpush1.msra.mxu0 %v2882
    %3285 = vmatprep.subr.mxu0 %v2875
    %3286 = vmatpush1.msra.mxu0 %v2874
    %3287 = vmatprep.subr.mxu0 %v2867
    %3288 = vmatpush1.msra.mxu0 %v2866
    %3289 = vmatprep.subr.mxu0 %v2859
    %3290 = vmatpush1.msra.mxu0 %v2858
    %3291 = vmatprep.subr.mxu0 %v2851
    %3292 = vmatpush1.msra.mxu0 %v2850
    %3293 = vmatprep.subr.mxu0 %v2843
    %3294 = vmatpush1.msra.mxu0 %v2842
    %3295 = vmatprep.subr.mxu0 %v2835
    %3296 = vmatpush1.msra.mxu0 %v2834
    %3297 = vmatprep.subr.mxu0 %v2827
    %3298 = vmatpush1.msra.mxu0 %v2826
    %3299 = vmatprep.subr.mxu0 %v2819
    %3300 = vmatpush1.msra.mxu0 %v2818
    %3301 = vmatprep.subr.mxu0 %v2811
    %3302 = vmatpush1.msra.mxu0 %v2810
    %3303 = vmatprep.subr.mxu0 %v2803
    %3304 = vmatpush1.msra.mxu0 %v2802
    %3305 = vmatprep.subr.mxu0 %v2795
    %3306 = vmatpush1.msra.mxu0 %v2794
    %3307 = vmatprep.subr.mxu0 %v2787
    %3308 = vmatpush1.msra.mxu0 %v2786
    %3309 = vmatprep.subr.mxu0 %v2779
    %3310 = vmatpush1.msra.mxu0 %v2778
    %3311 = vmatprep.subr.mxu0 %v2771
    %3312 = vmatpush1.msra.mxu0 %v2770
    %3313 = vmatprep.subr.mxu0 %v3019
    %3314 = vmatpush2.msra.mxu0 %v3018
    %3315 = vmatprep.subr.mxu0 %v3011
    %3316 = vmatpush2.msra.mxu0 %v3010
    %3317 = vmatprep.subr.mxu0 %v3003
    %3318 = vmatpush2.msra.mxu0 %v3002
    %3319 = vmatprep.subr.mxu0 %v2995
    %3320 = vmatpush2.msra.mxu0 %v2994
    %3321 = vmatprep.subr.mxu0 %v2987
    %3322 = vmatpush2.msra.mxu0 %v2986
    %3323 = vmatprep.subr.mxu0 %v2979
    %3324 = vmatpush2.msra.mxu0 %v2978
    %3325 = vmatprep.subr.mxu0 %v2971
    %3326 = vmatpush2.msra.mxu0 %v2970
    %3327 = vmatprep.subr.mxu0 %v2963
    %3328 = vmatpush2.msra.mxu0 %v2962
    %3329 = vmatprep.subr.mxu0 %v2955
    %3330 = vmatpush2.msra.mxu0 %v2954
    %3331 = vmatprep.subr.mxu0 %v2947
    %3332 = vmatpush2.msra.mxu0 %v2946
    %3333 = vmatprep.subr.mxu0 %v2939
    %3334 = vmatpush2.msra.mxu0 %v2938
    %3335 = vmatprep.subr.mxu0 %v2931
    %3336 = vmatpush2.msra.mxu0 %v2930
    %3337 = vmatprep.subr.mxu0 %v2923
    %3338 = vmatpush2.msra.mxu0 %v2922
    %3339 = vmatprep.subr.mxu0 %v2915
    %3340 = vmatpush2.msra.mxu0 %v2914
    %3341 = vmatprep.subr.mxu0 %v2907
    %3342 = vmatpush2.msra.mxu0 %v2906
    %3343 = vmatprep.subr.mxu0 %v2899
    %3344 = vmatpush2.msra.mxu0 %v2898
    %3345 = vmatprep.mubr.f32.mxu0 %v1489
    %3346 = vmatmul.mubr.f32.gmra.mxu0 %v1488
    %v3347 = vpop.f32.mrf.mxu0
    %v3348 = vadd.f32 %v3277, %v3347
    %v3349 = vpop.f32.mrf.mxu0
    %v3350 = vadd.f32 %v3279, %v3349
    %3351 = vdwg.mxu0
    %3352 = vmatprep.subr.mxu0 %v2125
    %3353 = vmatpush1.msra.mxu0 %v2124
    %3354 = vmatprep.subr.mxu0 %v2117
    %3355 = vmatpush1.msra.mxu0 %v2116
    %3356 = vmatprep.subr.mxu0 %v2109
    %3357 = vmatpush1.msra.mxu0 %v2108
    %3358 = vmatprep.subr.mxu0 %v2101
    %3359 = vmatpush1.msra.mxu0 %v2100
    %3360 = vmatprep.subr.mxu0 %v2093
    %3361 = vmatpush1.msra.mxu0 %v2092
    %3362 = vmatprep.subr.mxu0 %v2085
    %3363 = vmatpush1.msra.mxu0 %v2084
    %3364 = vmatprep.subr.mxu0 %v2077
    %3365 = vmatpush1.msra.mxu0 %v2076
    %3366 = vmatprep.subr.mxu0 %v2069
    %3367 = vmatpush1.msra.mxu0 %v2068
    %3368 = vmatprep.subr.mxu0 %v2061
    %3369 = vmatpush1.msra.mxu0 %v2060
    %3370 = vmatprep.subr.mxu0 %v2053
    %3371 = vmatpush1.msra.mxu0 %v2052
    %3372 = vmatprep.subr.mxu0 %v2045
    %3373 = vmatpush1.msra.mxu0 %v2044
    %3374 = vmatprep.subr.mxu0 %v2037
    %3375 = vmatpush1.msra.mxu0 %v2036
    %3376 = vmatprep.subr.mxu0 %v2029
    %3377 = vmatpush1.msra.mxu0 %v2028
    %3378 = vmatprep.subr.mxu0 %v2021
    %3379 = vmatpush1.msra.mxu0 %v2020
    %3380 = vmatprep.subr.mxu0 %v2013
    %3381 = vmatpush1.msra.mxu0 %v2012
    %3382 = vmatprep.subr.mxu0 %v2005
    %3383 = vmatpush1.msra.mxu0 %v2004
    %3384 = vmatprep.subr.mxu0 %v2253
    %3385 = vmatpush2.msra.mxu0 %v2252
    %3386 = vmatprep.subr.mxu0 %v2245
    %3387 = vmatpush2.msra.mxu0 %v2244
    %3388 = vmatprep.subr.mxu0 %v2237
    %3389 = vmatpush2.msra.mxu0 %v2236
    %3390 = vmatprep.subr.mxu0 %v2229
    %3391 = vmatpush2.msra.mxu0 %v2228
    %3392 = vmatprep.subr.mxu0 %v2221
    %3393 = vmatpush2.msra.mxu0 %v2220
    %3394 = vmatprep.subr.mxu0 %v2213
    %3395 = vmatpush2.msra.mxu0 %v2212
    %3396 = vmatprep.subr.mxu0 %v2205
    %3397 = vmatpush2.msra.mxu0 %v2204
    %3398 = vmatprep.subr.mxu0 %v2197
    %3399 = vmatpush2.msra.mxu0 %v2196
    %3400 = vmatprep.subr.mxu0 %v2189
    %3401 = vmatpush2.msra.mxu0 %v2188
    %3402 = vmatprep.subr.mxu0 %v2181
    %3403 = vmatpush2.msra.mxu0 %v2180
    %3404 = vmatprep.subr.mxu0 %v2173
    %3405 = vmatpush2.msra.mxu0 %v2172
    %3406 = vmatprep.subr.mxu0 %v2165
    %3407 = vmatpush2.msra.mxu0 %v2164
    %3408 = vmatprep.subr.mxu0 %v2157
    %3409 = vmatpush2.msra.mxu0 %v2156
    %3410 = vmatprep.subr.mxu0 %v2149
    %3411 = vmatpush2.msra.mxu0 %v2148
    %3412 = vmatprep.subr.mxu0 %v2141
    %3413 = vmatpush2.msra.mxu0 %v2140
    %3414 = vmatprep.subr.mxu0 %v2133
    %3415 = vmatpush2.msra.mxu0 %v2132
    %3416 = vmatprep.mubr.f32.mxu0 %v1483
    %3417 = vmatmul.mubr.f32.gmra.mxu0 %v1482
    %v3418 = vpop.f32.mrf.mxu0
    %v3419 = vadd.f32 %v3039, %v3418
    %v3420 = vpop.f32.mrf.mxu0
    %v3421 = vadd.f32 %v3043, %v3420
    %3422 = vdwg.mxu0
    %3423 = vmatprep.subr.mxu0 %v2381
    %3424 = vmatpush1.msra.mxu0 %v2380
    %3425 = vmatprep.subr.mxu0 %v2373
    %3426 = vmatpush1.msra.mxu0 %v2372
    %3427 = vmatprep.subr.mxu0 %v2365
    %3428 = vmatpush1.msra.mxu0 %v2364
    %3429 = vmatprep.subr.mxu0 %v2357
    %3430 = vmatpush1.msra.mxu0 %v2356
    %3431 = vmatprep.subr.mxu0 %v2349
    %3432 = vmatpush1.msra.mxu0 %v2348
    %3433 = vmatprep.subr.mxu0 %v2341
    %3434 = vmatpush1.msra.mxu0 %v2340
    %3435 = vmatprep.subr.mxu0 %v2333
    %3436 = vmatpush1.msra.mxu0 %v2332
    %3437 = vmatprep.subr.mxu0 %v2325
    %3438 = vmatpush1.msra.mxu0 %v2324
    %3439 = vmatprep.subr.mxu0 %v2317
    %3440 = vmatpush1.msra.mxu0 %v2316
    %3441 = vmatprep.subr.mxu0 %v2309
    %3442 = vmatpush1.msra.mxu0 %v2308
    %3443 = vmatprep.subr.mxu0 %v2301
    %3444 = vmatpush1.msra.mxu0 %v2300
    %3445 = vmatprep.subr.mxu0 %v2293
    %3446 = vmatpush1.msra.mxu0 %v2292
    %3447 = vmatprep.subr.mxu0 %v2285
    %3448 = vmatpush1.msra.mxu0 %v2284
    %3449 = vmatprep.subr.mxu0 %v2277
    %3450 = vmatpush1.msra.mxu0 %v2276
    %3451 = vmatprep.subr.mxu0 %v2269
    %3452 = vmatpush1.msra.mxu0 %v2268
    %3453 = vmatprep.subr.mxu0 %v2261
    %3454 = vmatpush1.msra.mxu0 %v2260
    %3455 = vmatprep.subr.mxu0 %v2509
    %3456 = vmatpush2.msra.mxu0 %v2508
    %3457 = vmatprep.subr.mxu0 %v2501
    %3458 = vmatpush2.msra.mxu0 %v2500
    %3459 = vmatprep.subr.mxu0 %v2493
    %3460 = vmatpush2.msra.mxu0 %v2492
    %3461 = vmatprep.subr.mxu0 %v2485
    %3462 = vmatpush2.msra.mxu0 %v2484
    %3463 = vmatprep.subr.mxu0 %v2477
    %3464 = vmatpush2.msra.mxu0 %v2476
    %3465 = vmatprep.subr.mxu0 %v2469
    %3466 = vmatpush2.msra.mxu0 %v2468
    %3467 = vmatprep.subr.mxu0 %v2461
    %3468 = vmatpush2.msra.mxu0 %v2460
    %3469 = vmatprep.subr.mxu0 %v2453
    %3470 = vmatpush2.msra.mxu0 %v2452
    %3471 = vmatprep.subr.mxu0 %v2445
    %3472 = vmatpush2.msra.mxu0 %v2444
    %3473 = vmatprep.subr.mxu0 %v2437
    %3474 = vmatpush2.msra.mxu0 %v2436
    %3475 = vmatprep.subr.mxu0 %v2429
    %3476 = vmatpush2.msra.mxu0 %v2428
    %3477 = vmatprep.subr.mxu0 %v2421
    %3478 = vmatpush2.msra.mxu0 %v2420
    %3479 = vmatprep.subr.mxu0 %v2413
    %3480 = vmatpush2.msra.mxu0 %v2412
    %3481 = vmatprep.subr.mxu0 %v2405
    %3482 = vmatpush2.msra.mxu0 %v2404
    %3483 = vmatprep.subr.mxu0 %v2397
    %3484 = vmatpush2.msra.mxu0 %v2396
    %3485 = vmatprep.subr.mxu0 %v2389
    %3486 = vmatpush2.msra.mxu0 %v2388
    %3487 = vmatprep.mubr.f32.mxu0 %v1485
    %3488 = vmatmul.mubr.f32.gmra.mxu0 %v1484
    %v3489 = vpop.f32.mrf.mxu0
    %v3490 = vadd.f32 %v3419, %v3489
    %v3491 = vpop.f32.mrf.mxu0
    %v3492 = vadd.f32 %v3421, %v3491
    %3493 = vdwg.mxu0
    %3494 = vmatprep.subr.mxu0 %v2637
    %3495 = vmatpush1.msra.mxu0 %v2636
    %3496 = vmatprep.subr.mxu0 %v2629
    %3497 = vmatpush1.msra.mxu0 %v2628
    %3498 = vmatprep.subr.mxu0 %v2621
    %3499 = vmatpush1.msra.mxu0 %v2620
    %3500 = vmatprep.subr.mxu0 %v2613
    %3501 = vmatpush1.msra.mxu0 %v2612
    %3502 = vmatprep.subr.mxu0 %v2605
    %3503 = vmatpush1.msra.mxu0 %v2604
    %3504 = vmatprep.subr.mxu0 %v2597
    %3505 = vmatpush1.msra.mxu0 %v2596
    %3506 = vmatprep.subr.mxu0 %v2589
    %3507 = vmatpush1.msra.mxu0 %v2588
    %3508 = vmatprep.subr.mxu0 %v2581
    %3509 = vmatpush1.msra.mxu0 %v2580
    %3510 = vmatprep.subr.mxu0 %v2573
    %3511 = vmatpush1.msra.mxu0 %v2572
    %3512 = vmatprep.subr.mxu0 %v2565
    %3513 = vmatpush1.msra.mxu0 %v2564
    %3514 = vmatprep.subr.mxu0 %v2557
    %3515 = vmatpush1.msra.mxu0 %v2556
    %3516 = vmatprep.subr.mxu0 %v2549
    %3517 = vmatpush1.msra.mxu0 %v2548
    %3518 = vmatprep.subr.mxu0 %v2541
    %3519 = vmatpush1.msra.mxu0 %v2540
    %3520 = vmatprep.subr.mxu0 %v2533
    %3521 = vmatpush1.msra.mxu0 %v2532
    %3522 = vmatprep.subr.mxu0 %v2525
    %3523 = vmatpush1.msra.mxu0 %v2524
    %3524 = vmatprep.subr.mxu0 %v2517
    %3525 = vmatpush1.msra.mxu0 %v2516
    %3526 = vmatprep.subr.mxu0 %v2765
    %3527 = vmatpush2.msra.mxu0 %v2764
    %3528 = vmatprep.subr.mxu0 %v2757
    %3529 = vmatpush2.msra.mxu0 %v2756
    %3530 = vmatprep.subr.mxu0 %v2749
    %3531 = vmatpush2.msra.mxu0 %v2748
    %3532 = vmatprep.subr.mxu0 %v2741
    %3533 = vmatpush2.msra.mxu0 %v2740
    %3534 = vmatprep.subr.mxu0 %v2733
    %3535 = vmatpush2.msra.mxu0 %v2732
    %3536 = vmatprep.subr.mxu0 %v2725
    %3537 = vmatpush2.msra.mxu0 %v2724
    %3538 = vmatprep.subr.mxu0 %v2717
    %3539 = vmatpush2.msra.mxu0 %v2716
    %3540 = vmatprep.subr.mxu0 %v2709
    %3541 = vmatpush2.msra.mxu0 %v2708
    %3542 = vmatprep.subr.mxu0 %v2701
    %3543 = vmatpush2.msra.mxu0 %v2700
    %3544 = vmatprep.subr.mxu0 %v2693
    %3545 = vmatpush2.msra.mxu0 %v2692
    %3546 = vmatprep.subr.mxu0 %v2685
    %3547 = vmatpush2.msra.mxu0 %v2684
    %3548 = vmatprep.subr.mxu0 %v2677
    %3549 = vmatpush2.msra.mxu0 %v2676
    %3550 = vmatprep.subr.mxu0 %v2669
    %3551 = vmatpush2.msra.mxu0 %v2668
    %3552 = vmatprep.subr.mxu0 %v2661
    %3553 = vmatpush2.msra.mxu0 %v2660
    %3554 = vmatprep.subr.mxu0 %v2653
    %3555 = vmatpush2.msra.mxu0 %v2652
    %3556 = vmatprep.subr.mxu0 %v2645
    %3557 = vmatpush2.msra.mxu0 %v2644
    %3558 = vmatprep.mubr.f32.mxu0 %v1487
    %3559 = vmatmul.mubr.f32.gmra.mxu0 %v1486
    %v3560 = vpop.f32.mrf.mxu0
    %v3561 = vadd.f32 %v3490, %v3560
    %v3562 = vpop.f32.mrf.mxu0
    %v3563 = vadd.f32 %v3492, %v3562
    %3564 = vdwg.mxu0
    %3565 = vmatprep.subr.mxu0 %v2893
    %3566 = vmatpush1.msra.mxu0 %v2892
    %3567 = vmatprep.subr.mxu0 %v2885
    %3568 = vmatpush1.msra.mxu0 %v2884
    %3569 = vmatprep.subr.mxu0 %v2877
    %3570 = vmatpush1.msra.mxu0 %v2876
    %3571 = vmatprep.subr.mxu0 %v2869
    %3572 = vmatpush1.msra.mxu0 %v2868
    %3573 = vmatprep.subr.mxu0 %v2861
    %3574 = vmatpush1.msra.mxu0 %v2860
    %3575 = vmatprep.subr.mxu0 %v2853
    %3576 = vmatpush1.msra.mxu0 %v2852
    %3577 = vmatprep.subr.mxu0 %v2845
    %3578 = vmatpush1.msra.mxu0 %v2844
    %3579 = vmatprep.subr.mxu0 %v2837
    %3580 = vmatpush1.msra.mxu0 %v2836
    %3581 = vmatprep.subr.mxu0 %v2829
    %3582 = vmatpush1.msra.mxu0 %v2828
    %3583 = vmatprep.subr.mxu0 %v2821
    %3584 = vmatpush1.msra.mxu0 %v2820
    %3585 = vmatprep.subr.mxu0 %v2813
    %3586 = vmatpush1.msra.mxu0 %v2812
    %3587 = vmatprep.subr.mxu0 %v2805
    %3588 = vmatpush1.msra.mxu0 %v2804
    %3589 = vmatprep.subr.mxu0 %v2797
    %3590 = vmatpush1.msra.mxu0 %v2796
    %3591 = vmatprep.subr.mxu0 %v2789
    %3592 = vmatpush1.msra.mxu0 %v2788
    %3593 = vmatprep.subr.mxu0 %v2781
    %3594 = vmatpush1.msra.mxu0 %v2780
    %3595 = vmatprep.subr.mxu0 %v2773
    %3596 = vmatpush1.msra.mxu0 %v2772
    %3597 = vmatprep.subr.mxu0 %v3021
    %3598 = vmatpush2.msra.mxu0 %v3020
    %3599 = vmatprep.subr.mxu0 %v3013
    %3600 = vmatpush2.msra.mxu0 %v3012
    %3601 = vmatprep.subr.mxu0 %v3005
    %3602 = vmatpush2.msra.mxu0 %v3004
    %3603 = vmatprep.subr.mxu0 %v2997
    %3604 = vmatpush2.msra.mxu0 %v2996
    %3605 = vmatprep.subr.mxu0 %v2989
    %3606 = vmatpush2.msra.mxu0 %v2988
    %3607 = vmatprep.subr.mxu0 %v2981
    %3608 = vmatpush2.msra.mxu0 %v2980
    %3609 = vmatprep.subr.mxu0 %v2973
    %3610 = vmatpush2.msra.mxu0 %v2972
    %3611 = vmatprep.subr.mxu0 %v2965
    %3612 = vmatpush2.msra.mxu0 %v2964
    %3613 = vmatprep.subr.mxu0 %v2957
    %3614 = vmatpush2.msra.mxu0 %v2956
    %3615 = vmatprep.subr.mxu0 %v2949
    %3616 = vmatpush2.msra.mxu0 %v2948
    %3617 = vmatprep.subr.mxu0 %v2941
    %3618 = vmatpush2.msra.mxu0 %v2940
    %3619 = vmatprep.subr.mxu0 %v2933
    %3620 = vmatpush2.msra.mxu0 %v2932
    %3621 = vmatprep.subr.mxu0 %v2925
    %3622 = vmatpush2.msra.mxu0 %v2924
    %3623 = vmatprep.subr.mxu0 %v2917
    %3624 = vmatpush2.msra.mxu0 %v2916
    %3625 = vmatprep.subr.mxu0 %v2909
    %3626 = vmatpush2.msra.mxu0 %v2908
    %3627 = vmatprep.subr.mxu0 %v2901
    %3628 = vmatpush2.msra.mxu0 %v2900
    %3629 = vmatprep.mubr.f32.mxu0 %v1489
    %3630 = vmatmul.mubr.f32.gmra.mxu0 %v1488
    %v3631 = vpop.f32.mrf.mxu0
    %v3632 = vadd.f32 %v3561, %v3631
    %v3633 = vpop.f32.mrf.mxu0
    %v3634 = vadd.f32 %v3563, %v3633
    %3635 = vdwg.mxu0
    %3636 = vmatprep.subr.mxu0 %v2127
    %3637 = vmatpush1.msra.mxu0 %v2126
    %3638 = vmatprep.subr.mxu0 %v2119
    %3639 = vmatpush1.msra.mxu0 %v2118
    %3640 = vmatprep.subr.mxu0 %v2111
    %3641 = vmatpush1.msra.mxu0 %v2110
    %3642 = vmatprep.subr.mxu0 %v2103
    %3643 = vmatpush1.msra.mxu0 %v2102
    %3644 = vmatprep.subr.mxu0 %v2095
    %3645 = vmatpush1.msra.mxu0 %v2094
    %3646 = vmatprep.subr.mxu0 %v2087
    %3647 = vmatpush1.msra.mxu0 %v2086
    %3648 = vmatprep.subr.mxu0 %v2079
    %3649 = vmatpush1.msra.mxu0 %v2078
    %3650 = vmatprep.subr.mxu0 %v2071
    %3651 = vmatpush1.msra.mxu0 %v2070
    %3652 = vmatprep.subr.mxu0 %v2063
    %3653 = vmatpush1.msra.mxu0 %v2062
    %3654 = vmatprep.subr.mxu0 %v2055
    %3655 = vmatpush1.msra.mxu0 %v2054
    %3656 = vmatprep.subr.mxu0 %v2047
    %3657 = vmatpush1.msra.mxu0 %v2046
    %3658 = vmatprep.subr.mxu0 %v2039
    %3659 = vmatpush1.msra.mxu0 %v2038
    %3660 = vmatprep.subr.mxu0 %v2031
    %3661 = vmatpush1.msra.mxu0 %v2030
    %3662 = vmatprep.subr.mxu0 %v2023
    %3663 = vmatpush1.msra.mxu0 %v2022
    %3664 = vmatprep.subr.mxu0 %v2015
    %3665 = vmatpush1.msra.mxu0 %v2014
    %3666 = vmatprep.subr.mxu0 %v2007
    %3667 = vmatpush1.msra.mxu0 %v2006
    %3668 = vmatprep.subr.mxu0 %v2255
    %3669 = vmatpush2.msra.mxu0 %v2254
    %3670 = vmatprep.subr.mxu0 %v2247
    %3671 = vmatpush2.msra.mxu0 %v2246
    %3672 = vmatprep.subr.mxu0 %v2239
    %3673 = vmatpush2.msra.mxu0 %v2238
    %3674 = vmatprep.subr.mxu0 %v2231
    %3675 = vmatpush2.msra.mxu0 %v2230
    %3676 = vmatprep.subr.mxu0 %v2223
    %3677 = vmatpush2.msra.mxu0 %v2222
    %3678 = vmatprep.subr.mxu0 %v2215
    %3679 = vmatpush2.msra.mxu0 %v2214
    %3680 = vmatprep.subr.mxu0 %v2207
    %3681 = vmatpush2.msra.mxu0 %v2206
    %3682 = vmatprep.subr.mxu0 %v2199
    %3683 = vmatpush2.msra.mxu0 %v2198
    %3684 = vmatprep.subr.mxu0 %v2191
    %3685 = vmatpush2.msra.mxu0 %v2190
    %3686 = vmatprep.subr.mxu0 %v2183
    %3687 = vmatpush2.msra.mxu0 %v2182
    %3688 = vmatprep.subr.mxu0 %v2175
    %3689 = vmatpush2.msra.mxu0 %v2174
    %3690 = vmatprep.subr.mxu0 %v2167
    %3691 = vmatpush2.msra.mxu0 %v2166
    %3692 = vmatprep.subr.mxu0 %v2159
    %3693 = vmatpush2.msra.mxu0 %v2158
    %3694 = vmatprep.subr.mxu0 %v2151
    %3695 = vmatpush2.msra.mxu0 %v2150
    %3696 = vmatprep.subr.mxu0 %v2143
    %3697 = vmatpush2.msra.mxu0 %v2142
    %3698 = vmatprep.subr.mxu0 %v2135
    %3699 = vmatpush2.msra.mxu0 %v2134
    %3700 = vmatprep.mubr.f32.mxu0 %v1483
    %3701 = vmatmul.mubr.f32.gmra.mxu0 %v1482
    %v3702 = vpop.f32.mrf.mxu0
    %v3703 = vadd.f32 %v3047, %v3702
    %v3704 = vpop.f32.mrf.mxu0
    %v3705 = vadd.f32 %v3051, %v3704
    %3706 = vdwg.mxu0
    %3707 = vmatprep.subr.mxu0 %v2383
    %3708 = vmatpush1.msra.mxu0 %v2382
    %3709 = vmatprep.subr.mxu0 %v2375
    %3710 = vmatpush1.msra.mxu0 %v2374
    %3711 = vmatprep.subr.mxu0 %v2367
    %3712 = vmatpush1.msra.mxu0 %v2366
    %3713 = vmatprep.subr.mxu0 %v2359
    %3714 = vmatpush1.msra.mxu0 %v2358
    %3715 = vmatprep.subr.mxu0 %v2351
    %3716 = vmatpush1.msra.mxu0 %v2350
    %3717 = vmatprep.subr.mxu0 %v2343
    %3718 = vmatpush1.msra.mxu0 %v2342
    %3719 = vmatprep.subr.mxu0 %v2335
    %3720 = vmatpush1.msra.mxu0 %v2334
    %3721 = vmatprep.subr.mxu0 %v2327
    %3722 = vmatpush1.msra.mxu0 %v2326
    %3723 = vmatprep.subr.mxu0 %v2319
    %3724 = vmatpush1.msra.mxu0 %v2318
    %3725 = vmatprep.subr.mxu0 %v2311
    %3726 = vmatpush1.msra.mxu0 %v2310
    %3727 = vmatprep.subr.mxu0 %v2303
    %3728 = vmatpush1.msra.mxu0 %v2302
    %3729 = vmatprep.subr.mxu0 %v2295
    %3730 = vmatpush1.msra.mxu0 %v2294
    %3731 = vmatprep.subr.mxu0 %v2287
    %3732 = vmatpush1.msra.mxu0 %v2286
    %3733 = vmatprep.subr.mxu0 %v2279
    %3734 = vmatpush1.msra.mxu0 %v2278
    %3735 = vmatprep.subr.mxu0 %v2271
    %3736 = vmatpush1.msra.mxu0 %v2270
    %3737 = vmatprep.subr.mxu0 %v2263
    %3738 = vmatpush1.msra.mxu0 %v2262
    %3739 = vmatprep.subr.mxu0 %v2511
    %3740 = vmatpush2.msra.mxu0 %v2510
    %3741 = vmatprep.subr.mxu0 %v2503
    %3742 = vmatpush2.msra.mxu0 %v2502
    %3743 = vmatprep.subr.mxu0 %v2495
    %3744 = vmatpush2.msra.mxu0 %v2494
    %3745 = vmatprep.subr.mxu0 %v2487
    %3746 = vmatpush2.msra.mxu0 %v2486
    %3747 = vmatprep.subr.mxu0 %v2479
    %3748 = vmatpush2.msra.mxu0 %v2478
    %3749 = vmatprep.subr.mxu0 %v2471
    %3750 = vmatpush2.msra.mxu0 %v2470
    %3751 = vmatprep.subr.mxu0 %v2463
    %3752 = vmatpush2.msra.mxu0 %v2462
    %3753 = vmatprep.subr.mxu0 %v2455
    %3754 = vmatpush2.msra.mxu0 %v2454
    %3755 = vmatprep.subr.mxu0 %v2447
    %3756 = vmatpush2.msra.mxu0 %v2446
    %3757 = vmatprep.subr.mxu0 %v2439
    %3758 = vmatpush2.msra.mxu0 %v2438
    %3759 = vmatprep.subr.mxu0 %v2431
    %3760 = vmatpush2.msra.mxu0 %v2430
    %3761 = vmatprep.subr.mxu0 %v2423
    %3762 = vmatpush2.msra.mxu0 %v2422
    %3763 = vmatprep.subr.mxu0 %v2415
    %3764 = vmatpush2.msra.mxu0 %v2414
    %3765 = vmatprep.subr.mxu0 %v2407
    %3766 = vmatpush2.msra.mxu0 %v2406
    %3767 = vmatprep.subr.mxu0 %v2399
    %3768 = vmatpush2.msra.mxu0 %v2398
    %3769 = vmatprep.subr.mxu0 %v2391
    %3770 = vmatpush2.msra.mxu0 %v2390
    %3771 = vmatprep.mubr.f32.mxu0 %v1485
    %3772 = vmatmul.mubr.f32.gmra.mxu0 %v1484
    %v3773 = vpop.f32.mrf.mxu0
    %v3774 = vadd.f32 %v3703, %v3773
    %v3775 = vpop.f32.mrf.mxu0
    %v3776 = vadd.f32 %v3705, %v3775
    %3777 = vdwg.mxu0
    %3778 = vmatprep.subr.mxu0 %v2639
    %3779 = vmatpush1.msra.mxu0 %v2638
    %3780 = vmatprep.subr.mxu0 %v2631
    %3781 = vmatpush1.msra.mxu0 %v2630
    %3782 = vmatprep.subr.mxu0 %v2623
    %3783 = vmatpush1.msra.mxu0 %v2622
    %3784 = vmatprep.subr.mxu0 %v2615
    %3785 = vmatpush1.msra.mxu0 %v2614
    %3786 = vmatprep.subr.mxu0 %v2607
    %3787 = vmatpush1.msra.mxu0 %v2606
    %3788 = vmatprep.subr.mxu0 %v2599
    %3789 = vmatpush1.msra.mxu0 %v2598
    %3790 = vmatprep.subr.mxu0 %v2591
    %3791 = vmatpush1.msra.mxu0 %v2590
    %3792 = vmatprep.subr.mxu0 %v2583
    %3793 = vmatpush1.msra.mxu0 %v2582
    %3794 = vmatprep.subr.mxu0 %v2575
    %3795 = vmatpush1.msra.mxu0 %v2574
    %3796 = vmatprep.subr.mxu0 %v2567
    %3797 = vmatpush1.msra.mxu0 %v2566
    %3798 = vmatprep.subr.mxu0 %v2559
    %3799 = vmatpush1.msra.mxu0 %v2558
    %3800 = vmatprep.subr.mxu0 %v2551
    %3801 = vmatpush1.msra.mxu0 %v2550
    %3802 = vmatprep.subr.mxu0 %v2543
    %3803 = vmatpush1.msra.mxu0 %v2542
    %3804 = vmatprep.subr.mxu0 %v2535
    %3805 = vmatpush1.msra.mxu0 %v2534
    %3806 = vmatprep.subr.mxu0 %v2527
    %3807 = vmatpush1.msra.mxu0 %v2526
    %3808 = vmatprep.subr.mxu0 %v2519
    %3809 = vmatpush1.msra.mxu0 %v2518
    %3810 = vmatprep.subr.mxu0 %v2767
    %3811 = vmatpush2.msra.mxu0 %v2766
    %3812 = vmatprep.subr.mxu0 %v2759
    %3813 = vmatpush2.msra.mxu0 %v2758
    %3814 = vmatprep.subr.mxu0 %v2751
    %3815 = vmatpush2.msra.mxu0 %v2750
    %3816 = vmatprep.subr.mxu0 %v2743
    %3817 = vmatpush2.msra.mxu0 %v2742
    %3818 = vmatprep.subr.mxu0 %v2735
    %3819 = vmatpush2.msra.mxu0 %v2734
    %3820 = vmatprep.subr.mxu0 %v2727
    %3821 = vmatpush2.msra.mxu0 %v2726
    %3822 = vmatprep.subr.mxu0 %v2719
    %3823 = vmatpush2.msra.mxu0 %v2718
    %3824 = vmatprep.subr.mxu0 %v2711
    %3825 = vmatpush2.msra.mxu0 %v2710
    %3826 = vmatprep.subr.mxu0 %v2703
    %3827 = vmatpush2.msra.mxu0 %v2702
    %3828 = vmatprep.subr.mxu0 %v2695
    %3829 = vmatpush2.msra.mxu0 %v2694
    %3830 = vmatprep.subr.mxu0 %v2687
    %3831 = vmatpush2.msra.mxu0 %v2686
    %3832 = vmatprep.subr.mxu0 %v2679
    %3833 = vmatpush2.msra.mxu0 %v2678
    %3834 = vmatprep.subr.mxu0 %v2671
    %3835 = vmatpush2.msra.mxu0 %v2670
    %3836 = vmatprep.subr.mxu0 %v2663
    %3837 = vmatpush2.msra.mxu0 %v2662
    %3838 = vmatprep.subr.mxu0 %v2655
    %3839 = vmatpush2.msra.mxu0 %v2654
    %3840 = vmatprep.subr.mxu0 %v2647
    %3841 = vmatpush2.msra.mxu0 %v2646
    %3842 = vmatprep.mubr.f32.mxu0 %v1487
    %3843 = vmatmul.mubr.f32.gmra.mxu0 %v1486
    %v3844 = vpop.f32.mrf.mxu0
    %v3845 = vadd.f32 %v3774, %v3844
    %v3846 = vpop.f32.mrf.mxu0
    %v3847 = vadd.f32 %v3776, %v3846
    %3848 = vdwg.mxu0
    %3849 = vmatprep.subr.mxu0 %v2895
    %3850 = vmatpush1.msra.mxu0 %v2894
    %3851 = vmatprep.subr.mxu0 %v2887
    %3852 = vmatpush1.msra.mxu0 %v2886
    %3853 = vmatprep.subr.mxu0 %v2879
    %3854 = vmatpush1.msra.mxu0 %v2878
    %3855 = vmatprep.subr.mxu0 %v2871
    %3856 = vmatpush1.msra.mxu0 %v2870
    %3857 = vmatprep.subr.mxu0 %v2863
    %3858 = vmatpush1.msra.mxu0 %v2862
    %3859 = vmatprep.subr.mxu0 %v2855
    %3860 = vmatpush1.msra.mxu0 %v2854
    %3861 = vmatprep.subr.mxu0 %v2847
    %3862 = vmatpush1.msra.mxu0 %v2846
    %3863 = vmatprep.subr.mxu0 %v2839
    %3864 = vmatpush1.msra.mxu0 %v2838
    %3865 = vmatprep.subr.mxu0 %v2831
    %3866 = vmatpush1.msra.mxu0 %v2830
    %3867 = vmatprep.subr.mxu0 %v2823
    %3868 = vmatpush1.msra.mxu0 %v2822
    %3869 = vmatprep.subr.mxu0 %v2815
    %3870 = vmatpush1.msra.mxu0 %v2814
    %3871 = vmatprep.subr.mxu0 %v2807
    %3872 = vmatpush1.msra.mxu0 %v2806
    %3873 = vmatprep.subr.mxu0 %v2799
    %3874 = vmatpush1.msra.mxu0 %v2798
    %3875 = vmatprep.subr.mxu0 %v2791
    %3876 = vmatpush1.msra.mxu0 %v2790
    %3877 = vmatprep.subr.mxu0 %v2783
    %3878 = vmatpush1.msra.mxu0 %v2782
    %3879 = vmatprep.subr.mxu0 %v2775
    %3880 = vmatpush1.msra.mxu0 %v2774
    %3881 = vmatprep.subr.mxu0 %v3023
    %3882 = vmatpush2.msra.mxu0 %v3022
    %3883 = vmatprep.subr.mxu0 %v3015
    %3884 = vmatpush2.msra.mxu0 %v3014
    %3885 = vmatprep.subr.mxu0 %v3007
    %3886 = vmatpush2.msra.mxu0 %v3006
    %3887 = vmatprep.subr.mxu0 %v2999
    %3888 = vmatpush2.msra.mxu0 %v2998
    %3889 = vmatprep.subr.mxu0 %v2991
    %3890 = vmatpush2.msra.mxu0 %v2990
    %3891 = vmatprep.subr.mxu0 %v2983
    %3892 = vmatpush2.msra.mxu0 %v2982
    %3893 = vmatprep.subr.mxu0 %v2975
    %3894 = vmatpush2.msra.mxu0 %v2974
    %3895 = vmatprep.subr.mxu0 %v2967
    %3896 = vmatpush2.msra.mxu0 %v2966
    %3897 = vmatprep.subr.mxu0 %v2959
    %3898 = vmatpush2.msra.mxu0 %v2958
    %3899 = vmatprep.subr.mxu0 %v2951
    %3900 = vmatpush2.msra.mxu0 %v2950
    %3901 = vmatprep.subr.mxu0 %v2943
    %3902 = vmatpush2.msra.mxu0 %v2942
    %3903 = vmatprep.subr.mxu0 %v2935
    %3904 = vmatpush2.msra.mxu0 %v2934
    %3905 = vmatprep.subr.mxu0 %v2927
    %3906 = vmatpush2.msra.mxu0 %v2926
    %3907 = vmatprep.subr.mxu0 %v2919
    %3908 = vmatpush2.msra.mxu0 %v2918
    %3909 = vmatprep.subr.mxu0 %v2911
    %3910 = vmatpush2.msra.mxu0 %v2910
    %3911 = vmatprep.subr.mxu0 %v2903
    %3912 = vmatpush2.msra.mxu0 %v2902
    %3913 = vmatprep.mubr.f32.mxu0 %v1489
    %3914 = vmatmul.mubr.f32.gmra.mxu0 %v1488
    %v3915 = vpop.f32.mrf.mxu0
    %v3916 = vadd.f32 %v3845, %v3915
    %v3917 = vpop.f32.mrf.mxu0
    %v3918 = vadd.f32 %v3847, %v3917
    %3919 = vdwg.mxu0
    %3920 = vmatprep.subr.mxu0 %v2129
    %3921 = vmatpush1.msra.mxu0 %v2128
    %3922 = vmatprep.subr.mxu0 %v2121
    %3923 = vmatpush1.msra.mxu0 %v2120
    %3924 = vmatprep.subr.mxu0 %v2113
    %3925 = vmatpush1.msra.mxu0 %v2112
    %3926 = vmatprep.subr.mxu0 %v2105
    %3927 = vmatpush1.msra.mxu0 %v2104
    %3928 = vmatprep.subr.mxu0 %v2097
    %3929 = vmatpush1.msra.mxu0 %v2096
    %3930 = vmatprep.subr.mxu0 %v2089
    %3931 = vmatpush1.msra.mxu0 %v2088
    %3932 = vmatprep.subr.mxu0 %v2081
    %3933 = vmatpush1.msra.mxu0 %v2080
    %3934 = vmatprep.subr.mxu0 %v2073
    %3935 = vmatpush1.msra.mxu0 %v2072
    %3936 = vmatprep.subr.mxu0 %v2065
    %3937 = vmatpush1.msra.mxu0 %v2064
    %3938 = vmatprep.subr.mxu0 %v2057
    %3939 = vmatpush1.msra.mxu0 %v2056
    %3940 = vmatprep.subr.mxu0 %v2049
    %3941 = vmatpush1.msra.mxu0 %v2048
    %3942 = vmatprep.subr.mxu0 %v2041
    %3943 = vmatpush1.msra.mxu0 %v2040
    %3944 = vmatprep.subr.mxu0 %v2033
    %3945 = vmatpush1.msra.mxu0 %v2032
    %3946 = vmatprep.subr.mxu0 %v2025
    %3947 = vmatpush1.msra.mxu0 %v2024
    %3948 = vmatprep.subr.mxu0 %v2017
    %3949 = vmatpush1.msra.mxu0 %v2016
    %3950 = vmatprep.subr.mxu0 %v2009
    %3951 = vmatpush1.msra.mxu0 %v2008
    %3952 = vmatprep.subr.mxu0 %v2257
    %3953 = vmatpush2.msra.mxu0 %v2256
    %3954 = vmatprep.subr.mxu0 %v2249
    %3955 = vmatpush2.msra.mxu0 %v2248
    %3956 = vmatprep.subr.mxu0 %v2241
    %3957 = vmatpush2.msra.mxu0 %v2240
    %3958 = vmatprep.subr.mxu0 %v2233
    %3959 = vmatpush2.msra.mxu0 %v2232
    %3960 = vmatprep.subr.mxu0 %v2225
    %3961 = vmatpush2.msra.mxu0 %v2224
    %3962 = vmatprep.subr.mxu0 %v2217
    %3963 = vmatpush2.msra.mxu0 %v2216
    %3964 = vmatprep.subr.mxu0 %v2209
    %3965 = vmatpush2.msra.mxu0 %v2208
    %3966 = vmatprep.subr.mxu0 %v2201
    %3967 = vmatpush2.msra.mxu0 %v2200
    %3968 = vmatprep.subr.mxu0 %v2193
    %3969 = vmatpush2.msra.mxu0 %v2192
    %3970 = vmatprep.subr.mxu0 %v2185
    %3971 = vmatpush2.msra.mxu0 %v2184
    %3972 = vmatprep.subr.mxu0 %v2177
    %3973 = vmatpush2.msra.mxu0 %v2176
    %3974 = vmatprep.subr.mxu0 %v2169
    %3975 = vmatpush2.msra.mxu0 %v2168
    %3976 = vmatprep.subr.mxu0 %v2161
    %3977 = vmatpush2.msra.mxu0 %v2160
    %3978 = vmatprep.subr.mxu0 %v2153
    %3979 = vmatpush2.msra.mxu0 %v2152
    %3980 = vmatprep.subr.mxu0 %v2145
    %3981 = vmatpush2.msra.mxu0 %v2144
    %3982 = vmatprep.subr.mxu0 %v2137
    %3983 = vmatpush2.msra.mxu0 %v2136
    %3984 = vmatprep.mubr.f32.mxu0 %v1483
    %3985 = vmatmul.mubr.f32.gmra.mxu0 %v1482
    %v3986 = vpop.f32.mrf.mxu0
    %v3987 = vadd.f32 %v3055, %v3986
    %v3988 = vpop.f32.mrf.mxu0
    %v3989 = vadd.f32 %v3059, %v3988
    %3990 = vdwg.mxu0
    %3991 = vmatprep.subr.mxu0 %v2385
    %3992 = vmatpush1.msra.mxu0 %v2384
    %3993 = vmatprep.subr.mxu0 %v2377
    %3994 = vmatpush1.msra.mxu0 %v2376
    %3995 = vmatprep.subr.mxu0 %v2369
    %3996 = vmatpush1.msra.mxu0 %v2368
    %3997 = vmatprep.subr.mxu0 %v2361
    %3998 = vmatpush1.msra.mxu0 %v2360
    %3999 = vmatprep.subr.mxu0 %v2353
    %4000 = vmatpush1.msra.mxu0 %v2352
    %4001 = vmatprep.subr.mxu0 %v2345
    %4002 = vmatpush1.msra.mxu0 %v2344
    %4003 = vmatprep.subr.mxu0 %v2337
    %4004 = vmatpush1.msra.mxu0 %v2336
    %4005 = vmatprep.subr.mxu0 %v2329
    %4006 = vmatpush1.msra.mxu0 %v2328
    %4007 = vmatprep.subr.mxu0 %v2321
    %4008 = vmatpush1.msra.mxu0 %v2320
    %4009 = vmatprep.subr.mxu0 %v2313
    %4010 = vmatpush1.msra.mxu0 %v2312
    %4011 = vmatprep.subr.mxu0 %v2305
    %4012 = vmatpush1.msra.mxu0 %v2304
    %4013 = vmatprep.subr.mxu0 %v2297
    %4014 = vmatpush1.msra.mxu0 %v2296
    %4015 = vmatprep.subr.mxu0 %v2289
    %4016 = vmatpush1.msra.mxu0 %v2288
    %4017 = vmatprep.subr.mxu0 %v2281
    %4018 = vmatpush1.msra.mxu0 %v2280
    %4019 = vmatprep.subr.mxu0 %v2273
    %4020 = vmatpush1.msra.mxu0 %v2272
    %4021 = vmatprep.subr.mxu0 %v2265
    %4022 = vmatpush1.msra.mxu0 %v2264
    %4023 = vmatprep.subr.mxu0 %v2513
    %4024 = vmatpush2.msra.mxu0 %v2512
    %4025 = vmatprep.subr.mxu0 %v2505
    %4026 = vmatpush2.msra.mxu0 %v2504
    %4027 = vmatprep.subr.mxu0 %v2497
    %4028 = vmatpush2.msra.mxu0 %v2496
    %4029 = vmatprep.subr.mxu0 %v2489
    %4030 = vmatpush2.msra.mxu0 %v2488
    %4031 = vmatprep.subr.mxu0 %v2481
    %4032 = vmatpush2.msra.mxu0 %v2480
    %4033 = vmatprep.subr.mxu0 %v2473
    %4034 = vmatpush2.msra.mxu0 %v2472
    %4035 = vmatprep.subr.mxu0 %v2465
    %4036 = vmatpush2.msra.mxu0 %v2464
    %4037 = vmatprep.subr.mxu0 %v2457
    %4038 = vmatpush2.msra.mxu0 %v2456
    %4039 = vmatprep.subr.mxu0 %v2449
    %4040 = vmatpush2.msra.mxu0 %v2448
    %4041 = vmatprep.subr.mxu0 %v2441
    %4042 = vmatpush2.msra.mxu0 %v2440
    %4043 = vmatprep.subr.mxu0 %v2433
    %4044 = vmatpush2.msra.mxu0 %v2432
    %4045 = vmatprep.subr.mxu0 %v2425
    %4046 = vmatpush2.msra.mxu0 %v2424
    %4047 = vmatprep.subr.mxu0 %v2417
    %4048 = vmatpush2.msra.mxu0 %v2416
    %4049 = vmatprep.subr.mxu0 %v2409
    %4050 = vmatpush2.msra.mxu0 %v2408
    %4051 = vmatprep.subr.mxu0 %v2401
    %4052 = vmatpush2.msra.mxu0 %v2400
    %4053 = vmatprep.subr.mxu0 %v2393
    %4054 = vmatpush2.msra.mxu0 %v2392
    %4055 = vmatprep.mubr.f32.mxu0 %v1485
    %4056 = vmatmul.mubr.f32.gmra.mxu0 %v1484
    %v4057 = vpop.f32.mrf.mxu0
    %v4058 = vadd.f32 %v3987, %v4057
    %v4059 = vpop.f32.mrf.mxu0
    %v4060 = vadd.f32 %v3989, %v4059
    %4061 = vdwg.mxu0
    %4062 = vmatprep.subr.mxu0 %v2641
    %4063 = vmatpush1.msra.mxu0 %v2640
    %4064 = vmatprep.subr.mxu0 %v2633
    %4065 = vmatpush1.msra.mxu0 %v2632
    %4066 = vmatprep.subr.mxu0 %v2625
    %4067 = vmatpush1.msra.mxu0 %v2624
    %4068 = vmatprep.subr.mxu0 %v2617
    %4069 = vmatpush1.msra.mxu0 %v2616
    %4070 = vmatprep.subr.mxu0 %v2609
    %4071 = vmatpush1.msra.mxu0 %v2608
    %4072 = vmatprep.subr.mxu0 %v2601
    %4073 = vmatpush1.msra.mxu0 %v2600
    %4074 = vmatprep.subr.mxu0 %v2593
    %4075 = vmatpush1.msra.mxu0 %v2592
    %4076 = vmatprep.subr.mxu0 %v2585
    %4077 = vmatpush1.msra.mxu0 %v2584
    %4078 = vmatprep.subr.mxu0 %v2577
    %4079 = vmatpush1.msra.mxu0 %v2576
    %4080 = vmatprep.subr.mxu0 %v2569
    %4081 = vmatpush1.msra.mxu0 %v2568
    %4082 = vmatprep.subr.mxu0 %v2561
    %4083 = vmatpush1.msra.mxu0 %v2560
    %4084 = vmatprep.subr.mxu0 %v2553
    %4085 = vmatpush1.msra.mxu0 %v2552
    %4086 = vmatprep.subr.mxu0 %v2545
    %4087 = vmatpush1.msra.mxu0 %v2544
    %4088 = vmatprep.subr.mxu0 %v2537
    %4089 = vmatpush1.msra.mxu0 %v2536
    %4090 = vmatprep.subr.mxu0 %v2529
    %4091 = vmatpush1.msra.mxu0 %v2528
    %4092 = vmatprep.subr.mxu0 %v2521
    %4093 = vmatpush1.msra.mxu0 %v2520
    %4094 = vmatprep.subr.mxu0 %v2769
    %4095 = vmatpush2.msra.mxu0 %v2768
    %4096 = vmatprep.subr.mxu0 %v2761
    %4097 = vmatpush2.msra.mxu0 %v2760
    %4098 = vmatprep.subr.mxu0 %v2753
    %4099 = vmatpush2.msra.mxu0 %v2752
    %4100 = vmatprep.subr.mxu0 %v2745
    %4101 = vmatpush2.msra.mxu0 %v2744
    %4102 = vmatprep.subr.mxu0 %v2737
    %4103 = vmatpush2.msra.mxu0 %v2736
    %4104 = vmatprep.subr.mxu0 %v2729
    %4105 = vmatpush2.msra.mxu0 %v2728
    %4106 = vmatprep.subr.mxu0 %v2721
    %4107 = vmatpush2.msra.mxu0 %v2720
    %4108 = vmatprep.subr.mxu0 %v2713
    %4109 = vmatpush2.msra.mxu0 %v2712
    %4110 = vmatprep.subr.mxu0 %v2705
    %4111 = vmatpush2.msra.mxu0 %v2704
    %4112 = vmatprep.subr.mxu0 %v2697
    %4113 = vmatpush2.msra.mxu0 %v2696
    %4114 = vmatprep.subr.mxu0 %v2689
    %4115 = vmatpush2.msra.mxu0 %v2688
    %4116 = vmatprep.subr.mxu0 %v2681
    %4117 = vmatpush2.msra.mxu0 %v2680
    %4118 = vmatprep.subr.mxu0 %v2673
    %4119 = vmatpush2.msra.mxu0 %v2672
    %4120 = vmatprep.subr.mxu0 %v2665
    %4121 = vmatpush2.msra.mxu0 %v2664
    %4122 = vmatprep.subr.mxu0 %v2657
    %4123 = vmatpush2.msra.mxu0 %v2656
    %4124 = vmatprep.subr.mxu0 %v2649
    %4125 = vmatpush2.msra.mxu0 %v2648
    %4126 = vmatprep.mubr.f32.mxu0 %v1487
    %4127 = vmatmul.mubr.f32.gmra.mxu0 %v1486
    %v4128 = vpop.f32.mrf.mxu0
    %v4129 = vadd.f32 %v4058, %v4128
    %v4130 = vpop.f32.mrf.mxu0
    %v4131 = vadd.f32 %v4060, %v4130
    %4132 = vdwg.mxu0
    %4133 = vmatprep.subr.mxu0 %v2897
    %4134 = vmatpush1.msra.mxu0 %v2896
    %4135 = vmatprep.subr.mxu0 %v2889
    %4136 = vmatpush1.msra.mxu0 %v2888
    %4137 = vmatprep.subr.mxu0 %v2881
    %4138 = vmatpush1.msra.mxu0 %v2880
    %4139 = vmatprep.subr.mxu0 %v2873
    %4140 = vmatpush1.msra.mxu0 %v2872
    %4141 = vmatprep.subr.mxu0 %v2865
    %4142 = vmatpush1.msra.mxu0 %v2864
    %4143 = vmatprep.subr.mxu0 %v2857
    %4144 = vmatpush1.msra.mxu0 %v2856
    %4145 = vmatprep.subr.mxu0 %v2849
    %4146 = vmatpush1.msra.mxu0 %v2848
    %4147 = vmatprep.subr.mxu0 %v2841
    %4148 = vmatpush1.msra.mxu0 %v2840
    %4149 = vmatprep.subr.mxu0 %v2833
    %4150 = vmatpush1.msra.mxu0 %v2832
    %4151 = vmatprep.subr.mxu0 %v2825
    %4152 = vmatpush1.msra.mxu0 %v2824
    %4153 = vmatprep.subr.mxu0 %v2817
    %4154 = vmatpush1.msra.mxu0 %v2816
    %4155 = vmatprep.subr.mxu0 %v2809
    %4156 = vmatpush1.msra.mxu0 %v2808
    %4157 = vmatprep.subr.mxu0 %v2801
    %4158 = vmatpush1.msra.mxu0 %v2800
    %4159 = vmatprep.subr.mxu0 %v2793
    %4160 = vmatpush1.msra.mxu0 %v2792
    %4161 = vmatprep.subr.mxu0 %v2785
    %4162 = vmatpush1.msra.mxu0 %v2784
    %4163 = vmatprep.subr.mxu0 %v2777
    %4164 = vmatpush1.msra.mxu0 %v2776
    %4165 = vmatprep.subr.mxu0 %v3025
    %4166 = vmatpush2.msra.mxu0 %v3024
    %4167 = vmatprep.subr.mxu0 %v3017
    %4168 = vmatpush2.msra.mxu0 %v3016
    %4169 = vmatprep.subr.mxu0 %v3009
    %4170 = vmatpush2.msra.mxu0 %v3008
    %4171 = vmatprep.subr.mxu0 %v3001
    %4172 = vmatpush2.msra.mxu0 %v3000
    %4173 = vmatprep.subr.mxu0 %v2993
    %4174 = vmatpush2.msra.mxu0 %v2992
    %4175 = vmatprep.subr.mxu0 %v2985
    %4176 = vmatpush2.msra.mxu0 %v2984
    %4177 = vmatprep.subr.mxu0 %v2977
    %4178 = vmatpush2.msra.mxu0 %v2976
    %4179 = vmatprep.subr.mxu0 %v2969
    %4180 = vmatpush2.msra.mxu0 %v2968
    %4181 = vmatprep.subr.mxu0 %v2961
    %4182 = vmatpush2.msra.mxu0 %v2960
    %4183 = vmatprep.subr.mxu0 %v2953
    %4184 = vmatpush2.msra.mxu0 %v2952
    %4185 = vmatprep.subr.mxu0 %v2945
    %4186 = vmatpush2.msra.mxu0 %v2944
    %4187 = vmatprep.subr.mxu0 %v2937
    %4188 = vmatpush2.msra.mxu0 %v2936
    %4189 = vmatprep.subr.mxu0 %v2929
    %4190 = vmatpush2.msra.mxu0 %v2928
    %4191 = vmatprep.subr.mxu0 %v2921
    %4192 = vmatpush2.msra.mxu0 %v2920
    %4193 = vmatprep.subr.mxu0 %v2913
    %4194 = vmatpush2.msra.mxu0 %v2912
    %4195 = vmatprep.subr.mxu0 %v2905
    %4196 = vmatpush2.msra.mxu0 %v2904
    %4197 = vmatprep.mubr.f32.mxu0 %v1489
    %4198 = vmatmul.mubr.f32.gmra.mxu0 %v1488
    %v4199 = vpop.f32.mrf.mxu0
    %v4200 = vadd.f32 %v4129, %v4199
    %v4201 = vpop.f32.mrf.mxu0
    %v4202 = vadd.f32 %v4131, %v4201
    %4203 = vdwg.mxu0
    %vm4204 = vcmp.ge.f32.partialorder %v3348, 0.0
    %vm4205 = vcmp.ge.f32.partialorder %v3350, 0.0
    %vm4206 = vcmp.ge.f32.partialorder %v3632, 0.0
    %vm4207 = vcmp.ge.f32.partialorder %v3634, 0.0
    %vm4208 = vcmp.ge.f32.partialorder %v3916, 0.0
    %vm4209 = vcmp.ge.f32.partialorder %v3918, 0.0
    %vm4210 = vcmp.ge.f32.partialorder %v4200, 0.0
    %vm4211 = vcmp.ge.f32.partialorder %v4202, 0.0
    %v4212 = vmul.f32 %v3348, 0.01
    %v4213 = vmul.f32 %v3350, 0.01
    %v4214 = vmul.f32 %v3632, 0.01
    %v4215 = vmul.f32 %v3634, 0.01
    %v4216 = vmul.f32 %v3916, 0.01
    %v4217 = vmul.f32 %v3918, 0.01
    %v4218 = vmul.f32 %v4200, 0.01
    %v4219 = vmul.f32 %v4202, 0.01
    %v4220 = vsel %vm4204, %v3348, %v4212
    %v4221 = vsel %vm4205, %v3350, %v4213
    %v4222 = vsel %vm4206, %v3632, %v4214
    %v4223 = vsel %vm4207, %v3634, %v4215
    %v4224 = vsel %vm4208, %v3916, %v4216
    %v4225 = vsel %vm4209, %v3918, %v4217
    %v4226 = vsel %vm4210, %v4200, %v4218
    %v4227 = vsel %vm4211, %v4202, %v4219
    %v4228 = vld [vmem:[#allocation21] sm:$0xff]
    %v4229 = vld [vmem:[#allocation21 + $0x8] sm:$0xff]
    %v4230 = vld [vmem:[#allocation21 + $0x10] sm:$0xff]
    %v4231 = vld [vmem:[#allocation21 + $0x18] sm:$0xff]
    %v4232 = vld [vmem:[#allocation21 + $0x20] sm:$0xff]
    %v4233 = vld [vmem:[#allocation21 + $0x28] sm:$0xff]
    %v4234 = vld [vmem:[#allocation21 + $0x30] sm:$0xff]
    %v4235 = vld [vmem:[#allocation21 + $0x38] sm:$0xff]
    %v4236 = vld [vmem:[#allocation21 + $0x40] sm:$0xff]
    %v4237 = vld [vmem:[#allocation21 + $0x48] sm:$0xff]
    %v4238 = vld [vmem:[#allocation21 + $0x50] sm:$0xff]
    %v4239 = vld [vmem:[#allocation21 + $0x58] sm:$0xff]
    %v4240 = vld [vmem:[#allocation21 + $0x60] sm:$0xff]
    %v4241 = vld [vmem:[#allocation21 + $0x68] sm:$0xff]
    %v4242 = vld [vmem:[#allocation21 + $0x70] sm:$0xff]
    %v4243 = vld [vmem:[#allocation21 + $0x78] sm:$0xff]
    %v4244 = vld [vmem:[#allocation21 + $0x80] sm:$0xff]
    %v4245 = vld [vmem:[#allocation21 + $0x88] sm:$0xff]
    %v4246 = vld [vmem:[#allocation21 + $0x90] sm:$0xff]
    %v4247 = vld [vmem:[#allocation21 + $0x98] sm:$0xff]
    %v4248 = vld [vmem:[#allocation21 + $0xa0] sm:$0xff]
    %v4249 = vld [vmem:[#allocation21 + $0xa8] sm:$0xff]
    %v4250 = vld [vmem:[#allocation21 + $0xb0] sm:$0xff]
    %v4251 = vld [vmem:[#allocation21 + $0xb8] sm:$0xff]
    %v4252 = vld [vmem:[#allocation21 + $0xc0] sm:$0xff]
    %v4253 = vld [vmem:[#allocation21 + $0xc8] sm:$0xff]
    %v4254 = vld [vmem:[#allocation21 + $0xd0] sm:$0xff]
    %v4255 = vld [vmem:[#allocation21 + $0xd8] sm:$0xff]
    %v4256 = vld [vmem:[#allocation21 + $0xe0] sm:$0xff]
    %v4257 = vld [vmem:[#allocation21 + $0xe8] sm:$0xff]
    %v4258 = vld [vmem:[#allocation21 + $0xf0] sm:$0xff]
    %v4259 = vld [vmem:[#allocation21 + $0xf8] sm:$0xff]
    %v4260 = vld [vmem:[#allocation21 + $0x100] sm:$0xff]
    %v4261 = vld [vmem:[#allocation21 + $0x108] sm:$0xff]
    %v4262 = vld [vmem:[#allocation21 + $0x110] sm:$0xff]
    %v4263 = vld [vmem:[#allocation21 + $0x118] sm:$0xff]
    %v4264 = vld [vmem:[#allocation21 + $0x120] sm:$0xff]
    %v4265 = vld [vmem:[#allocation21 + $0x128] sm:$0xff]
    %v4266 = vld [vmem:[#allocation21 + $0x130] sm:$0xff]
    %v4267 = vld [vmem:[#allocation21 + $0x138] sm:$0xff]
    %v4268 = vld [vmem:[#allocation21 + $0x140] sm:$0xff]
    %v4269 = vld [vmem:[#allocation21 + $0x148] sm:$0xff]
    %v4270 = vld [vmem:[#allocation21 + $0x150] sm:$0xff]
    %v4271 = vld [vmem:[#allocation21 + $0x158] sm:$0xff]
    %v4272 = vld [vmem:[#allocation21 + $0x160] sm:$0xff]
    %v4273 = vld [vmem:[#allocation21 + $0x168] sm:$0xff]
    %v4274 = vld [vmem:[#allocation21 + $0x170] sm:$0xff]
    %v4275 = vld [vmem:[#allocation21 + $0x178] sm:$0xff]
    %v4276 = vld [vmem:[#allocation21 + $0x180] sm:$0xff]
    %v4277 = vld [vmem:[#allocation21 + $0x188] sm:$0xff]
    %v4278 = vld [vmem:[#allocation21 + $0x190] sm:$0xff]
    %v4279 = vld [vmem:[#allocation21 + $0x198] sm:$0xff]
    %v4280 = vld [vmem:[#allocation21 + $0x1a0] sm:$0xff]
    %v4281 = vld [vmem:[#allocation21 + $0x1a8] sm:$0xff]
    %v4282 = vld [vmem:[#allocation21 + $0x1b0] sm:$0xff]
    %v4283 = vld [vmem:[#allocation21 + $0x1b8] sm:$0xff]
    %v4284 = vld [vmem:[#allocation21 + $0x1c0] sm:$0xff]
    %v4285 = vld [vmem:[#allocation21 + $0x1c8] sm:$0xff]
    %v4286 = vld [vmem:[#allocation21 + $0x1d0] sm:$0xff]
    %v4287 = vld [vmem:[#allocation21 + $0x1d8] sm:$0xff]
    %v4288 = vld [vmem:[#allocation21 + $0x1e0] sm:$0xff]
    %v4289 = vld [vmem:[#allocation21 + $0x1e8] sm:$0xff]
    %v4290 = vld [vmem:[#allocation21 + $0x1f0] sm:$0xff]
    %v4291 = vld [vmem:[#allocation21 + $0x1f8] sm:$0xff]
    %v4292 = vld [vmem:[#allocation21 + $0x200] sm:$0xff]
    %v4293 = vld [vmem:[#allocation21 + $0x208] sm:$0xff]
    %v4294 = vld [vmem:[#allocation21 + $0x210] sm:$0xff]
    %v4295 = vld [vmem:[#allocation21 + $0x218] sm:$0xff]
    %v4296 = vld [vmem:[#allocation21 + $0x220] sm:$0xff]
    %v4297 = vld [vmem:[#allocation21 + $0x228] sm:$0xff]
    %v4298 = vld [vmem:[#allocation21 + $0x230] sm:$0xff]
    %v4299 = vld [vmem:[#allocation21 + $0x238] sm:$0xff]
    %v4300 = vld [vmem:[#allocation21 + $0x240] sm:$0xff]
    %v4301 = vld [vmem:[#allocation21 + $0x248] sm:$0xff]
    %v4302 = vld [vmem:[#allocation21 + $0x250] sm:$0xff]
    %v4303 = vld [vmem:[#allocation21 + $0x258] sm:$0xff]
    %v4304 = vld [vmem:[#allocation21 + $0x260] sm:$0xff]
    %v4305 = vld [vmem:[#allocation21 + $0x268] sm:$0xff]
    %v4306 = vld [vmem:[#allocation21 + $0x270] sm:$0xff]
    %v4307 = vld [vmem:[#allocation21 + $0x278] sm:$0xff]
    %v4308 = vld [vmem:[#allocation21 + $0x280] sm:$0xff]
    %v4309 = vld [vmem:[#allocation21 + $0x288] sm:$0xff]
    %v4310 = vld [vmem:[#allocation21 + $0x290] sm:$0xff]
    %v4311 = vld [vmem:[#allocation21 + $0x298] sm:$0xff]
    %v4312 = vld [vmem:[#allocation21 + $0x2a0] sm:$0xff]
    %v4313 = vld [vmem:[#allocation21 + $0x2a8] sm:$0xff]
    %v4314 = vld [vmem:[#allocation21 + $0x2b0] sm:$0xff]
    %v4315 = vld [vmem:[#allocation21 + $0x2b8] sm:$0xff]
    %v4316 = vld [vmem:[#allocation21 + $0x2c0] sm:$0xff]
    %v4317 = vld [vmem:[#allocation21 + $0x2c8] sm:$0xff]
    %v4318 = vld [vmem:[#allocation21 + $0x2d0] sm:$0xff]
    %v4319 = vld [vmem:[#allocation21 + $0x2d8] sm:$0xff]
    %v4320 = vld [vmem:[#allocation21 + $0x2e0] sm:$0xff]
    %v4321 = vld [vmem:[#allocation21 + $0x2e8] sm:$0xff]
    %v4322 = vld [vmem:[#allocation21 + $0x2f0] sm:$0xff]
    %v4323 = vld [vmem:[#allocation21 + $0x2f8] sm:$0xff]
    %v4324 = vld [vmem:[#allocation21 + $0x300] sm:$0xff]
    %v4325 = vld [vmem:[#allocation21 + $0x308] sm:$0xff]
    %v4326 = vld [vmem:[#allocation21 + $0x310] sm:$0xff]
    %v4327 = vld [vmem:[#allocation21 + $0x318] sm:$0xff]
    %v4328 = vld [vmem:[#allocation21 + $0x320] sm:$0xff]
    %v4329 = vld [vmem:[#allocation21 + $0x328] sm:$0xff]
    %v4330 = vld [vmem:[#allocation21 + $0x330] sm:$0xff]
    %v4331 = vld [vmem:[#allocation21 + $0x338] sm:$0xff]
    %v4332 = vld [vmem:[#allocation21 + $0x340] sm:$0xff]
    %v4333 = vld [vmem:[#allocation21 + $0x348] sm:$0xff]
    %v4334 = vld [vmem:[#allocation21 + $0x350] sm:$0xff]
    %v4335 = vld [vmem:[#allocation21 + $0x358] sm:$0xff]
    %v4336 = vld [vmem:[#allocation21 + $0x360] sm:$0xff]
    %v4337 = vld [vmem:[#allocation21 + $0x368] sm:$0xff]
    %v4338 = vld [vmem:[#allocation21 + $0x370] sm:$0xff]
    %v4339 = vld [vmem:[#allocation21 + $0x378] sm:$0xff]
    %v4340 = vld [vmem:[#allocation21 + $0x380] sm:$0xff]
    %v4341 = vld [vmem:[#allocation21 + $0x388] sm:$0xff]
    %v4342 = vld [vmem:[#allocation21 + $0x390] sm:$0xff]
    %v4343 = vld [vmem:[#allocation21 + $0x398] sm:$0xff]
    %v4344 = vld [vmem:[#allocation21 + $0x3a0] sm:$0xff]
    %v4345 = vld [vmem:[#allocation21 + $0x3a8] sm:$0xff]
    %v4346 = vld [vmem:[#allocation21 + $0x3b0] sm:$0xff]
    %v4347 = vld [vmem:[#allocation21 + $0x3b8] sm:$0xff]
    %v4348 = vld [vmem:[#allocation21 + $0x3c0] sm:$0xff]
    %v4349 = vld [vmem:[#allocation21 + $0x3c8] sm:$0xff]
    %v4350 = vld [vmem:[#allocation21 + $0x3d0] sm:$0xff]
    %v4351 = vld [vmem:[#allocation21 + $0x3d8] sm:$0xff]
    %v4352 = vld [vmem:[#allocation21 + $0x3e0] sm:$0xff]
    %v4353 = vld [vmem:[#allocation21 + $0x3e8] sm:$0xff]
    %v4354 = vld [vmem:[#allocation21 + $0x3f0] sm:$0xff]
    %v4355 = vld [vmem:[#allocation21 + $0x3f8] sm:$0xff]
    %v4356 = vld [vmem:[#allocation21 + $0x400] sm:$0xff]
    %v4357 = vld [vmem:[#allocation21 + $0x408] sm:$0xff]
    %v4358 = vld [vmem:[#allocation21 + $0x410] sm:$0xff]
    %v4359 = vld [vmem:[#allocation21 + $0x418] sm:$0xff]
    %v4360 = vld [vmem:[#allocation21 + $0x420] sm:$0xff]
    %v4361 = vld [vmem:[#allocation21 + $0x428] sm:$0xff]
    %v4362 = vld [vmem:[#allocation21 + $0x430] sm:$0xff]
    %v4363 = vld [vmem:[#allocation21 + $0x438] sm:$0xff]
    %v4364 = vld [vmem:[#allocation21 + $0x440] sm:$0xff]
    %v4365 = vld [vmem:[#allocation21 + $0x448] sm:$0xff]
    %v4366 = vld [vmem:[#allocation21 + $0x450] sm:$0xff]
    %v4367 = vld [vmem:[#allocation21 + $0x458] sm:$0xff]
    %v4368 = vld [vmem:[#allocation21 + $0x460] sm:$0xff]
    %v4369 = vld [vmem:[#allocation21 + $0x468] sm:$0xff]
    %v4370 = vld [vmem:[#allocation21 + $0x470] sm:$0xff]
    %v4371 = vld [vmem:[#allocation21 + $0x478] sm:$0xff]
    %v4372 = vld [vmem:[#allocation21 + $0x480] sm:$0xff]
    %v4373 = vld [vmem:[#allocation21 + $0x488] sm:$0xff]
    %v4374 = vld [vmem:[#allocation21 + $0x490] sm:$0xff]
    %v4375 = vld [vmem:[#allocation21 + $0x498] sm:$0xff]
    %v4376 = vld [vmem:[#allocation21 + $0x4a0] sm:$0xff]
    %v4377 = vld [vmem:[#allocation21 + $0x4a8] sm:$0xff]
    %v4378 = vld [vmem:[#allocation21 + $0x4b0] sm:$0xff]
    %v4379 = vld [vmem:[#allocation21 + $0x4b8] sm:$0xff]
    %v4380 = vld [vmem:[#allocation21 + $0x4c0] sm:$0xff]
    %v4381 = vld [vmem:[#allocation21 + $0x4c8] sm:$0xff]
    %v4382 = vld [vmem:[#allocation21 + $0x4d0] sm:$0xff]
    %v4383 = vld [vmem:[#allocation21 + $0x4d8] sm:$0xff]
    %v4384 = vld [vmem:[#allocation21 + $0x4e0] sm:$0xff]
    %v4385 = vld [vmem:[#allocation21 + $0x4e8] sm:$0xff]
    %v4386 = vld [vmem:[#allocation21 + $0x4f0] sm:$0xff]
    %v4387 = vld [vmem:[#allocation21 + $0x4f8] sm:$0xff]
    %v4388 = vld [vmem:[#allocation21 + $0x500] sm:$0xff]
    %v4389 = vld [vmem:[#allocation21 + $0x508] sm:$0xff]
    %v4390 = vld [vmem:[#allocation21 + $0x510] sm:$0xff]
    %v4391 = vld [vmem:[#allocation21 + $0x518] sm:$0xff]
    %v4392 = vld [vmem:[#allocation21 + $0x520] sm:$0xff]
    %v4393 = vld [vmem:[#allocation21 + $0x528] sm:$0xff]
    %v4394 = vld [vmem:[#allocation21 + $0x530] sm:$0xff]
    %v4395 = vld [vmem:[#allocation21 + $0x538] sm:$0xff]
    %v4396 = vld [vmem:[#allocation21 + $0x540] sm:$0xff]
    %v4397 = vld [vmem:[#allocation21 + $0x548] sm:$0xff]
    %v4398 = vld [vmem:[#allocation21 + $0x550] sm:$0xff]
    %v4399 = vld [vmem:[#allocation21 + $0x558] sm:$0xff]
    %v4400 = vld [vmem:[#allocation21 + $0x560] sm:$0xff]
    %v4401 = vld [vmem:[#allocation21 + $0x568] sm:$0xff]
    %v4402 = vld [vmem:[#allocation21 + $0x570] sm:$0xff]
    %v4403 = vld [vmem:[#allocation21 + $0x578] sm:$0xff]
    %v4404 = vld [vmem:[#allocation21 + $0x580] sm:$0xff]
    %v4405 = vld [vmem:[#allocation21 + $0x588] sm:$0xff]
    %v4406 = vld [vmem:[#allocation21 + $0x590] sm:$0xff]
    %v4407 = vld [vmem:[#allocation21 + $0x598] sm:$0xff]
    %v4408 = vld [vmem:[#allocation21 + $0x5a0] sm:$0xff]
    %v4409 = vld [vmem:[#allocation21 + $0x5a8] sm:$0xff]
    %v4410 = vld [vmem:[#allocation21 + $0x5b0] sm:$0xff]
    %v4411 = vld [vmem:[#allocation21 + $0x5b8] sm:$0xff]
    %v4412 = vld [vmem:[#allocation21 + $0x5c0] sm:$0xff]
    %v4413 = vld [vmem:[#allocation21 + $0x5c8] sm:$0xff]
    %v4414 = vld [vmem:[#allocation21 + $0x5d0] sm:$0xff]
    %v4415 = vld [vmem:[#allocation21 + $0x5d8] sm:$0xff]
    %v4416 = vld [vmem:[#allocation21 + $0x5e0] sm:$0xff]
    %v4417 = vld [vmem:[#allocation21 + $0x5e8] sm:$0xff]
    %v4418 = vld [vmem:[#allocation21 + $0x5f0] sm:$0xff]
    %v4419 = vld [vmem:[#allocation21 + $0x5f8] sm:$0xff]
    %v4420 = vld [vmem:[#allocation21 + $0x600] sm:$0xff]
    %v4421 = vld [vmem:[#allocation21 + $0x608] sm:$0xff]
    %v4422 = vld [vmem:[#allocation21 + $0x610] sm:$0xff]
    %v4423 = vld [vmem:[#allocation21 + $0x618] sm:$0xff]
    %v4424 = vld [vmem:[#allocation21 + $0x620] sm:$0xff]
    %v4425 = vld [vmem:[#allocation21 + $0x628] sm:$0xff]
    %v4426 = vld [vmem:[#allocation21 + $0x630] sm:$0xff]
    %v4427 = vld [vmem:[#allocation21 + $0x638] sm:$0xff]
    %v4428 = vld [vmem:[#allocation21 + $0x640] sm:$0xff]
    %v4429 = vld [vmem:[#allocation21 + $0x648] sm:$0xff]
    %v4430 = vld [vmem:[#allocation21 + $0x650] sm:$0xff]
    %v4431 = vld [vmem:[#allocation21 + $0x658] sm:$0xff]
    %v4432 = vld [vmem:[#allocation21 + $0x660] sm:$0xff]
    %v4433 = vld [vmem:[#allocation21 + $0x668] sm:$0xff]
    %v4434 = vld [vmem:[#allocation21 + $0x670] sm:$0xff]
    %v4435 = vld [vmem:[#allocation21 + $0x678] sm:$0xff]
    %v4436 = vld [vmem:[#allocation21 + $0x680] sm:$0xff]
    %v4437 = vld [vmem:[#allocation21 + $0x688] sm:$0xff]
    %v4438 = vld [vmem:[#allocation21 + $0x690] sm:$0xff]
    %v4439 = vld [vmem:[#allocation21 + $0x698] sm:$0xff]
    %v4440 = vld [vmem:[#allocation21 + $0x6a0] sm:$0xff]
    %v4441 = vld [vmem:[#allocation21 + $0x6a8] sm:$0xff]
    %v4442 = vld [vmem:[#allocation21 + $0x6b0] sm:$0xff]
    %v4443 = vld [vmem:[#allocation21 + $0x6b8] sm:$0xff]
    %v4444 = vld [vmem:[#allocation21 + $0x6c0] sm:$0xff]
    %v4445 = vld [vmem:[#allocation21 + $0x6c8] sm:$0xff]
    %v4446 = vld [vmem:[#allocation21 + $0x6d0] sm:$0xff]
    %v4447 = vld [vmem:[#allocation21 + $0x6d8] sm:$0xff]
    %v4448 = vld [vmem:[#allocation21 + $0x6e0] sm:$0xff]
    %v4449 = vld [vmem:[#allocation21 + $0x6e8] sm:$0xff]
    %v4450 = vld [vmem:[#allocation21 + $0x6f0] sm:$0xff]
    %v4451 = vld [vmem:[#allocation21 + $0x6f8] sm:$0xff]
    %v4452 = vld [vmem:[#allocation21 + $0x700] sm:$0xff]
    %v4453 = vld [vmem:[#allocation21 + $0x708] sm:$0xff]
    %v4454 = vld [vmem:[#allocation21 + $0x710] sm:$0xff]
    %v4455 = vld [vmem:[#allocation21 + $0x718] sm:$0xff]
    %v4456 = vld [vmem:[#allocation21 + $0x720] sm:$0xff]
    %v4457 = vld [vmem:[#allocation21 + $0x728] sm:$0xff]
    %v4458 = vld [vmem:[#allocation21 + $0x730] sm:$0xff]
    %v4459 = vld [vmem:[#allocation21 + $0x738] sm:$0xff]
    %v4460 = vld [vmem:[#allocation21 + $0x740] sm:$0xff]
    %v4461 = vld [vmem:[#allocation21 + $0x748] sm:$0xff]
    %v4462 = vld [vmem:[#allocation21 + $0x750] sm:$0xff]
    %v4463 = vld [vmem:[#allocation21 + $0x758] sm:$0xff]
    %v4464 = vld [vmem:[#allocation21 + $0x760] sm:$0xff]
    %v4465 = vld [vmem:[#allocation21 + $0x768] sm:$0xff]
    %v4466 = vld [vmem:[#allocation21 + $0x770] sm:$0xff]
    %v4467 = vld [vmem:[#allocation21 + $0x778] sm:$0xff]
    %v4468 = vld [vmem:[#allocation21 + $0x780] sm:$0xff]
    %v4469 = vld [vmem:[#allocation21 + $0x788] sm:$0xff]
    %v4470 = vld [vmem:[#allocation21 + $0x790] sm:$0xff]
    %v4471 = vld [vmem:[#allocation21 + $0x798] sm:$0xff]
    %v4472 = vld [vmem:[#allocation21 + $0x7a0] sm:$0xff]
    %v4473 = vld [vmem:[#allocation21 + $0x7a8] sm:$0xff]
    %v4474 = vld [vmem:[#allocation21 + $0x7b0] sm:$0xff]
    %v4475 = vld [vmem:[#allocation21 + $0x7b8] sm:$0xff]
    %v4476 = vld [vmem:[#allocation21 + $0x7c0] sm:$0xff]
    %v4477 = vld [vmem:[#allocation21 + $0x7c8] sm:$0xff]
    %v4478 = vld [vmem:[#allocation21 + $0x7d0] sm:$0xff]
    %v4479 = vld [vmem:[#allocation21 + $0x7d8] sm:$0xff]
    %v4480 = vld [vmem:[#allocation21 + $0x7e0] sm:$0xff]
    %v4481 = vld [vmem:[#allocation21 + $0x7e8] sm:$0xff]
    %v4482 = vld [vmem:[#allocation21 + $0x7f0] sm:$0xff]
    %v4483 = vld [vmem:[#allocation21 + $0x7f8] sm:$0xff]
    %v4484 = vld [vmem:[#allocation21 + $0x800] sm:$0xff]
    %v4485 = vld [vmem:[#allocation21 + $0x808] sm:$0xff]
    %v4486 = vld [vmem:[#allocation21 + $0x810] sm:$0xff]
    %v4487 = vld [vmem:[#allocation21 + $0x818] sm:$0xff]
    %v4488 = vld [vmem:[#allocation21 + $0x820] sm:$0xff]
    %v4489 = vld [vmem:[#allocation21 + $0x828] sm:$0xff]
    %v4490 = vld [vmem:[#allocation21 + $0x830] sm:$0xff]
    %v4491 = vld [vmem:[#allocation21 + $0x838] sm:$0xff]
    %v4492 = vld [vmem:[#allocation21 + $0x840] sm:$0xff]
    %v4493 = vld [vmem:[#allocation21 + $0x848] sm:$0xff]
    %v4494 = vld [vmem:[#allocation21 + $0x850] sm:$0xff]
    %v4495 = vld [vmem:[#allocation21 + $0x858] sm:$0xff]
    %v4496 = vld [vmem:[#allocation21 + $0x860] sm:$0xff]
    %v4497 = vld [vmem:[#allocation21 + $0x868] sm:$0xff]
    %v4498 = vld [vmem:[#allocation21 + $0x870] sm:$0xff]
    %v4499 = vld [vmem:[#allocation21 + $0x878] sm:$0xff]
    %v4500 = vld [vmem:[#allocation21 + $0x880] sm:$0xff]
    %v4501 = vld [vmem:[#allocation21 + $0x888] sm:$0xff]
    %v4502 = vld [vmem:[#allocation21 + $0x890] sm:$0xff]
    %v4503 = vld [vmem:[#allocation21 + $0x898] sm:$0xff]
    %v4504 = vld [vmem:[#allocation21 + $0x8a0] sm:$0xff]
    %v4505 = vld [vmem:[#allocation21 + $0x8a8] sm:$0xff]
    %v4506 = vld [vmem:[#allocation21 + $0x8b0] sm:$0xff]
    %v4507 = vld [vmem:[#allocation21 + $0x8b8] sm:$0xff]
    %v4508 = vld [vmem:[#allocation21 + $0x8c0] sm:$0xff]
    %v4509 = vld [vmem:[#allocation21 + $0x8c8] sm:$0xff]
    %v4510 = vld [vmem:[#allocation21 + $0x8d0] sm:$0xff]
    %v4511 = vld [vmem:[#allocation21 + $0x8d8] sm:$0xff]
    %v4512 = vld [vmem:[#allocation21 + $0x8e0] sm:$0xff]
    %v4513 = vld [vmem:[#allocation21 + $0x8e8] sm:$0xff]
    %v4514 = vld [vmem:[#allocation21 + $0x8f0] sm:$0xff]
    %v4515 = vld [vmem:[#allocation21 + $0x8f8] sm:$0xff]
    %v4516 = vld [vmem:[#allocation21 + $0x900] sm:$0xff]
    %v4517 = vld [vmem:[#allocation21 + $0x908] sm:$0xff]
    %v4518 = vld [vmem:[#allocation21 + $0x910] sm:$0xff]
    %v4519 = vld [vmem:[#allocation21 + $0x918] sm:$0xff]
    %v4520 = vld [vmem:[#allocation21 + $0x920] sm:$0xff]
    %v4521 = vld [vmem:[#allocation21 + $0x928] sm:$0xff]
    %v4522 = vld [vmem:[#allocation21 + $0x930] sm:$0xff]
    %v4523 = vld [vmem:[#allocation21 + $0x938] sm:$0xff]
    %v4524 = vld [vmem:[#allocation21 + $0x940] sm:$0xff]
    %v4525 = vld [vmem:[#allocation21 + $0x948] sm:$0xff]
    %v4526 = vld [vmem:[#allocation21 + $0x950] sm:$0xff]
    %v4527 = vld [vmem:[#allocation21 + $0x958] sm:$0xff]
    %v4528 = vld [vmem:[#allocation21 + $0x960] sm:$0xff]
    %v4529 = vld [vmem:[#allocation21 + $0x968] sm:$0xff]
    %v4530 = vld [vmem:[#allocation21 + $0x970] sm:$0xff]
    %v4531 = vld [vmem:[#allocation21 + $0x978] sm:$0xff]
    %v4532 = vld [vmem:[#allocation21 + $0x980] sm:$0xff]
    %v4533 = vld [vmem:[#allocation21 + $0x988] sm:$0xff]
    %v4534 = vld [vmem:[#allocation21 + $0x990] sm:$0xff]
    %v4535 = vld [vmem:[#allocation21 + $0x998] sm:$0xff]
    %v4536 = vld [vmem:[#allocation21 + $0x9a0] sm:$0xff]
    %v4537 = vld [vmem:[#allocation21 + $0x9a8] sm:$0xff]
    %v4538 = vld [vmem:[#allocation21 + $0x9b0] sm:$0xff]
    %v4539 = vld [vmem:[#allocation21 + $0x9b8] sm:$0xff]
    %v4540 = vld [vmem:[#allocation21 + $0x9c0] sm:$0xff]
    %v4541 = vld [vmem:[#allocation21 + $0x9c8] sm:$0xff]
    %v4542 = vld [vmem:[#allocation21 + $0x9d0] sm:$0xff]
    %v4543 = vld [vmem:[#allocation21 + $0x9d8] sm:$0xff]
    %v4544 = vld [vmem:[#allocation21 + $0x9e0] sm:$0xff]
    %v4545 = vld [vmem:[#allocation21 + $0x9e8] sm:$0xff]
    %v4546 = vld [vmem:[#allocation21 + $0x9f0] sm:$0xff]
    %v4547 = vld [vmem:[#allocation21 + $0x9f8] sm:$0xff]
    %v4548 = vld [vmem:[#allocation21 + $0xa00] sm:$0xff]
    %v4549 = vld [vmem:[#allocation21 + $0xa08] sm:$0xff]
    %v4550 = vld [vmem:[#allocation21 + $0xa10] sm:$0xff]
    %v4551 = vld [vmem:[#allocation21 + $0xa18] sm:$0xff]
    %v4552 = vld [vmem:[#allocation21 + $0xa20] sm:$0xff]
    %v4553 = vld [vmem:[#allocation21 + $0xa28] sm:$0xff]
    %v4554 = vld [vmem:[#allocation21 + $0xa30] sm:$0xff]
    %v4555 = vld [vmem:[#allocation21 + $0xa38] sm:$0xff]
    %v4556 = vld [vmem:[#allocation21 + $0xa40] sm:$0xff]
    %v4557 = vld [vmem:[#allocation21 + $0xa48] sm:$0xff]
    %v4558 = vld [vmem:[#allocation21 + $0xa50] sm:$0xff]
    %v4559 = vld [vmem:[#allocation21 + $0xa58] sm:$0xff]
    %v4560 = vld [vmem:[#allocation21 + $0xa60] sm:$0xff]
    %v4561 = vld [vmem:[#allocation21 + $0xa68] sm:$0xff]
    %v4562 = vld [vmem:[#allocation21 + $0xa70] sm:$0xff]
    %v4563 = vld [vmem:[#allocation21 + $0xa78] sm:$0xff]
    %v4564 = vld [vmem:[#allocation21 + $0xa80] sm:$0xff]
    %v4565 = vld [vmem:[#allocation21 + $0xa88] sm:$0xff]
    %v4566 = vld [vmem:[#allocation21 + $0xa90] sm:$0xff]
    %v4567 = vld [vmem:[#allocation21 + $0xa98] sm:$0xff]
    %v4568 = vld [vmem:[#allocation21 + $0xaa0] sm:$0xff]
    %v4569 = vld [vmem:[#allocation21 + $0xaa8] sm:$0xff]
    %v4570 = vld [vmem:[#allocation21 + $0xab0] sm:$0xff]
    %v4571 = vld [vmem:[#allocation21 + $0xab8] sm:$0xff]
    %v4572 = vld [vmem:[#allocation21 + $0xac0] sm:$0xff]
    %v4573 = vld [vmem:[#allocation21 + $0xac8] sm:$0xff]
    %v4574 = vld [vmem:[#allocation21 + $0xad0] sm:$0xff]
    %v4575 = vld [vmem:[#allocation21 + $0xad8] sm:$0xff]
    %v4576 = vld [vmem:[#allocation21 + $0xae0] sm:$0xff]
    %v4577 = vld [vmem:[#allocation21 + $0xae8] sm:$0xff]
    %v4578 = vld [vmem:[#allocation21 + $0xaf0] sm:$0xff]
    %v4579 = vld [vmem:[#allocation21 + $0xaf8] sm:$0xff]
    %v4580 = vld [vmem:[#allocation21 + $0xb00] sm:$0xff]
    %v4581 = vld [vmem:[#allocation21 + $0xb08] sm:$0xff]
    %v4582 = vld [vmem:[#allocation21 + $0xb10] sm:$0xff]
    %v4583 = vld [vmem:[#allocation21 + $0xb18] sm:$0xff]
    %v4584 = vld [vmem:[#allocation21 + $0xb20] sm:$0xff]
    %v4585 = vld [vmem:[#allocation21 + $0xb28] sm:$0xff]
    %v4586 = vld [vmem:[#allocation21 + $0xb30] sm:$0xff]
    %v4587 = vld [vmem:[#allocation21 + $0xb38] sm:$0xff]
    %v4588 = vld [vmem:[#allocation21 + $0xb40] sm:$0xff]
    %v4589 = vld [vmem:[#allocation21 + $0xb48] sm:$0xff]
    %v4590 = vld [vmem:[#allocation21 + $0xb50] sm:$0xff]
    %v4591 = vld [vmem:[#allocation21 + $0xb58] sm:$0xff]
    %v4592 = vld [vmem:[#allocation21 + $0xb60] sm:$0xff]
    %v4593 = vld [vmem:[#allocation21 + $0xb68] sm:$0xff]
    %v4594 = vld [vmem:[#allocation21 + $0xb70] sm:$0xff]
    %v4595 = vld [vmem:[#allocation21 + $0xb78] sm:$0xff]
    %v4596 = vld [vmem:[#allocation21 + $0xb80] sm:$0xff]
    %v4597 = vld [vmem:[#allocation21 + $0xb88] sm:$0xff]
    %v4598 = vld [vmem:[#allocation21 + $0xb90] sm:$0xff]
    %v4599 = vld [vmem:[#allocation21 + $0xb98] sm:$0xff]
    %v4600 = vld [vmem:[#allocation21 + $0xba0] sm:$0xff]
    %v4601 = vld [vmem:[#allocation21 + $0xba8] sm:$0xff]
    %v4602 = vld [vmem:[#allocation21 + $0xbb0] sm:$0xff]
    %v4603 = vld [vmem:[#allocation21 + $0xbb8] sm:$0xff]
    %v4604 = vld [vmem:[#allocation21 + $0xbc0] sm:$0xff]
    %v4605 = vld [vmem:[#allocation21 + $0xbc8] sm:$0xff]
    %v4606 = vld [vmem:[#allocation21 + $0xbd0] sm:$0xff]
    %v4607 = vld [vmem:[#allocation21 + $0xbd8] sm:$0xff]
    %v4608 = vld [vmem:[#allocation21 + $0xbe0] sm:$0xff]
    %v4609 = vld [vmem:[#allocation21 + $0xbe8] sm:$0xff]
    %v4610 = vld [vmem:[#allocation21 + $0xbf0] sm:$0xff]
    %v4611 = vld [vmem:[#allocation21 + $0xbf8] sm:$0xff]
    %v4612 = vld [vmem:[#allocation21 + $0xc00] sm:$0xff]
    %v4613 = vld [vmem:[#allocation21 + $0xc08] sm:$0xff]
    %v4614 = vld [vmem:[#allocation21 + $0xc10] sm:$0xff]
    %v4615 = vld [vmem:[#allocation21 + $0xc18] sm:$0xff]
    %v4616 = vld [vmem:[#allocation21 + $0xc20] sm:$0xff]
    %v4617 = vld [vmem:[#allocation21 + $0xc28] sm:$0xff]
    %v4618 = vld [vmem:[#allocation21 + $0xc30] sm:$0xff]
    %v4619 = vld [vmem:[#allocation21 + $0xc38] sm:$0xff]
    %v4620 = vld [vmem:[#allocation21 + $0xc40] sm:$0xff]
    %v4621 = vld [vmem:[#allocation21 + $0xc48] sm:$0xff]
    %v4622 = vld [vmem:[#allocation21 + $0xc50] sm:$0xff]
    %v4623 = vld [vmem:[#allocation21 + $0xc58] sm:$0xff]
    %v4624 = vld [vmem:[#allocation21 + $0xc60] sm:$0xff]
    %v4625 = vld [vmem:[#allocation21 + $0xc68] sm:$0xff]
    %v4626 = vld [vmem:[#allocation21 + $0xc70] sm:$0xff]
    %v4627 = vld [vmem:[#allocation21 + $0xc78] sm:$0xff]
    %v4628 = vld [vmem:[#allocation21 + $0xc80] sm:$0xff]
    %v4629 = vld [vmem:[#allocation21 + $0xc88] sm:$0xff]
    %v4630 = vld [vmem:[#allocation21 + $0xc90] sm:$0xff]
    %v4631 = vld [vmem:[#allocation21 + $0xc98] sm:$0xff]
    %v4632 = vld [vmem:[#allocation21 + $0xca0] sm:$0xff]
    %v4633 = vld [vmem:[#allocation21 + $0xca8] sm:$0xff]
    %v4634 = vld [vmem:[#allocation21 + $0xcb0] sm:$0xff]
    %v4635 = vld [vmem:[#allocation21 + $0xcb8] sm:$0xff]
    %v4636 = vld [vmem:[#allocation21 + $0xcc0] sm:$0xff]
    %v4637 = vld [vmem:[#allocation21 + $0xcc8] sm:$0xff]
    %v4638 = vld [vmem:[#allocation21 + $0xcd0] sm:$0xff]
    %v4639 = vld [vmem:[#allocation21 + $0xcd8] sm:$0xff]
    %v4640 = vld [vmem:[#allocation21 + $0xce0] sm:$0xff]
    %v4641 = vld [vmem:[#allocation21 + $0xce8] sm:$0xff]
    %v4642 = vld [vmem:[#allocation21 + $0xcf0] sm:$0xff]
    %v4643 = vld [vmem:[#allocation21 + $0xcf8] sm:$0xff]
    %v4644 = vld [vmem:[#allocation21 + $0xd00] sm:$0xff]
    %v4645 = vld [vmem:[#allocation21 + $0xd08] sm:$0xff]
    %v4646 = vld [vmem:[#allocation21 + $0xd10] sm:$0xff]
    %v4647 = vld [vmem:[#allocation21 + $0xd18] sm:$0xff]
    %v4648 = vld [vmem:[#allocation21 + $0xd20] sm:$0xff]
    %v4649 = vld [vmem:[#allocation21 + $0xd28] sm:$0xff]
    %v4650 = vld [vmem:[#allocation21 + $0xd30] sm:$0xff]
    %v4651 = vld [vmem:[#allocation21 + $0xd38] sm:$0xff]
    %v4652 = vld [vmem:[#allocation21 + $0xd40] sm:$0xff]
    %v4653 = vld [vmem:[#allocation21 + $0xd48] sm:$0xff]
    %v4654 = vld [vmem:[#allocation21 + $0xd50] sm:$0xff]
    %v4655 = vld [vmem:[#allocation21 + $0xd58] sm:$0xff]
    %v4656 = vld [vmem:[#allocation21 + $0xd60] sm:$0xff]
    %v4657 = vld [vmem:[#allocation21 + $0xd68] sm:$0xff]
    %v4658 = vld [vmem:[#allocation21 + $0xd70] sm:$0xff]
    %v4659 = vld [vmem:[#allocation21 + $0xd78] sm:$0xff]
    %v4660 = vld [vmem:[#allocation21 + $0xd80] sm:$0xff]
    %v4661 = vld [vmem:[#allocation21 + $0xd88] sm:$0xff]
    %v4662 = vld [vmem:[#allocation21 + $0xd90] sm:$0xff]
    %v4663 = vld [vmem:[#allocation21 + $0xd98] sm:$0xff]
    %v4664 = vld [vmem:[#allocation21 + $0xda0] sm:$0xff]
    %v4665 = vld [vmem:[#allocation21 + $0xda8] sm:$0xff]
    %v4666 = vld [vmem:[#allocation21 + $0xdb0] sm:$0xff]
    %v4667 = vld [vmem:[#allocation21 + $0xdb8] sm:$0xff]
    %v4668 = vld [vmem:[#allocation21 + $0xdc0] sm:$0xff]
    %v4669 = vld [vmem:[#allocation21 + $0xdc8] sm:$0xff]
    %v4670 = vld [vmem:[#allocation21 + $0xdd0] sm:$0xff]
    %v4671 = vld [vmem:[#allocation21 + $0xdd8] sm:$0xff]
    %v4672 = vld [vmem:[#allocation21 + $0xde0] sm:$0xff]
    %v4673 = vld [vmem:[#allocation21 + $0xde8] sm:$0xff]
    %v4674 = vld [vmem:[#allocation21 + $0xdf0] sm:$0xff]
    %v4675 = vld [vmem:[#allocation21 + $0xdf8] sm:$0xff]
    %v4676 = vld [vmem:[#allocation21 + $0xe00] sm:$0xff]
    %v4677 = vld [vmem:[#allocation21 + $0xe08] sm:$0xff]
    %v4678 = vld [vmem:[#allocation21 + $0xe10] sm:$0xff]
    %v4679 = vld [vmem:[#allocation21 + $0xe18] sm:$0xff]
    %v4680 = vld [vmem:[#allocation21 + $0xe20] sm:$0xff]
    %v4681 = vld [vmem:[#allocation21 + $0xe28] sm:$0xff]
    %v4682 = vld [vmem:[#allocation21 + $0xe30] sm:$0xff]
    %v4683 = vld [vmem:[#allocation21 + $0xe38] sm:$0xff]
    %v4684 = vld [vmem:[#allocation21 + $0xe40] sm:$0xff]
    %v4685 = vld [vmem:[#allocation21 + $0xe48] sm:$0xff]
    %v4686 = vld [vmem:[#allocation21 + $0xe50] sm:$0xff]
    %v4687 = vld [vmem:[#allocation21 + $0xe58] sm:$0xff]
    %v4688 = vld [vmem:[#allocation21 + $0xe60] sm:$0xff]
    %v4689 = vld [vmem:[#allocation21 + $0xe68] sm:$0xff]
    %v4690 = vld [vmem:[#allocation21 + $0xe70] sm:$0xff]
    %v4691 = vld [vmem:[#allocation21 + $0xe78] sm:$0xff]
    %v4692 = vld [vmem:[#allocation21 + $0xe80] sm:$0xff]
    %v4693 = vld [vmem:[#allocation21 + $0xe88] sm:$0xff]
    %v4694 = vld [vmem:[#allocation21 + $0xe90] sm:$0xff]
    %v4695 = vld [vmem:[#allocation21 + $0xe98] sm:$0xff]
    %v4696 = vld [vmem:[#allocation21 + $0xea0] sm:$0xff]
    %v4697 = vld [vmem:[#allocation21 + $0xea8] sm:$0xff]
    %v4698 = vld [vmem:[#allocation21 + $0xeb0] sm:$0xff]
    %v4699 = vld [vmem:[#allocation21 + $0xeb8] sm:$0xff]
    %v4700 = vld [vmem:[#allocation21 + $0xec0] sm:$0xff]
    %v4701 = vld [vmem:[#allocation21 + $0xec8] sm:$0xff]
    %v4702 = vld [vmem:[#allocation21 + $0xed0] sm:$0xff]
    %v4703 = vld [vmem:[#allocation21 + $0xed8] sm:$0xff]
    %v4704 = vld [vmem:[#allocation21 + $0xee0] sm:$0xff]
    %v4705 = vld [vmem:[#allocation21 + $0xee8] sm:$0xff]
    %v4706 = vld [vmem:[#allocation21 + $0xef0] sm:$0xff]
    %v4707 = vld [vmem:[#allocation21 + $0xef8] sm:$0xff]
    %v4708 = vld [vmem:[#allocation21 + $0xf00] sm:$0xff]
    %v4709 = vld [vmem:[#allocation21 + $0xf08] sm:$0xff]
    %v4710 = vld [vmem:[#allocation21 + $0xf10] sm:$0xff]
    %v4711 = vld [vmem:[#allocation21 + $0xf18] sm:$0xff]
    %v4712 = vld [vmem:[#allocation21 + $0xf20] sm:$0xff]
    %v4713 = vld [vmem:[#allocation21 + $0xf28] sm:$0xff]
    %v4714 = vld [vmem:[#allocation21 + $0xf30] sm:$0xff]
    %v4715 = vld [vmem:[#allocation21 + $0xf38] sm:$0xff]
    %v4716 = vld [vmem:[#allocation21 + $0xf40] sm:$0xff]
    %v4717 = vld [vmem:[#allocation21 + $0xf48] sm:$0xff]
    %v4718 = vld [vmem:[#allocation21 + $0xf50] sm:$0xff]
    %v4719 = vld [vmem:[#allocation21 + $0xf58] sm:$0xff]
    %v4720 = vld [vmem:[#allocation21 + $0xf60] sm:$0xff]
    %v4721 = vld [vmem:[#allocation21 + $0xf68] sm:$0xff]
    %v4722 = vld [vmem:[#allocation21 + $0xf70] sm:$0xff]
    %v4723 = vld [vmem:[#allocation21 + $0xf78] sm:$0xff]
    %v4724 = vld [vmem:[#allocation21 + $0xf80] sm:$0xff]
    %v4725 = vld [vmem:[#allocation21 + $0xf88] sm:$0xff]
    %v4726 = vld [vmem:[#allocation21 + $0xf90] sm:$0xff]
    %v4727 = vld [vmem:[#allocation21 + $0xf98] sm:$0xff]
    %v4728 = vld [vmem:[#allocation21 + $0xfa0] sm:$0xff]
    %v4729 = vld [vmem:[#allocation21 + $0xfa8] sm:$0xff]
    %v4730 = vld [vmem:[#allocation21 + $0xfb0] sm:$0xff]
    %v4731 = vld [vmem:[#allocation21 + $0xfb8] sm:$0xff]
    %v4732 = vld [vmem:[#allocation21 + $0xfc0] sm:$0xff]
    %v4733 = vld [vmem:[#allocation21 + $0xfc8] sm:$0xff]
    %v4734 = vld [vmem:[#allocation21 + $0xfd0] sm:$0xff]
    %v4735 = vld [vmem:[#allocation21 + $0xfd8] sm:$0xff]
    %v4736 = vld [vmem:[#allocation21 + $0xfe0] sm:$0xff]
    %v4737 = vld [vmem:[#allocation21 + $0xfe8] sm:$0xff]
    %v4738 = vld [vmem:[#allocation21 + $0xff0] sm:$0xff]
    %v4739 = vld [vmem:[#allocation21 + $0xff8] sm:$0xff]
    %v4740 = vunpack.c.l.bf16 %v4228
    %v4741 = vunpack.c.h.bf16 %v4228
    %v4742 = vunpack.c.l.bf16 %v4229
    %v4743 = vunpack.c.h.bf16 %v4229
    %v4744 = vunpack.c.l.bf16 %v4230
    %v4745 = vunpack.c.h.bf16 %v4230
    %v4746 = vunpack.c.l.bf16 %v4231
    %v4747 = vunpack.c.h.bf16 %v4231
    %v4748 = vunpack.c.l.bf16 %v4232
    %v4749 = vunpack.c.h.bf16 %v4232
    %v4750 = vunpack.c.l.bf16 %v4233
    %v4751 = vunpack.c.h.bf16 %v4233
    %v4752 = vunpack.c.l.bf16 %v4234
    %v4753 = vunpack.c.h.bf16 %v4234
    %v4754 = vunpack.c.l.bf16 %v4235
    %v4755 = vunpack.c.h.bf16 %v4235
    %v4756 = vunpack.c.l.bf16 %v4236
    %v4757 = vunpack.c.h.bf16 %v4236
    %v4758 = vunpack.c.l.bf16 %v4237
    %v4759 = vunpack.c.h.bf16 %v4237
    %v4760 = vunpack.c.l.bf16 %v4238
    %v4761 = vunpack.c.h.bf16 %v4238
    %v4762 = vunpack.c.l.bf16 %v4239
    %v4763 = vunpack.c.h.bf16 %v4239
    %v4764 = vunpack.c.l.bf16 %v4240
    %v4765 = vunpack.c.h.bf16 %v4240
    %v4766 = vunpack.c.l.bf16 %v4241
    %v4767 = vunpack.c.h.bf16 %v4241
    %v4768 = vunpack.c.l.bf16 %v4242
    %v4769 = vunpack.c.h.bf16 %v4242
    %v4770 = vunpack.c.l.bf16 %v4243
    %v4771 = vunpack.c.h.bf16 %v4243
    %v4772 = vunpack.c.l.bf16 %v4244
    %v4773 = vunpack.c.h.bf16 %v4244
    %v4774 = vunpack.c.l.bf16 %v4245
    %v4775 = vunpack.c.h.bf16 %v4245
    %v4776 = vunpack.c.l.bf16 %v4246
    %v4777 = vunpack.c.h.bf16 %v4246
    %v4778 = vunpack.c.l.bf16 %v4247
    %v4779 = vunpack.c.h.bf16 %v4247
    %v4780 = vunpack.c.l.bf16 %v4248
    %v4781 = vunpack.c.h.bf16 %v4248
    %v4782 = vunpack.c.l.bf16 %v4249
    %v4783 = vunpack.c.h.bf16 %v4249
    %v4784 = vunpack.c.l.bf16 %v4250
    %v4785 = vunpack.c.h.bf16 %v4250
    %v4786 = vunpack.c.l.bf16 %v4251
    %v4787 = vunpack.c.h.bf16 %v4251
    %v4788 = vunpack.c.l.bf16 %v4252
    %v4789 = vunpack.c.h.bf16 %v4252
    %v4790 = vunpack.c.l.bf16 %v4253
    %v4791 = vunpack.c.h.bf16 %v4253
    %v4792 = vunpack.c.l.bf16 %v4254
    %v4793 = vunpack.c.h.bf16 %v4254
    %v4794 = vunpack.c.l.bf16 %v4255
    %v4795 = vunpack.c.h.bf16 %v4255
    %v4796 = vunpack.c.l.bf16 %v4256
    %v4797 = vunpack.c.h.bf16 %v4256
    %v4798 = vunpack.c.l.bf16 %v4257
    %v4799 = vunpack.c.h.bf16 %v4257
    %v4800 = vunpack.c.l.bf16 %v4258
    %v4801 = vunpack.c.h.bf16 %v4258
    %v4802 = vunpack.c.l.bf16 %v4259
    %v4803 = vunpack.c.h.bf16 %v4259
    %v4804 = vunpack.c.l.bf16 %v4260
    %v4805 = vunpack.c.h.bf16 %v4260
    %v4806 = vunpack.c.l.bf16 %v4261
    %v4807 = vunpack.c.h.bf16 %v4261
    %v4808 = vunpack.c.l.bf16 %v4262
    %v4809 = vunpack.c.h.bf16 %v4262
    %v4810 = vunpack.c.l.bf16 %v4263
    %v4811 = vunpack.c.h.bf16 %v4263
    %v4812 = vunpack.c.l.bf16 %v4264
    %v4813 = vunpack.c.h.bf16 %v4264
    %v4814 = vunpack.c.l.bf16 %v4265
    %v4815 = vunpack.c.h.bf16 %v4265
    %v4816 = vunpack.c.l.bf16 %v4266
    %v4817 = vunpack.c.h.bf16 %v4266
    %v4818 = vunpack.c.l.bf16 %v4267
    %v4819 = vunpack.c.h.bf16 %v4267
    %v4820 = vunpack.c.l.bf16 %v4268
    %v4821 = vunpack.c.h.bf16 %v4268
    %v4822 = vunpack.c.l.bf16 %v4269
    %v4823 = vunpack.c.h.bf16 %v4269
    %v4824 = vunpack.c.l.bf16 %v4270
    %v4825 = vunpack.c.h.bf16 %v4270
    %v4826 = vunpack.c.l.bf16 %v4271
    %v4827 = vunpack.c.h.bf16 %v4271
    %v4828 = vunpack.c.l.bf16 %v4272
    %v4829 = vunpack.c.h.bf16 %v4272
    %v4830 = vunpack.c.l.bf16 %v4273
    %v4831 = vunpack.c.h.bf16 %v4273
    %v4832 = vunpack.c.l.bf16 %v4274
    %v4833 = vunpack.c.h.bf16 %v4274
    %v4834 = vunpack.c.l.bf16 %v4275
    %v4835 = vunpack.c.h.bf16 %v4275
    %v4836 = vunpack.c.l.bf16 %v4276
    %v4837 = vunpack.c.h.bf16 %v4276
    %v4838 = vunpack.c.l.bf16 %v4277
    %v4839 = vunpack.c.h.bf16 %v4277
    %v4840 = vunpack.c.l.bf16 %v4278
    %v4841 = vunpack.c.h.bf16 %v4278
    %v4842 = vunpack.c.l.bf16 %v4279
    %v4843 = vunpack.c.h.bf16 %v4279
    %v4844 = vunpack.c.l.bf16 %v4280
    %v4845 = vunpack.c.h.bf16 %v4280
    %v4846 = vunpack.c.l.bf16 %v4281
    %v4847 = vunpack.c.h.bf16 %v4281
    %v4848 = vunpack.c.l.bf16 %v4282
    %v4849 = vunpack.c.h.bf16 %v4282
    %v4850 = vunpack.c.l.bf16 %v4283
    %v4851 = vunpack.c.h.bf16 %v4283
    %v4852 = vunpack.c.l.bf16 %v4284
    %v4853 = vunpack.c.h.bf16 %v4284
    %v4854 = vunpack.c.l.bf16 %v4285
    %v4855 = vunpack.c.h.bf16 %v4285
    %v4856 = vunpack.c.l.bf16 %v4286
    %v4857 = vunpack.c.h.bf16 %v4286
    %v4858 = vunpack.c.l.bf16 %v4287
    %v4859 = vunpack.c.h.bf16 %v4287
    %v4860 = vunpack.c.l.bf16 %v4288
    %v4861 = vunpack.c.h.bf16 %v4288
    %v4862 = vunpack.c.l.bf16 %v4289
    %v4863 = vunpack.c.h.bf16 %v4289
    %v4864 = vunpack.c.l.bf16 %v4290
    %v4865 = vunpack.c.h.bf16 %v4290
    %v4866 = vunpack.c.l.bf16 %v4291
    %v4867 = vunpack.c.h.bf16 %v4291
    %v4868 = vunpack.c.l.bf16 %v4292
    %v4869 = vunpack.c.h.bf16 %v4292
    %v4870 = vunpack.c.l.bf16 %v4293
    %v4871 = vunpack.c.h.bf16 %v4293
    %v4872 = vunpack.c.l.bf16 %v4294
    %v4873 = vunpack.c.h.bf16 %v4294
    %v4874 = vunpack.c.l.bf16 %v4295
    %v4875 = vunpack.c.h.bf16 %v4295
    %v4876 = vunpack.c.l.bf16 %v4296
    %v4877 = vunpack.c.h.bf16 %v4296
    %v4878 = vunpack.c.l.bf16 %v4297
    %v4879 = vunpack.c.h.bf16 %v4297
    %v4880 = vunpack.c.l.bf16 %v4298
    %v4881 = vunpack.c.h.bf16 %v4298
    %v4882 = vunpack.c.l.bf16 %v4299
    %v4883 = vunpack.c.h.bf16 %v4299
    %v4884 = vunpack.c.l.bf16 %v4300
    %v4885 = vunpack.c.h.bf16 %v4300
    %v4886 = vunpack.c.l.bf16 %v4301
    %v4887 = vunpack.c.h.bf16 %v4301
    %v4888 = vunpack.c.l.bf16 %v4302
    %v4889 = vunpack.c.h.bf16 %v4302
    %v4890 = vunpack.c.l.bf16 %v4303
    %v4891 = vunpack.c.h.bf16 %v4303
    %v4892 = vunpack.c.l.bf16 %v4304
    %v4893 = vunpack.c.h.bf16 %v4304
    %v4894 = vunpack.c.l.bf16 %v4305
    %v4895 = vunpack.c.h.bf16 %v4305
    %v4896 = vunpack.c.l.bf16 %v4306
    %v4897 = vunpack.c.h.bf16 %v4306
    %v4898 = vunpack.c.l.bf16 %v4307
    %v4899 = vunpack.c.h.bf16 %v4307
    %v4900 = vunpack.c.l.bf16 %v4308
    %v4901 = vunpack.c.h.bf16 %v4308
    %v4902 = vunpack.c.l.bf16 %v4309
    %v4903 = vunpack.c.h.bf16 %v4309
    %v4904 = vunpack.c.l.bf16 %v4310
    %v4905 = vunpack.c.h.bf16 %v4310
    %v4906 = vunpack.c.l.bf16 %v4311
    %v4907 = vunpack.c.h.bf16 %v4311
    %v4908 = vunpack.c.l.bf16 %v4312
    %v4909 = vunpack.c.h.bf16 %v4312
    %v4910 = vunpack.c.l.bf16 %v4313
    %v4911 = vunpack.c.h.bf16 %v4313
    %v4912 = vunpack.c.l.bf16 %v4314
    %v4913 = vunpack.c.h.bf16 %v4314
    %v4914 = vunpack.c.l.bf16 %v4315
    %v4915 = vunpack.c.h.bf16 %v4315
    %v4916 = vunpack.c.l.bf16 %v4316
    %v4917 = vunpack.c.h.bf16 %v4316
    %v4918 = vunpack.c.l.bf16 %v4317
    %v4919 = vunpack.c.h.bf16 %v4317
    %v4920 = vunpack.c.l.bf16 %v4318
    %v4921 = vunpack.c.h.bf16 %v4318
    %v4922 = vunpack.c.l.bf16 %v4319
    %v4923 = vunpack.c.h.bf16 %v4319
    %v4924 = vunpack.c.l.bf16 %v4320
    %v4925 = vunpack.c.h.bf16 %v4320
    %v4926 = vunpack.c.l.bf16 %v4321
    %v4927 = vunpack.c.h.bf16 %v4321
    %v4928 = vunpack.c.l.bf16 %v4322
    %v4929 = vunpack.c.h.bf16 %v4322
    %v4930 = vunpack.c.l.bf16 %v4323
    %v4931 = vunpack.c.h.bf16 %v4323
    %v4932 = vunpack.c.l.bf16 %v4324
    %v4933 = vunpack.c.h.bf16 %v4324
    %v4934 = vunpack.c.l.bf16 %v4325
    %v4935 = vunpack.c.h.bf16 %v4325
    %v4936 = vunpack.c.l.bf16 %v4326
    %v4937 = vunpack.c.h.bf16 %v4326
    %v4938 = vunpack.c.l.bf16 %v4327
    %v4939 = vunpack.c.h.bf16 %v4327
    %v4940 = vunpack.c.l.bf16 %v4328
    %v4941 = vunpack.c.h.bf16 %v4328
    %v4942 = vunpack.c.l.bf16 %v4329
    %v4943 = vunpack.c.h.bf16 %v4329
    %v4944 = vunpack.c.l.bf16 %v4330
    %v4945 = vunpack.c.h.bf16 %v4330
    %v4946 = vunpack.c.l.bf16 %v4331
    %v4947 = vunpack.c.h.bf16 %v4331
    %v4948 = vunpack.c.l.bf16 %v4332
    %v4949 = vunpack.c.h.bf16 %v4332
    %v4950 = vunpack.c.l.bf16 %v4333
    %v4951 = vunpack.c.h.bf16 %v4333
    %v4952 = vunpack.c.l.bf16 %v4334
    %v4953 = vunpack.c.h.bf16 %v4334
    %v4954 = vunpack.c.l.bf16 %v4335
    %v4955 = vunpack.c.h.bf16 %v4335
    %v4956 = vunpack.c.l.bf16 %v4336
    %v4957 = vunpack.c.h.bf16 %v4336
    %v4958 = vunpack.c.l.bf16 %v4337
    %v4959 = vunpack.c.h.bf16 %v4337
    %v4960 = vunpack.c.l.bf16 %v4338
    %v4961 = vunpack.c.h.bf16 %v4338
    %v4962 = vunpack.c.l.bf16 %v4339
    %v4963 = vunpack.c.h.bf16 %v4339
    %v4964 = vunpack.c.l.bf16 %v4340
    %v4965 = vunpack.c.h.bf16 %v4340
    %v4966 = vunpack.c.l.bf16 %v4341
    %v4967 = vunpack.c.h.bf16 %v4341
    %v4968 = vunpack.c.l.bf16 %v4342
    %v4969 = vunpack.c.h.bf16 %v4342
    %v4970 = vunpack.c.l.bf16 %v4343
    %v4971 = vunpack.c.h.bf16 %v4343
    %v4972 = vunpack.c.l.bf16 %v4344
    %v4973 = vunpack.c.h.bf16 %v4344
    %v4974 = vunpack.c.l.bf16 %v4345
    %v4975 = vunpack.c.h.bf16 %v4345
    %v4976 = vunpack.c.l.bf16 %v4346
    %v4977 = vunpack.c.h.bf16 %v4346
    %v4978 = vunpack.c.l.bf16 %v4347
    %v4979 = vunpack.c.h.bf16 %v4347
    %v4980 = vunpack.c.l.bf16 %v4348
    %v4981 = vunpack.c.h.bf16 %v4348
    %v4982 = vunpack.c.l.bf16 %v4349
    %v4983 = vunpack.c.h.bf16 %v4349
    %v4984 = vunpack.c.l.bf16 %v4350
    %v4985 = vunpack.c.h.bf16 %v4350
    %v4986 = vunpack.c.l.bf16 %v4351
    %v4987 = vunpack.c.h.bf16 %v4351
    %v4988 = vunpack.c.l.bf16 %v4352
    %v4989 = vunpack.c.h.bf16 %v4352
    %v4990 = vunpack.c.l.bf16 %v4353
    %v4991 = vunpack.c.h.bf16 %v4353
    %v4992 = vunpack.c.l.bf16 %v4354
    %v4993 = vunpack.c.h.bf16 %v4354
    %v4994 = vunpack.c.l.bf16 %v4355
    %v4995 = vunpack.c.h.bf16 %v4355
    %v4996 = vunpack.c.l.bf16 %v4356
    %v4997 = vunpack.c.h.bf16 %v4356
    %v4998 = vunpack.c.l.bf16 %v4357
    %v4999 = vunpack.c.h.bf16 %v4357
    %v5000 = vunpack.c.l.bf16 %v4358
    %v5001 = vunpack.c.h.bf16 %v4358
    %v5002 = vunpack.c.l.bf16 %v4359
    %v5003 = vunpack.c.h.bf16 %v4359
    %v5004 = vunpack.c.l.bf16 %v4360
    %v5005 = vunpack.c.h.bf16 %v4360
    %v5006 = vunpack.c.l.bf16 %v4361
    %v5007 = vunpack.c.h.bf16 %v4361
    %v5008 = vunpack.c.l.bf16 %v4362
    %v5009 = vunpack.c.h.bf16 %v4362
    %v5010 = vunpack.c.l.bf16 %v4363
    %v5011 = vunpack.c.h.bf16 %v4363
    %v5012 = vunpack.c.l.bf16 %v4364
    %v5013 = vunpack.c.h.bf16 %v4364
    %v5014 = vunpack.c.l.bf16 %v4365
    %v5015 = vunpack.c.h.bf16 %v4365
    %v5016 = vunpack.c.l.bf16 %v4366
    %v5017 = vunpack.c.h.bf16 %v4366
    %v5018 = vunpack.c.l.bf16 %v4367
    %v5019 = vunpack.c.h.bf16 %v4367
    %v5020 = vunpack.c.l.bf16 %v4368
    %v5021 = vunpack.c.h.bf16 %v4368
    %v5022 = vunpack.c.l.bf16 %v4369
    %v5023 = vunpack.c.h.bf16 %v4369
    %v5024 = vunpack.c.l.bf16 %v4370
    %v5025 = vunpack.c.h.bf16 %v4370
    %v5026 = vunpack.c.l.bf16 %v4371
    %v5027 = vunpack.c.h.bf16 %v4371
    %v5028 = vunpack.c.l.bf16 %v4372
    %v5029 = vunpack.c.h.bf16 %v4372
    %v5030 = vunpack.c.l.bf16 %v4373
    %v5031 = vunpack.c.h.bf16 %v4373
    %v5032 = vunpack.c.l.bf16 %v4374
    %v5033 = vunpack.c.h.bf16 %v4374
    %v5034 = vunpack.c.l.bf16 %v4375
    %v5035 = vunpack.c.h.bf16 %v4375
    %v5036 = vunpack.c.l.bf16 %v4376
    %v5037 = vunpack.c.h.bf16 %v4376
    %v5038 = vunpack.c.l.bf16 %v4377
    %v5039 = vunpack.c.h.bf16 %v4377
    %v5040 = vunpack.c.l.bf16 %v4378
    %v5041 = vunpack.c.h.bf16 %v4378
    %v5042 = vunpack.c.l.bf16 %v4379
    %v5043 = vunpack.c.h.bf16 %v4379
    %v5044 = vunpack.c.l.bf16 %v4380
    %v5045 = vunpack.c.h.bf16 %v4380
    %v5046 = vunpack.c.l.bf16 %v4381
    %v5047 = vunpack.c.h.bf16 %v4381
    %v5048 = vunpack.c.l.bf16 %v4382
    %v5049 = vunpack.c.h.bf16 %v4382
    %v5050 = vunpack.c.l.bf16 %v4383
    %v5051 = vunpack.c.h.bf16 %v4383
    %v5052 = vunpack.c.l.bf16 %v4384
    %v5053 = vunpack.c.h.bf16 %v4384
    %v5054 = vunpack.c.l.bf16 %v4385
    %v5055 = vunpack.c.h.bf16 %v4385
    %v5056 = vunpack.c.l.bf16 %v4386
    %v5057 = vunpack.c.h.bf16 %v4386
    %v5058 = vunpack.c.l.bf16 %v4387
    %v5059 = vunpack.c.h.bf16 %v4387
    %v5060 = vunpack.c.l.bf16 %v4388
    %v5061 = vunpack.c.h.bf16 %v4388
    %v5062 = vunpack.c.l.bf16 %v4389
    %v5063 = vunpack.c.h.bf16 %v4389
    %v5064 = vunpack.c.l.bf16 %v4390
    %v5065 = vunpack.c.h.bf16 %v4390
    %v5066 = vunpack.c.l.bf16 %v4391
    %v5067 = vunpack.c.h.bf16 %v4391
    %v5068 = vunpack.c.l.bf16 %v4392
    %v5069 = vunpack.c.h.bf16 %v4392
    %v5070 = vunpack.c.l.bf16 %v4393
    %v5071 = vunpack.c.h.bf16 %v4393
    %v5072 = vunpack.c.l.bf16 %v4394
    %v5073 = vunpack.c.h.bf16 %v4394
    %v5074 = vunpack.c.l.bf16 %v4395
    %v5075 = vunpack.c.h.bf16 %v4395
    %v5076 = vunpack.c.l.bf16 %v4396
    %v5077 = vunpack.c.h.bf16 %v4396
    %v5078 = vunpack.c.l.bf16 %v4397
    %v5079 = vunpack.c.h.bf16 %v4397
    %v5080 = vunpack.c.l.bf16 %v4398
    %v5081 = vunpack.c.h.bf16 %v4398
    %v5082 = vunpack.c.l.bf16 %v4399
    %v5083 = vunpack.c.h.bf16 %v4399
    %v5084 = vunpack.c.l.bf16 %v4400
    %v5085 = vunpack.c.h.bf16 %v4400
    %v5086 = vunpack.c.l.bf16 %v4401
    %v5087 = vunpack.c.h.bf16 %v4401
    %v5088 = vunpack.c.l.bf16 %v4402
    %v5089 = vunpack.c.h.bf16 %v4402
    %v5090 = vunpack.c.l.bf16 %v4403
    %v5091 = vunpack.c.h.bf16 %v4403
    %v5092 = vunpack.c.l.bf16 %v4404
    %v5093 = vunpack.c.h.bf16 %v4404
    %v5094 = vunpack.c.l.bf16 %v4405
    %v5095 = vunpack.c.h.bf16 %v4405
    %v5096 = vunpack.c.l.bf16 %v4406
    %v5097 = vunpack.c.h.bf16 %v4406
    %v5098 = vunpack.c.l.bf16 %v4407
    %v5099 = vunpack.c.h.bf16 %v4407
    %v5100 = vunpack.c.l.bf16 %v4408
    %v5101 = vunpack.c.h.bf16 %v4408
    %v5102 = vunpack.c.l.bf16 %v4409
    %v5103 = vunpack.c.h.bf16 %v4409
    %v5104 = vunpack.c.l.bf16 %v4410
    %v5105 = vunpack.c.h.bf16 %v4410
    %v5106 = vunpack.c.l.bf16 %v4411
    %v5107 = vunpack.c.h.bf16 %v4411
    %v5108 = vunpack.c.l.bf16 %v4412
    %v5109 = vunpack.c.h.bf16 %v4412
    %v5110 = vunpack.c.l.bf16 %v4413
    %v5111 = vunpack.c.h.bf16 %v4413
    %v5112 = vunpack.c.l.bf16 %v4414
    %v5113 = vunpack.c.h.bf16 %v4414
    %v5114 = vunpack.c.l.bf16 %v4415
    %v5115 = vunpack.c.h.bf16 %v4415
    %v5116 = vunpack.c.l.bf16 %v4416
    %v5117 = vunpack.c.h.bf16 %v4416
    %v5118 = vunpack.c.l.bf16 %v4417
    %v5119 = vunpack.c.h.bf16 %v4417
    %v5120 = vunpack.c.l.bf16 %v4418
    %v5121 = vunpack.c.h.bf16 %v4418
    %v5122 = vunpack.c.l.bf16 %v4419
    %v5123 = vunpack.c.h.bf16 %v4419
    %v5124 = vunpack.c.l.bf16 %v4420
    %v5125 = vunpack.c.h.bf16 %v4420
    %v5126 = vunpack.c.l.bf16 %v4421
    %v5127 = vunpack.c.h.bf16 %v4421
    %v5128 = vunpack.c.l.bf16 %v4422
    %v5129 = vunpack.c.h.bf16 %v4422
    %v5130 = vunpack.c.l.bf16 %v4423
    %v5131 = vunpack.c.h.bf16 %v4423
    %v5132 = vunpack.c.l.bf16 %v4424
    %v5133 = vunpack.c.h.bf16 %v4424
    %v5134 = vunpack.c.l.bf16 %v4425
    %v5135 = vunpack.c.h.bf16 %v4425
    %v5136 = vunpack.c.l.bf16 %v4426
    %v5137 = vunpack.c.h.bf16 %v4426
    %v5138 = vunpack.c.l.bf16 %v4427
    %v5139 = vunpack.c.h.bf16 %v4427
    %v5140 = vunpack.c.l.bf16 %v4428
    %v5141 = vunpack.c.h.bf16 %v4428
    %v5142 = vunpack.c.l.bf16 %v4429
    %v5143 = vunpack.c.h.bf16 %v4429
    %v5144 = vunpack.c.l.bf16 %v4430
    %v5145 = vunpack.c.h.bf16 %v4430
    %v5146 = vunpack.c.l.bf16 %v4431
    %v5147 = vunpack.c.h.bf16 %v4431
    %v5148 = vunpack.c.l.bf16 %v4432
    %v5149 = vunpack.c.h.bf16 %v4432
    %v5150 = vunpack.c.l.bf16 %v4433
    %v5151 = vunpack.c.h.bf16 %v4433
    %v5152 = vunpack.c.l.bf16 %v4434
    %v5153 = vunpack.c.h.bf16 %v4434
    %v5154 = vunpack.c.l.bf16 %v4435
    %v5155 = vunpack.c.h.bf16 %v4435
    %v5156 = vunpack.c.l.bf16 %v4436
    %v5157 = vunpack.c.h.bf16 %v4436
    %v5158 = vunpack.c.l.bf16 %v4437
    %v5159 = vunpack.c.h.bf16 %v4437
    %v5160 = vunpack.c.l.bf16 %v4438
    %v5161 = vunpack.c.h.bf16 %v4438
    %v5162 = vunpack.c.l.bf16 %v4439
    %v5163 = vunpack.c.h.bf16 %v4439
    %v5164 = vunpack.c.l.bf16 %v4440
    %v5165 = vunpack.c.h.bf16 %v4440
    %v5166 = vunpack.c.l.bf16 %v4441
    %v5167 = vunpack.c.h.bf16 %v4441
    %v5168 = vunpack.c.l.bf16 %v4442
    %v5169 = vunpack.c.h.bf16 %v4442
    %v5170 = vunpack.c.l.bf16 %v4443
    %v5171 = vunpack.c.h.bf16 %v4443
    %v5172 = vunpack.c.l.bf16 %v4444
    %v5173 = vunpack.c.h.bf16 %v4444
    %v5174 = vunpack.c.l.bf16 %v4445
    %v5175 = vunpack.c.h.bf16 %v4445
    %v5176 = vunpack.c.l.bf16 %v4446
    %v5177 = vunpack.c.h.bf16 %v4446
    %v5178 = vunpack.c.l.bf16 %v4447
    %v5179 = vunpack.c.h.bf16 %v4447
    %v5180 = vunpack.c.l.bf16 %v4448
    %v5181 = vunpack.c.h.bf16 %v4448
    %v5182 = vunpack.c.l.bf16 %v4449
    %v5183 = vunpack.c.h.bf16 %v4449
    %v5184 = vunpack.c.l.bf16 %v4450
    %v5185 = vunpack.c.h.bf16 %v4450
    %v5186 = vunpack.c.l.bf16 %v4451
    %v5187 = vunpack.c.h.bf16 %v4451
    %v5188 = vunpack.c.l.bf16 %v4452
    %v5189 = vunpack.c.h.bf16 %v4452
    %v5190 = vunpack.c.l.bf16 %v4453
    %v5191 = vunpack.c.h.bf16 %v4453
    %v5192 = vunpack.c.l.bf16 %v4454
    %v5193 = vunpack.c.h.bf16 %v4454
    %v5194 = vunpack.c.l.bf16 %v4455
    %v5195 = vunpack.c.h.bf16 %v4455
    %v5196 = vunpack.c.l.bf16 %v4456
    %v5197 = vunpack.c.h.bf16 %v4456
    %v5198 = vunpack.c.l.bf16 %v4457
    %v5199 = vunpack.c.h.bf16 %v4457
    %v5200 = vunpack.c.l.bf16 %v4458
    %v5201 = vunpack.c.h.bf16 %v4458
    %v5202 = vunpack.c.l.bf16 %v4459
    %v5203 = vunpack.c.h.bf16 %v4459
    %v5204 = vunpack.c.l.bf16 %v4460
    %v5205 = vunpack.c.h.bf16 %v4460
    %v5206 = vunpack.c.l.bf16 %v4461
    %v5207 = vunpack.c.h.bf16 %v4461
    %v5208 = vunpack.c.l.bf16 %v4462
    %v5209 = vunpack.c.h.bf16 %v4462
    %v5210 = vunpack.c.l.bf16 %v4463
    %v5211 = vunpack.c.h.bf16 %v4463
    %v5212 = vunpack.c.l.bf16 %v4464
    %v5213 = vunpack.c.h.bf16 %v4464
    %v5214 = vunpack.c.l.bf16 %v4465
    %v5215 = vunpack.c.h.bf16 %v4465
    %v5216 = vunpack.c.l.bf16 %v4466
    %v5217 = vunpack.c.h.bf16 %v4466
    %v5218 = vunpack.c.l.bf16 %v4467
    %v5219 = vunpack.c.h.bf16 %v4467
    %v5220 = vunpack.c.l.bf16 %v4468
    %v5221 = vunpack.c.h.bf16 %v4468
    %v5222 = vunpack.c.l.bf16 %v4469
    %v5223 = vunpack.c.h.bf16 %v4469
    %v5224 = vunpack.c.l.bf16 %v4470
    %v5225 = vunpack.c.h.bf16 %v4470
    %v5226 = vunpack.c.l.bf16 %v4471
    %v5227 = vunpack.c.h.bf16 %v4471
    %v5228 = vunpack.c.l.bf16 %v4472
    %v5229 = vunpack.c.h.bf16 %v4472
    %v5230 = vunpack.c.l.bf16 %v4473
    %v5231 = vunpack.c.h.bf16 %v4473
    %v5232 = vunpack.c.l.bf16 %v4474
    %v5233 = vunpack.c.h.bf16 %v4474
    %v5234 = vunpack.c.l.bf16 %v4475
    %v5235 = vunpack.c.h.bf16 %v4475
    %v5236 = vunpack.c.l.bf16 %v4476
    %v5237 = vunpack.c.h.bf16 %v4476
    %v5238 = vunpack.c.l.bf16 %v4477
    %v5239 = vunpack.c.h.bf16 %v4477
    %v5240 = vunpack.c.l.bf16 %v4478
    %v5241 = vunpack.c.h.bf16 %v4478
    %v5242 = vunpack.c.l.bf16 %v4479
    %v5243 = vunpack.c.h.bf16 %v4479
    %v5244 = vunpack.c.l.bf16 %v4480
    %v5245 = vunpack.c.h.bf16 %v4480
    %v5246 = vunpack.c.l.bf16 %v4481
    %v5247 = vunpack.c.h.bf16 %v4481
    %v5248 = vunpack.c.l.bf16 %v4482
    %v5249 = vunpack.c.h.bf16 %v4482
    %v5250 = vunpack.c.l.bf16 %v4483
    %v5251 = vunpack.c.h.bf16 %v4483
    %v5252 = vunpack.c.l.bf16 %v4484
    %v5253 = vunpack.c.h.bf16 %v4484
    %v5254 = vunpack.c.l.bf16 %v4485
    %v5255 = vunpack.c.h.bf16 %v4485
    %v5256 = vunpack.c.l.bf16 %v4486
    %v5257 = vunpack.c.h.bf16 %v4486
    %v5258 = vunpack.c.l.bf16 %v4487
    %v5259 = vunpack.c.h.bf16 %v4487
    %v5260 = vunpack.c.l.bf16 %v4488
    %v5261 = vunpack.c.h.bf16 %v4488
    %v5262 = vunpack.c.l.bf16 %v4489
    %v5263 = vunpack.c.h.bf16 %v4489
    %v5264 = vunpack.c.l.bf16 %v4490
    %v5265 = vunpack.c.h.bf16 %v4490
    %v5266 = vunpack.c.l.bf16 %v4491
    %v5267 = vunpack.c.h.bf16 %v4491
    %v5268 = vunpack.c.l.bf16 %v4492
    %v5269 = vunpack.c.h.bf16 %v4492
    %v5270 = vunpack.c.l.bf16 %v4493
    %v5271 = vunpack.c.h.bf16 %v4493
    %v5272 = vunpack.c.l.bf16 %v4494
    %v5273 = vunpack.c.h.bf16 %v4494
    %v5274 = vunpack.c.l.bf16 %v4495
    %v5275 = vunpack.c.h.bf16 %v4495
    %v5276 = vunpack.c.l.bf16 %v4496
    %v5277 = vunpack.c.h.bf16 %v4496
    %v5278 = vunpack.c.l.bf16 %v4497
    %v5279 = vunpack.c.h.bf16 %v4497
    %v5280 = vunpack.c.l.bf16 %v4498
    %v5281 = vunpack.c.h.bf16 %v4498
    %v5282 = vunpack.c.l.bf16 %v4499
    %v5283 = vunpack.c.h.bf16 %v4499
    %v5284 = vunpack.c.l.bf16 %v4500
    %v5285 = vunpack.c.h.bf16 %v4500
    %v5286 = vunpack.c.l.bf16 %v4501
    %v5287 = vunpack.c.h.bf16 %v4501
    %v5288 = vunpack.c.l.bf16 %v4502
    %v5289 = vunpack.c.h.bf16 %v4502
    %v5290 = vunpack.c.l.bf16 %v4503
    %v5291 = vunpack.c.h.bf16 %v4503
    %v5292 = vunpack.c.l.bf16 %v4504
    %v5293 = vunpack.c.h.bf16 %v4504
    %v5294 = vunpack.c.l.bf16 %v4505
    %v5295 = vunpack.c.h.bf16 %v4505
    %v5296 = vunpack.c.l.bf16 %v4506
    %v5297 = vunpack.c.h.bf16 %v4506
    %v5298 = vunpack.c.l.bf16 %v4507
    %v5299 = vunpack.c.h.bf16 %v4507
    %v5300 = vunpack.c.l.bf16 %v4508
    %v5301 = vunpack.c.h.bf16 %v4508
    %v5302 = vunpack.c.l.bf16 %v4509
    %v5303 = vunpack.c.h.bf16 %v4509
    %v5304 = vunpack.c.l.bf16 %v4510
    %v5305 = vunpack.c.h.bf16 %v4510
    %v5306 = vunpack.c.l.bf16 %v4511
    %v5307 = vunpack.c.h.bf16 %v4511
    %v5308 = vunpack.c.l.bf16 %v4512
    %v5309 = vunpack.c.h.bf16 %v4512
    %v5310 = vunpack.c.l.bf16 %v4513
    %v5311 = vunpack.c.h.bf16 %v4513
    %v5312 = vunpack.c.l.bf16 %v4514
    %v5313 = vunpack.c.h.bf16 %v4514
    %v5314 = vunpack.c.l.bf16 %v4515
    %v5315 = vunpack.c.h.bf16 %v4515
    %v5316 = vunpack.c.l.bf16 %v4516
    %v5317 = vunpack.c.h.bf16 %v4516
    %v5318 = vunpack.c.l.bf16 %v4517
    %v5319 = vunpack.c.h.bf16 %v4517
    %v5320 = vunpack.c.l.bf16 %v4518
    %v5321 = vunpack.c.h.bf16 %v4518
    %v5322 = vunpack.c.l.bf16 %v4519
    %v5323 = vunpack.c.h.bf16 %v4519
    %v5324 = vunpack.c.l.bf16 %v4520
    %v5325 = vunpack.c.h.bf16 %v4520
    %v5326 = vunpack.c.l.bf16 %v4521
    %v5327 = vunpack.c.h.bf16 %v4521
    %v5328 = vunpack.c.l.bf16 %v4522
    %v5329 = vunpack.c.h.bf16 %v4522
    %v5330 = vunpack.c.l.bf16 %v4523
    %v5331 = vunpack.c.h.bf16 %v4523
    %v5332 = vunpack.c.l.bf16 %v4524
    %v5333 = vunpack.c.h.bf16 %v4524
    %v5334 = vunpack.c.l.bf16 %v4525
    %v5335 = vunpack.c.h.bf16 %v4525
    %v5336 = vunpack.c.l.bf16 %v4526
    %v5337 = vunpack.c.h.bf16 %v4526
    %v5338 = vunpack.c.l.bf16 %v4527
    %v5339 = vunpack.c.h.bf16 %v4527
    %v5340 = vunpack.c.l.bf16 %v4528
    %v5341 = vunpack.c.h.bf16 %v4528
    %v5342 = vunpack.c.l.bf16 %v4529
    %v5343 = vunpack.c.h.bf16 %v4529
    %v5344 = vunpack.c.l.bf16 %v4530
    %v5345 = vunpack.c.h.bf16 %v4530
    %v5346 = vunpack.c.l.bf16 %v4531
    %v5347 = vunpack.c.h.bf16 %v4531
    %v5348 = vunpack.c.l.bf16 %v4532
    %v5349 = vunpack.c.h.bf16 %v4532
    %v5350 = vunpack.c.l.bf16 %v4533
    %v5351 = vunpack.c.h.bf16 %v4533
    %v5352 = vunpack.c.l.bf16 %v4534
    %v5353 = vunpack.c.h.bf16 %v4534
    %v5354 = vunpack.c.l.bf16 %v4535
    %v5355 = vunpack.c.h.bf16 %v4535
    %v5356 = vunpack.c.l.bf16 %v4536
    %v5357 = vunpack.c.h.bf16 %v4536
    %v5358 = vunpack.c.l.bf16 %v4537
    %v5359 = vunpack.c.h.bf16 %v4537
    %v5360 = vunpack.c.l.bf16 %v4538
    %v5361 = vunpack.c.h.bf16 %v4538
    %v5362 = vunpack.c.l.bf16 %v4539
    %v5363 = vunpack.c.h.bf16 %v4539
    %v5364 = vunpack.c.l.bf16 %v4540
    %v5365 = vunpack.c.h.bf16 %v4540
    %v5366 = vunpack.c.l.bf16 %v4541
    %v5367 = vunpack.c.h.bf16 %v4541
    %v5368 = vunpack.c.l.bf16 %v4542
    %v5369 = vunpack.c.h.bf16 %v4542
    %v5370 = vunpack.c.l.bf16 %v4543
    %v5371 = vunpack.c.h.bf16 %v4543
    %v5372 = vunpack.c.l.bf16 %v4544
    %v5373 = vunpack.c.h.bf16 %v4544
    %v5374 = vunpack.c.l.bf16 %v4545
    %v5375 = vunpack.c.h.bf16 %v4545
    %v5376 = vunpack.c.l.bf16 %v4546
    %v5377 = vunpack.c.h.bf16 %v4546
    %v5378 = vunpack.c.l.bf16 %v4547
    %v5379 = vunpack.c.h.bf16 %v4547
    %v5380 = vunpack.c.l.bf16 %v4548
    %v5381 = vunpack.c.h.bf16 %v4548
    %v5382 = vunpack.c.l.bf16 %v4549
    %v5383 = vunpack.c.h.bf16 %v4549
    %v5384 = vunpack.c.l.bf16 %v4550
    %v5385 = vunpack.c.h.bf16 %v4550
    %v5386 = vunpack.c.l.bf16 %v4551
    %v5387 = vunpack.c.h.bf16 %v4551
    %v5388 = vunpack.c.l.bf16 %v4552
    %v5389 = vunpack.c.h.bf16 %v4552
    %v5390 = vunpack.c.l.bf16 %v4553
    %v5391 = vunpack.c.h.bf16 %v4553
    %v5392 = vunpack.c.l.bf16 %v4554
    %v5393 = vunpack.c.h.bf16 %v4554
    %v5394 = vunpack.c.l.bf16 %v4555
    %v5395 = vunpack.c.h.bf16 %v4555
    %v5396 = vunpack.c.l.bf16 %v4556
    %v5397 = vunpack.c.h.bf16 %v4556
    %v5398 = vunpack.c.l.bf16 %v4557
    %v5399 = vunpack.c.h.bf16 %v4557
    %v5400 = vunpack.c.l.bf16 %v4558
    %v5401 = vunpack.c.h.bf16 %v4558
    %v5402 = vunpack.c.l.bf16 %v4559
    %v5403 = vunpack.c.h.bf16 %v4559
    %v5404 = vunpack.c.l.bf16 %v4560
    %v5405 = vunpack.c.h.bf16 %v4560
    %v5406 = vunpack.c.l.bf16 %v4561
    %v5407 = vunpack.c.h.bf16 %v4561
    %v5408 = vunpack.c.l.bf16 %v4562
    %v5409 = vunpack.c.h.bf16 %v4562
    %v5410 = vunpack.c.l.bf16 %v4563
    %v5411 = vunpack.c.h.bf16 %v4563
    %v5412 = vunpack.c.l.bf16 %v4564
    %v5413 = vunpack.c.h.bf16 %v4564
    %v5414 = vunpack.c.l.bf16 %v4565
    %v5415 = vunpack.c.h.bf16 %v4565
    %v5416 = vunpack.c.l.bf16 %v4566
    %v5417 = vunpack.c.h.bf16 %v4566
    %v5418 = vunpack.c.l.bf16 %v4567
    %v5419 = vunpack.c.h.bf16 %v4567
    %v5420 = vunpack.c.l.bf16 %v4568
    %v5421 = vunpack.c.h.bf16 %v4568
    %v5422 = vunpack.c.l.bf16 %v4569
    %v5423 = vunpack.c.h.bf16 %v4569
    %v5424 = vunpack.c.l.bf16 %v4570
    %v5425 = vunpack.c.h.bf16 %v4570
    %v5426 = vunpack.c.l.bf16 %v4571
    %v5427 = vunpack.c.h.bf16 %v4571
    %v5428 = vunpack.c.l.bf16 %v4572
    %v5429 = vunpack.c.h.bf16 %v4572
    %v5430 = vunpack.c.l.bf16 %v4573
    %v5431 = vunpack.c.h.bf16 %v4573
    %v5432 = vunpack.c.l.bf16 %v4574
    %v5433 = vunpack.c.h.bf16 %v4574
    %v5434 = vunpack.c.l.bf16 %v4575
    %v5435 = vunpack.c.h.bf16 %v4575
    %v5436 = vunpack.c.l.bf16 %v4576
    %v5437 = vunpack.c.h.bf16 %v4576
    %v5438 = vunpack.c.l.bf16 %v4577
    %v5439 = vunpack.c.h.bf16 %v4577
    %v5440 = vunpack.c.l.bf16 %v4578
    %v5441 = vunpack.c.h.bf16 %v4578
    %v5442 = vunpack.c.l.bf16 %v4579
    %v5443 = vunpack.c.h.bf16 %v4579
    %v5444 = vunpack.c.l.bf16 %v4580
    %v5445 = vunpack.c.h.bf16 %v4580
    %v5446 = vunpack.c.l.bf16 %v4581
    %v5447 = vunpack.c.h.bf16 %v4581
    %v5448 = vunpack.c.l.bf16 %v4582
    %v5449 = vunpack.c.h.bf16 %v4582
    %v5450 = vunpack.c.l.bf16 %v4583
    %v5451 = vunpack.c.h.bf16 %v4583
    %v5452 = vunpack.c.l.bf16 %v4584
    %v5453 = vunpack.c.h.bf16 %v4584
    %v5454 = vunpack.c.l.bf16 %v4585
    %v5455 = vunpack.c.h.bf16 %v4585
    %v5456 = vunpack.c.l.bf16 %v4586
    %v5457 = vunpack.c.h.bf16 %v4586
    %v5458 = vunpack.c.l.bf16 %v4587
    %v5459 = vunpack.c.h.bf16 %v4587
    %v5460 = vunpack.c.l.bf16 %v4588
    %v5461 = vunpack.c.h.bf16 %v4588
    %v5462 = vunpack.c.l.bf16 %v4589
    %v5463 = vunpack.c.h.bf16 %v4589
    %v5464 = vunpack.c.l.bf16 %v4590
    %v5465 = vunpack.c.h.bf16 %v4590
    %v5466 = vunpack.c.l.bf16 %v4591
    %v5467 = vunpack.c.h.bf16 %v4591
    %v5468 = vunpack.c.l.bf16 %v4592
    %v5469 = vunpack.c.h.bf16 %v4592
    %v5470 = vunpack.c.l.bf16 %v4593
    %v5471 = vunpack.c.h.bf16 %v4593
    %v5472 = vunpack.c.l.bf16 %v4594
    %v5473 = vunpack.c.h.bf16 %v4594
    %v5474 = vunpack.c.l.bf16 %v4595
    %v5475 = vunpack.c.h.bf16 %v4595
    %v5476 = vunpack.c.l.bf16 %v4596
    %v5477 = vunpack.c.h.bf16 %v4596
    %v5478 = vunpack.c.l.bf16 %v4597
    %v5479 = vunpack.c.h.bf16 %v4597
    %v5480 = vunpack.c.l.bf16 %v4598
    %v5481 = vunpack.c.h.bf16 %v4598
    %v5482 = vunpack.c.l.bf16 %v4599
    %v5483 = vunpack.c.h.bf16 %v4599
    %v5484 = vunpack.c.l.bf16 %v4600
    %v5485 = vunpack.c.h.bf16 %v4600
    %v5486 = vunpack.c.l.bf16 %v4601
    %v5487 = vunpack.c.h.bf16 %v4601
    %v5488 = vunpack.c.l.bf16 %v4602
    %v5489 = vunpack.c.h.bf16 %v4602
    %v5490 = vunpack.c.l.bf16 %v4603
    %v5491 = vunpack.c.h.bf16 %v4603
    %v5492 = vunpack.c.l.bf16 %v4604
    %v5493 = vunpack.c.h.bf16 %v4604
    %v5494 = vunpack.c.l.bf16 %v4605
    %v5495 = vunpack.c.h.bf16 %v4605
    %v5496 = vunpack.c.l.bf16 %v4606
    %v5497 = vunpack.c.h.bf16 %v4606
    %v5498 = vunpack.c.l.bf16 %v4607
    %v5499 = vunpack.c.h.bf16 %v4607
    %v5500 = vunpack.c.l.bf16 %v4608
    %v5501 = vunpack.c.h.bf16 %v4608
    %v5502 = vunpack.c.l.bf16 %v4609
    %v5503 = vunpack.c.h.bf16 %v4609
    %v5504 = vunpack.c.l.bf16 %v4610
    %v5505 = vunpack.c.h.bf16 %v4610
    %v5506 = vunpack.c.l.bf16 %v4611
    %v5507 = vunpack.c.h.bf16 %v4611
    %v5508 = vunpack.c.l.bf16 %v4612
    %v5509 = vunpack.c.h.bf16 %v4612
    %v5510 = vunpack.c.l.bf16 %v4613
    %v5511 = vunpack.c.h.bf16 %v4613
    %v5512 = vunpack.c.l.bf16 %v4614
    %v5513 = vunpack.c.h.bf16 %v4614
    %v5514 = vunpack.c.l.bf16 %v4615
    %v5515 = vunpack.c.h.bf16 %v4615
    %v5516 = vunpack.c.l.bf16 %v4616
    %v5517 = vunpack.c.h.bf16 %v4616
    %v5518 = vunpack.c.l.bf16 %v4617
    %v5519 = vunpack.c.h.bf16 %v4617
    %v5520 = vunpack.c.l.bf16 %v4618
    %v5521 = vunpack.c.h.bf16 %v4618
    %v5522 = vunpack.c.l.bf16 %v4619
    %v5523 = vunpack.c.h.bf16 %v4619
    %v5524 = vunpack.c.l.bf16 %v4620
    %v5525 = vunpack.c.h.bf16 %v4620
    %v5526 = vunpack.c.l.bf16 %v4621
    %v5527 = vunpack.c.h.bf16 %v4621
    %v5528 = vunpack.c.l.bf16 %v4622
    %v5529 = vunpack.c.h.bf16 %v4622
    %v5530 = vunpack.c.l.bf16 %v4623
    %v5531 = vunpack.c.h.bf16 %v4623
    %v5532 = vunpack.c.l.bf16 %v4624
    %v5533 = vunpack.c.h.bf16 %v4624
    %v5534 = vunpack.c.l.bf16 %v4625
    %v5535 = vunpack.c.h.bf16 %v4625
    %v5536 = vunpack.c.l.bf16 %v4626
    %v5537 = vunpack.c.h.bf16 %v4626
    %v5538 = vunpack.c.l.bf16 %v4627
    %v5539 = vunpack.c.h.bf16 %v4627
    %v5540 = vunpack.c.l.bf16 %v4628
    %v5541 = vunpack.c.h.bf16 %v4628
    %v5542 = vunpack.c.l.bf16 %v4629
    %v5543 = vunpack.c.h.bf16 %v4629
    %v5544 = vunpack.c.l.bf16 %v4630
    %v5545 = vunpack.c.h.bf16 %v4630
    %v5546 = vunpack.c.l.bf16 %v4631
    %v5547 = vunpack.c.h.bf16 %v4631
    %v5548 = vunpack.c.l.bf16 %v4632
    %v5549 = vunpack.c.h.bf16 %v4632
    %v5550 = vunpack.c.l.bf16 %v4633
    %v5551 = vunpack.c.h.bf16 %v4633
    %v5552 = vunpack.c.l.bf16 %v4634
    %v5553 = vunpack.c.h.bf16 %v4634
    %v5554 = vunpack.c.l.bf16 %v4635
    %v5555 = vunpack.c.h.bf16 %v4635
    %v5556 = vunpack.c.l.bf16 %v4636
    %v5557 = vunpack.c.h.bf16 %v4636
    %v5558 = vunpack.c.l.bf16 %v4637
    %v5559 = vunpack.c.h.bf16 %v4637
    %v5560 = vunpack.c.l.bf16 %v4638
    %v5561 = vunpack.c.h.bf16 %v4638
    %v5562 = vunpack.c.l.bf16 %v4639
    %v5563 = vunpack.c.h.bf16 %v4639
    %v5564 = vunpack.c.l.bf16 %v4640
    %v5565 = vunpack.c.h.bf16 %v4640
    %v5566 = vunpack.c.l.bf16 %v4641
    %v5567 = vunpack.c.h.bf16 %v4641
    %v5568 = vunpack.c.l.bf16 %v4642
    %v5569 = vunpack.c.h.bf16 %v4642
    %v5570 = vunpack.c.l.bf16 %v4643
    %v5571 = vunpack.c.h.bf16 %v4643
    %v5572 = vunpack.c.l.bf16 %v4644
    %v5573 = vunpack.c.h.bf16 %v4644
    %v5574 = vunpack.c.l.bf16 %v4645
    %v5575 = vunpack.c.h.bf16 %v4645
    %v5576 = vunpack.c.l.bf16 %v4646
    %v5577 = vunpack.c.h.bf16 %v4646
    %v5578 = vunpack.c.l.bf16 %v4647
    %v5579 = vunpack.c.h.bf16 %v4647
    %v5580 = vunpack.c.l.bf16 %v4648
    %v5581 = vunpack.c.h.bf16 %v4648
    %v5582 = vunpack.c.l.bf16 %v4649
    %v5583 = vunpack.c.h.bf16 %v4649
    %v5584 = vunpack.c.l.bf16 %v4650
    %v5585 = vunpack.c.h.bf16 %v4650
    %v5586 = vunpack.c.l.bf16 %v4651
    %v5587 = vunpack.c.h.bf16 %v4651
    %v5588 = vunpack.c.l.bf16 %v4652
    %v5589 = vunpack.c.h.bf16 %v4652
    %v5590 = vunpack.c.l.bf16 %v4653
    %v5591 = vunpack.c.h.bf16 %v4653
    %v5592 = vunpack.c.l.bf16 %v4654
    %v5593 = vunpack.c.h.bf16 %v4654
    %v5594 = vunpack.c.l.bf16 %v4655
    %v5595 = vunpack.c.h.bf16 %v4655
    %v5596 = vunpack.c.l.bf16 %v4656
    %v5597 = vunpack.c.h.bf16 %v4656
    %v5598 = vunpack.c.l.bf16 %v4657
    %v5599 = vunpack.c.h.bf16 %v4657
    %v5600 = vunpack.c.l.bf16 %v4658
    %v5601 = vunpack.c.h.bf16 %v4658
    %v5602 = vunpack.c.l.bf16 %v4659
    %v5603 = vunpack.c.h.bf16 %v4659
    %v5604 = vunpack.c.l.bf16 %v4660
    %v5605 = vunpack.c.h.bf16 %v4660
    %v5606 = vunpack.c.l.bf16 %v4661
    %v5607 = vunpack.c.h.bf16 %v4661
    %v5608 = vunpack.c.l.bf16 %v4662
    %v5609 = vunpack.c.h.bf16 %v4662
    %v5610 = vunpack.c.l.bf16 %v4663
    %v5611 = vunpack.c.h.bf16 %v4663
    %v5612 = vunpack.c.l.bf16 %v4664
    %v5613 = vunpack.c.h.bf16 %v4664
    %v5614 = vunpack.c.l.bf16 %v4665
    %v5615 = vunpack.c.h.bf16 %v4665
    %v5616 = vunpack.c.l.bf16 %v4666
    %v5617 = vunpack.c.h.bf16 %v4666
    %v5618 = vunpack.c.l.bf16 %v4667
    %v5619 = vunpack.c.h.bf16 %v4667
    %v5620 = vunpack.c.l.bf16 %v4668
    %v5621 = vunpack.c.h.bf16 %v4668
    %v5622 = vunpack.c.l.bf16 %v4669
    %v5623 = vunpack.c.h.bf16 %v4669
    %v5624 = vunpack.c.l.bf16 %v4670
    %v5625 = vunpack.c.h.bf16 %v4670
    %v5626 = vunpack.c.l.bf16 %v4671
    %v5627 = vunpack.c.h.bf16 %v4671
    %v5628 = vunpack.c.l.bf16 %v4672
    %v5629 = vunpack.c.h.bf16 %v4672
    %v5630 = vunpack.c.l.bf16 %v4673
    %v5631 = vunpack.c.h.bf16 %v4673
    %v5632 = vunpack.c.l.bf16 %v4674
    %v5633 = vunpack.c.h.bf16 %v4674
    %v5634 = vunpack.c.l.bf16 %v4675
    %v5635 = vunpack.c.h.bf16 %v4675
    %v5636 = vunpack.c.l.bf16 %v4676
    %v5637 = vunpack.c.h.bf16 %v4676
    %v5638 = vunpack.c.l.bf16 %v4677
    %v5639 = vunpack.c.h.bf16 %v4677
    %v5640 = vunpack.c.l.bf16 %v4678
    %v5641 = vunpack.c.h.bf16 %v4678
    %v5642 = vunpack.c.l.bf16 %v4679
    %v5643 = vunpack.c.h.bf16 %v4679
    %v5644 = vunpack.c.l.bf16 %v4680
    %v5645 = vunpack.c.h.bf16 %v4680
    %v5646 = vunpack.c.l.bf16 %v4681
    %v5647 = vunpack.c.h.bf16 %v4681
    %v5648 = vunpack.c.l.bf16 %v4682
    %v5649 = vunpack.c.h.bf16 %v4682
    %v5650 = vunpack.c.l.bf16 %v4683
    %v5651 = vunpack.c.h.bf16 %v4683
    %v5652 = vunpack.c.l.bf16 %v4684
    %v5653 = vunpack.c.h.bf16 %v4684
    %v5654 = vunpack.c.l.bf16 %v4685
    %v5655 = vunpack.c.h.bf16 %v4685
    %v5656 = vunpack.c.l.bf16 %v4686
    %v5657 = vunpack.c.h.bf16 %v4686
    %v5658 = vunpack.c.l.bf16 %v4687
    %v5659 = vunpack.c.h.bf16 %v4687
    %v5660 = vunpack.c.l.bf16 %v4688
    %v5661 = vunpack.c.h.bf16 %v4688
    %v5662 = vunpack.c.l.bf16 %v4689
    %v5663 = vunpack.c.h.bf16 %v4689
    %v5664 = vunpack.c.l.bf16 %v4690
    %v5665 = vunpack.c.h.bf16 %v4690
    %v5666 = vunpack.c.l.bf16 %v4691
    %v5667 = vunpack.c.h.bf16 %v4691
    %v5668 = vunpack.c.l.bf16 %v4692
    %v5669 = vunpack.c.h.bf16 %v4692
    %v5670 = vunpack.c.l.bf16 %v4693
    %v5671 = vunpack.c.h.bf16 %v4693
    %v5672 = vunpack.c.l.bf16 %v4694
    %v5673 = vunpack.c.h.bf16 %v4694
    %v5674 = vunpack.c.l.bf16 %v4695
    %v5675 = vunpack.c.h.bf16 %v4695
    %v5676 = vunpack.c.l.bf16 %v4696
    %v5677 = vunpack.c.h.bf16 %v4696
    %v5678 = vunpack.c.l.bf16 %v4697
    %v5679 = vunpack.c.h.bf16 %v4697
    %v5680 = vunpack.c.l.bf16 %v4698
    %v5681 = vunpack.c.h.bf16 %v4698
    %v5682 = vunpack.c.l.bf16 %v4699
    %v5683 = vunpack.c.h.bf16 %v4699
    %v5684 = vunpack.c.l.bf16 %v4700
    %v5685 = vunpack.c.h.bf16 %v4700
    %v5686 = vunpack.c.l.bf16 %v4701
    %v5687 = vunpack.c.h.bf16 %v4701
    %v5688 = vunpack.c.l.bf16 %v4702
    %v5689 = vunpack.c.h.bf16 %v4702
    %v5690 = vunpack.c.l.bf16 %v4703
    %v5691 = vunpack.c.h.bf16 %v4703
    %v5692 = vunpack.c.l.bf16 %v4704
    %v5693 = vunpack.c.h.bf16 %v4704
    %v5694 = vunpack.c.l.bf16 %v4705
    %v5695 = vunpack.c.h.bf16 %v4705
    %v5696 = vunpack.c.l.bf16 %v4706
    %v5697 = vunpack.c.h.bf16 %v4706
    %v5698 = vunpack.c.l.bf16 %v4707
    %v5699 = vunpack.c.h.bf16 %v4707
    %v5700 = vunpack.c.l.bf16 %v4708
    %v5701 = vunpack.c.h.bf16 %v4708
    %v5702 = vunpack.c.l.bf16 %v4709
    %v5703 = vunpack.c.h.bf16 %v4709
    %v5704 = vunpack.c.l.bf16 %v4710
    %v5705 = vunpack.c.h.bf16 %v4710
    %v5706 = vunpack.c.l.bf16 %v4711
    %v5707 = vunpack.c.h.bf16 %v4711
    %v5708 = vunpack.c.l.bf16 %v4712
    %v5709 = vunpack.c.h.bf16 %v4712
    %v5710 = vunpack.c.l.bf16 %v4713
    %v5711 = vunpack.c.h.bf16 %v4713
    %v5712 = vunpack.c.l.bf16 %v4714
    %v5713 = vunpack.c.h.bf16 %v4714
    %v5714 = vunpack.c.l.bf16 %v4715
    %v5715 = vunpack.c.h.bf16 %v4715
    %v5716 = vunpack.c.l.bf16 %v4716
    %v5717 = vunpack.c.h.bf16 %v4716
    %v5718 = vunpack.c.l.bf16 %v4717
    %v5719 = vunpack.c.h.bf16 %v4717
    %v5720 = vunpack.c.l.bf16 %v4718
    %v5721 = vunpack.c.h.bf16 %v4718
    %v5722 = vunpack.c.l.bf16 %v4719
    %v5723 = vunpack.c.h.bf16 %v4719
    %v5724 = vunpack.c.l.bf16 %v4720
    %v5725 = vunpack.c.h.bf16 %v4720
    %v5726 = vunpack.c.l.bf16 %v4721
    %v5727 = vunpack.c.h.bf16 %v4721
    %v5728 = vunpack.c.l.bf16 %v4722
    %v5729 = vunpack.c.h.bf16 %v4722
    %v5730 = vunpack.c.l.bf16 %v4723
    %v5731 = vunpack.c.h.bf16 %v4723
    %v5732 = vunpack.c.l.bf16 %v4724
    %v5733 = vunpack.c.h.bf16 %v4724
    %v5734 = vunpack.c.l.bf16 %v4725
    %v5735 = vunpack.c.h.bf16 %v4725
    %v5736 = vunpack.c.l.bf16 %v4726
    %v5737 = vunpack.c.h.bf16 %v4726
    %v5738 = vunpack.c.l.bf16 %v4727
    %v5739 = vunpack.c.h.bf16 %v4727
    %v5740 = vunpack.c.l.bf16 %v4728
    %v5741 = vunpack.c.h.bf16 %v4728
    %v5742 = vunpack.c.l.bf16 %v4729
    %v5743 = vunpack.c.h.bf16 %v4729
    %v5744 = vunpack.c.l.bf16 %v4730
    %v5745 = vunpack.c.h.bf16 %v4730
    %v5746 = vunpack.c.l.bf16 %v4731
    %v5747 = vunpack.c.h.bf16 %v4731
    %v5748 = vunpack.c.l.bf16 %v4732
    %v5749 = vunpack.c.h.bf16 %v4732
    %v5750 = vunpack.c.l.bf16 %v4733
    %v5751 = vunpack.c.h.bf16 %v4733
    %v5752 = vunpack.c.l.bf16 %v4734
    %v5753 = vunpack.c.h.bf16 %v4734
    %v5754 = vunpack.c.l.bf16 %v4735
    %v5755 = vunpack.c.h.bf16 %v4735
    %v5756 = vunpack.c.l.bf16 %v4736
    %v5757 = vunpack.c.h.bf16 %v4736
    %v5758 = vunpack.c.l.bf16 %v4737
    %v5759 = vunpack.c.h.bf16 %v4737
    %v5760 = vunpack.c.l.bf16 %v4738
    %v5761 = vunpack.c.h.bf16 %v4738
    %v5762 = vunpack.c.l.bf16 %v4739
    %v5763 = vunpack.c.h.bf16 %v4739
    %v5764 = vld [vmem:[#allocation22] sm:$0xff]
    %v5766 = vlaneseq
    %v5767 = vshrl.u32 %v5766, 7
    %v5768 = vsub.s32 0, %v5767
    %v5769 = vrot.slane %v5764, %v5768
    %v5770 = vlaneseq
    %v5771 = vshrl.u32 %v5770, 7
    %v5772 = vsub.s32 1, %v5771
    %v5773 = vrot.slane %v5764, %v5772
    %v5774 = vlaneseq
    %v5775 = vshrl.u32 %v5774, 7
    %v5776 = vsub.s32 2, %v5775
    %v5777 = vrot.slane %v5764, %v5776
    %v5778 = vlaneseq
    %v5779 = vshrl.u32 %v5778, 7
    %v5780 = vsub.s32 3, %v5779
    %v5781 = vrot.slane %v5764, %v5780
    %v5782 = vlaneseq
    %v5783 = vshrl.u32 %v5782, 7
    %v5784 = vsub.s32 4, %v5783
    %v5785 = vrot.slane %v5764, %v5784
    %v5786 = vlaneseq
    %v5787 = vshrl.u32 %v5786, 7
    %v5788 = vsub.s32 5, %v5787
    %v5789 = vrot.slane %v5764, %v5788
    %v5790 = vlaneseq
    %v5791 = vshrl.u32 %v5790, 7
    %v5792 = vsub.s32 6, %v5791
    %v5793 = vrot.slane %v5764, %v5792
    %v5794 = vlaneseq
    %v5795 = vshrl.u32 %v5794, 7
    %v5796 = vsub.s32 7, %v5795
    %v5797 = vrot.slane %v5764, %v5796
    %5806 = vmatprep.subr.mxu0 %v4861
    %5807 = vmatpush1.msra.mxu0 %v4860
    %5808 = vmatprep.subr.mxu0 %v4853
    %5809 = vmatpush1.msra.mxu0 %v4852
    %5810 = vmatprep.subr.mxu0 %v4845
    %5811 = vmatpush1.msra.mxu0 %v4844
    %5812 = vmatprep.subr.mxu0 %v4837
    %5813 = vmatpush1.msra.mxu0 %v4836
    %5814 = vmatprep.subr.mxu0 %v4829
    %5815 = vmatpush1.msra.mxu0 %v4828
    %5816 = vmatprep.subr.mxu0 %v4821
    %5817 = vmatpush1.msra.mxu0 %v4820
    %5818 = vmatprep.subr.mxu0 %v4813
    %5819 = vmatpush1.msra.mxu0 %v4812
    %5820 = vmatprep.subr.mxu0 %v4805
    %5821 = vmatpush1.msra.mxu0 %v4804
    %5822 = vmatprep.subr.mxu0 %v4797
    %5823 = vmatpush1.msra.mxu0 %v4796
    %5824 = vmatprep.subr.mxu0 %v4789
    %5825 = vmatpush1.msra.mxu0 %v4788
    %5826 = vmatprep.subr.mxu0 %v4781
    %5827 = vmatpush1.msra.mxu0 %v4780
    %5828 = vmatprep.subr.mxu0 %v4773
    %5829 = vmatpush1.msra.mxu0 %v4772
    %5830 = vmatprep.subr.mxu0 %v4765
    %5831 = vmatpush1.msra.mxu0 %v4764
    %5832 = vmatprep.subr.mxu0 %v4757
    %5833 = vmatpush1.msra.mxu0 %v4756
    %5834 = vmatprep.subr.mxu0 %v4749
    %5835 = vmatpush1.msra.mxu0 %v4748
    %5836 = vmatprep.subr.mxu0 %v4741
    %5837 = vmatpush1.msra.mxu0 %v4740
    %5838 = vmatprep.subr.mxu0 %v4989
    %5839 = vmatpush2.msra.mxu0 %v4988
    %5840 = vmatprep.subr.mxu0 %v4981
    %5841 = vmatpush2.msra.mxu0 %v4980
    %5842 = vmatprep.subr.mxu0 %v4973
    %5843 = vmatpush2.msra.mxu0 %v4972
    %5844 = vmatprep.subr.mxu0 %v4965
    %5845 = vmatpush2.msra.mxu0 %v4964
    %5846 = vmatprep.subr.mxu0 %v4957
    %5847 = vmatpush2.msra.mxu0 %v4956
    %5848 = vmatprep.subr.mxu0 %v4949
    %5849 = vmatpush2.msra.mxu0 %v4948
    %5850 = vmatprep.subr.mxu0 %v4941
    %5851 = vmatpush2.msra.mxu0 %v4940
    %5852 = vmatprep.subr.mxu0 %v4933
    %5853 = vmatpush2.msra.mxu0 %v4932
    %5854 = vmatprep.subr.mxu0 %v4925
    %5855 = vmatpush2.msra.mxu0 %v4924
    %5856 = vmatprep.subr.mxu0 %v4917
    %5857 = vmatpush2.msra.mxu0 %v4916
    %5858 = vmatprep.subr.mxu0 %v4909
    %5859 = vmatpush2.msra.mxu0 %v4908
    %5860 = vmatprep.subr.mxu0 %v4901
    %5861 = vmatpush2.msra.mxu0 %v4900
    %5862 = vmatprep.subr.mxu0 %v4893
    %5863 = vmatpush2.msra.mxu0 %v4892
    %5864 = vmatprep.subr.mxu0 %v4885
    %5865 = vmatpush2.msra.mxu0 %v4884
    %5866 = vmatprep.subr.mxu0 %v4877
    %5867 = vmatpush2.msra.mxu0 %v4876
    %5868 = vmatprep.subr.mxu0 %v4869
    %5869 = vmatpush2.msra.mxu0 %v4868
    %5870 = vmatprep.mubr.f32.mxu0 %v4221
    %5871 = vmatmul.mubr.f32.gmra.mxu0 %v4220
    %v5872 = vpop.f32.mrf.mxu0
    %v5873 = vadd.f32 %v5769, %v5872
    %v5874 = vpop.f32.mrf.mxu0
    %v5875 = vadd.f32 %v5773, %v5874
    %5876 = vdwg.mxu0
    %5877 = vmatprep.subr.mxu0 %v5117
    %5878 = vmatpush1.msra.mxu0 %v5116
    %5879 = vmatprep.subr.mxu0 %v5109
    %5880 = vmatpush1.msra.mxu0 %v5108
    %5881 = vmatprep.subr.mxu0 %v5101
    %5882 = vmatpush1.msra.mxu0 %v5100
    %5883 = vmatprep.subr.mxu0 %v5093
    %5884 = vmatpush1.msra.mxu0 %v5092
    %5885 = vmatprep.subr.mxu0 %v5085
    %5886 = vmatpush1.msra.mxu0 %v5084
    %5887 = vmatprep.subr.mxu0 %v5077
    %5888 = vmatpush1.msra.mxu0 %v5076
    %5889 = vmatprep.subr.mxu0 %v5069
    %5890 = vmatpush1.msra.mxu0 %v5068
    %5891 = vmatprep.subr.mxu0 %v5061
    %5892 = vmatpush1.msra.mxu0 %v5060
    %5893 = vmatprep.subr.mxu0 %v5053
    %5894 = vmatpush1.msra.mxu0 %v5052
    %5895 = vmatprep.subr.mxu0 %v5045
    %5896 = vmatpush1.msra.mxu0 %v5044
    %5897 = vmatprep.subr.mxu0 %v5037
    %5898 = vmatpush1.msra.mxu0 %v5036
    %5899 = vmatprep.subr.mxu0 %v5029
    %5900 = vmatpush1.msra.mxu0 %v5028
    %5901 = vmatprep.subr.mxu0 %v5021
    %5902 = vmatpush1.msra.mxu0 %v5020
    %5903 = vmatprep.subr.mxu0 %v5013
    %5904 = vmatpush1.msra.mxu0 %v5012
    %5905 = vmatprep.subr.mxu0 %v5005
    %5906 = vmatpush1.msra.mxu0 %v5004
    %5907 = vmatprep.subr.mxu0 %v4997
    %5908 = vmatpush1.msra.mxu0 %v4996
    %5909 = vmatprep.subr.mxu0 %v5245
    %5910 = vmatpush2.msra.mxu0 %v5244
    %5911 = vmatprep.subr.mxu0 %v5237
    %5912 = vmatpush2.msra.mxu0 %v5236
    %5913 = vmatprep.subr.mxu0 %v5229
    %5914 = vmatpush2.msra.mxu0 %v5228
    %5915 = vmatprep.subr.mxu0 %v5221
    %5916 = vmatpush2.msra.mxu0 %v5220
    %5917 = vmatprep.subr.mxu0 %v5213
    %5918 = vmatpush2.msra.mxu0 %v5212
    %5919 = vmatprep.subr.mxu0 %v5205
    %5920 = vmatpush2.msra.mxu0 %v5204
    %5921 = vmatprep.subr.mxu0 %v5197
    %5922 = vmatpush2.msra.mxu0 %v5196
    %5923 = vmatprep.subr.mxu0 %v5189
    %5924 = vmatpush2.msra.mxu0 %v5188
    %5925 = vmatprep.subr.mxu0 %v5181
    %5926 = vmatpush2.msra.mxu0 %v5180
    %5927 = vmatprep.subr.mxu0 %v5173
    %5928 = vmatpush2.msra.mxu0 %v5172
    %5929 = vmatprep.subr.mxu0 %v5165
    %5930 = vmatpush2.msra.mxu0 %v5164
    %5931 = vmatprep.subr.mxu0 %v5157
    %5932 = vmatpush2.msra.mxu0 %v5156
    %5933 = vmatprep.subr.mxu0 %v5149
    %5934 = vmatpush2.msra.mxu0 %v5148
    %5935 = vmatprep.subr.mxu0 %v5141
    %5936 = vmatpush2.msra.mxu0 %v5140
    %5937 = vmatprep.subr.mxu0 %v5133
    %5938 = vmatpush2.msra.mxu0 %v5132
    %5939 = vmatprep.subr.mxu0 %v5125
    %5940 = vmatpush2.msra.mxu0 %v5124
    %5941 = vmatprep.mubr.f32.mxu0 %v4223
    %5942 = vmatmul.mubr.f32.gmra.mxu0 %v4222
    %v5943 = vpop.f32.mrf.mxu0
    %v5944 = vadd.f32 %v5873, %v5943
    %v5945 = vpop.f32.mrf.mxu0
    %v5946 = vadd.f32 %v5875, %v5945
    %5947 = vdwg.mxu0
    %5948 = vmatprep.subr.mxu0 %v5373
    %5949 = vmatpush1.msra.mxu0 %v5372
    %5950 = vmatprep.subr.mxu0 %v5365
    %5951 = vmatpush1.msra.mxu0 %v5364
    %5952 = vmatprep.subr.mxu0 %v5357
    %5953 = vmatpush1.msra.mxu0 %v5356
    %5954 = vmatprep.subr.mxu0 %v5349
    %5955 = vmatpush1.msra.mxu0 %v5348
    %5956 = vmatprep.subr.mxu0 %v5341
    %5957 = vmatpush1.msra.mxu0 %v5340
    %5958 = vmatprep.subr.mxu0 %v5333
    %5959 = vmatpush1.msra.mxu0 %v5332
    %5960 = vmatprep.subr.mxu0 %v5325
    %5961 = vmatpush1.msra.mxu0 %v5324
    %5962 = vmatprep.subr.mxu0 %v5317
    %5963 = vmatpush1.msra.mxu0 %v5316
    %5964 = vmatprep.subr.mxu0 %v5309
    %5965 = vmatpush1.msra.mxu0 %v5308
    %5966 = vmatprep.subr.mxu0 %v5301
    %5967 = vmatpush1.msra.mxu0 %v5300
    %5968 = vmatprep.subr.mxu0 %v5293
    %5969 = vmatpush1.msra.mxu0 %v5292
    %5970 = vmatprep.subr.mxu0 %v5285
    %5971 = vmatpush1.msra.mxu0 %v5284
    %5972 = vmatprep.subr.mxu0 %v5277
    %5973 = vmatpush1.msra.mxu0 %v5276
    %5974 = vmatprep.subr.mxu0 %v5269
    %5975 = vmatpush1.msra.mxu0 %v5268
    %5976 = vmatprep.subr.mxu0 %v5261
    %5977 = vmatpush1.msra.mxu0 %v5260
    %5978 = vmatprep.subr.mxu0 %v5253
    %5979 = vmatpush1.msra.mxu0 %v5252
    %5980 = vmatprep.subr.mxu0 %v5501
    %5981 = vmatpush2.msra.mxu0 %v5500
    %5982 = vmatprep.subr.mxu0 %v5493
    %5983 = vmatpush2.msra.mxu0 %v5492
    %5984 = vmatprep.subr.mxu0 %v5485
    %5985 = vmatpush2.msra.mxu0 %v5484
    %5986 = vmatprep.subr.mxu0 %v5477
    %5987 = vmatpush2.msra.mxu0 %v5476
    %5988 = vmatprep.subr.mxu0 %v5469
    %5989 = vmatpush2.msra.mxu0 %v5468
    %5990 = vmatprep.subr.mxu0 %v5461
    %5991 = vmatpush2.msra.mxu0 %v5460
    %5992 = vmatprep.subr.mxu0 %v5453
    %5993 = vmatpush2.msra.mxu0 %v5452
    %5994 = vmatprep.subr.mxu0 %v5445
    %5995 = vmatpush2.msra.mxu0 %v5444
    %5996 = vmatprep.subr.mxu0 %v5437
    %5997 = vmatpush2.msra.mxu0 %v5436
    %5998 = vmatprep.subr.mxu0 %v5429
    %5999 = vmatpush2.msra.mxu0 %v5428
    %6000 = vmatprep.subr.mxu0 %v5421
    %6001 = vmatpush2.msra.mxu0 %v5420
    %6002 = vmatprep.subr.mxu0 %v5413
    %6003 = vmatpush2.msra.mxu0 %v5412
    %6004 = vmatprep.subr.mxu0 %v5405
    %6005 = vmatpush2.msra.mxu0 %v5404
    %6006 = vmatprep.subr.mxu0 %v5397
    %6007 = vmatpush2.msra.mxu0 %v5396
    %6008 = vmatprep.subr.mxu0 %v5389
    %6009 = vmatpush2.msra.mxu0 %v5388
    %6010 = vmatprep.subr.mxu0 %v5381
    %6011 = vmatpush2.msra.mxu0 %v5380
    %6012 = vmatprep.mubr.f32.mxu0 %v4225
    %6013 = vmatmul.mubr.f32.gmra.mxu0 %v4224
    %v6014 = vpop.f32.mrf.mxu0
    %v6015 = vadd.f32 %v5944, %v6014
    %v6016 = vpop.f32.mrf.mxu0
    %v6017 = vadd.f32 %v5946, %v6016
    %6018 = vdwg.mxu0
    %6019 = vmatprep.subr.mxu0 %v5629
    %6020 = vmatpush1.msra.mxu0 %v5628
    %6021 = vmatprep.subr.mxu0 %v5621
    %6022 = vmatpush1.msra.mxu0 %v5620
    %6023 = vmatprep.subr.mxu0 %v5613
    %6024 = vmatpush1.msra.mxu0 %v5612
    %6025 = vmatprep.subr.mxu0 %v5605
    %6026 = vmatpush1.msra.mxu0 %v5604
    %6027 = vmatprep.subr.mxu0 %v5597
    %6028 = vmatpush1.msra.mxu0 %v5596
    %6029 = vmatprep.subr.mxu0 %v5589
    %6030 = vmatpush1.msra.mxu0 %v5588
    %6031 = vmatprep.subr.mxu0 %v5581
    %6032 = vmatpush1.msra.mxu0 %v5580
    %6033 = vmatprep.subr.mxu0 %v5573
    %6034 = vmatpush1.msra.mxu0 %v5572
    %6035 = vmatprep.subr.mxu0 %v5565
    %6036 = vmatpush1.msra.mxu0 %v5564
    %6037 = vmatprep.subr.mxu0 %v5557
    %6038 = vmatpush1.msra.mxu0 %v5556
    %6039 = vmatprep.subr.mxu0 %v5549
    %6040 = vmatpush1.msra.mxu0 %v5548
    %6041 = vmatprep.subr.mxu0 %v5541
    %6042 = vmatpush1.msra.mxu0 %v5540
    %6043 = vmatprep.subr.mxu0 %v5533
    %6044 = vmatpush1.msra.mxu0 %v5532
    %6045 = vmatprep.subr.mxu0 %v5525
    %6046 = vmatpush1.msra.mxu0 %v5524
    %6047 = vmatprep.subr.mxu0 %v5517
    %6048 = vmatpush1.msra.mxu0 %v5516
    %6049 = vmatprep.subr.mxu0 %v5509
    %6050 = vmatpush1.msra.mxu0 %v5508
    %6051 = vmatprep.subr.mxu0 %v5757
    %6052 = vmatpush2.msra.mxu0 %v5756
    %6053 = vmatprep.subr.mxu0 %v5749
    %6054 = vmatpush2.msra.mxu0 %v5748
    %6055 = vmatprep.subr.mxu0 %v5741
    %6056 = vmatpush2.msra.mxu0 %v5740
    %6057 = vmatprep.subr.mxu0 %v5733
    %6058 = vmatpush2.msra.mxu0 %v5732
    %6059 = vmatprep.subr.mxu0 %v5725
    %6060 = vmatpush2.msra.mxu0 %v5724
    %6061 = vmatprep.subr.mxu0 %v5717
    %6062 = vmatpush2.msra.mxu0 %v5716
    %6063 = vmatprep.subr.mxu0 %v5709
    %6064 = vmatpush2.msra.mxu0 %v5708
    %6065 = vmatprep.subr.mxu0 %v5701
    %6066 = vmatpush2.msra.mxu0 %v5700
    %6067 = vmatprep.subr.mxu0 %v5693
    %6068 = vmatpush2.msra.mxu0 %v5692
    %6069 = vmatprep.subr.mxu0 %v5685
    %6070 = vmatpush2.msra.mxu0 %v5684
    %6071 = vmatprep.subr.mxu0 %v5677
    %6072 = vmatpush2.msra.mxu0 %v5676
    %6073 = vmatprep.subr.mxu0 %v5669
    %6074 = vmatpush2.msra.mxu0 %v5668
    %6075 = vmatprep.subr.mxu0 %v5661
    %6076 = vmatpush2.msra.mxu0 %v5660
    %6077 = vmatprep.subr.mxu0 %v5653
    %6078 = vmatpush2.msra.mxu0 %v5652
    %6079 = vmatprep.subr.mxu0 %v5645
    %6080 = vmatpush2.msra.mxu0 %v5644
    %6081 = vmatprep.subr.mxu0 %v5637
    %6082 = vmatpush2.msra.mxu0 %v5636
    %6083 = vmatprep.mubr.f32.mxu0 %v4227
    %6084 = vmatmul.mubr.f32.gmra.mxu0 %v4226
    %v6085 = vpop.f32.mrf.mxu0
    %v6086 = vadd.f32 %v6015, %v6085
    %v6087 = vpop.f32.mrf.mxu0
    %v6088 = vadd.f32 %v6017, %v6087
    %6089 = vdwg.mxu0
    %6090 = vmatprep.subr.mxu0 %v4863
    %6091 = vmatpush1.msra.mxu0 %v4862
    %6092 = vmatprep.subr.mxu0 %v4855
    %6093 = vmatpush1.msra.mxu0 %v4854
    %6094 = vmatprep.subr.mxu0 %v4847
    %6095 = vmatpush1.msra.mxu0 %v4846
    %6096 = vmatprep.subr.mxu0 %v4839
    %6097 = vmatpush1.msra.mxu0 %v4838
    %6098 = vmatprep.subr.mxu0 %v4831
    %6099 = vmatpush1.msra.mxu0 %v4830
    %6100 = vmatprep.subr.mxu0 %v4823
    %6101 = vmatpush1.msra.mxu0 %v4822
    %6102 = vmatprep.subr.mxu0 %v4815
    %6103 = vmatpush1.msra.mxu0 %v4814
    %6104 = vmatprep.subr.mxu0 %v4807
    %6105 = vmatpush1.msra.mxu0 %v4806
    %6106 = vmatprep.subr.mxu0 %v4799
    %6107 = vmatpush1.msra.mxu0 %v4798
    %6108 = vmatprep.subr.mxu0 %v4791
    %6109 = vmatpush1.msra.mxu0 %v4790
    %6110 = vmatprep.subr.mxu0 %v4783
    %6111 = vmatpush1.msra.mxu0 %v4782
    %6112 = vmatprep.subr.mxu0 %v4775
    %6113 = vmatpush1.msra.mxu0 %v4774
    %6114 = vmatprep.subr.mxu0 %v4767
    %6115 = vmatpush1.msra.mxu0 %v4766
    %6116 = vmatprep.subr.mxu0 %v4759
    %6117 = vmatpush1.msra.mxu0 %v4758
    %6118 = vmatprep.subr.mxu0 %v4751
    %6119 = vmatpush1.msra.mxu0 %v4750
    %6120 = vmatprep.subr.mxu0 %v4743
    %6121 = vmatpush1.msra.mxu0 %v4742
    %6122 = vmatprep.subr.mxu0 %v4991
    %6123 = vmatpush2.msra.mxu0 %v4990
    %6124 = vmatprep.subr.mxu0 %v4983
    %6125 = vmatpush2.msra.mxu0 %v4982
    %6126 = vmatprep.subr.mxu0 %v4975
    %6127 = vmatpush2.msra.mxu0 %v4974
    %6128 = vmatprep.subr.mxu0 %v4967
    %6129 = vmatpush2.msra.mxu0 %v4966
    %6130 = vmatprep.subr.mxu0 %v4959
    %6131 = vmatpush2.msra.mxu0 %v4958
    %6132 = vmatprep.subr.mxu0 %v4951
    %6133 = vmatpush2.msra.mxu0 %v4950
    %6134 = vmatprep.subr.mxu0 %v4943
    %6135 = vmatpush2.msra.mxu0 %v4942
    %6136 = vmatprep.subr.mxu0 %v4935
    %6137 = vmatpush2.msra.mxu0 %v4934
    %6138 = vmatprep.subr.mxu0 %v4927
    %6139 = vmatpush2.msra.mxu0 %v4926
    %6140 = vmatprep.subr.mxu0 %v4919
    %6141 = vmatpush2.msra.mxu0 %v4918
    %6142 = vmatprep.subr.mxu0 %v4911
    %6143 = vmatpush2.msra.mxu0 %v4910
    %6144 = vmatprep.subr.mxu0 %v4903
    %6145 = vmatpush2.msra.mxu0 %v4902
    %6146 = vmatprep.subr.mxu0 %v4895
    %6147 = vmatpush2.msra.mxu0 %v4894
    %6148 = vmatprep.subr.mxu0 %v4887
    %6149 = vmatpush2.msra.mxu0 %v4886
    %6150 = vmatprep.subr.mxu0 %v4879
    %6151 = vmatpush2.msra.mxu0 %v4878
    %6152 = vmatprep.subr.mxu0 %v4871
    %6153 = vmatpush2.msra.mxu0 %v4870
    %6154 = vmatprep.mubr.f32.mxu0 %v4221
    %6155 = vmatmul.mubr.f32.gmra.mxu0 %v4220
    %v6156 = vpop.f32.mrf.mxu0
    %v6157 = vadd.f32 %v5777, %v6156
    %v6158 = vpop.f32.mrf.mxu0
    %v6159 = vadd.f32 %v5781, %v6158
    %6160 = vdwg.mxu0
    %6161 = vmatprep.subr.mxu0 %v5119
    %6162 = vmatpush1.msra.mxu0 %v5118
    %6163 = vmatprep.subr.mxu0 %v5111
    %6164 = vmatpush1.msra.mxu0 %v5110
    %6165 = vmatprep.subr.mxu0 %v5103
    %6166 = vmatpush1.msra.mxu0 %v5102
    %6167 = vmatprep.subr.mxu0 %v5095
    %6168 = vmatpush1.msra.mxu0 %v5094
    %6169 = vmatprep.subr.mxu0 %v5087
    %6170 = vmatpush1.msra.mxu0 %v5086
    %6171 = vmatprep.subr.mxu0 %v5079
    %6172 = vmatpush1.msra.mxu0 %v5078
    %6173 = vmatprep.subr.mxu0 %v5071
    %6174 = vmatpush1.msra.mxu0 %v5070
    %6175 = vmatprep.subr.mxu0 %v5063
    %6176 = vmatpush1.msra.mxu0 %v5062
    %6177 = vmatprep.subr.mxu0 %v5055
    %6178 = vmatpush1.msra.mxu0 %v5054
    %6179 = vmatprep.subr.mxu0 %v5047
    %6180 = vmatpush1.msra.mxu0 %v5046
    %6181 = vmatprep.subr.mxu0 %v5039
    %6182 = vmatpush1.msra.mxu0 %v5038
    %6183 = vmatprep.subr.mxu0 %v5031
    %6184 = vmatpush1.msra.mxu0 %v5030
    %6185 = vmatprep.subr.mxu0 %v5023
    %6186 = vmatpush1.msra.mxu0 %v5022
    %6187 = vmatprep.subr.mxu0 %v5015
    %6188 = vmatpush1.msra.mxu0 %v5014
    %6189 = vmatprep.subr.mxu0 %v5007
    %6190 = vmatpush1.msra.mxu0 %v5006
    %6191 = vmatprep.subr.mxu0 %v4999
    %6192 = vmatpush1.msra.mxu0 %v4998
    %6193 = vmatprep.subr.mxu0 %v5247
    %6194 = vmatpush2.msra.mxu0 %v5246
    %6195 = vmatprep.subr.mxu0 %v5239
    %6196 = vmatpush2.msra.mxu0 %v5238
    %6197 = vmatprep.subr.mxu0 %v5231
    %6198 = vmatpush2.msra.mxu0 %v5230
    %6199 = vmatprep.subr.mxu0 %v5223
    %6200 = vmatpush2.msra.mxu0 %v5222
    %6201 = vmatprep.subr.mxu0 %v5215
    %6202 = vmatpush2.msra.mxu0 %v5214
    %6203 = vmatprep.subr.mxu0 %v5207
    %6204 = vmatpush2.msra.mxu0 %v5206
    %6205 = vmatprep.subr.mxu0 %v5199
    %6206 = vmatpush2.msra.mxu0 %v5198
    %6207 = vmatprep.subr.mxu0 %v5191
    %6208 = vmatpush2.msra.mxu0 %v5190
    %6209 = vmatprep.subr.mxu0 %v5183
    %6210 = vmatpush2.msra.mxu0 %v5182
    %6211 = vmatprep.subr.mxu0 %v5175
    %6212 = vmatpush2.msra.mxu0 %v5174
    %6213 = vmatprep.subr.mxu0 %v5167
    %6214 = vmatpush2.msra.mxu0 %v5166
    %6215 = vmatprep.subr.mxu0 %v5159
    %6216 = vmatpush2.msra.mxu0 %v5158
    %6217 = vmatprep.subr.mxu0 %v5151
    %6218 = vmatpush2.msra.mxu0 %v5150
    %6219 = vmatprep.subr.mxu0 %v5143
    %6220 = vmatpush2.msra.mxu0 %v5142
    %6221 = vmatprep.subr.mxu0 %v5135
    %6222 = vmatpush2.msra.mxu0 %v5134
    %6223 = vmatprep.subr.mxu0 %v5127
    %6224 = vmatpush2.msra.mxu0 %v5126
    %6225 = vmatprep.mubr.f32.mxu0 %v4223
    %6226 = vmatmul.mubr.f32.gmra.mxu0 %v4222
    %v6227 = vpop.f32.mrf.mxu0
    %v6228 = vadd.f32 %v6157, %v6227
    %v6229 = vpop.f32.mrf.mxu0
    %v6230 = vadd.f32 %v6159, %v6229
    %6231 = vdwg.mxu0
    %6232 = vmatprep.subr.mxu0 %v5375
    %6233 = vmatpush1.msra.mxu0 %v5374
    %6234 = vmatprep.subr.mxu0 %v5367
    %6235 = vmatpush1.msra.mxu0 %v5366
    %6236 = vmatprep.subr.mxu0 %v5359
    %6237 = vmatpush1.msra.mxu0 %v5358
    %6238 = vmatprep.subr.mxu0 %v5351
    %6239 = vmatpush1.msra.mxu0 %v5350
    %6240 = vmatprep.subr.mxu0 %v5343
    %6241 = vmatpush1.msra.mxu0 %v5342
    %6242 = vmatprep.subr.mxu0 %v5335
    %6243 = vmatpush1.msra.mxu0 %v5334
    %6244 = vmatprep.subr.mxu0 %v5327
    %6245 = vmatpush1.msra.mxu0 %v5326
    %6246 = vmatprep.subr.mxu0 %v5319
    %6247 = vmatpush1.msra.mxu0 %v5318
    %6248 = vmatprep.subr.mxu0 %v5311
    %6249 = vmatpush1.msra.mxu0 %v5310
    %6250 = vmatprep.subr.mxu0 %v5303
    %6251 = vmatpush1.msra.mxu0 %v5302
    %6252 = vmatprep.subr.mxu0 %v5295
    %6253 = vmatpush1.msra.mxu0 %v5294
    %6254 = vmatprep.subr.mxu0 %v5287
    %6255 = vmatpush1.msra.mxu0 %v5286
    %6256 = vmatprep.subr.mxu0 %v5279
    %6257 = vmatpush1.msra.mxu0 %v5278
    %6258 = vmatprep.subr.mxu0 %v5271
    %6259 = vmatpush1.msra.mxu0 %v5270
    %6260 = vmatprep.subr.mxu0 %v5263
    %6261 = vmatpush1.msra.mxu0 %v5262
    %6262 = vmatprep.subr.mxu0 %v5255
    %6263 = vmatpush1.msra.mxu0 %v5254
    %6264 = vmatprep.subr.mxu0 %v5503
    %6265 = vmatpush2.msra.mxu0 %v5502
    %6266 = vmatprep.subr.mxu0 %v5495
    %6267 = vmatpush2.msra.mxu0 %v5494
    %6268 = vmatprep.subr.mxu0 %v5487
    %6269 = vmatpush2.msra.mxu0 %v5486
    %6270 = vmatprep.subr.mxu0 %v5479
    %6271 = vmatpush2.msra.mxu0 %v5478
    %6272 = vmatprep.subr.mxu0 %v5471
    %6273 = vmatpush2.msra.mxu0 %v5470
    %6274 = vmatprep.subr.mxu0 %v5463
    %6275 = vmatpush2.msra.mxu0 %v5462
    %6276 = vmatprep.subr.mxu0 %v5455
    %6277 = vmatpush2.msra.mxu0 %v5454
    %6278 = vmatprep.subr.mxu0 %v5447
    %6279 = vmatpush2.msra.mxu0 %v5446
    %6280 = vmatprep.subr.mxu0 %v5439
    %6281 = vmatpush2.msra.mxu0 %v5438
    %6282 = vmatprep.subr.mxu0 %v5431
    %6283 = vmatpush2.msra.mxu0 %v5430
    %6284 = vmatprep.subr.mxu0 %v5423
    %6285 = vmatpush2.msra.mxu0 %v5422
    %6286 = vmatprep.subr.mxu0 %v5415
    %6287 = vmatpush2.msra.mxu0 %v5414
    %6288 = vmatprep.subr.mxu0 %v5407
    %6289 = vmatpush2.msra.mxu0 %v5406
    %6290 = vmatprep.subr.mxu0 %v5399
    %6291 = vmatpush2.msra.mxu0 %v5398
    %6292 = vmatprep.subr.mxu0 %v5391
    %6293 = vmatpush2.msra.mxu0 %v5390
    %6294 = vmatprep.subr.mxu0 %v5383
    %6295 = vmatpush2.msra.mxu0 %v5382
    %6296 = vmatprep.mubr.f32.mxu0 %v4225
    %6297 = vmatmul.mubr.f32.gmra.mxu0 %v4224
    %v6298 = vpop.f32.mrf.mxu0
    %v6299 = vadd.f32 %v6228, %v6298
    %v6300 = vpop.f32.mrf.mxu0
    %v6301 = vadd.f32 %v6230, %v6300
    %6302 = vdwg.mxu0
    %6303 = vmatprep.subr.mxu0 %v5631
    %6304 = vmatpush1.msra.mxu0 %v5630
    %6305 = vmatprep.subr.mxu0 %v5623
    %6306 = vmatpush1.msra.mxu0 %v5622
    %6307 = vmatprep.subr.mxu0 %v5615
    %6308 = vmatpush1.msra.mxu0 %v5614
    %6309 = vmatprep.subr.mxu0 %v5607
    %6310 = vmatpush1.msra.mxu0 %v5606
    %6311 = vmatprep.subr.mxu0 %v5599
    %6312 = vmatpush1.msra.mxu0 %v5598
    %6313 = vmatprep.subr.mxu0 %v5591
    %6314 = vmatpush1.msra.mxu0 %v5590
    %6315 = vmatprep.subr.mxu0 %v5583
    %6316 = vmatpush1.msra.mxu0 %v5582
    %6317 = vmatprep.subr.mxu0 %v5575
    %6318 = vmatpush1.msra.mxu0 %v5574
    %6319 = vmatprep.subr.mxu0 %v5567
    %6320 = vmatpush1.msra.mxu0 %v5566
    %6321 = vmatprep.subr.mxu0 %v5559
    %6322 = vmatpush1.msra.mxu0 %v5558
    %6323 = vmatprep.subr.mxu0 %v5551
    %6324 = vmatpush1.msra.mxu0 %v5550
    %6325 = vmatprep.subr.mxu0 %v5543
    %6326 = vmatpush1.msra.mxu0 %v5542
    %6327 = vmatprep.subr.mxu0 %v5535
    %6328 = vmatpush1.msra.mxu0 %v5534
    %6329 = vmatprep.subr.mxu0 %v5527
    %6330 = vmatpush1.msra.mxu0 %v5526
    %6331 = vmatprep.subr.mxu0 %v5519
    %6332 = vmatpush1.msra.mxu0 %v5518
    %6333 = vmatprep.subr.mxu0 %v5511
    %6334 = vmatpush1.msra.mxu0 %v5510
    %6335 = vmatprep.subr.mxu0 %v5759
    %6336 = vmatpush2.msra.mxu0 %v5758
    %6337 = vmatprep.subr.mxu0 %v5751
    %6338 = vmatpush2.msra.mxu0 %v5750
    %6339 = vmatprep.subr.mxu0 %v5743
    %6340 = vmatpush2.msra.mxu0 %v5742
    %6341 = vmatprep.subr.mxu0 %v5735
    %6342 = vmatpush2.msra.mxu0 %v5734
    %6343 = vmatprep.subr.mxu0 %v5727
    %6344 = vmatpush2.msra.mxu0 %v5726
    %6345 = vmatprep.subr.mxu0 %v5719
    %6346 = vmatpush2.msra.mxu0 %v5718
    %6347 = vmatprep.subr.mxu0 %v5711
    %6348 = vmatpush2.msra.mxu0 %v5710
    %6349 = vmatprep.subr.mxu0 %v5703
    %6350 = vmatpush2.msra.mxu0 %v5702
    %6351 = vmatprep.subr.mxu0 %v5695
    %6352 = vmatpush2.msra.mxu0 %v5694
    %6353 = vmatprep.subr.mxu0 %v5687
    %6354 = vmatpush2.msra.mxu0 %v5686
    %6355 = vmatprep.subr.mxu0 %v5679
    %6356 = vmatpush2.msra.mxu0 %v5678
    %6357 = vmatprep.subr.mxu0 %v5671
    %6358 = vmatpush2.msra.mxu0 %v5670
    %6359 = vmatprep.subr.mxu0 %v5663
    %6360 = vmatpush2.msra.mxu0 %v5662
    %6361 = vmatprep.subr.mxu0 %v5655
    %6362 = vmatpush2.msra.mxu0 %v5654
    %6363 = vmatprep.subr.mxu0 %v5647
    %6364 = vmatpush2.msra.mxu0 %v5646
    %6365 = vmatprep.subr.mxu0 %v5639
    %6366 = vmatpush2.msra.mxu0 %v5638
    %6367 = vmatprep.mubr.f32.mxu0 %v4227
    %6368 = vmatmul.mubr.f32.gmra.mxu0 %v4226
    %v6369 = vpop.f32.mrf.mxu0
    %v6370 = vadd.f32 %v6299, %v6369
    %v6371 = vpop.f32.mrf.mxu0
    %v6372 = vadd.f32 %v6301, %v6371
    %6373 = vdwg.mxu0
    %6374 = vmatprep.subr.mxu0 %v4865
    %6375 = vmatpush1.msra.mxu0 %v4864
    %6376 = vmatprep.subr.mxu0 %v4857
    %6377 = vmatpush1.msra.mxu0 %v4856
    %6378 = vmatprep.subr.mxu0 %v4849
    %6379 = vmatpush1.msra.mxu0 %v4848
    %6380 = vmatprep.subr.mxu0 %v4841
    %6381 = vmatpush1.msra.mxu0 %v4840
    %6382 = vmatprep.subr.mxu0 %v4833
    %6383 = vmatpush1.msra.mxu0 %v4832
    %6384 = vmatprep.subr.mxu0 %v4825
    %6385 = vmatpush1.msra.mxu0 %v4824
    %6386 = vmatprep.subr.mxu0 %v4817
    %6387 = vmatpush1.msra.mxu0 %v4816
    %6388 = vmatprep.subr.mxu0 %v4809
    %6389 = vmatpush1.msra.mxu0 %v4808
    %6390 = vmatprep.subr.mxu0 %v4801
    %6391 = vmatpush1.msra.mxu0 %v4800
    %6392 = vmatprep.subr.mxu0 %v4793
    %6393 = vmatpush1.msra.mxu0 %v4792
    %6394 = vmatprep.subr.mxu0 %v4785
    %6395 = vmatpush1.msra.mxu0 %v4784
    %6396 = vmatprep.subr.mxu0 %v4777
    %6397 = vmatpush1.msra.mxu0 %v4776
    %6398 = vmatprep.subr.mxu0 %v4769
    %6399 = vmatpush1.msra.mxu0 %v4768
    %6400 = vmatprep.subr.mxu0 %v4761
    %6401 = vmatpush1.msra.mxu0 %v4760
    %6402 = vmatprep.subr.mxu0 %v4753
    %6403 = vmatpush1.msra.mxu0 %v4752
    %6404 = vmatprep.subr.mxu0 %v4745
    %6405 = vmatpush1.msra.mxu0 %v4744
    %6406 = vmatprep.subr.mxu0 %v4993
    %6407 = vmatpush2.msra.mxu0 %v4992
    %6408 = vmatprep.subr.mxu0 %v4985
    %6409 = vmatpush2.msra.mxu0 %v4984
    %6410 = vmatprep.subr.mxu0 %v4977
    %6411 = vmatpush2.msra.mxu0 %v4976
    %6412 = vmatprep.subr.mxu0 %v4969
    %6413 = vmatpush2.msra.mxu0 %v4968
    %6414 = vmatprep.subr.mxu0 %v4961
    %6415 = vmatpush2.msra.mxu0 %v4960
    %6416 = vmatprep.subr.mxu0 %v4953
    %6417 = vmatpush2.msra.mxu0 %v4952
    %6418 = vmatprep.subr.mxu0 %v4945
    %6419 = vmatpush2.msra.mxu0 %v4944
    %6420 = vmatprep.subr.mxu0 %v4937
    %6421 = vmatpush2.msra.mxu0 %v4936
    %6422 = vmatprep.subr.mxu0 %v4929
    %6423 = vmatpush2.msra.mxu0 %v4928
    %6424 = vmatprep.subr.mxu0 %v4921
    %6425 = vmatpush2.msra.mxu0 %v4920
    %6426 = vmatprep.subr.mxu0 %v4913
    %6427 = vmatpush2.msra.mxu0 %v4912
    %6428 = vmatprep.subr.mxu0 %v4905
    %6429 = vmatpush2.msra.mxu0 %v4904
    %6430 = vmatprep.subr.mxu0 %v4897
    %6431 = vmatpush2.msra.mxu0 %v4896
    %6432 = vmatprep.subr.mxu0 %v4889
    %6433 = vmatpush2.msra.mxu0 %v4888
    %6434 = vmatprep.subr.mxu0 %v4881
    %6435 = vmatpush2.msra.mxu0 %v4880
    %6436 = vmatprep.subr.mxu0 %v4873
    %6437 = vmatpush2.msra.mxu0 %v4872
    %6438 = vmatprep.mubr.f32.mxu0 %v4221
    %6439 = vmatmul.mubr.f32.gmra.mxu0 %v4220
    %v6440 = vpop.f32.mrf.mxu0
    %v6441 = vadd.f32 %v5785, %v6440
    %v6442 = vpop.f32.mrf.mxu0
    %v6443 = vadd.f32 %v5789, %v6442
    %6444 = vdwg.mxu0
    %6445 = vmatprep.subr.mxu0 %v5121
    %6446 = vmatpush1.msra.mxu0 %v5120
    %6447 = vmatprep.subr.mxu0 %v5113
    %6448 = vmatpush1.msra.mxu0 %v5112
    %6449 = vmatprep.subr.mxu0 %v5105
    %6450 = vmatpush1.msra.mxu0 %v5104
    %6451 = vmatprep.subr.mxu0 %v5097
    %6452 = vmatpush1.msra.mxu0 %v5096
    %6453 = vmatprep.subr.mxu0 %v5089
    %6454 = vmatpush1.msra.mxu0 %v5088
    %6455 = vmatprep.subr.mxu0 %v5081
    %6456 = vmatpush1.msra.mxu0 %v5080
    %6457 = vmatprep.subr.mxu0 %v5073
    %6458 = vmatpush1.msra.mxu0 %v5072
    %6459 = vmatprep.subr.mxu0 %v5065
    %6460 = vmatpush1.msra.mxu0 %v5064
    %6461 = vmatprep.subr.mxu0 %v5057
    %6462 = vmatpush1.msra.mxu0 %v5056
    %6463 = vmatprep.subr.mxu0 %v5049
    %6464 = vmatpush1.msra.mxu0 %v5048
    %6465 = vmatprep.subr.mxu0 %v5041
    %6466 = vmatpush1.msra.mxu0 %v5040
    %6467 = vmatprep.subr.mxu0 %v5033
    %6468 = vmatpush1.msra.mxu0 %v5032
    %6469 = vmatprep.subr.mxu0 %v5025
    %6470 = vmatpush1.msra.mxu0 %v5024
    %6471 = vmatprep.subr.mxu0 %v5017
    %6472 = vmatpush1.msra.mxu0 %v5016
    %6473 = vmatprep.subr.mxu0 %v5009
    %6474 = vmatpush1.msra.mxu0 %v5008
    %6475 = vmatprep.subr.mxu0 %v5001
    %6476 = vmatpush1.msra.mxu0 %v5000
    %6477 = vmatprep.subr.mxu0 %v5249
    %6478 = vmatpush2.msra.mxu0 %v5248
    %6479 = vmatprep.subr.mxu0 %v5241
    %6480 = vmatpush2.msra.mxu0 %v5240
    %6481 = vmatprep.subr.mxu0 %v5233
    %6482 = vmatpush2.msra.mxu0 %v5232
    %6483 = vmatprep.subr.mxu0 %v5225
    %6484 = vmatpush2.msra.mxu0 %v5224
    %6485 = vmatprep.subr.mxu0 %v5217
    %6486 = vmatpush2.msra.mxu0 %v5216
    %6487 = vmatprep.subr.mxu0 %v5209
    %6488 = vmatpush2.msra.mxu0 %v5208
    %6489 = vmatprep.subr.mxu0 %v5201
    %6490 = vmatpush2.msra.mxu0 %v5200
    %6491 = vmatprep.subr.mxu0 %v5193
    %6492 = vmatpush2.msra.mxu0 %v5192
    %6493 = vmatprep.subr.mxu0 %v5185
    %6494 = vmatpush2.msra.mxu0 %v5184
    %6495 = vmatprep.subr.mxu0 %v5177
    %6496 = vmatpush2.msra.mxu0 %v5176
    %6497 = vmatprep.subr.mxu0 %v5169
    %6498 = vmatpush2.msra.mxu0 %v5168
    %6499 = vmatprep.subr.mxu0 %v5161
    %6500 = vmatpush2.msra.mxu0 %v5160
    %6501 = vmatprep.subr.mxu0 %v5153
    %6502 = vmatpush2.msra.mxu0 %v5152
    %6503 = vmatprep.subr.mxu0 %v5145
    %6504 = vmatpush2.msra.mxu0 %v5144
    %6505 = vmatprep.subr.mxu0 %v5137
    %6506 = vmatpush2.msra.mxu0 %v5136
    %6507 = vmatprep.subr.mxu0 %v5129
    %6508 = vmatpush2.msra.mxu0 %v5128
    %6509 = vmatprep.mubr.f32.mxu0 %v4223
    %6510 = vmatmul.mubr.f32.gmra.mxu0 %v4222
    %v6511 = vpop.f32.mrf.mxu0
    %v6512 = vadd.f32 %v6441, %v6511
    %v6513 = vpop.f32.mrf.mxu0
    %v6514 = vadd.f32 %v6443, %v6513
    %6515 = vdwg.mxu0
    %6516 = vmatprep.subr.mxu0 %v5377
    %6517 = vmatpush1.msra.mxu0 %v5376
    %6518 = vmatprep.subr.mxu0 %v5369
    %6519 = vmatpush1.msra.mxu0 %v5368
    %6520 = vmatprep.subr.mxu0 %v5361
    %6521 = vmatpush1.msra.mxu0 %v5360
    %6522 = vmatprep.subr.mxu0 %v5353
    %6523 = vmatpush1.msra.mxu0 %v5352
    %6524 = vmatprep.subr.mxu0 %v5345
    %6525 = vmatpush1.msra.mxu0 %v5344
    %6526 = vmatprep.subr.mxu0 %v5337
    %6527 = vmatpush1.msra.mxu0 %v5336
    %6528 = vmatprep.subr.mxu0 %v5329
    %6529 = vmatpush1.msra.mxu0 %v5328
    %6530 = vmatprep.subr.mxu0 %v5321
    %6531 = vmatpush1.msra.mxu0 %v5320
    %6532 = vmatprep.subr.mxu0 %v5313
    %6533 = vmatpush1.msra.mxu0 %v5312
    %6534 = vmatprep.subr.mxu0 %v5305
    %6535 = vmatpush1.msra.mxu0 %v5304
    %6536 = vmatprep.subr.mxu0 %v5297
    %6537 = vmatpush1.msra.mxu0 %v5296
    %6538 = vmatprep.subr.mxu0 %v5289
    %6539 = vmatpush1.msra.mxu0 %v5288
    %6540 = vmatprep.subr.mxu0 %v5281
    %6541 = vmatpush1.msra.mxu0 %v5280
    %6542 = vmatprep.subr.mxu0 %v5273
    %6543 = vmatpush1.msra.mxu0 %v5272
    %6544 = vmatprep.subr.mxu0 %v5265
    %6545 = vmatpush1.msra.mxu0 %v5264
    %6546 = vmatprep.subr.mxu0 %v5257
    %6547 = vmatpush1.msra.mxu0 %v5256
    %6548 = vmatprep.subr.mxu0 %v5505
    %6549 = vmatpush2.msra.mxu0 %v5504
    %6550 = vmatprep.subr.mxu0 %v5497
    %6551 = vmatpush2.msra.mxu0 %v5496
    %6552 = vmatprep.subr.mxu0 %v5489
    %6553 = vmatpush2.msra.mxu0 %v5488
    %6554 = vmatprep.subr.mxu0 %v5481
    %6555 = vmatpush2.msra.mxu0 %v5480
    %6556 = vmatprep.subr.mxu0 %v5473
    %6557 = vmatpush2.msra.mxu0 %v5472
    %6558 = vmatprep.subr.mxu0 %v5465
    %6559 = vmatpush2.msra.mxu0 %v5464
    %6560 = vmatprep.subr.mxu0 %v5457
    %6561 = vmatpush2.msra.mxu0 %v5456
    %6562 = vmatprep.subr.mxu0 %v5449
    %6563 = vmatpush2.msra.mxu0 %v5448
    %6564 = vmatprep.subr.mxu0 %v5441
    %6565 = vmatpush2.msra.mxu0 %v5440
    %6566 = vmatprep.subr.mxu0 %v5433
    %6567 = vmatpush2.msra.mxu0 %v5432
    %6568 = vmatprep.subr.mxu0 %v5425
    %6569 = vmatpush2.msra.mxu0 %v5424
    %6570 = vmatprep.subr.mxu0 %v5417
    %6571 = vmatpush2.msra.mxu0 %v5416
    %6572 = vmatprep.subr.mxu0 %v5409
    %6573 = vmatpush2.msra.mxu0 %v5408
    %6574 = vmatprep.subr.mxu0 %v5401
    %6575 = vmatpush2.msra.mxu0 %v5400
    %6576 = vmatprep.subr.mxu0 %v5393
    %6577 = vmatpush2.msra.mxu0 %v5392
    %6578 = vmatprep.subr.mxu0 %v5385
    %6579 = vmatpush2.msra.mxu0 %v5384
    %6580 = vmatprep.mubr.f32.mxu0 %v4225
    %6581 = vmatmul.mubr.f32.gmra.mxu0 %v4224
    %v6582 = vpop.f32.mrf.mxu0
    %v6583 = vadd.f32 %v6512, %v6582
    %v6584 = vpop.f32.mrf.mxu0
    %v6585 = vadd.f32 %v6514, %v6584
    %6586 = vdwg.mxu0
    %6587 = vmatprep.subr.mxu0 %v5633
    %6588 = vmatpush1.msra.mxu0 %v5632
    %6589 = vmatprep.subr.mxu0 %v5625
    %6590 = vmatpush1.msra.mxu0 %v5624
    %6591 = vmatprep.subr.mxu0 %v5617
    %6592 = vmatpush1.msra.mxu0 %v5616
    %6593 = vmatprep.subr.mxu0 %v5609
    %6594 = vmatpush1.msra.mxu0 %v5608
    %6595 = vmatprep.subr.mxu0 %v5601
    %6596 = vmatpush1.msra.mxu0 %v5600
    %6597 = vmatprep.subr.mxu0 %v5593
    %6598 = vmatpush1.msra.mxu0 %v5592
    %6599 = vmatprep.subr.mxu0 %v5585
    %6600 = vmatpush1.msra.mxu0 %v5584
    %6601 = vmatprep.subr.mxu0 %v5577
    %6602 = vmatpush1.msra.mxu0 %v5576
    %6603 = vmatprep.subr.mxu0 %v5569
    %6604 = vmatpush1.msra.mxu0 %v5568
    %6605 = vmatprep.subr.mxu0 %v5561
    %6606 = vmatpush1.msra.mxu0 %v5560
    %6607 = vmatprep.subr.mxu0 %v5553
    %6608 = vmatpush1.msra.mxu0 %v5552
    %6609 = vmatprep.subr.mxu0 %v5545
    %6610 = vmatpush1.msra.mxu0 %v5544
    %6611 = vmatprep.subr.mxu0 %v5537
    %6612 = vmatpush1.msra.mxu0 %v5536
    %6613 = vmatprep.subr.mxu0 %v5529
    %6614 = vmatpush1.msra.mxu0 %v5528
    %6615 = vmatprep.subr.mxu0 %v5521
    %6616 = vmatpush1.msra.mxu0 %v5520
    %6617 = vmatprep.subr.mxu0 %v5513
    %6618 = vmatpush1.msra.mxu0 %v5512
    %6619 = vmatprep.subr.mxu0 %v5761
    %6620 = vmatpush2.msra.mxu0 %v5760
    %6621 = vmatprep.subr.mxu0 %v5753
    %6622 = vmatpush2.msra.mxu0 %v5752
    %6623 = vmatprep.subr.mxu0 %v5745
    %6624 = vmatpush2.msra.mxu0 %v5744
    %6625 = vmatprep.subr.mxu0 %v5737
    %6626 = vmatpush2.msra.mxu0 %v5736
    %6627 = vmatprep.subr.mxu0 %v5729
    %6628 = vmatpush2.msra.mxu0 %v5728
    %6629 = vmatprep.subr.mxu0 %v5721
    %6630 = vmatpush2.msra.mxu0 %v5720
    %6631 = vmatprep.subr.mxu0 %v5713
    %6632 = vmatpush2.msra.mxu0 %v5712
    %6633 = vmatprep.subr.mxu0 %v5705
    %6634 = vmatpush2.msra.mxu0 %v5704
    %6635 = vmatprep.subr.mxu0 %v5697
    %6636 = vmatpush2.msra.mxu0 %v5696
    %6637 = vmatprep.subr.mxu0 %v5689
    %6638 = vmatpush2.msra.mxu0 %v5688
    %6639 = vmatprep.subr.mxu0 %v5681
    %6640 = vmatpush2.msra.mxu0 %v5680
    %6641 = vmatprep.subr.mxu0 %v5673
    %6642 = vmatpush2.msra.mxu0 %v5672
    %6643 = vmatprep.subr.mxu0 %v5665
    %6644 = vmatpush2.msra.mxu0 %v5664
    %6645 = vmatprep.subr.mxu0 %v5657
    %6646 = vmatpush2.msra.mxu0 %v5656
    %6647 = vmatprep.subr.mxu0 %v5649
    %6648 = vmatpush2.msra.mxu0 %v5648
    %6649 = vmatprep.subr.mxu0 %v5641
    %6650 = vmatpush2.msra.mxu0 %v5640
    %6651 = vmatprep.mubr.f32.mxu0 %v4227
    %6652 = vmatmul.mubr.f32.gmra.mxu0 %v4226
    %v6653 = vpop.f32.mrf.mxu0
    %v6654 = vadd.f32 %v6583, %v6653
    %v6655 = vpop.f32.mrf.mxu0
    %v6656 = vadd.f32 %v6585, %v6655
    %6657 = vdwg.mxu0
    %6658 = vmatprep.subr.mxu0 %v4867
    %6659 = vmatpush1.msra.mxu0 %v4866
    %6660 = vmatprep.subr.mxu0 %v4859
    %6661 = vmatpush1.msra.mxu0 %v4858
    %6662 = vmatprep.subr.mxu0 %v4851
    %6663 = vmatpush1.msra.mxu0 %v4850
    %6664 = vmatprep.subr.mxu0 %v4843
    %6665 = vmatpush1.msra.mxu0 %v4842
    %6666 = vmatprep.subr.mxu0 %v4835
    %6667 = vmatpush1.msra.mxu0 %v4834
    %6668 = vmatprep.subr.mxu0 %v4827
    %6669 = vmatpush1.msra.mxu0 %v4826
    %6670 = vmatprep.subr.mxu0 %v4819
    %6671 = vmatpush1.msra.mxu0 %v4818
    %6672 = vmatprep.subr.mxu0 %v4811
    %6673 = vmatpush1.msra.mxu0 %v4810
    %6674 = vmatprep.subr.mxu0 %v4803
    %6675 = vmatpush1.msra.mxu0 %v4802
    %6676 = vmatprep.subr.mxu0 %v4795
    %6677 = vmatpush1.msra.mxu0 %v4794
    %6678 = vmatprep.subr.mxu0 %v4787
    %6679 = vmatpush1.msra.mxu0 %v4786
    %6680 = vmatprep.subr.mxu0 %v4779
    %6681 = vmatpush1.msra.mxu0 %v4778
    %6682 = vmatprep.subr.mxu0 %v4771
    %6683 = vmatpush1.msra.mxu0 %v4770
    %6684 = vmatprep.subr.mxu0 %v4763
    %6685 = vmatpush1.msra.mxu0 %v4762
    %6686 = vmatprep.subr.mxu0 %v4755
    %6687 = vmatpush1.msra.mxu0 %v4754
    %6688 = vmatprep.subr.mxu0 %v4747
    %6689 = vmatpush1.msra.mxu0 %v4746
    %6690 = vmatprep.subr.mxu0 %v4995
    %6691 = vmatpush2.msra.mxu0 %v4994
    %6692 = vmatprep.subr.mxu0 %v4987
    %6693 = vmatpush2.msra.mxu0 %v4986
    %6694 = vmatprep.subr.mxu0 %v4979
    %6695 = vmatpush2.msra.mxu0 %v4978
    %6696 = vmatprep.subr.mxu0 %v4971
    %6697 = vmatpush2.msra.mxu0 %v4970
    %6698 = vmatprep.subr.mxu0 %v4963
    %6699 = vmatpush2.msra.mxu0 %v4962
    %6700 = vmatprep.subr.mxu0 %v4955
    %6701 = vmatpush2.msra.mxu0 %v4954
    %6702 = vmatprep.subr.mxu0 %v4947
    %6703 = vmatpush2.msra.mxu0 %v4946
    %6704 = vmatprep.subr.mxu0 %v4939
    %6705 = vmatpush2.msra.mxu0 %v4938
    %6706 = vmatprep.subr.mxu0 %v4931
    %6707 = vmatpush2.msra.mxu0 %v4930
    %6708 = vmatprep.subr.mxu0 %v4923
    %6709 = vmatpush2.msra.mxu0 %v4922
    %6710 = vmatprep.subr.mxu0 %v4915
    %6711 = vmatpush2.msra.mxu0 %v4914
    %6712 = vmatprep.subr.mxu0 %v4907
    %6713 = vmatpush2.msra.mxu0 %v4906
    %6714 = vmatprep.subr.mxu0 %v4899
    %6715 = vmatpush2.msra.mxu0 %v4898
    %6716 = vmatprep.subr.mxu0 %v4891
    %6717 = vmatpush2.msra.mxu0 %v4890
    %6718 = vmatprep.subr.mxu0 %v4883
    %6719 = vmatpush2.msra.mxu0 %v4882
    %6720 = vmatprep.subr.mxu0 %v4875
    %6721 = vmatpush2.msra.mxu0 %v4874
    %6722 = vmatprep.mubr.f32.mxu0 %v4221
    %6723 = vmatmul.mubr.f32.gmra.mxu0 %v4220
    %v6724 = vpop.f32.mrf.mxu0
    %v6725 = vadd.f32 %v5793, %v6724
    %v6726 = vpop.f32.mrf.mxu0
    %v6727 = vadd.f32 %v5797, %v6726
    %6728 = vdwg.mxu0
    %6729 = vmatprep.subr.mxu0 %v5123
    %6730 = vmatpush1.msra.mxu0 %v5122
    %6731 = vmatprep.subr.mxu0 %v5115
    %6732 = vmatpush1.msra.mxu0 %v5114
    %6733 = vmatprep.subr.mxu0 %v5107
    %6734 = vmatpush1.msra.mxu0 %v5106
    %6735 = vmatprep.subr.mxu0 %v5099
    %6736 = vmatpush1.msra.mxu0 %v5098
    %6737 = vmatprep.subr.mxu0 %v5091
    %6738 = vmatpush1.msra.mxu0 %v5090
    %6739 = vmatprep.subr.mxu0 %v5083
    %6740 = vmatpush1.msra.mxu0 %v5082
    %6741 = vmatprep.subr.mxu0 %v5075
    %6742 = vmatpush1.msra.mxu0 %v5074
    %6743 = vmatprep.subr.mxu0 %v5067
    %6744 = vmatpush1.msra.mxu0 %v5066
    %6745 = vmatprep.subr.mxu0 %v5059
    %6746 = vmatpush1.msra.mxu0 %v5058
    %6747 = vmatprep.subr.mxu0 %v5051
    %6748 = vmatpush1.msra.mxu0 %v5050
    %6749 = vmatprep.subr.mxu0 %v5043
    %6750 = vmatpush1.msra.mxu0 %v5042
    %6751 = vmatprep.subr.mxu0 %v5035
    %6752 = vmatpush1.msra.mxu0 %v5034
    %6753 = vmatprep.subr.mxu0 %v5027
    %6754 = vmatpush1.msra.mxu0 %v5026
    %6755 = vmatprep.subr.mxu0 %v5019
    %6756 = vmatpush1.msra.mxu0 %v5018
    %6757 = vmatprep.subr.mxu0 %v5011
    %6758 = vmatpush1.msra.mxu0 %v5010
    %6759 = vmatprep.subr.mxu0 %v5003
    %6760 = vmatpush1.msra.mxu0 %v5002
    %6761 = vmatprep.subr.mxu0 %v5251
    %6762 = vmatpush2.msra.mxu0 %v5250
    %6763 = vmatprep.subr.mxu0 %v5243
    %6764 = vmatpush2.msra.mxu0 %v5242
    %6765 = vmatprep.subr.mxu0 %v5235
    %6766 = vmatpush2.msra.mxu0 %v5234
    %6767 = vmatprep.subr.mxu0 %v5227
    %6768 = vmatpush2.msra.mxu0 %v5226
    %6769 = vmatprep.subr.mxu0 %v5219
    %6770 = vmatpush2.msra.mxu0 %v5218
    %6771 = vmatprep.subr.mxu0 %v5211
    %6772 = vmatpush2.msra.mxu0 %v5210
    %6773 = vmatprep.subr.mxu0 %v5203
    %6774 = vmatpush2.msra.mxu0 %v5202
    %6775 = vmatprep.subr.mxu0 %v5195
    %6776 = vmatpush2.msra.mxu0 %v5194
    %6777 = vmatprep.subr.mxu0 %v5187
    %6778 = vmatpush2.msra.mxu0 %v5186
    %6779 = vmatprep.subr.mxu0 %v5179
    %6780 = vmatpush2.msra.mxu0 %v5178
    %6781 = vmatprep.subr.mxu0 %v5171
    %6782 = vmatpush2.msra.mxu0 %v5170
    %6783 = vmatprep.subr.mxu0 %v5163
    %6784 = vmatpush2.msra.mxu0 %v5162
    %6785 = vmatprep.subr.mxu0 %v5155
    %6786 = vmatpush2.msra.mxu0 %v5154
    %6787 = vmatprep.subr.mxu0 %v5147
    %6788 = vmatpush2.msra.mxu0 %v5146
    %6789 = vmatprep.subr.mxu0 %v5139
    %6790 = vmatpush2.msra.mxu0 %v5138
    %6791 = vmatprep.subr.mxu0 %v5131
    %6792 = vmatpush2.msra.mxu0 %v5130
    %6793 = vmatprep.mubr.f32.mxu0 %v4223
    %6794 = vmatmul.mubr.f32.gmra.mxu0 %v4222
    %v6795 = vpop.f32.mrf.mxu0
    %v6796 = vadd.f32 %v6725, %v6795
    %v6797 = vpop.f32.mrf.mxu0
    %v6798 = vadd.f32 %v6727, %v6797
    %6799 = vdwg.mxu0
    %6800 = vmatprep.subr.mxu0 %v5379
    %6801 = vmatpush1.msra.mxu0 %v5378
    %6802 = vmatprep.subr.mxu0 %v5371
    %6803 = vmatpush1.msra.mxu0 %v5370
    %6804 = vmatprep.subr.mxu0 %v5363
    %6805 = vmatpush1.msra.mxu0 %v5362
    %6806 = vmatprep.subr.mxu0 %v5355
    %6807 = vmatpush1.msra.mxu0 %v5354
    %6808 = vmatprep.subr.mxu0 %v5347
    %6809 = vmatpush1.msra.mxu0 %v5346
    %6810 = vmatprep.subr.mxu0 %v5339
    %6811 = vmatpush1.msra.mxu0 %v5338
    %6812 = vmatprep.subr.mxu0 %v5331
    %6813 = vmatpush1.msra.mxu0 %v5330
    %6814 = vmatprep.subr.mxu0 %v5323
    %6815 = vmatpush1.msra.mxu0 %v5322
    %6816 = vmatprep.subr.mxu0 %v5315
    %6817 = vmatpush1.msra.mxu0 %v5314
    %6818 = vmatprep.subr.mxu0 %v5307
    %6819 = vmatpush1.msra.mxu0 %v5306
    %6820 = vmatprep.subr.mxu0 %v5299
    %6821 = vmatpush1.msra.mxu0 %v5298
    %6822 = vmatprep.subr.mxu0 %v5291
    %6823 = vmatpush1.msra.mxu0 %v5290
    %6824 = vmatprep.subr.mxu0 %v5283
    %6825 = vmatpush1.msra.mxu0 %v5282
    %6826 = vmatprep.subr.mxu0 %v5275
    %6827 = vmatpush1.msra.mxu0 %v5274
    %6828 = vmatprep.subr.mxu0 %v5267
    %6829 = vmatpush1.msra.mxu0 %v5266
    %6830 = vmatprep.subr.mxu0 %v5259
    %6831 = vmatpush1.msra.mxu0 %v5258
    %6832 = vmatprep.subr.mxu0 %v5507
    %6833 = vmatpush2.msra.mxu0 %v5506
    %6834 = vmatprep.subr.mxu0 %v5499
    %6835 = vmatpush2.msra.mxu0 %v5498
    %6836 = vmatprep.subr.mxu0 %v5491
    %6837 = vmatpush2.msra.mxu0 %v5490
    %6838 = vmatprep.subr.mxu0 %v5483
    %6839 = vmatpush2.msra.mxu0 %v5482
    %6840 = vmatprep.subr.mxu0 %v5475
    %6841 = vmatpush2.msra.mxu0 %v5474
    %6842 = vmatprep.subr.mxu0 %v5467
    %6843 = vmatpush2.msra.mxu0 %v5466
    %6844 = vmatprep.subr.mxu0 %v5459
    %6845 = vmatpush2.msra.mxu0 %v5458
    %6846 = vmatprep.subr.mxu0 %v5451
    %6847 = vmatpush2.msra.mxu0 %v5450
    %6848 = vmatprep.subr.mxu0 %v5443
    %6849 = vmatpush2.msra.mxu0 %v5442
    %6850 = vmatprep.subr.mxu0 %v5435
    %6851 = vmatpush2.msra.mxu0 %v5434
    %6852 = vmatprep.subr.mxu0 %v5427
    %6853 = vmatpush2.msra.mxu0 %v5426
    %6854 = vmatprep.subr.mxu0 %v5419
    %6855 = vmatpush2.msra.mxu0 %v5418
    %6856 = vmatprep.subr.mxu0 %v5411
    %6857 = vmatpush2.msra.mxu0 %v5410
    %6858 = vmatprep.subr.mxu0 %v5403
    %6859 = vmatpush2.msra.mxu0 %v5402
    %6860 = vmatprep.subr.mxu0 %v5395
    %6861 = vmatpush2.msra.mxu0 %v5394
    %6862 = vmatprep.subr.mxu0 %v5387
    %6863 = vmatpush2.msra.mxu0 %v5386
    %6864 = vmatprep.mubr.f32.mxu0 %v4225
    %6865 = vmatmul.mubr.f32.gmra.mxu0 %v4224
    %v6866 = vpop.f32.mrf.mxu0
    %v6867 = vadd.f32 %v6796, %v6866
    %v6868 = vpop.f32.mrf.mxu0
    %v6869 = vadd.f32 %v6798, %v6868
    %6870 = vdwg.mxu0
    %6871 = vmatprep.subr.mxu0 %v5635
    %6872 = vmatpush1.msra.mxu0 %v5634
    %6873 = vmatprep.subr.mxu0 %v5627
    %6874 = vmatpush1.msra.mxu0 %v5626
    %6875 = vmatprep.subr.mxu0 %v5619
    %6876 = vmatpush1.msra.mxu0 %v5618
    %6877 = vmatprep.subr.mxu0 %v5611
    %6878 = vmatpush1.msra.mxu0 %v5610
    %6879 = vmatprep.subr.mxu0 %v5603
    %6880 = vmatpush1.msra.mxu0 %v5602
    %6881 = vmatprep.subr.mxu0 %v5595
    %6882 = vmatpush1.msra.mxu0 %v5594
    %6883 = vmatprep.subr.mxu0 %v5587
    %6884 = vmatpush1.msra.mxu0 %v5586
    %6885 = vmatprep.subr.mxu0 %v5579
    %6886 = vmatpush1.msra.mxu0 %v5578
    %6887 = vmatprep.subr.mxu0 %v5571
    %6888 = vmatpush1.msra.mxu0 %v5570
    %6889 = vmatprep.subr.mxu0 %v5563
    %6890 = vmatpush1.msra.mxu0 %v5562
    %6891 = vmatprep.subr.mxu0 %v5555
    %6892 = vmatpush1.msra.mxu0 %v5554
    %6893 = vmatprep.subr.mxu0 %v5547
    %6894 = vmatpush1.msra.mxu0 %v5546
    %6895 = vmatprep.subr.mxu0 %v5539
    %6896 = vmatpush1.msra.mxu0 %v5538
    %6897 = vmatprep.subr.mxu0 %v5531
    %6898 = vmatpush1.msra.mxu0 %v5530
    %6899 = vmatprep.subr.mxu0 %v5523
    %6900 = vmatpush1.msra.mxu0 %v5522
    %6901 = vmatprep.subr.mxu0 %v5515
    %6902 = vmatpush1.msra.mxu0 %v5514
    %6903 = vmatprep.subr.mxu0 %v5763
    %6904 = vmatpush2.msra.mxu0 %v5762
    %6905 = vmatprep.subr.mxu0 %v5755
    %6906 = vmatpush2.msra.mxu0 %v5754
    %6907 = vmatprep.subr.mxu0 %v5747
    %6908 = vmatpush2.msra.mxu0 %v5746
    %6909 = vmatprep.subr.mxu0 %v5739
    %6910 = vmatpush2.msra.mxu0 %v5738
    %6911 = vmatprep.subr.mxu0 %v5731
    %6912 = vmatpush2.msra.mxu0 %v5730
    %6913 = vmatprep.subr.mxu0 %v5723
    %6914 = vmatpush2.msra.mxu0 %v5722
    %6915 = vmatprep.subr.mxu0 %v5715
    %6916 = vmatpush2.msra.mxu0 %v5714
    %6917 = vmatprep.subr.mxu0 %v5707
    %6918 = vmatpush2.msra.mxu0 %v5706
    %6919 = vmatprep.subr.mxu0 %v5699
    %6920 = vmatpush2.msra.mxu0 %v5698
    %6921 = vmatprep.subr.mxu0 %v5691
    %6922 = vmatpush2.msra.mxu0 %v5690
    %6923 = vmatprep.subr.mxu0 %v5683
    %6924 = vmatpush2.msra.mxu0 %v5682
    %6925 = vmatprep.subr.mxu0 %v5675
    %6926 = vmatpush2.msra.mxu0 %v5674
    %6927 = vmatprep.subr.mxu0 %v5667
    %6928 = vmatpush2.msra.mxu0 %v5666
    %6929 = vmatprep.subr.mxu0 %v5659
    %6930 = vmatpush2.msra.mxu0 %v5658
    %6931 = vmatprep.subr.mxu0 %v5651
    %6932 = vmatpush2.msra.mxu0 %v5650
    %6933 = vmatprep.subr.mxu0 %v5643
    %6934 = vmatpush2.msra.mxu0 %v5642
    %6935 = vmatprep.mubr.f32.mxu0 %v4227
    %6936 = vmatmul.mubr.f32.gmra.mxu0 %v4226
    %v6937 = vpop.f32.mrf.mxu0
    %v6938 = vadd.f32 %v6867, %v6937
    %v6939 = vpop.f32.mrf.mxu0
    %v6940 = vadd.f32 %v6869, %v6939
    %6941 = vdwg.mxu0
    %v6942 = vadd.f32 %v1482, %v6086
    %v6943 = vadd.f32 %v1483, %v6088
    %v6944 = vadd.f32 %v1484, %v6370
    %v6945 = vadd.f32 %v1485, %v6372
    %v6946 = vadd.f32 %v1486, %v6654
    %v6947 = vadd.f32 %v1487, %v6656
    %v6948 = vadd.f32 %v1488, %v6938
    %v6949 = vadd.f32 %v1489, %v6940
    %vm6950 = vcmp.ge.f32.partialorder %v6942, 0.0
    %vm6951 = vcmp.ge.f32.partialorder %v6943, 0.0
    %vm6952 = vcmp.ge.f32.partialorder %v6944, 0.0
    %vm6953 = vcmp.ge.f32.partialorder %v6945, 0.0
    %vm6954 = vcmp.ge.f32.partialorder %v6946, 0.0
    %vm6955 = vcmp.ge.f32.partialorder %v6947, 0.0
    %vm6956 = vcmp.ge.f32.partialorder %v6948, 0.0
    %vm6957 = vcmp.ge.f32.partialorder %v6949, 0.0
    %v6958 = vmul.f32 %v6942, 0.01
    %v6959 = vmul.f32 %v6943, 0.01
    %v6960 = vmul.f32 %v6944, 0.01
    %v6961 = vmul.f32 %v6945, 0.01
    %v6962 = vmul.f32 %v6946, 0.01
    %v6963 = vmul.f32 %v6947, 0.01
    %v6964 = vmul.f32 %v6948, 0.01
    %v6965 = vmul.f32 %v6949, 0.01
    %v6966 = vsel %vm6950, %v6942, %v6958
    %v6967 = vsel %vm6951, %v6943, %v6959
    %v6968 = vsel %vm6952, %v6944, %v6960
    %v6969 = vsel %vm6953, %v6945, %v6961
    %v6970 = vsel %vm6954, %v6946, %v6962
    %v6971 = vsel %vm6955, %v6947, %v6963
    %v6972 = vsel %vm6956, %v6948, %v6964
    %v6973 = vsel %vm6957, %v6949, %v6965
    %v6974 = vld [vmem:[#allocation24] sm:$0xf]
    %v6975 = vld [vmem:[#allocation24 + $0x4] sm:$0xf]
    %v6976 = vld [vmem:[#allocation24 + $0x8] sm:$0xf]
    %v6977 = vld [vmem:[#allocation24 + $0xc] sm:$0xf]
    %v6978 = vld [vmem:[#allocation24 + $0x10] sm:$0xf]
    %v6979 = vld [vmem:[#allocation24 + $0x14] sm:$0xf]
    %v6980 = vld [vmem:[#allocation24 + $0x18] sm:$0xf]
    %v6981 = vld [vmem:[#allocation24 + $0x1c] sm:$0xf]
    %v6982 = vld [vmem:[#allocation24 + $0x20] sm:$0xf]
    %v6983 = vld [vmem:[#allocation24 + $0x24] sm:$0xf]
    %v6984 = vld [vmem:[#allocation24 + $0x28] sm:$0xf]
    %v6985 = vld [vmem:[#allocation24 + $0x2c] sm:$0xf]
    %v6986 = vld [vmem:[#allocation24 + $0x30] sm:$0xf]
    %v6987 = vld [vmem:[#allocation24 + $0x34] sm:$0xf]
    %v6988 = vld [vmem:[#allocation24 + $0x38] sm:$0xf]
    %v6989 = vld [vmem:[#allocation24 + $0x3c] sm:$0xf]
    %v6990 = vunpack.c.l.bf16 %v6974
    %v6991 = vunpack.c.l.bf16 %v6975
    %v6992 = vunpack.c.l.bf16 %v6976
    %v6993 = vunpack.c.l.bf16 %v6977
    %v6994 = vunpack.c.l.bf16 %v6978
    %v6995 = vunpack.c.l.bf16 %v6979
    %v6996 = vunpack.c.l.bf16 %v6980
    %v6997 = vunpack.c.l.bf16 %v6981
    %v6998 = vunpack.c.l.bf16 %v6982
    %v6999 = vunpack.c.l.bf16 %v6983
    %v7000 = vunpack.c.l.bf16 %v6984
    %v7001 = vunpack.c.l.bf16 %v6985
    %v7002 = vunpack.c.l.bf16 %v6986
    %v7003 = vunpack.c.l.bf16 %v6987
    %v7004 = vunpack.c.l.bf16 %v6988
    %v7005 = vunpack.c.l.bf16 %v6989
    %v7006 = vld [vmem:[#allocation25] sm:$0xf]
    %v7007 = vld [vmem:[#allocation25 + $0x4] sm:$0xf]
    %v7008 = vld [vmem:[#allocation25 + $0x8] sm:$0xf]
    %v7009 = vld [vmem:[#allocation25 + $0xc] sm:$0xf]
    %v7010 = vld [vmem:[#allocation25 + $0x10] sm:$0xf]
    %v7011 = vld [vmem:[#allocation25 + $0x14] sm:$0xf]
    %v7012 = vld [vmem:[#allocation25 + $0x18] sm:$0xf]
    %v7013 = vld [vmem:[#allocation25 + $0x1c] sm:$0xf]
    %v7014 = vld [vmem:[#allocation25 + $0x20] sm:$0xf]
    %v7015 = vld [vmem:[#allocation25 + $0x24] sm:$0xf]
    %v7016 = vld [vmem:[#allocation25 + $0x28] sm:$0xf]
    %v7017 = vld [vmem:[#allocation25 + $0x2c] sm:$0xf]
    %v7018 = vld [vmem:[#allocation25 + $0x30] sm:$0xf]
    %v7019 = vld [vmem:[#allocation25 + $0x34] sm:$0xf]
    %v7020 = vld [vmem:[#allocation25 + $0x38] sm:$0xf]
    %v7021 = vld [vmem:[#allocation25 + $0x3c] sm:$0xf]
    %v7022 = vld [vmem:[#allocation25 + $0x40] sm:$0xf]
    %v7023 = vld [vmem:[#allocation25 + $0x44] sm:$0xf]
    %v7024 = vld [vmem:[#allocation25 + $0x48] sm:$0xf]
    %v7025 = vld [vmem:[#allocation25 + $0x4c] sm:$0xf]
    %v7026 = vld [vmem:[#allocation25 + $0x50] sm:$0xf]
    %v7027 = vld [vmem:[#allocation25 + $0x54] sm:$0xf]
    %v7028 = vld [vmem:[#allocation25 + $0x58] sm:$0xf]
    %v7029 = vld [vmem:[#allocation25 + $0x5c] sm:$0xf]
    %v7030 = vld [vmem:[#allocation25 + $0x60] sm:$0xf]
    %v7031 = vld [vmem:[#allocation25 + $0x64] sm:$0xf]
    %v7032 = vld [vmem:[#allocation25 + $0x68] sm:$0xf]
    %v7033 = vld [vmem:[#allocation25 + $0x6c] sm:$0xf]
    %v7034 = vld [vmem:[#allocation25 + $0x70] sm:$0xf]
    %v7035 = vld [vmem:[#allocation25 + $0x74] sm:$0xf]
    %v7036 = vld [vmem:[#allocation25 + $0x78] sm:$0xf]
    %v7037 = vld [vmem:[#allocation25 + $0x7c] sm:$0xf]
    %v7038 = vld [vmem:[#allocation25 + $0x80] sm:$0xf]
    %v7039 = vld [vmem:[#allocation25 + $0x84] sm:$0xf]
    %v7040 = vld [vmem:[#allocation25 + $0x88] sm:$0xf]
    %v7041 = vld [vmem:[#allocation25 + $0x8c] sm:$0xf]
    %v7042 = vld [vmem:[#allocation25 + $0x90] sm:$0xf]
    %v7043 = vld [vmem:[#allocation25 + $0x94] sm:$0xf]
    %v7044 = vld [vmem:[#allocation25 + $0x98] sm:$0xf]
    %v7045 = vld [vmem:[#allocation25 + $0x9c] sm:$0xf]
    %v7046 = vld [vmem:[#allocation25 + $0xa0] sm:$0xf]
    %v7047 = vld [vmem:[#allocation25 + $0xa4] sm:$0xf]
    %v7048 = vld [vmem:[#allocation25 + $0xa8] sm:$0xf]
    %v7049 = vld [vmem:[#allocation25 + $0xac] sm:$0xf]
    %v7050 = vld [vmem:[#allocation25 + $0xb0] sm:$0xf]
    %v7051 = vld [vmem:[#allocation25 + $0xb4] sm:$0xf]
    %v7052 = vld [vmem:[#allocation25 + $0xb8] sm:$0xf]
    %v7053 = vld [vmem:[#allocation25 + $0xbc] sm:$0xf]
    %v7054 = vld [vmem:[#allocation25 + $0xc0] sm:$0xf]
    %v7055 = vld [vmem:[#allocation25 + $0xc4] sm:$0xf]
    %v7056 = vld [vmem:[#allocation25 + $0xc8] sm:$0xf]
    %v7057 = vld [vmem:[#allocation25 + $0xcc] sm:$0xf]
    %v7058 = vld [vmem:[#allocation25 + $0xd0] sm:$0xf]
    %v7059 = vld [vmem:[#allocation25 + $0xd4] sm:$0xf]
    %v7060 = vld [vmem:[#allocation25 + $0xd8] sm:$0xf]
    %v7061 = vld [vmem:[#allocation25 + $0xdc] sm:$0xf]
    %v7062 = vld [vmem:[#allocation25 + $0xe0] sm:$0xf]
    %v7063 = vld [vmem:[#allocation25 + $0xe4] sm:$0xf]
    %v7064 = vld [vmem:[#allocation25 + $0xe8] sm:$0xf]
    %v7065 = vld [vmem:[#allocation25 + $0xec] sm:$0xf]
    %v7066 = vld [vmem:[#allocation25 + $0xf0] sm:$0xf]
    %v7067 = vld [vmem:[#allocation25 + $0xf4] sm:$0xf]
    %v7068 = vld [vmem:[#allocation25 + $0xf8] sm:$0xf]
    %v7069 = vld [vmem:[#allocation25 + $0xfc] sm:$0xf]
    %v7070 = vld [vmem:[#allocation25 + $0x100] sm:$0xf]
    %v7071 = vld [vmem:[#allocation25 + $0x104] sm:$0xf]
    %v7072 = vld [vmem:[#allocation25 + $0x108] sm:$0xf]
    %v7073 = vld [vmem:[#allocation25 + $0x10c] sm:$0xf]
    %v7074 = vld [vmem:[#allocation25 + $0x110] sm:$0xf]
    %v7075 = vld [vmem:[#allocation25 + $0x114] sm:$0xf]
    %v7076 = vld [vmem:[#allocation25 + $0x118] sm:$0xf]
    %v7077 = vld [vmem:[#allocation25 + $0x11c] sm:$0xf]
    %v7078 = vld [vmem:[#allocation25 + $0x120] sm:$0xf]
    %v7079 = vld [vmem:[#allocation25 + $0x124] sm:$0xf]
    %v7080 = vld [vmem:[#allocation25 + $0x128] sm:$0xf]
    %v7081 = vld [vmem:[#allocation25 + $0x12c] sm:$0xf]
    %v7082 = vld [vmem:[#allocation25 + $0x130] sm:$0xf]
    %v7083 = vld [vmem:[#allocation25 + $0x134] sm:$0xf]
    %v7084 = vld [vmem:[#allocation25 + $0x138] sm:$0xf]
    %v7085 = vld [vmem:[#allocation25 + $0x13c] sm:$0xf]
    %v7086 = vld [vmem:[#allocation25 + $0x140] sm:$0xf]
    %v7087 = vld [vmem:[#allocation25 + $0x144] sm:$0xf]
    %v7088 = vld [vmem:[#allocation25 + $0x148] sm:$0xf]
    %v7089 = vld [vmem:[#allocation25 + $0x14c] sm:$0xf]
    %v7090 = vld [vmem:[#allocation25 + $0x150] sm:$0xf]
    %v7091 = vld [vmem:[#allocation25 + $0x154] sm:$0xf]
    %v7092 = vld [vmem:[#allocation25 + $0x158] sm:$0xf]
    %v7093 = vld [vmem:[#allocation25 + $0x15c] sm:$0xf]
    %v7094 = vld [vmem:[#allocation25 + $0x160] sm:$0xf]
    %v7095 = vld [vmem:[#allocation25 + $0x164] sm:$0xf]
    %v7096 = vld [vmem:[#allocation25 + $0x168] sm:$0xf]
    %v7097 = vld [vmem:[#allocation25 + $0x16c] sm:$0xf]
    %v7098 = vld [vmem:[#allocation25 + $0x170] sm:$0xf]
    %v7099 = vld [vmem:[#allocation25 + $0x174] sm:$0xf]
    %v7100 = vld [vmem:[#allocation25 + $0x178] sm:$0xf]
    %v7101 = vld [vmem:[#allocation25 + $0x17c] sm:$0xf]
    %v7102 = vld [vmem:[#allocation25 + $0x180] sm:$0xf]
    %v7103 = vld [vmem:[#allocation25 + $0x184] sm:$0xf]
    %v7104 = vld [vmem:[#allocation25 + $0x188] sm:$0xf]
    %v7105 = vld [vmem:[#allocation25 + $0x18c] sm:$0xf]
    %v7106 = vld [vmem:[#allocation25 + $0x190] sm:$0xf]
    %v7107 = vld [vmem:[#allocation25 + $0x194] sm:$0xf]
    %v7108 = vld [vmem:[#allocation25 + $0x198] sm:$0xf]
    %v7109 = vld [vmem:[#allocation25 + $0x19c] sm:$0xf]
    %v7110 = vld [vmem:[#allocation25 + $0x1a0] sm:$0xf]
    %v7111 = vld [vmem:[#allocation25 + $0x1a4] sm:$0xf]
    %v7112 = vld [vmem:[#allocation25 + $0x1a8] sm:$0xf]
    %v7113 = vld [vmem:[#allocation25 + $0x1ac] sm:$0xf]
    %v7114 = vld [vmem:[#allocation25 + $0x1b0] sm:$0xf]
    %v7115 = vld [vmem:[#allocation25 + $0x1b4] sm:$0xf]
    %v7116 = vld [vmem:[#allocation25 + $0x1b8] sm:$0xf]
    %v7117 = vld [vmem:[#allocation25 + $0x1bc] sm:$0xf]
    %v7118 = vld [vmem:[#allocation25 + $0x1c0] sm:$0xf]
    %v7119 = vld [vmem:[#allocation25 + $0x1c4] sm:$0xf]
    %v7120 = vld [vmem:[#allocation25 + $0x1c8] sm:$0xf]
    %v7121 = vld [vmem:[#allocation25 + $0x1cc] sm:$0xf]
    %v7122 = vld [vmem:[#allocation25 + $0x1d0] sm:$0xf]
    %v7123 = vld [vmem:[#allocation25 + $0x1d4] sm:$0xf]
    %v7124 = vld [vmem:[#allocation25 + $0x1d8] sm:$0xf]
    %v7125 = vld [vmem:[#allocation25 + $0x1dc] sm:$0xf]
    %v7126 = vld [vmem:[#allocation25 + $0x1e0] sm:$0xf]
    %v7127 = vld [vmem:[#allocation25 + $0x1e4] sm:$0xf]
    %v7128 = vld [vmem:[#allocation25 + $0x1e8] sm:$0xf]
    %v7129 = vld [vmem:[#allocation25 + $0x1ec] sm:$0xf]
    %v7130 = vld [vmem:[#allocation25 + $0x1f0] sm:$0xf]
    %v7131 = vld [vmem:[#allocation25 + $0x1f4] sm:$0xf]
    %v7132 = vld [vmem:[#allocation25 + $0x1f8] sm:$0xf]
    %v7133 = vld [vmem:[#allocation25 + $0x1fc] sm:$0xf]
    %v7134 = vunpack.c.l.bf16 %v7006
    %v7135 = vunpack.c.l.bf16 %v7007
    %v7136 = vunpack.c.l.bf16 %v7008
    %v7137 = vunpack.c.l.bf16 %v7009
    %v7138 = vunpack.c.l.bf16 %v7010
    %v7139 = vunpack.c.l.bf16 %v7011
    %v7140 = vunpack.c.l.bf16 %v7012
    %v7141 = vunpack.c.l.bf16 %v7013
    %v7142 = vunpack.c.l.bf16 %v7014
    %v7143 = vunpack.c.l.bf16 %v7015
    %v7144 = vunpack.c.l.bf16 %v7016
    %v7145 = vunpack.c.l.bf16 %v7017
    %v7146 = vunpack.c.l.bf16 %v7018
    %v7147 = vunpack.c.l.bf16 %v7019
    %v7148 = vunpack.c.l.bf16 %v7020
    %v7149 = vunpack.c.l.bf16 %v7021
    %v7150 = vunpack.c.l.bf16 %v7022
    %v7151 = vunpack.c.l.bf16 %v7023
    %v7152 = vunpack.c.l.bf16 %v7024
    %v7153 = vunpack.c.l.bf16 %v7025
    %v7154 = vunpack.c.l.bf16 %v7026
    %v7155 = vunpack.c.l.bf16 %v7027
    %v7156 = vunpack.c.l.bf16 %v7028
    %v7157 = vunpack.c.l.bf16 %v7029
    %v7158 = vunpack.c.l.bf16 %v7030
    %v7159 = vunpack.c.l.bf16 %v7031
    %v7160 = vunpack.c.l.bf16 %v7032
    %v7161 = vunpack.c.l.bf16 %v7033
    %v7162 = vunpack.c.l.bf16 %v7034
    %v7163 = vunpack.c.l.bf16 %v7035
    %v7164 = vunpack.c.l.bf16 %v7036
    %v7165 = vunpack.c.l.bf16 %v7037
    %v7166 = vunpack.c.l.bf16 %v7038
    %v7167 = vunpack.c.l.bf16 %v7039
    %v7168 = vunpack.c.l.bf16 %v7040
    %v7169 = vunpack.c.l.bf16 %v7041
    %v7170 = vunpack.c.l.bf16 %v7042
    %v7171 = vunpack.c.l.bf16 %v7043
    %v7172 = vunpack.c.l.bf16 %v7044
    %v7173 = vunpack.c.l.bf16 %v7045
    %v7174 = vunpack.c.l.bf16 %v7046
    %v7175 = vunpack.c.l.bf16 %v7047
    %v7176 = vunpack.c.l.bf16 %v7048
    %v7177 = vunpack.c.l.bf16 %v7049
    %v7178 = vunpack.c.l.bf16 %v7050
    %v7179 = vunpack.c.l.bf16 %v7051
    %v7180 = vunpack.c.l.bf16 %v7052
    %v7181 = vunpack.c.l.bf16 %v7053
    %v7182 = vunpack.c.l.bf16 %v7054
    %v7183 = vunpack.c.l.bf16 %v7055
    %v7184 = vunpack.c.l.bf16 %v7056
    %v7185 = vunpack.c.l.bf16 %v7057
    %v7186 = vunpack.c.l.bf16 %v7058
    %v7187 = vunpack.c.l.bf16 %v7059
    %v7188 = vunpack.c.l.bf16 %v7060
    %v7189 = vunpack.c.l.bf16 %v7061
    %v7190 = vunpack.c.l.bf16 %v7062
    %v7191 = vunpack.c.l.bf16 %v7063
    %v7192 = vunpack.c.l.bf16 %v7064
    %v7193 = vunpack.c.l.bf16 %v7065
    %v7194 = vunpack.c.l.bf16 %v7066
    %v7195 = vunpack.c.l.bf16 %v7067
    %v7196 = vunpack.c.l.bf16 %v7068
    %v7197 = vunpack.c.l.bf16 %v7069
    %v7198 = vunpack.c.l.bf16 %v7070
    %v7199 = vunpack.c.l.bf16 %v7071
    %v7200 = vunpack.c.l.bf16 %v7072
    %v7201 = vunpack.c.l.bf16 %v7073
    %v7202 = vunpack.c.l.bf16 %v7074
    %v7203 = vunpack.c.l.bf16 %v7075
    %v7204 = vunpack.c.l.bf16 %v7076
    %v7205 = vunpack.c.l.bf16 %v7077
    %v7206 = vunpack.c.l.bf16 %v7078
    %v7207 = vunpack.c.l.bf16 %v7079
    %v7208 = vunpack.c.l.bf16 %v7080
    %v7209 = vunpack.c.l.bf16 %v7081
    %v7210 = vunpack.c.l.bf16 %v7082
    %v7211 = vunpack.c.l.bf16 %v7083
    %v7212 = vunpack.c.l.bf16 %v7084
    %v7213 = vunpack.c.l.bf16 %v7085
    %v7214 = vunpack.c.l.bf16 %v7086
    %v7215 = vunpack.c.l.bf16 %v7087
    %v7216 = vunpack.c.l.bf16 %v7088
    %v7217 = vunpack.c.l.bf16 %v7089
    %v7218 = vunpack.c.l.bf16 %v7090
    %v7219 = vunpack.c.l.bf16 %v7091
    %v7220 = vunpack.c.l.bf16 %v7092
    %v7221 = vunpack.c.l.bf16 %v7093
    %v7222 = vunpack.c.l.bf16 %v7094
    %v7223 = vunpack.c.l.bf16 %v7095
    %v7224 = vunpack.c.l.bf16 %v7096
    %v7225 = vunpack.c.l.bf16 %v7097
    %v7226 = vunpack.c.l.bf16 %v7098
    %v7227 = vunpack.c.l.bf16 %v7099
    %v7228 = vunpack.c.l.bf16 %v7100
    %v7229 = vunpack.c.l.bf16 %v7101
    %v7230 = vunpack.c.l.bf16 %v7102
    %v7231 = vunpack.c.l.bf16 %v7103
    %v7232 = vunpack.c.l.bf16 %v7104
    %v7233 = vunpack.c.l.bf16 %v7105
    %v7234 = vunpack.c.l.bf16 %v7106
    %v7235 = vunpack.c.l.bf16 %v7107
    %v7236 = vunpack.c.l.bf16 %v7108
    %v7237 = vunpack.c.l.bf16 %v7109
    %v7238 = vunpack.c.l.bf16 %v7110
    %v7239 = vunpack.c.l.bf16 %v7111
    %v7240 = vunpack.c.l.bf16 %v7112
    %v7241 = vunpack.c.l.bf16 %v7113
    %v7242 = vunpack.c.l.bf16 %v7114
    %v7243 = vunpack.c.l.bf16 %v7115
    %v7244 = vunpack.c.l.bf16 %v7116
    %v7245 = vunpack.c.l.bf16 %v7117
    %v7246 = vunpack.c.l.bf16 %v7118
    %v7247 = vunpack.c.l.bf16 %v7119
    %v7248 = vunpack.c.l.bf16 %v7120
    %v7249 = vunpack.c.l.bf16 %v7121
    %v7250 = vunpack.c.l.bf16 %v7122
    %v7251 = vunpack.c.l.bf16 %v7123
    %v7252 = vunpack.c.l.bf16 %v7124
    %v7253 = vunpack.c.l.bf16 %v7125
    %v7254 = vunpack.c.l.bf16 %v7126
    %v7255 = vunpack.c.l.bf16 %v7127
    %v7256 = vunpack.c.l.bf16 %v7128
    %v7257 = vunpack.c.l.bf16 %v7129
    %v7258 = vunpack.c.l.bf16 %v7130
    %v7259 = vunpack.c.l.bf16 %v7131
    %v7260 = vunpack.c.l.bf16 %v7132
    %v7261 = vunpack.c.l.bf16 %v7133
    %7262 = vmatprep.subr.mxu0 0.0
    %7263 = vmatpush1.msra.mxu0 %v7149
    %7264 = vmatprep.subr.mxu0 0.0
    %7265 = vmatpush1.msra.mxu0 %v7148
    %7266 = vmatprep.subr.mxu0 0.0
    %7267 = vmatpush1.msra.mxu0 %v7147
    %7268 = vmatprep.subr.mxu0 0.0
    %7269 = vmatpush1.msra.mxu0 %v7146
    %7270 = vmatprep.subr.mxu0 0.0
    %7271 = vmatpush1.msra.mxu0 %v7145
    %7272 = vmatprep.subr.mxu0 0.0
    %7273 = vmatpush1.msra.mxu0 %v7144
    %7274 = vmatprep.subr.mxu0 0.0
    %7275 = vmatpush1.msra.mxu0 %v7143
    %7276 = vmatprep.subr.mxu0 0.0
    %7277 = vmatpush1.msra.mxu0 %v7142
    %7278 = vmatprep.subr.mxu0 0.0
    %7279 = vmatpush1.msra.mxu0 %v7141
    %7280 = vmatprep.subr.mxu0 0.0
    %7281 = vmatpush1.msra.mxu0 %v7140
    %7282 = vmatprep.subr.mxu0 0.0
    %7283 = vmatpush1.msra.mxu0 %v7139
    %7284 = vmatprep.subr.mxu0 0.0
    %7285 = vmatpush1.msra.mxu0 %v7138
    %7286 = vmatprep.subr.mxu0 0.0
    %7287 = vmatpush1.msra.mxu0 %v7137
    %7288 = vmatprep.subr.mxu0 0.0
    %7289 = vmatpush1.msra.mxu0 %v7136
    %7290 = vmatprep.subr.mxu0 0.0
    %7291 = vmatpush1.msra.mxu0 %v7135
    %7292 = vmatprep.subr.mxu0 0.0
    %7293 = vmatpush1.msra.mxu0 %v7134
    %7294 = vmatprep.subr.mxu0 0.0
    %7295 = vmatpush2.msra.mxu0 %v7165
    %7296 = vmatprep.subr.mxu0 0.0
    %7297 = vmatpush2.msra.mxu0 %v7164
    %7298 = vmatprep.subr.mxu0 0.0
    %7299 = vmatpush2.msra.mxu0 %v7163
    %7300 = vmatprep.subr.mxu0 0.0
    %7301 = vmatpush2.msra.mxu0 %v7162
    %7302 = vmatprep.subr.mxu0 0.0
    %7303 = vmatpush2.msra.mxu0 %v7161
    %7304 = vmatprep.subr.mxu0 0.0
    %7305 = vmatpush2.msra.mxu0 %v7160
    %7306 = vmatprep.subr.mxu0 0.0
    %7307 = vmatpush2.msra.mxu0 %v7159
    %7308 = vmatprep.subr.mxu0 0.0
    %7309 = vmatpush2.msra.mxu0 %v7158
    %7310 = vmatprep.subr.mxu0 0.0
    %7311 = vmatpush2.msra.mxu0 %v7157
    %7312 = vmatprep.subr.mxu0 0.0
    %7313 = vmatpush2.msra.mxu0 %v7156
    %7314 = vmatprep.subr.mxu0 0.0
    %7315 = vmatpush2.msra.mxu0 %v7155
    %7316 = vmatprep.subr.mxu0 0.0
    %7317 = vmatpush2.msra.mxu0 %v7154
    %7318 = vmatprep.subr.mxu0 0.0
    %7319 = vmatpush2.msra.mxu0 %v7153
    %7320 = vmatprep.subr.mxu0 0.0
    %7321 = vmatpush2.msra.mxu0 %v7152
    %7322 = vmatprep.subr.mxu0 0.0
    %7323 = vmatpush2.msra.mxu0 %v7151
    %7324 = vmatprep.subr.mxu0 0.0
    %7325 = vmatpush2.msra.mxu0 %v7150
    %7326 = vmatprep.mubr.f32.mxu0 %v6967
    %7327 = vmatmul.mubr.f32.gmra.mxu0 %v6966
    %v7328 = vpop.f32.mrf.mxu0
    %v7329 = vadd.f32 0.0, %v7328
    %v7330 = vpop.f32.mrf.mxu0
    %7331 = vdwg.mxu0
    %7332 = vmatprep.subr.mxu0 0.0
    %7333 = vmatpush1.msra.mxu0 %v7181
    %7334 = vmatprep.subr.mxu0 0.0
    %7335 = vmatpush1.msra.mxu0 %v7180
    %7336 = vmatprep.subr.mxu0 0.0
    %7337 = vmatpush1.msra.mxu0 %v7179
    %7338 = vmatprep.subr.mxu0 0.0
    %7339 = vmatpush1.msra.mxu0 %v7178
    %7340 = vmatprep.subr.mxu0 0.0
    %7341 = vmatpush1.msra.mxu0 %v7177
    %7342 = vmatprep.subr.mxu0 0.0
    %7343 = vmatpush1.msra.mxu0 %v7176
    %7344 = vmatprep.subr.mxu0 0.0
    %7345 = vmatpush1.msra.mxu0 %v7175
    %7346 = vmatprep.subr.mxu0 0.0
    %7347 = vmatpush1.msra.mxu0 %v7174
    %7348 = vmatprep.subr.mxu0 0.0
    %7349 = vmatpush1.msra.mxu0 %v7173
    %7350 = vmatprep.subr.mxu0 0.0
    %7351 = vmatpush1.msra.mxu0 %v7172
    %7352 = vmatprep.subr.mxu0 0.0
    %7353 = vmatpush1.msra.mxu0 %v7171
    %7354 = vmatprep.subr.mxu0 0.0
    %7355 = vmatpush1.msra.mxu0 %v7170
    %7356 = vmatprep.subr.mxu0 0.0
    %7357 = vmatpush1.msra.mxu0 %v7169
    %7358 = vmatprep.subr.mxu0 0.0
    %7359 = vmatpush1.msra.mxu0 %v7168
    %7360 = vmatprep.subr.mxu0 0.0
    %7361 = vmatpush1.msra.mxu0 %v7167
    %7362 = vmatprep.subr.mxu0 0.0
    %7363 = vmatpush1.msra.mxu0 %v7166
    %7364 = vmatprep.subr.mxu0 0.0
    %7365 = vmatpush2.msra.mxu0 %v7197
    %7366 = vmatprep.subr.mxu0 0.0
    %7367 = vmatpush2.msra.mxu0 %v7196
    %7368 = vmatprep.subr.mxu0 0.0
    %7369 = vmatpush2.msra.mxu0 %v7195
    %7370 = vmatprep.subr.mxu0 0.0
    %7371 = vmatpush2.msra.mxu0 %v7194
    %7372 = vmatprep.subr.mxu0 0.0
    %7373 = vmatpush2.msra.mxu0 %v7193
    %7374 = vmatprep.subr.mxu0 0.0
    %7375 = vmatpush2.msra.mxu0 %v7192
    %7376 = vmatprep.subr.mxu0 0.0
    %7377 = vmatpush2.msra.mxu0 %v7191
    %7378 = vmatprep.subr.mxu0 0.0
    %7379 = vmatpush2.msra.mxu0 %v7190
    %7380 = vmatprep.subr.mxu0 0.0
    %7381 = vmatpush2.msra.mxu0 %v7189
    %7382 = vmatprep.subr.mxu0 0.0
    %7383 = vmatpush2.msra.mxu0 %v7188
    %7384 = vmatprep.subr.mxu0 0.0
    %7385 = vmatpush2.msra.mxu0 %v7187
    %7386 = vmatprep.subr.mxu0 0.0
    %7387 = vmatpush2.msra.mxu0 %v7186
    %7388 = vmatprep.subr.mxu0 0.0
    %7389 = vmatpush2.msra.mxu0 %v7185
    %7390 = vmatprep.subr.mxu0 0.0
    %7391 = vmatpush2.msra.mxu0 %v7184
    %7392 = vmatprep.subr.mxu0 0.0
    %7393 = vmatpush2.msra.mxu0 %v7183
    %7394 = vmatprep.subr.mxu0 0.0
    %7395 = vmatpush2.msra.mxu0 %v7182
    %7396 = vmatprep.mubr.f32.mxu0 %v6969
    %7397 = vmatmul.mubr.f32.gmra.mxu0 %v6968
    %v7398 = vpop.f32.mrf.mxu0
    %v7399 = vadd.f32 %v7329, %v7398
    %v7400 = vpop.f32.mrf.mxu0
    %7401 = vdwg.mxu0
    %7402 = vmatprep.subr.mxu0 0.0
    %7403 = vmatpush1.msra.mxu0 %v7213
    %7404 = vmatprep.subr.mxu0 0.0
    %7405 = vmatpush1.msra.mxu0 %v7212
    %7406 = vmatprep.subr.mxu0 0.0
    %7407 = vmatpush1.msra.mxu0 %v7211
    %7408 = vmatprep.subr.mxu0 0.0
    %7409 = vmatpush1.msra.mxu0 %v7210
    %7410 = vmatprep.subr.mxu0 0.0
    %7411 = vmatpush1.msra.mxu0 %v7209
    %7412 = vmatprep.subr.mxu0 0.0
    %7413 = vmatpush1.msra.mxu0 %v7208
    %7414 = vmatprep.subr.mxu0 0.0
    %7415 = vmatpush1.msra.mxu0 %v7207
    %7416 = vmatprep.subr.mxu0 0.0
    %7417 = vmatpush1.msra.mxu0 %v7206
    %7418 = vmatprep.subr.mxu0 0.0
    %7419 = vmatpush1.msra.mxu0 %v7205
    %7420 = vmatprep.subr.mxu0 0.0
    %7421 = vmatpush1.msra.mxu0 %v7204
    %7422 = vmatprep.subr.mxu0 0.0
    %7423 = vmatpush1.msra.mxu0 %v7203
    %7424 = vmatprep.subr.mxu0 0.0
    %7425 = vmatpush1.msra.mxu0 %v7202
    %7426 = vmatprep.subr.mxu0 0.0
    %7427 = vmatpush1.msra.mxu0 %v7201
    %7428 = vmatprep.subr.mxu0 0.0
    %7429 = vmatpush1.msra.mxu0 %v7200
    %7430 = vmatprep.subr.mxu0 0.0
    %7431 = vmatpush1.msra.mxu0 %v7199
    %7432 = vmatprep.subr.mxu0 0.0
    %7433 = vmatpush1.msra.mxu0 %v7198
    %7434 = vmatprep.subr.mxu0 0.0
    %7435 = vmatpush2.msra.mxu0 %v7229
    %7436 = vmatprep.subr.mxu0 0.0
    %7437 = vmatpush2.msra.mxu0 %v7228
    %7438 = vmatprep.subr.mxu0 0.0
    %7439 = vmatpush2.msra.mxu0 %v7227
    %7440 = vmatprep.subr.mxu0 0.0
    %7441 = vmatpush2.msra.mxu0 %v7226
    %7442 = vmatprep.subr.mxu0 0.0
    %7443 = vmatpush2.msra.mxu0 %v7225
    %7444 = vmatprep.subr.mxu0 0.0
    %7445 = vmatpush2.msra.mxu0 %v7224
    %7446 = vmatprep.subr.mxu0 0.0
    %7447 = vmatpush2.msra.mxu0 %v7223
    %7448 = vmatprep.subr.mxu0 0.0
    %7449 = vmatpush2.msra.mxu0 %v7222
    %7450 = vmatprep.subr.mxu0 0.0
    %7451 = vmatpush2.msra.mxu0 %v7221
    %7452 = vmatprep.subr.mxu0 0.0
    %7453 = vmatpush2.msra.mxu0 %v7220
    %7454 = vmatprep.subr.mxu0 0.0
    %7455 = vmatpush2.msra.mxu0 %v7219
    %7456 = vmatprep.subr.mxu0 0.0
    %7457 = vmatpush2.msra.mxu0 %v7218
    %7458 = vmatprep.subr.mxu0 0.0
    %7459 = vmatpush2.msra.mxu0 %v7217
    %7460 = vmatprep.subr.mxu0 0.0
    %7461 = vmatpush2.msra.mxu0 %v7216
    %7462 = vmatprep.subr.mxu0 0.0
    %7463 = vmatpush2.msra.mxu0 %v7215
    %7464 = vmatprep.subr.mxu0 0.0
    %7465 = vmatpush2.msra.mxu0 %v7214
    %7466 = vmatprep.mubr.f32.mxu0 %v6971
    %7467 = vmatmul.mubr.f32.gmra.mxu0 %v6970
    %v7468 = vpop.f32.mrf.mxu0
    %v7469 = vadd.f32 %v7399, %v7468
    %v7470 = vpop.f32.mrf.mxu0
    %7471 = vdwg.mxu0
    %7472 = vmatprep.subr.mxu0 0.0
    %7473 = vmatpush1.msra.mxu0 %v7245
    %7474 = vmatprep.subr.mxu0 0.0
    %7475 = vmatpush1.msra.mxu0 %v7244
    %7476 = vmatprep.subr.mxu0 0.0
    %7477 = vmatpush1.msra.mxu0 %v7243
    %7478 = vmatprep.subr.mxu0 0.0
    %7479 = vmatpush1.msra.mxu0 %v7242
    %7480 = vmatprep.subr.mxu0 0.0
    %7481 = vmatpush1.msra.mxu0 %v7241
    %7482 = vmatprep.subr.mxu0 0.0
    %7483 = vmatpush1.msra.mxu0 %v7240
    %7484 = vmatprep.subr.mxu0 0.0
    %7485 = vmatpush1.msra.mxu0 %v7239
    %7486 = vmatprep.subr.mxu0 0.0
    %7487 = vmatpush1.msra.mxu0 %v7238
    %7488 = vmatprep.subr.mxu0 0.0
    %7489 = vmatpush1.msra.mxu0 %v7237
    %7490 = vmatprep.subr.mxu0 0.0
    %7491 = vmatpush1.msra.mxu0 %v7236
    %7492 = vmatprep.subr.mxu0 0.0
    %7493 = vmatpush1.msra.mxu0 %v7235
    %7494 = vmatprep.subr.mxu0 0.0
    %7495 = vmatpush1.msra.mxu0 %v7234
    %7496 = vmatprep.subr.mxu0 0.0
    %7497 = vmatpush1.msra.mxu0 %v7233
    %7498 = vmatprep.subr.mxu0 0.0
    %7499 = vmatpush1.msra.mxu0 %v7232
    %7500 = vmatprep.subr.mxu0 0.0
    %7501 = vmatpush1.msra.mxu0 %v7231
    %7502 = vmatprep.subr.mxu0 0.0
    %7503 = vmatpush1.msra.mxu0 %v7230
    %7504 = vmatprep.subr.mxu0 0.0
    %7505 = vmatpush2.msra.mxu0 %v7261
    %7506 = vmatprep.subr.mxu0 0.0
    %7507 = vmatpush2.msra.mxu0 %v7260
    %7508 = vmatprep.subr.mxu0 0.0
    %7509 = vmatpush2.msra.mxu0 %v7259
    %7510 = vmatprep.subr.mxu0 0.0
    %7511 = vmatpush2.msra.mxu0 %v7258
    %7512 = vmatprep.subr.mxu0 0.0
    %7513 = vmatpush2.msra.mxu0 %v7257
    %7514 = vmatprep.subr.mxu0 0.0
    %7515 = vmatpush2.msra.mxu0 %v7256
    %7516 = vmatprep.subr.mxu0 0.0
    %7517 = vmatpush2.msra.mxu0 %v7255
    %7518 = vmatprep.subr.mxu0 0.0
    %7519 = vmatpush2.msra.mxu0 %v7254
    %7520 = vmatprep.subr.mxu0 0.0
    %7521 = vmatpush2.msra.mxu0 %v7253
    %7522 = vmatprep.subr.mxu0 0.0
    %7523 = vmatpush2.msra.mxu0 %v7252
    %7524 = vmatprep.subr.mxu0 0.0
    %7525 = vmatpush2.msra.mxu0 %v7251
    %7526 = vmatprep.subr.mxu0 0.0
    %7527 = vmatpush2.msra.mxu0 %v7250
    %7528 = vmatprep.subr.mxu0 0.0
    %7529 = vmatpush2.msra.mxu0 %v7249
    %7530 = vmatprep.subr.mxu0 0.0
    %7531 = vmatpush2.msra.mxu0 %v7248
    %7532 = vmatprep.subr.mxu0 0.0
    %7533 = vmatpush2.msra.mxu0 %v7247
    %7534 = vmatprep.subr.mxu0 0.0
    %7535 = vmatpush2.msra.mxu0 %v7246
    %7536 = vmatprep.mubr.f32.mxu0 %v6973
    %7537 = vmatmul.mubr.f32.gmra.mxu0 %v6972
    %v7538 = vpop.f32.mrf.mxu0
    %v7539 = vadd.f32 %v7469, %v7538
    %v7540 = vpop.f32.mrf.mxu0
    %7541 = vdwg.mxu0
    %7542 = vmatprep.subr.mxu0 0.0
    %7543 = vmatpush1.msra.mxu0 %v7005
    %7544 = vmatprep.subr.mxu0 0.0
    %7545 = vmatpush1.msra.mxu0 %v7004
    %7546 = vmatprep.subr.mxu0 0.0
    %7547 = vmatpush1.msra.mxu0 %v7003
    %7548 = vmatprep.subr.mxu0 0.0
    %7549 = vmatpush1.msra.mxu0 %v7002
    %7550 = vmatprep.subr.mxu0 0.0
    %7551 = vmatpush1.msra.mxu0 %v7001
    %7552 = vmatprep.subr.mxu0 0.0
    %7553 = vmatpush1.msra.mxu0 %v7000
    %7554 = vmatprep.subr.mxu0 0.0
    %7555 = vmatpush1.msra.mxu0 %v6999
    %7556 = vmatprep.subr.mxu0 0.0
    %7557 = vmatpush1.msra.mxu0 %v6998
    %7558 = vmatprep.subr.mxu0 0.0
    %7559 = vmatpush1.msra.mxu0 %v6997
    %7560 = vmatprep.subr.mxu0 0.0
    %7561 = vmatpush1.msra.mxu0 %v6996
    %7562 = vmatprep.subr.mxu0 0.0
    %7563 = vmatpush1.msra.mxu0 %v6995
    %7564 = vmatprep.subr.mxu0 0.0
    %7565 = vmatpush1.msra.mxu0 %v6994
    %7566 = vmatprep.subr.mxu0 0.0
    %7567 = vmatpush1.msra.mxu0 %v6993
    %7568 = vmatprep.subr.mxu0 0.0
    %7569 = vmatpush1.msra.mxu0 %v6992
    %7570 = vmatprep.subr.mxu0 0.0
    %7571 = vmatpush1.msra.mxu0 %v6991
    %7572 = vmatprep.subr.mxu0 0.0
    %7573 = vmatpush1.msra.mxu0 %v6990
    %7574 = vmatprep.subr.mxu0 0.0
    %7575 = vmatpush2.msra.mxu0 0.0
    %7576 = vmatprep.subr.mxu0 0.0
    %7577 = vmatpush2.msra.mxu0 0.0
    %7578 = vmatprep.subr.mxu0 0.0
    %7579 = vmatpush2.msra.mxu0 0.0
    %7580 = vmatprep.subr.mxu0 0.0
    %7581 = vmatpush2.msra.mxu0 0.0
    %7582 = vmatprep.subr.mxu0 0.0
    %7583 = vmatpush2.msra.mxu0 0.0
    %7584 = vmatprep.subr.mxu0 0.0
    %7585 = vmatpush2.msra.mxu0 0.0
    %7586 = vmatprep.subr.mxu0 0.0
    %7587 = vmatpush2.msra.mxu0 0.0
    %7588 = vmatprep.subr.mxu0 0.0
    %7589 = vmatpush2.msra.mxu0 0.0
    %7590 = vmatprep.subr.mxu0 0.0
    %7591 = vmatpush2.msra.mxu0 0.0
    %7592 = vmatprep.subr.mxu0 0.0
    %7593 = vmatpush2.msra.mxu0 0.0
    %7594 = vmatprep.subr.mxu0 0.0
    %7595 = vmatpush2.msra.mxu0 0.0
    %7596 = vmatprep.subr.mxu0 0.0
    %7597 = vmatpush2.msra.mxu0 0.0
    %7598 = vmatprep.subr.mxu0 0.0
    %7599 = vmatpush2.msra.mxu0 0.0
    %7600 = vmatprep.subr.mxu0 0.0
    %7601 = vmatpush2.msra.mxu0 0.0
    %7602 = vmatprep.subr.mxu0 0.0
    %7603 = vmatpush2.msra.mxu0 0.0
    %7604 = vmatprep.subr.mxu0 0.0
    %7605 = vmatpush2.msra.mxu0 0.0
    %7606 = vmatprep.mubr.f32.mxu0 0.0
    %7607 = vmatmul.mubr.f32.gmra.mxu0 %v753
    %v7608 = vpop.f32.mrf.mxu0
    %v7609 = vadd.f32 %v7539, %v7608
    %v7610 = vpop.f32.mrf.mxu0
    %7611 = vdwg.mxu0
    %v7612 = vld [vmem:[#allocation27] sm:$0x1]
    %v7614 = vlaneseq
    %v7615 = vshrl.u32 %v7614, 7
    %v7616 = vsub.s32 0, %v7615
    %v7617 = vrot.slane %v7612, %v7616
    %v7619 = vadd.f32 %v7609, %v7617
    %vm7620 = vcmp.ge.f32.partialorder %v7619, 0.0
    %v7621 = vmul.f32 %v7619, 0.01
    %v7622 = vsel %vm7620, %v7619, %v7621
    %v7623 = vld [vmem:[#allocation28] sm:$0xf]
    %v7624 = vld [vmem:[#allocation28 + $0x4] sm:$0xf]
    %v7625 = vld [vmem:[#allocation28 + $0x8] sm:$0xf]
    %v7626 = vld [vmem:[#allocation28 + $0xc] sm:$0xf]
    %v7627 = vld [vmem:[#allocation28 + $0x10] sm:$0xf]
    %v7628 = vld [vmem:[#allocation28 + $0x14] sm:$0xf]
    %v7629 = vld [vmem:[#allocation28 + $0x18] sm:$0xf]
    %v7630 = vld [vmem:[#allocation28 + $0x1c] sm:$0xf]
    %v7631 = vld [vmem:[#allocation28 + $0x20] sm:$0xf]
    %v7632 = vld [vmem:[#allocation28 + $0x24] sm:$0xf]
    %v7633 = vld [vmem:[#allocation28 + $0x28] sm:$0xf]
    %v7634 = vld [vmem:[#allocation28 + $0x2c] sm:$0xf]
    %v7635 = vld [vmem:[#allocation28 + $0x30] sm:$0xf]
    %v7636 = vld [vmem:[#allocation28 + $0x34] sm:$0xf]
    %v7637 = vld [vmem:[#allocation28 + $0x38] sm:$0xf]
    %v7638 = vld [vmem:[#allocation28 + $0x3c] sm:$0xf]
    %v7639 = vunpack.c.l.bf16 %v7623
    %v7640 = vunpack.c.l.bf16 %v7624
    %v7641 = vunpack.c.l.bf16 %v7625
    %v7642 = vunpack.c.l.bf16 %v7626
    %v7643 = vunpack.c.l.bf16 %v7627
    %v7644 = vunpack.c.l.bf16 %v7628
    %v7645 = vunpack.c.l.bf16 %v7629
    %v7646 = vunpack.c.l.bf16 %v7630
    %v7647 = vunpack.c.l.bf16 %v7631
    %v7648 = vunpack.c.l.bf16 %v7632
    %v7649 = vunpack.c.l.bf16 %v7633
    %v7650 = vunpack.c.l.bf16 %v7634
    %v7651 = vunpack.c.l.bf16 %v7635
    %v7652 = vunpack.c.l.bf16 %v7636
    %v7653 = vunpack.c.l.bf16 %v7637
    %v7654 = vunpack.c.l.bf16 %v7638
    %v7655 = vld [vmem:[#allocation30] sm:$0x1]
    %v7657 = vlaneseq
    %v7658 = vshrl.u32 %v7657, 7
    %v7659 = vsub.s32 0, %v7658
    %v7660 = vrot.slane %v7655, %v7659
    %7662 = vmatprep.subr.mxu0 0.0
    %7663 = vmatpush1.msra.mxu0 %v7654
    %7664 = vmatprep.subr.mxu0 0.0
    %7665 = vmatpush1.msra.mxu0 %v7653
    %7666 = vmatprep.subr.mxu0 0.0
    %7667 = vmatpush1.msra.mxu0 %v7652
    %7668 = vmatprep.subr.mxu0 0.0
    %7669 = vmatpush1.msra.mxu0 %v7651
    %7670 = vmatprep.subr.mxu0 0.0
    %7671 = vmatpush1.msra.mxu0 %v7650
    %7672 = vmatprep.subr.mxu0 0.0
    %7673 = vmatpush1.msra.mxu0 %v7649
    %7674 = vmatprep.subr.mxu0 0.0
    %7675 = vmatpush1.msra.mxu0 %v7648
    %7676 = vmatprep.subr.mxu0 0.0
    %7677 = vmatpush1.msra.mxu0 %v7647
    %7678 = vmatprep.subr.mxu0 0.0
    %7679 = vmatpush1.msra.mxu0 %v7646
    %7680 = vmatprep.subr.mxu0 0.0
    %7681 = vmatpush1.msra.mxu0 %v7645
    %7682 = vmatprep.subr.mxu0 0.0
    %7683 = vmatpush1.msra.mxu0 %v7644
    %7684 = vmatprep.subr.mxu0 0.0
    %7685 = vmatpush1.msra.mxu0 %v7643
    %7686 = vmatprep.subr.mxu0 0.0
    %7687 = vmatpush1.msra.mxu0 %v7642
    %7688 = vmatprep.subr.mxu0 0.0
    %7689 = vmatpush1.msra.mxu0 %v7641
    %7690 = vmatprep.subr.mxu0 0.0
    %7691 = vmatpush1.msra.mxu0 %v7640
    %7692 = vmatprep.subr.mxu0 0.0
    %7693 = vmatpush1.msra.mxu0 %v7639
    %7694 = vmatprep.subr.mxu0 0.0
    %7695 = vmatpush2.msra.mxu0 0.0
    %7696 = vmatprep.subr.mxu0 0.0
    %7697 = vmatpush2.msra.mxu0 0.0
    %7698 = vmatprep.subr.mxu0 0.0
    %7699 = vmatpush2.msra.mxu0 0.0
    %7700 = vmatprep.subr.mxu0 0.0
    %7701 = vmatpush2.msra.mxu0 0.0
    %7702 = vmatprep.subr.mxu0 0.0
    %7703 = vmatpush2.msra.mxu0 0.0
    %7704 = vmatprep.subr.mxu0 0.0
    %7705 = vmatpush2.msra.mxu0 0.0
    %7706 = vmatprep.subr.mxu0 0.0
    %7707 = vmatpush2.msra.mxu0 0.0
    %7708 = vmatprep.subr.mxu0 0.0
    %7709 = vmatpush2.msra.mxu0 0.0
    %7710 = vmatprep.subr.mxu0 0.0
    %7711 = vmatpush2.msra.mxu0 0.0
    %7712 = vmatprep.subr.mxu0 0.0
    %7713 = vmatpush2.msra.mxu0 0.0
    %7714 = vmatprep.subr.mxu0 0.0
    %7715 = vmatpush2.msra.mxu0 0.0
    %7716 = vmatprep.subr.mxu0 0.0
    %7717 = vmatpush2.msra.mxu0 0.0
    %7718 = vmatprep.subr.mxu0 0.0
    %7719 = vmatpush2.msra.mxu0 0.0
    %7720 = vmatprep.subr.mxu0 0.0
    %7721 = vmatpush2.msra.mxu0 0.0
    %7722 = vmatprep.subr.mxu0 0.0
    %7723 = vmatpush2.msra.mxu0 0.0
    %7724 = vmatprep.subr.mxu0 0.0
    %7725 = vmatpush2.msra.mxu0 0.0
    %7726 = vmatprep.mubr.f32.mxu0 0.0
    %7727 = vmatmul.mubr.f32.gmra.mxu0 %v7622
    %v7728 = vpop.f32.mrf.mxu0
    %v7729 = vadd.f32 %v7660, %v7728
    %v7730 = vpop.f32.mrf.mxu0
    %7731 = vdwg.mxu0
    %7732 = vst [vmem:[%s21] sm:$0xff] %v7729
    // Predicated region
    $region162: #{critic_forward.1} parent=1 // pred_check
      _
    $region163: #{critic_forward.1} parent=1 // pred_check_branch
      %7734 = sbr.rel (0) target = $region165
    $region164: #{critic_forward.1} parent=1 // pred_region
      _
    $region165: #{critic_forward.1} parent=1 // pred_fallthru
      _
    // Predicated region
    $region166: #{critic_forward.1} parent=1 // pred_check
      _
    $region167: #{critic_forward.1} parent=1 // pred_check_branch
      %7736 = sbr.rel (0) target = $region169
    $region168: #{critic_forward.1} parent=1 // pred_region
      _
    $region169: #{critic_forward.1} parent=1 // pred_fallthru
      _
    %7737 = vsyncpa [#allocation3], 1
    %7738 = vsyncpa [#allocation5], 1
    %7739 = vsyncpa [#allocation8], 1
    %7740 = vsyncpa [#allocation11], 1
    %7741 = vsyncpa [#allocation14], 1
    %7742 = vsyncpa [#allocation17], 1
    %7743 = vsyncpa [#allocation20], 1
    %7744 = vsyncpa [#allocation23], 1
    %7745 = vsyncpa [#allocation26], 1
    %7746 = vsyncpa [#allocation29], 1

</llo_original>
